<compile_context>
chip_gen: v5e
topology: v5e:2x2
jax: 0.10.0
libtpu: 0.0.40
codegen_flags: <defaults>
</compile_context>

<pallas_src>
import math

import jax
import jax.numpy as jnp
from jax import lax
from jax.experimental import pallas as pl
from jax.experimental.pallas import tpu as pltpu

# ----------------------------------------------------------------------------
# configuration (small, consistent with the module)
# ----------------------------------------------------------------------------
BATCH = 2
IMG_H, IMG_W = 48, 48
# (cin, cout, pad, has_batchnorm) per conv layer of Im2LatexBackbone (scaled)
CONV_CFG = [
    (3, 8, 1, False),
    (8, 16, 1, False),
    (16, 32, 1, True),
    (32, 32, 1, False),
    (32, 64, 1, True),
    (64, 64, 0, True),
]
ENC_IN = 64          # backbone output channels == head encoder_input_size
ENC_HIDDEN = 16      # bi-LSTM row encoder hidden size (per direction)
DEC_HIDDEN = 32      # decoder LSTMCell hidden size
EMB_SIZE = 16        # token embedding size
OUT_SIZE = 32        # vocabulary size
MAX_LEN = 8          # greedy decode length (head's max_len)
CONV_TILE_M = 1024   # cap on conv row tile (keeps double-buffered VMEM small,
                     # well under the 64 MiB budget of v7x)


# ----------------------------------------------------------------------------
# Pallas kernels
# ----------------------------------------------------------------------------
def _conv_relu_kernel(p_ref, w_ref, b_ref, o_ref):
    y = jnp.dot(p_ref[...], w_ref[...], preferred_element_type=jnp.float32)
    o_ref[...] = jnp.maximum(y + b_ref[...], 0.0)


def _conv_bn_relu_kernel(p_ref, w_ref, b_ref, g_ref, be_ref, o_ref):
    # conv (as matmul) + bias, then BatchNorm2d with training-mode batch
    # statistics (one pass: sum and sum-of-squares), then ReLU.
    y = jnp.dot(p_ref[...], w_ref[...], preferred_element_type=jnp.float32)
    y = y + b_ref[...]
    inv_m = 1.0 / y.shape[0]
    mean = jnp.sum(y, axis=0, keepdims=True) * inv_m
    ex2 = jnp.sum(y * y, axis=0, keepdims=True) * inv_m
    var = ex2 - mean * mean
    yn = (y - mean) * lax.rsqrt(var + 1e-5)
    o_ref[...] = jnp.maximum(yn * g_ref[...] + be_ref[...], 0.0)


def _lstm_cell(x, h, c, wih_ref, whh_ref, bih_ref, bhh_ref):
    # per-gate weight blocks (leading axis = 4, PyTorch gate order i, f, g, o)
    gates = []
    for k in range(4):
        gates.append(
            jnp.dot(x, wih_ref[k], preferred_element_type=jnp.float32)
            + jnp.dot(h, whh_ref[k], preferred_element_type=jnp.float32)
            + bih_ref[k] + bhh_ref[k])
    i_g = jax.nn.sigmoid(gates[0])
    f_g = jax.nn.sigmoid(gates[1])
    g_g = jnp.tanh(gates[2])
    o_g = jax.nn.sigmoid(gates[3])
    c_new = f_g * c + i_g * g_g
    h_new = o_g * jnp.tanh(c_new)
    return h_new, c_new


def _bilstm_kernel(xf_ref, xb_ref,
                   wih_f_ref, whh_f_ref, bih_f_ref, bhh_f_ref,
                   wih_b_ref, whh_b_ref, bih_b_ref, bhh_b_ref,
                   outf_ref, outb_ref,
                   hf_scr, cf_scr, hb_scr, cb_scr):
    # grid axis 0 = time.  Forward direction reads/writes time index i; the
    # backward direction reads/writes time index T-1-i via its BlockSpecs, so
    # both directions run in the same grid step with state in VMEM scratch.
    t = pl.program_id(0)

    @pl.when(t == 0)
    def _():
        hf_scr[...] = jnp.zeros_like(hf_scr)
        cf_scr[...] = jnp.zeros_like(cf_scr)
        hb_scr[...] = jnp.zeros_like(hb_scr)
        cb_scr[...] = jnp.zeros_like(cb_scr)

    hf, cf = _lstm_cell(xf_ref[0], hf_scr[...], cf_scr[...],
                        wih_f_ref, whh_f_ref, bih_f_ref, bhh_f_ref)
    hb, cb = _lstm_cell(xb_ref[0], hb_scr[...], cb_scr[...],
                        wih_b_ref, whh_b_ref, bih_b_ref, bhh_b_ref)
    hf_scr[...] = hf
    cf_scr[...] = cf
    hb_scr[...] = hb
    cb_scr[...] = cb
    outf_ref[0] = hf
    outb_ref[0] = hb


def _decode_kernel(enc_ref, emb_ref,
                   wih_e_ref, wih_o_ref, whh_ref, bih_ref, bhh_ref,
                   init_wh_ref, init_bh_ref, init_wc_ref, init_bc_ref,
                   init_wo_ref, init_bo_ref,
                   w1_ref, w2_ref, beta_ref, w3h_ref, w3c_ref, wout_ref,
                   probs_ref,
                   h_scr, c_scr, o_scr, y_scr, e1_scr):
    # one fused kernel for the whole greedy decode: grid axis 0 = decode step.
    t = pl.program_id(0)
    bsz, seq_l, c2 = enc_ref.shape
    vocab = wout_ref.shape[-1]

    @pl.when(t == 0)
    def _():
        enc = enc_ref[...]
        mean = jnp.mean(enc, axis=1)                              # (B, 2He)
        h_scr[...] = jnp.tanh(
            jnp.dot(mean, init_wh_ref[...], preferred_element_type=jnp.float32)
            + init_bh_ref[...])
        c_scr[...] = jnp.tanh(
            jnp.dot(mean, init_wc_ref[...], preferred_element_type=jnp.float32)
            + init_bc_ref[...])
        o_scr[...] = jnp.tanh(
            jnp.dot(mean, init_wo_ref[...], preferred_element_type=jnp.float32)
            + init_bo_ref[...])
        # time-invariant half of the Bahdanau attention, hoisted out of loop
        e1_scr[...] = jnp.dot(
            enc.reshape(bsz * seq_l, c2), w1_ref[...],
            preferred_element_type=jnp.float32).reshape(bsz, seq_l, c2)
        # start-of-sequence token (id 0) embedding
        y_scr[...] = jnp.zeros(y_scr.shape, jnp.float32) + emb_ref[0:1, :]

    prev_y = y_scr[...]
    o_prev = o_scr[...]
    h = h_scr[...]
    c = c_scr[...]

    # ---- LSTMCell on cat([embedding, o_prev]) as split-accumulate matmuls ----
    gates = []
    for k in range(4):                       # gate order i, f, g, o
        gates.append(
            jnp.dot(prev_y, wih_e_ref[k], preferred_element_type=jnp.float32)
            + jnp.dot(o_prev, wih_o_ref[k], preferred_element_type=jnp.float32)
            + jnp.dot(h, whh_ref[k], preferred_element_type=jnp.float32)
            + bih_ref[k] + bhh_ref[k])
    i_g = jax.nn.sigmoid(gates[0])
    f_g = jax.nn.sigmoid(gates[1])
    g_g = jnp.tanh(gates[2])
    o_g = jax.nn.sigmoid(gates[3])
    c_new = f_g * c + i_g * g_g
    h_new = o_g * jnp.tanh(c_new)

    # ---- attention over the row-encoder output ----
    enc = enc_ref[...]                                            # (B, L, 2He)
    e2 = jnp.dot(h_new, w2_ref[...], preferred_element_type=jnp.float32)
    a = jnp.tanh(e1_scr[...] + e2[:, None, :])
    score = jnp.sum(a * beta_ref[...], axis=-1)                   # (B, L)
    score = score - jnp.max(score, axis=-1, keepdims=True)
    ew = jnp.exp(score)
    alpha = ew * pl.reciprocal(jnp.sum(ew, axis=-1, keepdims=True), approx=True)
    context = jnp.sum(alpha[:, :, None] * enc, axis=1)            # (B, 2He)

    # ---- output projection (split W_3, no concatenate) + softmax ----
    o_t = jnp.tanh(
        jnp.dot(h_new, w3h_ref[...], preferred_element_type=jnp.float32)
        + jnp.dot(context, w3c_ref[...], preferred_element_type=jnp.float32))
    logits = jnp.dot(o_t, wout_ref[...], preferred_element_type=jnp.float32)
    logits = logits - jnp.max(logits, axis=-1, keepdims=True)
    pe = jnp.exp(logits)
    probs = pe * pl.reciprocal(jnp.sum(pe, axis=-1, keepdims=True), approx=True)

    h_scr[...] = h_new
    c_scr[...] = c_new
    o_scr[...] = o_t
    probs_ref[0] = probs

    # ---- greedy argmax feedback: next embedding via one-hot @ table ----
    col = lax.broadcasted_iota(jnp.int32, probs.shape, 1)
    mx = jnp.max(probs, axis=-1, keepdims=True)
    first = jnp.min(jnp.where(probs >= mx, col, vocab), axis=-1, keepdims=True)
    onehot = (col == first).astype(jnp.float32)
    y_scr[...] = jnp.dot(onehot, emb_ref[...], preferred_element_type=jnp.float32)


# ----------------------------------------------------------------------------
# wrappers
# ----------------------------------------------------------------------------
def _res(shape):
    """BlockSpec for a weight/activation kept fully resident across the grid."""
    n = len(shape)
    return pl.BlockSpec(shape, lambda *_, _n=n: (0,) * _n)


def _im2col_3x3(x_nhwc, pad):
    x = jnp.pad(x_nhwc, ((0, 0), (1, 1), (1, 1), (0, 0))) if pad else x_nhwc
    b, hp, wp, c = x.shape
    ho, wo = hp - 2, wp - 2
    cols = [x[:, di:di + ho, dj:dj + wo, :] for di in range(3) for dj in range(3)]
    patches = jnp.concatenate(cols, axis=-1)      # (B, Ho, Wo, 9*C), (kh,kw,cin)
    return patches.reshape(b * ho * wo, 9 * c), (b, ho, wo)


def _pick_tile_m(m, cap=CONV_TILE_M):
    if m <= cap:
        return m
    for t in range(cap - cap % 8, 7, -8):
        if m % t == 0:
            return t
    return m


def conv_block(x_nhwc, layer, pad, bn):
    patches, (b, ho, wo) = _im2col_3x3(x_nhwc, pad)
    m, k = patches.shape
    cout = layer['w'].shape[1]
    out_shape = jax.ShapeDtypeStruct((m, cout), jnp.float32)
    if bn:
        # BatchNorm needs global batch statistics -> single (small) block.
        y = pl.pallas_call(_conv_bn_relu_kernel, out_shape=out_shape)(
            patches, layer['w'], layer['b'], layer['gamma'], layer['beta'])
    else:
        tm = _pick_tile_m(m)
        grid_spec = pltpu.PrefetchScalarGridSpec(
            num_scalar_prefetch=0,
            grid=(m // tm,),
            in_specs=[
                pl.BlockSpec((tm, k), lambda i: (i, 0)),
                pl.BlockSpec((k, cout), lambda i: (0, 0)),
                pl.BlockSpec((1, cout), lambda i: (0, 0)),
            ],
            out_specs=pl.BlockSpec((tm, cout), lambda i: (i, 0)),
        )
        y = pl.pallas_call(
            _conv_relu_kernel,
            grid_spec=grid_spec,
            out_shape=out_shape,
            compiler_params=pltpu.CompilerParams(
                dimension_semantics=("parallel",)),
        )(patches, layer['w'], layer['b'])
    return y.reshape(b, ho, wo, cout)


def maxpool(x_nhwc, kh, kw):
    b, h, w, c = x_nhwc.shape
    return x_nhwc.reshape(b, h // kh, kh, w // kw, kw, c).max(axis=(2, 4))


def backbone_forward(x_nchw, bp):
    x = jnp.transpose(x_nchw, (0, 2, 3, 1))       # NCHW -> NHWC
    x = conv_block(x, bp[0], pad=1, bn=False)
    x = maxpool(x, 2, 2)
    x = conv_block(x, bp[1], pad=1, bn=False)
    x = maxpool(x, 2, 2)
    x = conv_block(x, bp[2], pad=1, bn=True)
    x = conv_block(x, bp[3], pad=1, bn=False)
    x = maxpool(x, 2, 1)
    x = conv_block(x, bp[4], pad=1, bn=True)
    x = maxpool(x, 1, 2)
    x = conv_block(x, bp[5], pad=0, bn=True)
    return x                                      # (B, H', W', ENC_IN)


def encode(features_nhwc, hp):
    b, h, w, c = features_nhwc.shape
    # row encoder: every row is an independent sequence through a bi-LSTM.
    rows = features_nhwc.reshape(b * h, w, c)
    x_twc = jnp.transpose(rows, (1, 0, 2))        # (W, B*H, C) time-major
    t_len, bb, _ = x_twc.shape
    hid = hp['enc_whh_f'].shape[-1]

    grid_spec = pltpu.PrefetchScalarGridSpec(
        num_scalar_prefetch=0,
        grid=(t_len,),
        in_specs=[
            pl.BlockSpec((1, bb, c), lambda i: (i, 0, 0)),
            pl.BlockSpec((1, bb, c), lambda i, _t=t_len: (_t - 1 - i, 0, 0)),
            _res(hp['enc_wih_f'].shape), _res(hp['enc_whh_f'].shape),
            _res(hp['enc_bih_f'].shape), _res(hp['enc_bhh_f'].shape),
            _res(hp['enc_wih_b'].shape), _res(hp['enc_whh_b'].shape),
            _res(hp['enc_bih_b'].shape), _res(hp['enc_bhh_b'].shape),
        ],
        out_specs=[
            pl.BlockSpec((1, bb, hid), lambda i: (i, 0, 0)),
            pl.BlockSpec((1, bb, hid), lambda i, _t=t_len: (_t - 1 - i, 0, 0)),
        ],
        scratch_shapes=[pltpu.VMEM((bb, hid), jnp.float32) for _ in range(4)],
    )
    out_f, out_b = pl.pallas_call(
        _bilstm_kernel,
        grid_spec=grid_spec,
        out_shape=(jax.ShapeDtypeStruct((t_len, bb, hid), jnp.float32),
                   jax.ShapeDtypeStruct((t_len, bb, hid), jnp.float32)),
        compiler_params=pltpu.CompilerParams(
            dimension_semantics=("arbitrary",)),
    )(x_twc, x_twc,
      hp['enc_wih_f'], hp['enc_whh_f'], hp['enc_bih_f'], hp['enc_bhh_f'],
      hp['enc_wih_b'], hp['enc_whh_b'], hp['enc_bih_b'], hp['enc_bhh_b'])

    row_enc = jnp.concatenate([out_f, out_b], axis=-1)        # (W, B*H, 2He)
    row_enc = jnp.transpose(row_enc, (1, 0, 2)).reshape(b, h, w, 2 * hid)
    return row_enc


def decode_greedy(enc_flat, hp):
    b, l, c2 = enc_flat.shape
    hd = hp['init_wh'].shape[-1]
    emb = hp['embedding'].shape[-1]
    v = hp['W_out'].shape[-1]

    operands = (
        enc_flat, hp['embedding'],
        hp['dec_wih_e'], hp['dec_wih_o'], hp['dec_whh'],
        hp['dec_bih'], hp['dec_bhh'],
        hp['init_wh'], hp['init_bh'], hp['init_wc'], hp['init_bc'],
        hp['init_wo'], hp['init_bo'],
        hp['W_1'], hp['W_2'], hp['beta'], hp['W_3_h'], hp['W_3_c'], hp['W_out'],
    )
    grid_spec = pltpu.PrefetchScalarGridSpec(
        num_scalar_prefetch=0,
        grid=(MAX_LEN,),
        in_specs=[_res(x.shape) for x in operands],
        out_specs=pl.BlockSpec((1, b, v), lambda t: (t, 0, 0)),
        scratch_shapes=[
            pltpu.VMEM((b, hd), jnp.float32),       # h
            pltpu.VMEM((b, hd), jnp.float32),       # c
            pltpu.VMEM((b, hd), jnp.float32),       # o_t
            pltpu.VMEM((b, emb), jnp.float32),      # prev token embedding
            pltpu.VMEM((b, l, c2), jnp.float32),    # hoisted enc @ W_1
        ],
    )
    return pl.pallas_call(
        _decode_kernel,
        grid_spec=grid_spec,
        out_shape=jax.ShapeDtypeStruct((MAX_LEN, b, v), jnp.float32),
        compiler_params=pltpu.CompilerParams(
            dimension_semantics=("arbitrary",)),
    )(*operands)


def head_forward(features_nhwc, hp):
    row_enc_out = encode(features_nhwc, hp)
    b, h, w, c2 = row_enc_out.shape
    enc_flat = row_enc_out.reshape(b, h * w, c2)
    probs = decode_greedy(enc_flat, hp)           # (T, B, V) softmax probs
    logits = jnp.transpose(probs, (1, 0, 2))      # (B, T, V)
    targets = jnp.argmax(logits, axis=-1).astype(jnp.int32)
    return logits, targets


def im2latex_forward(params, input_images_nchw):
    features = backbone_forward(input_images_nchw, params['backbone'])
    return head_forward(features, params['head'])


# ----------------------------------------------------------------------------
# deterministic synthetic parameters
# ----------------------------------------------------------------------------
def init_params(key):
    keys = iter(jax.random.split(key, 64))
    nk = lambda: next(keys)

    def unif(shape, bound):
        return jax.random.uniform(nk(), shape, jnp.float32, -bound, bound)

    backbone = []
    for cin, cout, _pad, bn in CONV_CFG:
        bnd = 1.0 / math.sqrt(cin * 9)
        w = unif((cout, cin, 3, 3), bnd)                        # PyTorch layout
        b = unif((cout,), bnd)
        layer = {
            # (kh, kw, cin, cout) flattened -> matches im2col patch ordering
            'w': jnp.transpose(w, (2, 3, 1, 0)).reshape(9 * cin, cout),
            'b': b.reshape(1, cout),
        }
        if bn:
            layer['gamma'] = jnp.ones((1, cout), jnp.float32)
            layer['beta'] = jnp.zeros((1, cout), jnp.float32)
        backbone.append(layer)

    def lstm_p(in_dim, hid):
        bnd = 1.0 / math.sqrt(hid)
        # per-gate (i, f, g, o) weight blocks, stored so kernels do x @ W
        return (unif((4, in_dim, hid), bnd), unif((4, hid, hid), bnd),
                unif((4, 1, hid), bnd), unif((4, 1, hid), bnd))

    he2 = 2 * ENC_HIDDEN
    head = {}
    (head['enc_wih_f'], head['enc_whh_f'],
     head['enc_bih_f'], head['enc_bhh_f']) = lstm_p(ENC_IN, ENC_HIDDEN)
    (head['enc_wih_b'], head['enc_whh_b'],
     head['enc_bih_b'], head['enc_bhh_b']) = lstm_p(ENC_IN, ENC_HIDDEN)
    head['embedding'] = jax.random.normal(nk(), (OUT_SIZE, EMB_SIZE), jnp.float32)

    bnd = 1.0 / math.sqrt(DEC_HIDDEN)
    head['dec_wih_e'] = unif((4, EMB_SIZE, DEC_HIDDEN), bnd)    # embedding part
    head['dec_wih_o'] = unif((4, DEC_HIDDEN, DEC_HIDDEN), bnd)  # o_prev part
    head['dec_whh'] = unif((4, DEC_HIDDEN, DEC_HIDDEN), bnd)
    head['dec_bih'] = unif((4, 1, DEC_HIDDEN), bnd)
    head['dec_bhh'] = unif((4, 1, DEC_HIDDEN), bnd)

    bnd = 1.0 / math.sqrt(he2)
    head['init_wh'] = unif((he2, DEC_HIDDEN), bnd)
    head['init_bh'] = unif((1, DEC_HIDDEN), bnd)
    head['init_wc'] = unif((he2, DEC_HIDDEN), bnd)
    head['init_bc'] = unif((1, DEC_HIDDEN), bnd)
    head['init_wo'] = unif((he2, DEC_HIDDEN), bnd)
    head['init_bo'] = unif((1, DEC_HIDDEN), bnd)

    head['W_1'] = unif((he2, he2), 1.0 / math.sqrt(he2))
    head['W_2'] = unif((DEC_HIDDEN, he2), 1.0 / math.sqrt(DEC_HIDDEN))
    bnd3 = 1.0 / math.sqrt(DEC_HIDDEN + he2)
    head['W_3_h'] = unif((DEC_HIDDEN, DEC_HIDDEN), bnd3)        # h_new part
    head['W_3_c'] = unif((he2, DEC_HIDDEN), bnd3)               # context part
    head['W_out'] = unif((DEC_HIDDEN, OUT_SIZE), 1.0 / math.sqrt(DEC_HIDDEN))
    head['beta'] = unif((1, he2), 1e-2)
    return {'backbone': backbone, 'head': head}


# ----------------------------------------------------------------------------
if __name__ == "__main__":
    key = jax.random.PRNGKey(0)
    k_params, k_img = jax.random.split(key)
    params = init_params(k_params)
    input_images = jax.random.normal(k_img, (BATCH, 3, IMG_H, IMG_W), jnp.float32)

    fwd = jax.jit(im2latex_forward)
    logits, targets = fwd(params, input_images)
    jax.block_until_ready((logits, targets))

    assert logits.shape == (BATCH, MAX_LEN, OUT_SIZE)
    assert targets.shape == (BATCH, MAX_LEN)
    assert bool(jnp.all(jnp.isfinite(logits)))
    print("KERNEL_OK")
</pallas_src>

<mosaic_0001>
module attributes {stable_mosaic.version = 11 : i64} {
  func.func @_conv_relu_kernel(%arg0: i32, %arg1: memref<768x27xf32, #tpu.memory_space<vmem>>, %arg2: memref<27x8xf32, #tpu.memory_space<vmem>>, %arg3: memref<1x8xf32, #tpu.memory_space<vmem>>, %arg4: memref<768x8xf32, #tpu.memory_space<vmem>>) attributes {dimension_semantics = [#tpu.dimension_semantics<parallel>], iteration_bounds = array<i64: 6>, scalar_prefetch = 0 : i64, scratch_operands = 0 : i64, tpu.core_type = #tpu.core_type<tc>, window_params = [{transform_indices = @transform_0, window_bounds = array<i64: 768, 27>}, {pipeline_mode = #tpu.pipeline_mode<synchronous>, transform_indices = @transform_1, window_bounds = array<i64: 27, 8>}, {pipeline_mode = #tpu.pipeline_mode<synchronous>, transform_indices = @transform_2, window_bounds = array<i64: 1, 8>}, {transform_indices = @transform_3, window_bounds = array<i64: 768, 8>}]} {
    %c0 = arith.constant 0 : index
    %c0_0 = arith.constant 0 : index
    %0 = vector.load %arg1[%c0, %c0_0] : memref<768x27xf32, #tpu.memory_space<vmem>>, vector<768x27xf32>
    %c0_1 = arith.constant 0 : index
    %c0_2 = arith.constant 0 : index
    %1 = vector.load %arg2[%c0_1, %c0_2] : memref<27x8xf32, #tpu.memory_space<vmem>>, vector<27x8xf32>
    %cst = arith.constant dense<0.000000e+00> : vector<768x8xf32>
    %2 = tpu.matmul %0, %1, %cst {dimension_numbers = #tpu.dot_dimension_numbers<[1], [0], [0], [1], [0, 0, 1, 1], [], []>} : vector<768x27xf32>, vector<27x8xf32>, vector<768x8xf32> -> vector<768x8xf32>
    %c0_3 = arith.constant 0 : index
    %c0_4 = arith.constant 0 : index
    %3 = vector.load %arg3[%c0_3, %c0_4] : memref<1x8xf32, #tpu.memory_space<vmem>>, vector<1x8xf32>
    %4 = vector.broadcast %3 : vector<1x8xf32> to vector<768x8xf32>
    %5 = arith.addf %2, %4 : vector<768x8xf32>
    %cst_5 = arith.constant 0.000000e+00 : f32
    %6 = vector.broadcast %cst_5 : f32 to vector<768x8xf32>
    %7 = arith.maximumf %5, %6 : vector<768x8xf32>
    %c0_6 = arith.constant 0 : index
    %c0_7 = arith.constant 0 : index
    %8 = vector.load %arg4[%c0_6, %c0_7] : memref<768x8xf32, #tpu.memory_space<vmem>>, vector<768x8xf32>
    tpu.vector_store %arg4[%c0_6, %c0_7], %7 {strides = array<i32>} : memref<768x8xf32, #tpu.memory_space<vmem>>, vector<768x8xf32>,
    return
  }
  func.func @transform_0(%arg0: i32) -> (i32, i32) {
    %c0_i32 = arith.constant 0 : i32
    %c0_i32_0 = arith.constant 0 : i32
    return %arg0, %c0_i32 : i32, i32
  }
  func.func @transform_1(%arg0: i32) -> (i32, i32) {
    %c0_i32 = arith.constant 0 : i32
    %c0_i32_0 = arith.constant 0 : i32
    %c0_i32_1 = arith.constant 0 : i32
    return %c0_i32, %c0_i32_0 : i32, i32
  }
  func.func @transform_2(%arg0: i32) -> (i32, i32) {
    %c0_i32 = arith.constant 0 : i32
    %c0_i32_0 = arith.constant 0 : i32
    %c0_i32_1 = arith.constant 0 : i32
    return %c0_i32, %c0_i32_0 : i32, i32
  }
  func.func @transform_3(%arg0: i32) -> (i32, i32) {
    %c0_i32 = arith.constant 0 : i32
    %c0_i32_0 = arith.constant 0 : i32
    return %arg0, %c0_i32 : i32, i32
  }
}

module attributes {stable_mosaic.version = 11 : i64} {
  func.func @_conv_relu_kernel(%arg0: i32, %arg1: memref<576x72xf32, #tpu.memory_space<vmem>>, %arg2: memref<72x16xf32, #tpu.memory_space<vmem>>, %arg3: memref<1x16xf32, #tpu.memory_space<vmem>>, %arg4: memref<576x16xf32, #tpu.memory_space<vmem>>) attributes {dimension_semantics = [#tpu.dimension_semantics<parallel>], iteration_bounds = array<i64: 2>, scalar_prefetch = 0 : i64, scratch_operands = 0 : i64, tpu.core_type = #tpu.core_type<tc>, window_params = [{transform_indices = @transform_0, window_bounds = array<i64: 576, 72>}, {pipeline_mode = #tpu.pipeline_mode<synchronous>, transform_indices = @transform_1, window_bounds = array<i64: 72, 16>}, {pipeline_mode = #tpu.pipeline_mode<synchronous>, transform_indices = @transform_2, window_bounds = array<i64: 1, 16>}, {transform_indices = @transform_3, window_bounds = array<i64: 576, 16>}]} {
    %c0 = arith.constant 0 : index
    %c0_0 = arith.constant 0 : index
    %0 = vector.load %arg1[%c0, %c0_0] : memref<576x72xf32, #tpu.memory_space<vmem>>, vector<576x72xf32>
    %c0_1 = arith.constant 0 : index
    %c0_2 = arith.constant 0 : index
    %1 = vector.load %arg2[%c0_1, %c0_2] : memref<72x16xf32, #tpu.memory_space<vmem>>, vector<72x16xf32>
    %cst = arith.constant dense<0.000000e+00> : vector<576x16xf32>
    %2 = tpu.matmul %0, %1, %cst {dimension_numbers = #tpu.dot_dimension_numbers<[1], [0], [0], [1], [0, 0, 1, 1], [], []>} : vector<576x72xf32>, vector<72x16xf32>, vector<576x16xf32> -> vector<576x16xf32>
    %c0_3 = arith.constant 0 : index
    %c0_4 = arith.constant 0 : index
    %3 = vector.load %arg3[%c0_3, %c0_4] : memref<1x16xf32, #tpu.memory_space<vmem>>, vector<1x16xf32>
    %4 = vector.broadcast %3 : vector<1x16xf32> to vector<576x16xf32>
    %5 = arith.addf %2, %4 : vector<576x16xf32>
    %cst_5 = arith.constant 0.000000e+00 : f32
    %6 = vector.broadcast %cst_5 : f32 to vector<576x16xf32>
    %7 = arith.maximumf %5, %6 : vector<576x16xf32>
    %c0_6 = arith.constant 0 : index
    %c0_7 = arith.constant 0 : index
    %8 = vector.load %arg4[%c0_6, %c0_7] : memref<576x16xf32, #tpu.memory_space<vmem>>, vector<576x16xf32>
    tpu.vector_store %arg4[%c0_6, %c0_7], %7 {strides = array<i32>} : memref<576x16xf32, #tpu.memory_space<vmem>>, vector<576x16xf32>,
    return
  }
  func.func @transform_0(%arg0: i32) -> (i32, i32) {
    %c0_i32 = arith.constant 0 : i32
    %c0_i32_0 = arith.constant 0 : i32
    return %arg0, %c0_i32 : i32, i32
  }
  func.func @transform_1(%arg0: i32) -> (i32, i32) {
    %c0_i32 = arith.constant 0 : i32
    %c0_i32_0 = arith.constant 0 : i32
    %c0_i32_1 = arith.constant 0 : i32
    return %c0_i32, %c0_i32_0 : i32, i32
  }
  func.func @transform_2(%arg0: i32) -> (i32, i32) {
    %c0_i32 = arith.constant 0 : i32
    %c0_i32_0 = arith.constant 0 : i32
    %c0_i32_1 = arith.constant 0 : i32
    return %c0_i32, %c0_i32_0 : i32, i32
  }
  func.func @transform_3(%arg0: i32) -> (i32, i32) {
    %c0_i32 = arith.constant 0 : i32
    %c0_i32_0 = arith.constant 0 : i32
    return %arg0, %c0_i32 : i32, i32
  }
}

module attributes {stable_mosaic.version = 11 : i64} {
  func.func @_conv_bn_relu_kernel(%arg0: memref<288x144xf32, #tpu.memory_space<vmem>>, %arg1: memref<144x32xf32, #tpu.memory_space<vmem>>, %arg2: memref<1x32xf32, #tpu.memory_space<vmem>>, %arg3: memref<1x32xf32, #tpu.memory_space<vmem>>, %arg4: memref<1x32xf32, #tpu.memory_space<vmem>>, %arg5: memref<288x32xf32, #tpu.memory_space<vmem>>) attributes {dimension_semantics = [], scalar_prefetch = 0 : i64, scratch_operands = 0 : i64, tpu.core_type = #tpu.core_type<tc>} {
    %c0 = arith.constant 0 : index
    %c0_0 = arith.constant 0 : index
    %0 = vector.load %arg0[%c0, %c0_0] : memref<288x144xf32, #tpu.memory_space<vmem>>, vector<288x144xf32>
    %c0_1 = arith.constant 0 : index
    %c0_2 = arith.constant 0 : index
    %1 = vector.load %arg1[%c0_1, %c0_2] : memref<144x32xf32, #tpu.memory_space<vmem>>, vector<144x32xf32>
    %cst = arith.constant dense<0.000000e+00> : vector<288x32xf32>
    %2 = tpu.matmul %0, %1, %cst {dimension_numbers = #tpu.dot_dimension_numbers<[1], [0], [0], [1], [0, 0, 1, 1], [], []>} : vector<288x144xf32>, vector<144x32xf32>, vector<288x32xf32> -> vector<288x32xf32>
    %c0_3 = arith.constant 0 : index
    %c0_4 = arith.constant 0 : index
    %3 = vector.load %arg2[%c0_3, %c0_4] : memref<1x32xf32, #tpu.memory_space<vmem>>, vector<1x32xf32>
    %4 = vector.broadcast %3 : vector<1x32xf32> to vector<288x32xf32>
    %5 = arith.addf %2, %4 : vector<288x32xf32>
    %cst_5 = arith.constant dense<0.000000e+00> : vector<32xf32>
    %6 = vector.multi_reduction <add>, %5, %cst_5 [0] : vector<288x32xf32> to vector<32xf32>
    %7 = vector.shape_cast %6 : vector<32xf32> to vector<1x32xf32>
    %cst_6 = arith.constant 0.00347222225 : f32
    %8 = vector.broadcast %cst_6 : f32 to vector<1x32xf32>
    %9 = arith.mulf %7, %8 : vector<1x32xf32>
    %10 = arith.mulf %5, %5 : vector<288x32xf32>
    %cst_7 = arith.constant dense<0.000000e+00> : vector<32xf32>
    %11 = vector.multi_reduction <add>, %10, %cst_7 [0] : vector<288x32xf32> to vector<32xf32>
    %12 = vector.shape_cast %11 : vector<32xf32> to vector<1x32xf32>
    %cst_8 = arith.constant 0.00347222225 : f32
    %13 = vector.broadcast %cst_8 : f32 to vector<1x32xf32>
    %14 = arith.mulf %12, %13 : vector<1x32xf32>
    %15 = arith.mulf %9, %9 : vector<1x32xf32>
    %16 = arith.subf %14, %15 : vector<1x32xf32>
    %17 = vector.broadcast %9 : vector<1x32xf32> to vector<288x32xf32>
    %18 = arith.subf %5, %17 : vector<288x32xf32>
    %cst_9 = arith.constant 9.99999974E-6 : f32
    %19 = vector.broadcast %cst_9 : f32 to vector<1x32xf32>
    %20 = arith.addf %16, %19 : vector<1x32xf32>
    %21 = math.rsqrt %20 : vector<1x32xf32>
    %22 = vector.broadcast %21 : vector<1x32xf32> to vector<288x32xf32>
    %23 = arith.mulf %18, %22 : vector<288x32xf32>
    %c0_10 = arith.constant 0 : index
    %c0_11 = arith.constant 0 : index
    %24 = vector.load %arg3[%c0_10, %c0_11] : memref<1x32xf32, #tpu.memory_space<vmem>>, vector<1x32xf32>
    %25 = vector.broadcast %24 : vector<1x32xf32> to vector<288x32xf32>
    %26 = arith.mulf %23, %25 : vector<288x32xf32>
    %c0_12 = arith.constant 0 : index
    %c0_13 = arith.constant 0 : index
    %27 = vector.load %arg4[%c0_12, %c0_13] : memref<1x32xf32, #tpu.memory_space<vmem>>, vector<1x32xf32>
    %28 = vector.broadcast %27 : vector<1x32xf32> to vector<288x32xf32>
    %29 = arith.addf %26, %28 : vector<288x32xf32>
    %cst_14 = arith.constant 0.000000e+00 : f32
    %30 = vector.broadcast %cst_14 : f32 to vector<288x32xf32>
    %31 = arith.maximumf %29, %30 : vector<288x32xf32>
    %c0_15 = arith.constant 0 : index
    %c0_16 = arith.constant 0 : index
    %32 = vector.load %arg5[%c0_15, %c0_16] : memref<288x32xf32, #tpu.memory_space<vmem>>, vector<288x32xf32>
    tpu.vector_store %arg5[%c0_15, %c0_16], %31 {strides = array<i32>} : memref<288x32xf32, #tpu.memory_space<vmem>>, vector<288x32xf32>,
    return
  }
}

module attributes {stable_mosaic.version = 11 : i64} {
  func.func @_conv_relu_kernel(%arg0: i32, %arg1: memref<288x288xf32, #tpu.memory_space<vmem>>, %arg2: memref<288x32xf32, #tpu.memory_space<vmem>>, %arg3: memref<1x32xf32, #tpu.memory_space<vmem>>, %arg4: memref<288x32xf32, #tpu.memory_space<vmem>>) attributes {dimension_semantics = [#tpu.dimension_semantics<parallel>], iteration_bounds = array<i64: 1>, scalar_prefetch = 0 : i64, scratch_operands = 0 : i64, tpu.core_type = #tpu.core_type<tc>, window_params = [{transform_indices = @transform_0, window_bounds = array<i64: 288, 288>}, {pipeline_mode = #tpu.pipeline_mode<synchronous>, transform_indices = @transform_1, window_bounds = array<i64: 288, 32>}, {pipeline_mode = #tpu.pipeline_mode<synchronous>, transform_indices = @transform_2, window_bounds = array<i64: 1, 32>}, {transform_indices = @transform_3, window_bounds = array<i64: 288, 32>}]} {
    %c0 = arith.constant 0 : index
    %c0_0 = arith.constant 0 : index
    %0 = vector.load %arg1[%c0, %c0_0] : memref<288x288xf32, #tpu.memory_space<vmem>>, vector<288x288xf32>
    %c0_1 = arith.constant 0 : index
    %c0_2 = arith.constant 0 : index
    %1 = vector.load %arg2[%c0_1, %c0_2] : memref<288x32xf32, #tpu.memory_space<vmem>>, vector<288x32xf32>
    %cst = arith.constant dense<0.000000e+00> : vector<288x32xf32>
    %2 = tpu.matmul %0, %1, %cst {dimension_numbers = #tpu.dot_dimension_numbers<[1], [0], [0], [1], [0, 0, 1, 1], [], []>} : vector<288x288xf32>, vector<288x32xf32>, vector<288x32xf32> -> vector<288x32xf32>
    %c0_3 = arith.constant 0 : index
    %c0_4 = arith.constant 0 : index
    %3 = vector.load %arg3[%c0_3, %c0_4] : memref<1x32xf32, #tpu.memory_space<vmem>>, vector<1x32xf32>
    %4 = vector.broadcast %3 : vector<1x32xf32> to vector<288x32xf32>
    %5 = arith.addf %2, %4 : vector<288x32xf32>
    %cst_5 = arith.constant 0.000000e+00 : f32
    %6 = vector.broadcast %cst_5 : f32 to vector<288x32xf32>
    %7 = arith.maximumf %5, %6 : vector<288x32xf32>
    %c0_6 = arith.constant 0 : index
    %c0_7 = arith.constant 0 : index
    %8 = vector.load %arg4[%c0_6, %c0_7] : memref<288x32xf32, #tpu.memory_space<vmem>>, vector<288x32xf32>
    tpu.vector_store %arg4[%c0_6, %c0_7], %7 {strides = array<i32>} : memref<288x32xf32, #tpu.memory_space<vmem>>, vector<288x32xf32>,
    return
  }
  func.func @transform_0(%arg0: i32) -> (i32, i32) {
    %c0_i32 = arith.constant 0 : i32
    %c0_i32_0 = arith.constant 0 : i32
    return %arg0, %c0_i32 : i32, i32
  }
  func.func @transform_1(%arg0: i32) -> (i32, i32) {
    %c0_i32 = arith.constant 0 : i32
    %c0_i32_0 = arith.constant 0 : i32
    %c0_i32_1 = arith.constant 0 : i32
    return %c0_i32, %c0_i32_0 : i32, i32
  }
  func.func @transform_2(%arg0: i32) -> (i32, i32) {
    %c0_i32 = arith.constant 0 : i32
    %c0_i32_0 = arith.constant 0 : i32
    %c0_i32_1 = arith.constant 0 : i32
    return %c0_i32, %c0_i32_0 : i32, i32
  }
  func.func @transform_3(%arg0: i32) -> (i32, i32) {
    %c0_i32 = arith.constant 0 : i32
    %c0_i32_0 = arith.constant 0 : i32
    return %arg0, %c0_i32 : i32, i32
  }
}

module attributes {stable_mosaic.version = 11 : i64} {
  func.func @_conv_bn_relu_kernel(%arg0: memref<144x288xf32, #tpu.memory_space<vmem>>, %arg1: memref<288x64xf32, #tpu.memory_space<vmem>>, %arg2: memref<1x64xf32, #tpu.memory_space<vmem>>, %arg3: memref<1x64xf32, #tpu.memory_space<vmem>>, %arg4: memref<1x64xf32, #tpu.memory_space<vmem>>, %arg5: memref<144x64xf32, #tpu.memory_space<vmem>>) attributes {dimension_semantics = [], scalar_prefetch = 0 : i64, scratch_operands = 0 : i64, tpu.core_type = #tpu.core_type<tc>} {
    %c0 = arith.constant 0 : index
    %c0_0 = arith.constant 0 : index
    %0 = vector.load %arg0[%c0, %c0_0] : memref<144x288xf32, #tpu.memory_space<vmem>>, vector<144x288xf32>
    %c0_1 = arith.constant 0 : index
    %c0_2 = arith.constant 0 : index
    %1 = vector.load %arg1[%c0_1, %c0_2] : memref<288x64xf32, #tpu.memory_space<vmem>>, vector<288x64xf32>
    %cst = arith.constant dense<0.000000e+00> : vector<144x64xf32>
    %2 = tpu.matmul %0, %1, %cst {dimension_numbers = #tpu.dot_dimension_numbers<[1], [0], [0], [1], [0, 0, 1, 1], [], []>} : vector<144x288xf32>, vector<288x64xf32>, vector<144x64xf32> -> vector<144x64xf32>
    %c0_3 = arith.constant 0 : index
    %c0_4 = arith.constant 0 : index
    %3 = vector.load %arg2[%c0_3, %c0_4] : memref<1x64xf32, #tpu.memory_space<vmem>>, vector<1x64xf32>
    %4 = vector.broadcast %3 : vector<1x64xf32> to vector<144x64xf32>
    %5 = arith.addf %2, %4 : vector<144x64xf32>
    %cst_5 = arith.constant dense<0.000000e+00> : vector<64xf32>
    %6 = vector.multi_reduction <add>, %5, %cst_5 [0] : vector<144x64xf32> to vector<64xf32>
    %7 = vector.shape_cast %6 : vector<64xf32> to vector<1x64xf32>
    %cst_6 = arith.constant 0.0069444445 : f32
    %8 = vector.broadcast %cst_6 : f32 to vector<1x64xf32>
    %9 = arith.mulf %7, %8 : vector<1x64xf32>
    %10 = arith.mulf %5, %5 : vector<144x64xf32>
    %cst_7 = arith.constant dense<0.000000e+00> : vector<64xf32>
    %11 = vector.multi_reduction <add>, %10, %cst_7 [0] : vector<144x64xf32> to vector<64xf32>
    %12 = vector.shape_cast %11 : vector<64xf32> to vector<1x64xf32>
    %cst_8 = arith.constant 0.0069444445 : f32
    %13 = vector.broadcast %cst_8 : f32 to vector<1x64xf32>
    %14 = arith.mulf %12, %13 : vector<1x64xf32>
    %15 = arith.mulf %9, %9 : vector<1x64xf32>
    %16 = arith.subf %14, %15 : vector<1x64xf32>
    %17 = vector.broadcast %9 : vector<1x64xf32> to vector<144x64xf32>
    %18 = arith.subf %5, %17 : vector<144x64xf32>
    %cst_9 = arith.constant 9.99999974E-6 : f32
    %19 = vector.broadcast %cst_9 : f32 to vector<1x64xf32>
    %20 = arith.addf %16, %19 : vector<1x64xf32>
    %21 = math.rsqrt %20 : vector<1x64xf32>
    %22 = vector.broadcast %21 : vector<1x64xf32> to vector<144x64xf32>
    %23 = arith.mulf %18, %22 : vector<144x64xf32>
    %c0_10 = arith.constant 0 : index
    %c0_11 = arith.constant 0 : index
    %24 = vector.load %arg3[%c0_10, %c0_11] : memref<1x64xf32, #tpu.memory_space<vmem>>, vector<1x64xf32>
    %25 = vector.broadcast %24 : vector<1x64xf32> to vector<144x64xf32>
    %26 = arith.mulf %23, %25 : vector<144x64xf32>
    %c0_12 = arith.constant 0 : index
    %c0_13 = arith.constant 0 : index
    %27 = vector.load %arg4[%c0_12, %c0_13] : memref<1x64xf32, #tpu.memory_space<vmem>>, vector<1x64xf32>
    %28 = vector.broadcast %27 : vector<1x64xf32> to vector<144x64xf32>
    %29 = arith.addf %26, %28 : vector<144x64xf32>
    %cst_14 = arith.constant 0.000000e+00 : f32
    %30 = vector.broadcast %cst_14 : f32 to vector<144x64xf32>
    %31 = arith.maximumf %29, %30 : vector<144x64xf32>
    %c0_15 = arith.constant 0 : index
    %c0_16 = arith.constant 0 : index
    %32 = vector.load %arg5[%c0_15, %c0_16] : memref<144x64xf32, #tpu.memory_space<vmem>>, vector<144x64xf32>
    tpu.vector_store %arg5[%c0_15, %c0_16], %31 {strides = array<i32>} : memref<144x64xf32, #tpu.memory_space<vmem>>, vector<144x64xf32>,
    return
  }
}

module attributes {stable_mosaic.version = 11 : i64} {
  func.func @_conv_bn_relu_kernel(%arg0: memref<32x576xf32, #tpu.memory_space<vmem>>, %arg1: memref<576x64xf32, #tpu.memory_space<vmem>>, %arg2: memref<1x64xf32, #tpu.memory_space<vmem>>, %arg3: memref<1x64xf32, #tpu.memory_space<vmem>>, %arg4: memref<1x64xf32, #tpu.memory_space<vmem>>, %arg5: memref<32x64xf32, #tpu.memory_space<vmem>>) attributes {dimension_semantics = [], scalar_prefetch = 0 : i64, scratch_operands = 0 : i64, tpu.core_type = #tpu.core_type<tc>} {
    %c0 = arith.constant 0 : index
    %c0_0 = arith.constant 0 : index
    %0 = vector.load %arg0[%c0, %c0_0] : memref<32x576xf32, #tpu.memory_space<vmem>>, vector<32x576xf32>
    %c0_1 = arith.constant 0 : index
    %c0_2 = arith.constant 0 : index
    %1 = vector.load %arg1[%c0_1, %c0_2] : memref<576x64xf32, #tpu.memory_space<vmem>>, vector<576x64xf32>
    %cst = arith.constant dense<0.000000e+00> : vector<32x64xf32>
    %2 = tpu.matmul %0, %1, %cst {dimension_numbers = #tpu.dot_dimension_numbers<[1], [0], [0], [1], [0, 0, 1, 1], [], []>} : vector<32x576xf32>, vector<576x64xf32>, vector<32x64xf32> -> vector<32x64xf32>
    %c0_3 = arith.constant 0 : index
    %c0_4 = arith.constant 0 : index
    %3 = vector.load %arg2[%c0_3, %c0_4] : memref<1x64xf32, #tpu.memory_space<vmem>>, vector<1x64xf32>
    %4 = vector.broadcast %3 : vector<1x64xf32> to vector<32x64xf32>
    %5 = arith.addf %2, %4 : vector<32x64xf32>
    %cst_5 = arith.constant dense<0.000000e+00> : vector<64xf32>
    %6 = vector.multi_reduction <add>, %5, %cst_5 [0] : vector<32x64xf32> to vector<64xf32>
    %7 = vector.shape_cast %6 : vector<64xf32> to vector<1x64xf32>
    %cst_6 = arith.constant 3.125000e-02 : f32
    %8 = vector.broadcast %cst_6 : f32 to vector<1x64xf32>
    %9 = arith.mulf %7, %8 : vector<1x64xf32>
    %10 = arith.mulf %5, %5 : vector<32x64xf32>
    %cst_7 = arith.constant dense<0.000000e+00> : vector<64xf32>
    %11 = vector.multi_reduction <add>, %10, %cst_7 [0] : vector<32x64xf32> to vector<64xf32>
    %12 = vector.shape_cast %11 : vector<64xf32> to vector<1x64xf32>
    %cst_8 = arith.constant 3.125000e-02 : f32
    %13 = vector.broadcast %cst_8 : f32 to vector<1x64xf32>
    %14 = arith.mulf %12, %13 : vector<1x64xf32>
    %15 = arith.mulf %9, %9 : vector<1x64xf32>
    %16 = arith.subf %14, %15 : vector<1x64xf32>
    %17 = vector.broadcast %9 : vector<1x64xf32> to vector<32x64xf32>
    %18 = arith.subf %5, %17 : vector<32x64xf32>
    %cst_9 = arith.constant 9.99999974E-6 : f32
    %19 = vector.broadcast %cst_9 : f32 to vector<1x64xf32>
    %20 = arith.addf %16, %19 : vector<1x64xf32>
    %21 = math.rsqrt %20 : vector<1x64xf32>
    %22 = vector.broadcast %21 : vector<1x64xf32> to vector<32x64xf32>
    %23 = arith.mulf %18, %22 : vector<32x64xf32>
    %c0_10 = arith.constant 0 : index
    %c0_11 = arith.constant 0 : index
    %24 = vector.load %arg3[%c0_10, %c0_11] : memref<1x64xf32, #tpu.memory_space<vmem>>, vector<1x64xf32>
    %25 = vector.broadcast %24 : vector<1x64xf32> to vector<32x64xf32>
    %26 = arith.mulf %23, %25 : vector<32x64xf32>
    %c0_12 = arith.constant 0 : index
    %c0_13 = arith.constant 0 : index
    %27 = vector.load %arg4[%c0_12, %c0_13] : memref<1x64xf32, #tpu.memory_space<vmem>>, vector<1x64xf32>
    %28 = vector.broadcast %27 : vector<1x64xf32> to vector<32x64xf32>
    %29 = arith.addf %26, %28 : vector<32x64xf32>
    %cst_14 = arith.constant 0.000000e+00 : f32
    %30 = vector.broadcast %cst_14 : f32 to vector<32x64xf32>
    %31 = arith.maximumf %29, %30 : vector<32x64xf32>
    %c0_15 = arith.constant 0 : index
    %c0_16 = arith.constant 0 : index
    %32 = vector.load %arg5[%c0_15, %c0_16] : memref<32x64xf32, #tpu.memory_space<vmem>>, vector<32x64xf32>
    tpu.vector_store %arg5[%c0_15, %c0_16], %31 {strides = array<i32>} : memref<32x64xf32, #tpu.memory_space<vmem>>, vector<32x64xf32>,
    return
  }
}

module attributes {stable_mosaic.version = 11 : i64} {
  func.func @_decode_kernel(%arg0: i32, %arg1: memref<2x16x32xf32, #tpu.memory_space<vmem>>, %arg2: memref<32x16xf32, #tpu.memory_space<vmem>>, %arg3: memref<4x16x32xf32, #tpu.memory_space<vmem>>, %arg4: memref<4x32x32xf32, #tpu.memory_space<vmem>>, %arg5: memref<4x32x32xf32, #tpu.memory_space<vmem>>, %arg6: memref<4x1x32xf32, #tpu.memory_space<vmem>>, %arg7: memref<4x1x32xf32, #tpu.memory_space<vmem>>, %arg8: memref<32x32xf32, #tpu.memory_space<vmem>>, %arg9: memref<1x32xf32, #tpu.memory_space<vmem>>, %arg10: memref<32x32xf32, #tpu.memory_space<vmem>>, %arg11: memref<1x32xf32, #tpu.memory_space<vmem>>, %arg12: memref<32x32xf32, #tpu.memory_space<vmem>>, %arg13: memref<1x32xf32, #tpu.memory_space<vmem>>, %arg14: memref<32x32xf32, #tpu.memory_space<vmem>>, %arg15: memref<32x32xf32, #tpu.memory_space<vmem>>, %arg16: memref<1x32xf32, #tpu.memory_space<vmem>>, %arg17: memref<32x32xf32, #tpu.memory_space<vmem>>, %arg18: memref<32x32xf32, #tpu.memory_space<vmem>>, %arg19: memref<32x32xf32, #tpu.memory_space<vmem>>, %arg20: memref<1x2x32xf32, #tpu.memory_space<vmem>>, %arg21: memref<2x32xf32, #tpu.memory_space<vmem>>, %arg22: memref<2x32xf32, #tpu.memory_space<vmem>>, %arg23: memref<2x32xf32, #tpu.memory_space<vmem>>, %arg24: memref<2x16xf32, #tpu.memory_space<vmem>>, %arg25: memref<2x16x32xf32, #tpu.memory_space<vmem>>) attributes {dimension_semantics = [#tpu.dimension_semantics<arbitrary>], iteration_bounds = array<i64: 8>, scalar_prefetch = 0 : i64, scratch_operands = 5 : i64, tpu.core_type = #tpu.core_type<tc>, window_params = [{pipeline_mode = #tpu.pipeline_mode<synchronous>, transform_indices = @transform_0, window_bounds = array<i64: 2, 16, 32>}, {pipeline_mode = #tpu.pipeline_mode<synchronous>, transform_indices = @transform_1, window_bounds = array<i64: 32, 16>}, {pipeline_mode = #tpu.pipeline_mode<synchronous>, transform_indices = @transform_2, window_bounds = array<i64: 4, 16, 32>}, {pipeline_mode = #tpu.pipeline_mode<synchronous>, transform_indices = @transform_3, window_bounds = array<i64: 4, 32, 32>}, {pipeline_mode = #tpu.pipeline_mode<synchronous>, transform_indices = @transform_4, window_bounds = array<i64: 4, 32, 32>}, {pipeline_mode = #tpu.pipeline_mode<synchronous>, transform_indices = @transform_5, window_bounds = array<i64: 4, 1, 32>}, {pipeline_mode = #tpu.pipeline_mode<synchronous>, transform_indices = @transform_6, window_bounds = array<i64: 4, 1, 32>}, {pipeline_mode = #tpu.pipeline_mode<synchronous>, transform_indices = @transform_7, window_bounds = array<i64: 32, 32>}, {pipeline_mode = #tpu.pipeline_mode<synchronous>, transform_indices = @transform_8, window_bounds = array<i64: 1, 32>}, {pipeline_mode = #tpu.pipeline_mode<synchronous>, transform_indices = @transform_9, window_bounds = array<i64: 32, 32>}, {pipeline_mode = #tpu.pipeline_mode<synchronous>, transform_indices = @transform_10, window_bounds = array<i64: 1, 32>}, {pipeline_mode = #tpu.pipeline_mode<synchronous>, transform_indices = @transform_11, window_bounds = array<i64: 32, 32>}, {pipeline_mode = #tpu.pipeline_mode<synchronous>, transform_indices = @transform_12, window_bounds = array<i64: 1, 32>}, {pipeline_mode = #tpu.pipeline_mode<synchronous>, transform_indices = @transform_13, window_bounds = array<i64: 32, 32>}, {pipeline_mode = #tpu.pipeline_mode<synchronous>, transform_indices = @transform_14, window_bounds = array<i64: 32, 32>}, {pipeline_mode = #tpu.pipeline_mode<synchronous>, transform_indices = @transform_15, window_bounds = array<i64: 1, 32>}, {pipeline_mode = #tpu.pipeline_mode<synchronous>, transform_indices = @transform_16, window_bounds = array<i64: 32, 32>}, {pipeline_mode = #tpu.pipeline_mode<synchronous>, transform_indices = @transform_17, window_bounds = array<i64: 32, 32>}, {pipeline_mode = #tpu.pipeline_mode<synchronous>, transform_indices = @transform_18, window_bounds = array<i64: 32, 32>}, {transform_indices = @transform_19, window_bounds = array<i64: 1, 2, 32>}]} {
    %c0_i32 = arith.constant 0 : i32
    %0 = arith.cmpi eq, %arg0, %c0_i32 : i32
    %1 = arith.extui %0 : i1 to i32
    %c0_i32_0 = arith.constant 0 : i32
    %2 = arith.cmpi ne, %1, %c0_i32_0 : i32
    scf.if %2 {
      %c0_121 = arith.constant 0 : index
      %c0_122 = arith.constant 0 : index
      %c0_123 = arith.constant 0 : index
      %171 = vector.load %arg1[%c0_121, %c0_122, %c0_123] : memref<2x16x32xf32, #tpu.memory_space<vmem>>, vector<2x16x32xf32>
      %cst_124 = arith.constant dense<0.000000e+00> : vector<2x32xf32>
      %172 = vector.multi_reduction <add>, %171, %cst_124 [1] : vector<2x16x32xf32> to vector<2x32xf32>
      %cst_125 = arith.constant 1.600000e+01 : f32
      %173 = vector.broadcast %cst_125 : f32 to vector<2x32xf32>
      %174 = arith.divf %172, %173 : vector<2x32xf32>
      %c0_126 = arith.constant 0 : index
      %c0_127 = arith.constant 0 : index
      %175 = vector.load %arg8[%c0_126, %c0_127] : memref<32x32xf32, #tpu.memory_space<vmem>>, vector<32x32xf32>
      %cst_128 = arith.constant dense<0.000000e+00> : vector<2x32xf32>
      %176 = tpu.matmul %174, %175, %cst_128 {dimension_numbers = #tpu.dot_dimension_numbers<[1], [0], [0], [1], [0, 0, 1, 1], [], []>} : vector<2x32xf32>, vector<32x32xf32>, vector<2x32xf32> -> vector<2x32xf32>
      %c0_129 = arith.constant 0 : index
      %c0_130 = arith.constant 0 : index
      %177 = vector.load %arg9[%c0_129, %c0_130] : memref<1x32xf32, #tpu.memory_space<vmem>>, vector<1x32xf32>
      %178 = vector.broadcast %177 : vector<1x32xf32> to vector<2x32xf32>
      %179 = arith.addf %176, %178 : vector<2x32xf32>
      %180 = math.tanh %179 : vector<2x32xf32>
      %c0_131 = arith.constant 0 : index
      %c0_132 = arith.constant 0 : index
      %181 = vector.load %arg21[%c0_131, %c0_132] : memref<2x32xf32, #tpu.memory_space<vmem>>, vector<2x32xf32>
      tpu.vector_store %arg21[%c0_131, %c0_132], %180 {strides = array<i32>} : memref<2x32xf32, #tpu.memory_space<vmem>>, vector<2x32xf32>,
      %c0_133 = arith.constant 0 : index
      %c0_134 = arith.constant 0 : index
      %182 = vector.load %arg10[%c0_133, %c0_134] : memref<32x32xf32, #tpu.memory_space<vmem>>, vector<32x32xf32>
      %cst_135 = arith.constant dense<0.000000e+00> : vector<2x32xf32>
      %183 = tpu.matmul %174, %182, %cst_135 {dimension_numbers = #tpu.dot_dimension_numbers<[1], [0], [0], [1], [0, 0, 1, 1], [], []>} : vector<2x32xf32>, vector<32x32xf32>, vector<2x32xf32> -> vector<2x32xf32>
      %c0_136 = arith.constant 0 : index
      %c0_137 = arith.constant 0 : index
      %184 = vector.load %arg11[%c0_136, %c0_137] : memref<1x32xf32, #tpu.memory_space<vmem>>, vector<1x32xf32>
      %185 = vector.broadcast %184 : vector<1x32xf32> to vector<2x32xf32>
      %186 = arith.addf %183, %185 : vector<2x32xf32>
      %187 = math.tanh %186 : vector<2x32xf32>
      %c0_138 = arith.constant 0 : index
      %c0_139 = arith.constant 0 : index
      %188 = vector.load %arg22[%c0_138, %c0_139] : memref<2x32xf32, #tpu.memory_space<vmem>>, vector<2x32xf32>
      tpu.vector_store %arg22[%c0_138, %c0_139], %187 {strides = array<i32>} : memref<2x32xf32, #tpu.memory_space<vmem>>, vector<2x32xf32>,
      %c0_140 = arith.constant 0 : index
      %c0_141 = arith.constant 0 : index
      %189 = vector.load %arg12[%c0_140, %c0_141] : memref<32x32xf32, #tpu.memory_space<vmem>>, vector<32x32xf32>
      %cst_142 = arith.constant dense<0.000000e+00> : vector<2x32xf32>
      %190 = tpu.matmul %174, %189, %cst_142 {dimension_numbers = #tpu.dot_dimension_numbers<[1], [0], [0], [1], [0, 0, 1, 1], [], []>} : vector<2x32xf32>, vector<32x32xf32>, vector<2x32xf32> -> vector<2x32xf32>
      %c0_143 = arith.constant 0 : index
      %c0_144 = arith.constant 0 : index
      %191 = vector.load %arg13[%c0_143, %c0_144] : memref<1x32xf32, #tpu.memory_space<vmem>>, vector<1x32xf32>
      %192 = vector.broadcast %191 : vector<1x32xf32> to vector<2x32xf32>
      %193 = arith.addf %190, %192 : vector<2x32xf32>
      %194 = math.tanh %193 : vector<2x32xf32>
      %c0_145 = arith.constant 0 : index
      %c0_146 = arith.constant 0 : index
      %195 = vector.load %arg23[%c0_145, %c0_146] : memref<2x32xf32, #tpu.memory_space<vmem>>, vector<2x32xf32>
      tpu.vector_store %arg23[%c0_145, %c0_146], %194 {strides = array<i32>} : memref<2x32xf32, #tpu.memory_space<vmem>>, vector<2x32xf32>,
      %196 = vector.shape_cast %171 : vector<2x16x32xf32> to vector<32x32xf32>
      %c0_147 = arith.constant 0 : index
      %c0_148 = arith.constant 0 : index
      %197 = vector.load %arg14[%c0_147, %c0_148] : memref<32x32xf32, #tpu.memory_space<vmem>>, vector<32x32xf32>
      %cst_149 = arith.constant dense<0.000000e+00> : vector<32x32xf32>
      %198 = tpu.matmul %196, %197, %cst_149 {dimension_numbers = #tpu.dot_dimension_numbers<[1], [0], [0], [1], [0, 0, 1, 1], [], []>} : vector<32x32xf32>, vector<32x32xf32>, vector<32x32xf32> -> vector<32x32xf32>
      %199 = vector.shape_cast %198 : vector<32x32xf32> to vector<2x16x32xf32>
      %c0_150 = arith.constant 0 : index
      %c0_151 = arith.constant 0 : index
      %c0_152 = arith.constant 0 : index
      %200 = vector.load %arg25[%c0_150, %c0_151, %c0_152] : memref<2x16x32xf32, #tpu.memory_space<vmem>>, vector<2x16x32xf32>
      tpu.vector_store %arg25[%c0_150, %c0_151, %c0_152], %199 {strides = array<i32>} : memref<2x16x32xf32, #tpu.memory_space<vmem>>, vector<2x16x32xf32>,
      %cst_153 = arith.constant 0.000000e+00 : f32
      %201 = vector.broadcast %cst_153 : f32 to vector<2x16xf32>
      %c0_154 = arith.constant 0 : index
      %c0_155 = arith.constant 0 : index
      %202 = vector.load %arg2[%c0_154, %c0_155] : memref<32x16xf32, #tpu.memory_space<vmem>>, vector<1x16xf32>
      %203 = vector.broadcast %202 : vector<1x16xf32> to vector<2x16xf32>
      %204 = arith.addf %201, %203 : vector<2x16xf32>
      %c0_156 = arith.constant 0 : index
      %c0_157 = arith.constant 0 : index
      %205 = vector.load %arg24[%c0_156, %c0_157] : memref<2x16xf32, #tpu.memory_space<vmem>>, vector<2x16xf32>
      tpu.vector_store %arg24[%c0_156, %c0_157], %204 {strides = array<i32>} : memref<2x16xf32, #tpu.memory_space<vmem>>, vector<2x16xf32>,
    } else {
    }
    %c0 = arith.constant 0 : index
    %c0_1 = arith.constant 0 : index
    %3 = vector.load %arg24[%c0, %c0_1] : memref<2x16xf32, #tpu.memory_space<vmem>>, vector<2x16xf32>
    %c0_2 = arith.constant 0 : index
    %c0_3 = arith.constant 0 : index
    %4 = vector.load %arg23[%c0_2, %c0_3] : memref<2x32xf32, #tpu.memory_space<vmem>>, vector<2x32xf32>
    %c0_4 = arith.constant 0 : index
    %c0_5 = arith.constant 0 : index
    %5 = vector.load %arg21[%c0_4, %c0_5] : memref<2x32xf32, #tpu.memory_space<vmem>>, vector<2x32xf32>
    %c0_6 = arith.constant 0 : index
    %c0_7 = arith.constant 0 : index
    %6 = vector.load %arg22[%c0_6, %c0_7] : memref<2x32xf32, #tpu.memory_space<vmem>>, vector<2x32xf32>
    %c0_8 = arith.constant 0 : index
    %c0_9 = arith.constant 0 : index
    %c0_10 = arith.constant 0 : index
    %7 = vector.load %arg3[%c0_8, %c0_9, %c0_10] : memref<4x16x32xf32, #tpu.memory_space<vmem>>, vector<1x16x32xf32>
    %8 = vector.shape_cast %7 : vector<1x16x32xf32> to vector<16x32xf32>
    %cst = arith.constant dense<0.000000e+00> : vector<2x32xf32>
    %9 = tpu.matmul %3, %8, %cst {dimension_numbers = #tpu.dot_dimension_numbers<[1], [0], [0], [1], [0, 0, 1, 1], [], []>} : vector<2x16xf32>, vector<16x32xf32>, vector<2x32xf32> -> vector<2x32xf32>
    %c0_11 = arith.constant 0 : index
    %c0_12 = arith.constant 0 : index
    %c0_13 = arith.constant 0 : index
    %10 = vector.load %arg4[%c0_11, %c0_12, %c0_13] : memref<4x32x32xf32, #tpu.memory_space<vmem>>, vector<1x32x32xf32>
    %11 = vector.shape_cast %10 : vector<1x32x32xf32> to vector<32x32xf32>
    %cst_14 = arith.constant dense<0.000000e+00> : vector<2x32xf32>
    %12 = tpu.matmul %4, %11, %cst_14 {dimension_numbers = #tpu.dot_dimension_numbers<[1], [0], [0], [1], [0, 0, 1, 1], [], []>} : vector<2x32xf32>, vector<32x32xf32>, vector<2x32xf32> -> vector<2x32xf32>
    %13 = arith.addf %9, %12 : vector<2x32xf32>
    %c0_15 = arith.constant 0 : index
    %c0_16 = arith.constant 0 : index
    %c0_17 = arith.constant 0 : index
    %14 = vector.load %arg5[%c0_15, %c0_16, %c0_17] : memref<4x32x32xf32, #tpu.memory_space<vmem>>, vector<1x32x32xf32>
    %15 = vector.shape_cast %14 : vector<1x32x32xf32> to vector<32x32xf32>
    %cst_18 = arith.constant dense<0.000000e+00> : vector<2x32xf32>
    %16 = tpu.matmul %5, %15, %cst_18 {dimension_numbers = #tpu.dot_dimension_numbers<[1], [0], [0], [1], [0, 0, 1, 1], [], []>} : vector<2x32xf32>, vector<32x32xf32>, vector<2x32xf32> -> vector<2x32xf32>
    %17 = arith.addf %13, %16 : vector<2x32xf32>
    %c0_19 = arith.constant 0 : index
    %c0_20 = arith.constant 0 : index
    %c0_21 = arith.constant 0 : index
    %18 = vector.load %arg6[%c0_19, %c0_20, %c0_21] : memref<4x1x32xf32, #tpu.memory_space<vmem>>, vector<1x1x32xf32>
    %19 = vector.shape_cast %18 : vector<1x1x32xf32> to vector<1x32xf32>
    %20 = vector.broadcast %19 : vector<1x32xf32> to vector<2x32xf32>
    %21 = arith.addf %17, %20 : vector<2x32xf32>
    %c0_22 = arith.constant 0 : index
    %c0_23 = arith.constant 0 : index
    %c0_24 = arith.constant 0 : index
    %22 = vector.load %arg7[%c0_22, %c0_23, %c0_24] : memref<4x1x32xf32, #tpu.memory_space<vmem>>, vector<1x1x32xf32>
    %23 = vector.shape_cast %22 : vector<1x1x32xf32> to vector<1x32xf32>
    %24 = vector.broadcast %23 : vector<1x32xf32> to vector<2x32xf32>
    %25 = arith.addf %21, %24 : vector<2x32xf32>
    %c1 = arith.constant 1 : index
    %c0_25 = arith.constant 0 : index
    %c0_26 = arith.constant 0 : index
    %26 = vector.load %arg3[%c1, %c0_25, %c0_26] : memref<4x16x32xf32, #tpu.memory_space<vmem>>, vector<1x16x32xf32>
    %27 = vector.shape_cast %26 : vector<1x16x32xf32> to vector<16x32xf32>
    %cst_27 = arith.constant dense<0.000000e+00> : vector<2x32xf32>
    %28 = tpu.matmul %3, %27, %cst_27 {dimension_numbers = #tpu.dot_dimension_numbers<[1], [0], [0], [1], [0, 0, 1, 1], [], []>} : vector<2x16xf32>, vector<16x32xf32>, vector<2x32xf32> -> vector<2x32xf32>
    %c1_28 = arith.constant 1 : index
    %c0_29 = arith.constant 0 : index
    %c0_30 = arith.constant 0 : index
    %29 = vector.load %arg4[%c1_28, %c0_29, %c0_30] : memref<4x32x32xf32, #tpu.memory_space<vmem>>, vector<1x32x32xf32>
    %30 = vector.shape_cast %29 : vector<1x32x32xf32> to vector<32x32xf32>
    %cst_31 = arith.constant dense<0.000000e+00> : vector<2x32xf32>
    %31 = tpu.matmul %4, %30, %cst_31 {dimension_numbers = #tpu.dot_dimension_numbers<[1], [0], [0], [1], [0, 0, 1, 1], [], []>} : vector<2x32xf32>, vector<32x32xf32>, vector<2x32xf32> -> vector<2x32xf32>
    %32 = arith.addf %28, %31 : vector<2x32xf32>
    %c1_32 = arith.constant 1 : index
    %c0_33 = arith.constant 0 : index
    %c0_34 = arith.constant 0 : index
    %33 = vector.load %arg5[%c1_32, %c0_33, %c0_34] : memref<4x32x32xf32, #tpu.memory_space<vmem>>, vector<1x32x32xf32>
    %34 = vector.shape_cast %33 : vector<1x32x32xf32> to vector<32x32xf32>
    %cst_35 = arith.constant dense<0.000000e+00> : vector<2x32xf32>
    %35 = tpu.matmul %5, %34, %cst_35 {dimension_numbers = #tpu.dot_dimension_numbers<[1], [0], [0], [1], [0, 0, 1, 1], [], []>} : vector<2x32xf32>, vector<32x32xf32>, vector<2x32xf32> -> vector<2x32xf32>
    %36 = arith.addf %32, %35 : vector<2x32xf32>
    %c1_36 = arith.constant 1 : index
    %c0_37 = arith.constant 0 : index
    %c0_38 = arith.constant 0 : index
    %37 = vector.load %arg6[%c1_36, %c0_37, %c0_38] : memref<4x1x32xf32, #tpu.memory_space<vmem>>, vector<1x1x32xf32>
    %38 = vector.shape_cast %37 : vector<1x1x32xf32> to vector<1x32xf32>
    %39 = vector.broadcast %38 : vector<1x32xf32> to vector<2x32xf32>
    %40 = arith.addf %36, %39 : vector<2x32xf32>
    %c1_39 = arith.constant 1 : index
    %c0_40 = arith.constant 0 : index
    %c0_41 = arith.constant 0 : index
    %41 = vector.load %arg7[%c1_39, %c0_40, %c0_41] : memref<4x1x32xf32, #tpu.memory_space<vmem>>, vector<1x1x32xf32>
    %42 = vector.shape_cast %41 : vector<1x1x32xf32> to vector<1x32xf32>
    %43 = vector.broadcast %42 : vector<1x32xf32> to vector<2x32xf32>
    %44 = arith.addf %40, %43 : vector<2x32xf32>
    %c2 = arith.constant 2 : index
    %c0_42 = arith.constant 0 : index
    %c0_43 = arith.constant 0 : index
    %45 = vector.load %arg3[%c2, %c0_42, %c0_43] : memref<4x16x32xf32, #tpu.memory_space<vmem>>, vector<1x16x32xf32>
    %46 = vector.shape_cast %45 : vector<1x16x32xf32> to vector<16x32xf32>
    %cst_44 = arith.constant dense<0.000000e+00> : vector<2x32xf32>
    %47 = tpu.matmul %3, %46, %cst_44 {dimension_numbers = #tpu.dot_dimension_numbers<[1], [0], [0], [1], [0, 0, 1, 1], [], []>} : vector<2x16xf32>, vector<16x32xf32>, vector<2x32xf32> -> vector<2x32xf32>
    %c2_45 = arith.constant 2 : index
    %c0_46 = arith.constant 0 : index
    %c0_47 = arith.constant 0 : index
    %48 = vector.load %arg4[%c2_45, %c0_46, %c0_47] : memref<4x32x32xf32, #tpu.memory_space<vmem>>, vector<1x32x32xf32>
    %49 = vector.shape_cast %48 : vector<1x32x32xf32> to vector<32x32xf32>
    %cst_48 = arith.constant dense<0.000000e+00> : vector<2x32xf32>
    %50 = tpu.matmul %4, %49, %cst_48 {dimension_numbers = #tpu.dot_dimension_numbers<[1], [0], [0], [1], [0, 0, 1, 1], [], []>} : vector<2x32xf32>, vector<32x32xf32>, vector<2x32xf32> -> vector<2x32xf32>
    %51 = arith.addf %47, %50 : vector<2x32xf32>
    %c2_49 = arith.constant 2 : index
    %c0_50 = arith.constant 0 : index
    %c0_51 = arith.constant 0 : index
    %52 = vector.load %arg5[%c2_49, %c0_50, %c0_51] : memref<4x32x32xf32, #tpu.memory_space<vmem>>, vector<1x32x32xf32>
    %53 = vector.shape_cast %52 : vector<1x32x32xf32> to vector<32x32xf32>
    %cst_52 = arith.constant dense<0.000000e+00> : vector<2x32xf32>
    %54 = tpu.matmul %5, %53, %cst_52 {dimension_numbers = #tpu.dot_dimension_numbers<[1], [0], [0], [1], [0, 0, 1, 1], [], []>} : vector<2x32xf32>, vector<32x32xf32>, vector<2x32xf32> -> vector<2x32xf32>
    %55 = arith.addf %51, %54 : vector<2x32xf32>
    %c2_53 = arith.constant 2 : index
    %c0_54 = arith.constant 0 : index
    %c0_55 = arith.constant 0 : index
    %56 = vector.load %arg6[%c2_53, %c0_54, %c0_55] : memref<4x1x32xf32, #tpu.memory_space<vmem>>, vector<1x1x32xf32>
    %57 = vector.shape_cast %56 : vector<1x1x32xf32> to vector<1x32xf32>
    %58 = vector.broadcast %57 : vector<1x32xf32> to vector<2x32xf32>
    %59 = arith.addf %55, %58 : vector<2x32xf32>
    %c2_56 = arith.constant 2 : index
    %c0_57 = arith.constant 0 : index
    %c0_58 = arith.constant 0 : index
    %60 = vector.load %arg7[%c2_56, %c0_57, %c0_58] : memref<4x1x32xf32, #tpu.memory_space<vmem>>, vector<1x1x32xf32>
    %61 = vector.shape_cast %60 : vector<1x1x32xf32> to vector<1x32xf32>
    %62 = vector.broadcast %61 : vector<1x32xf32> to vector<2x32xf32>
    %63 = arith.addf %59, %62 : vector<2x32xf32>
    %c3 = arith.constant 3 : index
    %c0_59 = arith.constant 0 : index
    %c0_60 = arith.constant 0 : index
    %64 = vector.load %arg3[%c3, %c0_59, %c0_60] : memref<4x16x32xf32, #tpu.memory_space<vmem>>, vector<1x16x32xf32>
    %65 = vector.shape_cast %64 : vector<1x16x32xf32> to vector<16x32xf32>
    %cst_61 = arith.constant dense<0.000000e+00> : vector<2x32xf32>
    %66 = tpu.matmul %3, %65, %cst_61 {dimension_numbers = #tpu.dot_dimension_numbers<[1], [0], [0], [1], [0, 0, 1, 1], [], []>} : vector<2x16xf32>, vector<16x32xf32>, vector<2x32xf32> -> vector<2x32xf32>
    %c3_62 = arith.constant 3 : index
    %c0_63 = arith.constant 0 : index
    %c0_64 = arith.constant 0 : index
    %67 = vector.load %arg4[%c3_62, %c0_63, %c0_64] : memref<4x32x32xf32, #tpu.memory_space<vmem>>, vector<1x32x32xf32>
    %68 = vector.shape_cast %67 : vector<1x32x32xf32> to vector<32x32xf32>
    %cst_65 = arith.constant dense<0.000000e+00> : vector<2x32xf32>
    %69 = tpu.matmul %4, %68, %cst_65 {dimension_numbers = #tpu.dot_dimension_numbers<[1], [0], [0], [1], [0, 0, 1, 1], [], []>} : vector<2x32xf32>, vector<32x32xf32>, vector<2x32xf32> -> vector<2x32xf32>
    %70 = arith.addf %66, %69 : vector<2x32xf32>
    %c3_66 = arith.constant 3 : index
    %c0_67 = arith.constant 0 : index
    %c0_68 = arith.constant 0 : index
    %71 = vector.load %arg5[%c3_66, %c0_67, %c0_68] : memref<4x32x32xf32, #tpu.memory_space<vmem>>, vector<1x32x32xf32>
    %72 = vector.shape_cast %71 : vector<1x32x32xf32> to vector<32x32xf32>
    %cst_69 = arith.constant dense<0.000000e+00> : vector<2x32xf32>
    %73 = tpu.matmul %5, %72, %cst_69 {dimension_numbers = #tpu.dot_dimension_numbers<[1], [0], [0], [1], [0, 0, 1, 1], [], []>} : vector<2x32xf32>, vector<32x32xf32>, vector<2x32xf32> -> vector<2x32xf32>
    %74 = arith.addf %70, %73 : vector<2x32xf32>
    %c3_70 = arith.constant 3 : index
    %c0_71 = arith.constant 0 : index
    %c0_72 = arith.constant 0 : index
    %75 = vector.load %arg6[%c3_70, %c0_71, %c0_72] : memref<4x1x32xf32, #tpu.memory_space<vmem>>, vector<1x1x32xf32>
    %76 = vector.shape_cast %75 : vector<1x1x32xf32> to vector<1x32xf32>
    %77 = vector.broadcast %76 : vector<1x32xf32> to vector<2x32xf32>
    %78 = arith.addf %74, %77 : vector<2x32xf32>
    %c3_73 = arith.constant 3 : index
    %c0_74 = arith.constant 0 : index
    %c0_75 = arith.constant 0 : index
    %79 = vector.load %arg7[%c3_73, %c0_74, %c0_75] : memref<4x1x32xf32, #tpu.memory_space<vmem>>, vector<1x1x32xf32>
    %80 = vector.shape_cast %79 : vector<1x1x32xf32> to vector<1x32xf32>
    %81 = vector.broadcast %80 : vector<1x32xf32> to vector<2x32xf32>
    %82 = arith.addf %78, %81 : vector<2x32xf32>
    %83 = arith.negf %25 : vector<2x32xf32>
    %84 = math.exp %83 : vector<2x32xf32>
    %cst_76 = arith.constant 1.000000e+00 : f32
    %85 = vector.broadcast %cst_76 : f32 to vector<2x32xf32>
    %86 = arith.addf %85, %84 : vector<2x32xf32>
    %87 = arith.divf %85, %86 : vector<2x32xf32>
    %88 = arith.negf %44 : vector<2x32xf32>
    %89 = math.exp %88 : vector<2x32xf32>
    %cst_77 = arith.constant 1.000000e+00 : f32
    %90 = vector.broadcast %cst_77 : f32 to vector<2x32xf32>
    %91 = arith.addf %90, %89 : vector<2x32xf32>
    %92 = arith.divf %90, %91 : vector<2x32xf32>
    %93 = math.tanh %63 : vector<2x32xf32>
    %94 = arith.negf %82 : vector<2x32xf32>
    %95 = math.exp %94 : vector<2x32xf32>
    %cst_78 = arith.constant 1.000000e+00 : f32
    %96 = vector.broadcast %cst_78 : f32 to vector<2x32xf32>
    %97 = arith.addf %96, %95 : vector<2x32xf32>
    %98 = arith.divf %96, %97 : vector<2x32xf32>
    %99 = arith.mulf %92, %6 : vector<2x32xf32>
    %100 = arith.mulf %87, %93 : vector<2x32xf32>
    %101 = arith.addf %99, %100 : vector<2x32xf32>
    %102 = math.tanh %101 : vector<2x32xf32>
    %103 = arith.mulf %98, %102 : vector<2x32xf32>
    %c0_79 = arith.constant 0 : index
    %c0_80 = arith.constant 0 : index
    %c0_81 = arith.constant 0 : index
    %104 = vector.load %arg1[%c0_79, %c0_80, %c0_81] : memref<2x16x32xf32, #tpu.memory_space<vmem>>, vector<2x16x32xf32>
    %c0_82 = arith.constant 0 : index
    %c0_83 = arith.constant 0 : index
    %105 = vector.load %arg15[%c0_82, %c0_83] : memref<32x32xf32, #tpu.memory_space<vmem>>, vector<32x32xf32>
    %cst_84 = arith.constant dense<0.000000e+00> : vector<2x32xf32>
    %106 = tpu.matmul %103, %105, %cst_84 {dimension_numbers = #tpu.dot_dimension_numbers<[1], [0], [0], [1], [0, 0, 1, 1], [], []>} : vector<2x32xf32>, vector<32x32xf32>, vector<2x32xf32> -> vector<2x32xf32>
    %c0_85 = arith.constant 0 : index
    %c0_86 = arith.constant 0 : index
    %c0_87 = arith.constant 0 : index
    %107 = vector.load %arg25[%c0_85, %c0_86, %c0_87] : memref<2x16x32xf32, #tpu.memory_space<vmem>>, vector<2x16x32xf32>
    %108 = vector.shape_cast %106 : vector<2x32xf32> to vector<2x1x32xf32>
    %109 = vector.broadcast %108 : vector<2x1x32xf32> to vector<2x16x32xf32>
    %110 = arith.addf %107, %109 : vector<2x16x32xf32>
    %111 = math.tanh %110 : vector<2x16x32xf32>
    %c0_88 = arith.constant 0 : index
    %c0_89 = arith.constant 0 : index
    %112 = vector.load %arg16[%c0_88, %c0_89] : memref<1x32xf32, #tpu.memory_space<vmem>>, vector<1x32xf32>
    %113 = vector.shape_cast %112 : vector<1x32xf32> to vector<1x1x32xf32>
    %114 = vector.broadcast %113 : vector<1x1x32xf32> to vector<2x16x32xf32>
    %115 = arith.mulf %111, %114 : vector<2x16x32xf32>
    %cst_90 = arith.constant dense<0.000000e+00> : vector<2x16xf32>
    %116 = vector.multi_reduction <add>, %115, %cst_90 [2] : vector<2x16x32xf32> to vector<2x16xf32>
    %cst_91 = arith.constant dense<0xFF800000> : vector<2xf32>
    %117 = vector.multi_reduction <maximumf>, %116, %cst_91 [1] : vector<2x16xf32> to vector<2xf32>
    %118 = vector.shape_cast %117 : vector<2xf32> to vector<2x1xf32>
    %119 = vector.broadcast %118 : vector<2x1xf32> to vector<2x16xf32>
    %120 = arith.subf %116, %119 : vector<2x16xf32>
    %121 = math.exp %120 : vector<2x16xf32>
    %cst_92 = arith.constant dense<0.000000e+00> : vector<2xf32>
    %122 = vector.multi_reduction <add>, %121, %cst_92 [1] : vector<2x16xf32> to vector<2xf32>
    %123 = vector.shape_cast %122 : vector<2xf32> to vector<2x1xf32>
    %124 = tpu.reciprocal %123 {approx = true} : vector<2x1xf32> -> vector<2x1xf32>
    %125 = vector.broadcast %124 : vector<2x1xf32> to vector<2x16xf32>
    %126 = arith.mulf %121, %125 : vector<2x16xf32>
    %127 = vector.shape_cast %126 : vector<2x16xf32> to vector<2x16x1xf32>
    %128 = vector.broadcast %127 : vector<2x16x1xf32> to vector<2x16x32xf32>
    %129 = arith.mulf %128, %104 : vector<2x16x32xf32>
    %cst_93 = arith.constant dense<0.000000e+00> : vector<2x32xf32>
    %130 = vector.multi_reduction <add>, %129, %cst_93 [1] : vector<2x16x32xf32> to vector<2x32xf32>
    %c0_94 = arith.constant 0 : index
    %c0_95 = arith.constant 0 : index
    %131 = vector.load %arg17[%c0_94, %c0_95] : memref<32x32xf32, #tpu.memory_space<vmem>>, vector<32x32xf32>
    %cst_96 = arith.constant dense<0.000000e+00> : vector<2x32xf32>
    %132 = tpu.matmul %103, %131, %cst_96 {dimension_numbers = #tpu.dot_dimension_numbers<[1], [0], [0], [1], [0, 0, 1, 1], [], []>} : vector<2x32xf32>, vector<32x32xf32>, vector<2x32xf32> -> vector<2x32xf32>
    %c0_97 = arith.constant 0 : index
    %c0_98 = arith.constant 0 : index
    %133 = vector.load %arg18[%c0_97, %c0_98] : memref<32x32xf32, #tpu.memory_space<vmem>>, vector<32x32xf32>
    %cst_99 = arith.constant dense<0.000000e+00> : vector<2x32xf32>
    %134 = tpu.matmul %130, %133, %cst_99 {dimension_numbers = #tpu.dot_dimension_numbers<[1], [0], [0], [1], [0, 0, 1, 1], [], []>} : vector<2x32xf32>, vector<32x32xf32>, vector<2x32xf32> -> vector<2x32xf32>
    %135 = arith.addf %132, %134 : vector<2x32xf32>
    %136 = math.tanh %135 : vector<2x32xf32>
    %c0_100 = arith.constant 0 : index
    %c0_101 = arith.constant 0 : index
    %137 = vector.load %arg19[%c0_100, %c0_101] : memref<32x32xf32, #tpu.memory_space<vmem>>, vector<32x32xf32>
    %cst_102 = arith.constant dense<0.000000e+00> : vector<2x32xf32>
    %138 = tpu.matmul %136, %137, %cst_102 {dimension_numbers = #tpu.dot_dimension_numbers<[1], [0], [0], [1], [0, 0, 1, 1], [], []>} : vector<2x32xf32>, vector<32x32xf32>, vector<2x32xf32> -> vector<2x32xf32>
    %cst_103 = arith.constant dense<0xFF800000> : vector<2xf32>
    %139 = vector.multi_reduction <maximumf>, %138, %cst_103 [1] : vector<2x32xf32> to vector<2xf32>
    %140 = vector.shape_cast %139 : vector<2xf32> to vector<2x1xf32>
    %141 = vector.broadcast %140 : vector<2x1xf32> to vector<2x32xf32>
    %142 = arith.subf %138, %141 : vector<2x32xf32>
    %143 = math.exp %142 : vector<2x32xf32>
    %cst_104 = arith.constant dense<0.000000e+00> : vector<2xf32>
    %144 = vector.multi_reduction <add>, %143, %cst_104 [1] : vector<2x32xf32> to vector<2xf32>
    %145 = vector.shape_cast %144 : vector<2xf32> to vector<2x1xf32>
    %146 = tpu.reciprocal %145 {approx = true} : vector<2x1xf32> -> vector<2x1xf32>
    %147 = vector.broadcast %146 : vector<2x1xf32> to vector<2x32xf32>
    %148 = arith.mulf %143, %147 : vector<2x32xf32>
    %c0_105 = arith.constant 0 : index
    %c0_106 = arith.constant 0 : index
    %149 = vector.load %arg21[%c0_105, %c0_106] : memref<2x32xf32, #tpu.memory_space<vmem>>, vector<2x32xf32>
    tpu.vector_store %arg21[%c0_105, %c0_106], %103 {strides = array<i32>} : memref<2x32xf32, #tpu.memory_space<vmem>>, vector<2x32xf32>,
    %c0_107 = arith.constant 0 : index
    %c0_108 = arith.constant 0 : index
    %150 = vector.load %arg22[%c0_107, %c0_108] : memref<2x32xf32, #tpu.memory_space<vmem>>, vector<2x32xf32>
    tpu.vector_store %arg22[%c0_107, %c0_108], %101 {strides = array<i32>} : memref<2x32xf32, #tpu.memory_space<vmem>>, vector<2x32xf32>,
    %c0_109 = arith.constant 0 : index
    %c0_110 = arith.constant 0 : index
    %151 = vector.load %arg23[%c0_109, %c0_110] : memref<2x32xf32, #tpu.memory_space<vmem>>, vector<2x32xf32>
    tpu.vector_store %arg23[%c0_109, %c0_110], %136 {strides = array<i32>} : memref<2x32xf32, #tpu.memory_space<vmem>>, vector<2x32xf32>,
    %c0_111 = arith.constant 0 : index
    %c0_112 = arith.constant 0 : index
    %c0_113 = arith.constant 0 : index
    %152 = vector.load %arg20[%c0_111, %c0_112, %c0_113] : memref<1x2x32xf32, #tpu.memory_space<vmem>>, vector<1x2x32xf32>
    %153 = vector.shape_cast %152 : vector<1x2x32xf32> to vector<2x32xf32>
    %154 = vector.shape_cast %148 : vector<2x32xf32> to vector<1x2x32xf32>
    tpu.vector_store %arg20[%c0_111, %c0_112, %c0_113], %154 {strides = array<i32>} : memref<1x2x32xf32, #tpu.memory_space<vmem>>, vector<1x2x32xf32>,
    %155 = tpu.iota {dimensions = array<i32: 1>} : vector<2x32xi32>
    %cst_114 = arith.constant dense<0xFF800000> : vector<2xf32>
    %156 = vector.multi_reduction <maximumf>, %148, %cst_114 [1] : vector<2x32xf32> to vector<2xf32>
    %157 = vector.shape_cast %156 : vector<2xf32> to vector<2x1xf32>
    %158 = vector.broadcast %157 : vector<2x1xf32> to vector<2x32xf32>
    %159 = arith.cmpf oge, %148, %158 : vector<2x32xf32>
    %c32_i32 = arith.constant 32 : i32
    %160 = vector.broadcast %c32_i32 : i32 to vector<2x32xi32>
    %161 = arith.select %159, %155, %160 : vector<2x32xi1>, vector<2x32xi32>
    %cst_115 = arith.constant dense<2147483647> : vector<2xi32>
    %162 = vector.multi_reduction <minsi>, %161, %cst_115 [1] : vector<2x32xi32> to vector<2xi32>
    %163 = vector.shape_cast %162 : vector<2xi32> to vector<2x1xi32>
    %164 = vector.broadcast %163 : vector<2x1xi32> to vector<2x32xi32>
    %165 = arith.cmpi eq, %155, %164 : vector<2x32xi32>
    %166 = arith.extui %165 : vector<2x32xi1> to vector<2x32xi32>
    %167 = arith.sitofp %166 : vector<2x32xi32> to vector<2x32xf32>
    %c0_116 = arith.constant 0 : index
    %c0_117 = arith.constant 0 : index
    %168 = vector.load %arg2[%c0_116, %c0_117] : memref<32x16xf32, #tpu.memory_space<vmem>>, vector<32x16xf32>
    %cst_118 = arith.constant dense<0.000000e+00> : vector<2x16xf32>
    %169 = tpu.matmul %167, %168, %cst_118 {dimension_numbers = #tpu.dot_dimension_numbers<[1], [0], [0], [1], [0, 0, 1, 1], [], []>} : vector<2x32xf32>, vector<32x16xf32>, vector<2x16xf32> -> vector<2x16xf32>
    %c0_119 = arith.constant 0 : index
    %c0_120 = arith.constant 0 : index
    %170 = vector.load %arg24[%c0_119, %c0_120] : memref<2x16xf32, #tpu.memory_space<vmem>>, vector<2x16xf32>
    tpu.vector_store %arg24[%c0_119, %c0_120], %169 {strides = array<i32>} : memref<2x16xf32, #tpu.memory_space<vmem>>, vector<2x16xf32>,
    return
  }
  func.func @transform_0(%arg0: i32) -> (i32, i32, i32) {
    %c0_i32 = arith.constant 0 : i32
    %c0_i32_0 = arith.constant 0 : i32
    %c0_i32_1 = arith.constant 0 : i32
    %c0_i32_2 = arith.constant 0 : i32
    return %c0_i32, %c0_i32_0, %c0_i32_1 : i32, i32, i32
  }
  func.func @transform_1(%arg0: i32) -> (i32, i32) {
    %c0_i32 = arith.constant 0 : i32
    %c0_i32_0 = arith.constant 0 : i32
    %c0_i32_1 = arith.constant 0 : i32
    return %c0_i32, %c0_i32_0 : i32, i32
  }
  func.func @transform_2(%arg0: i32) -> (i32, i32, i32) {
    %c0_i32 = arith.constant 0 : i32
    %c0_i32_0 = arith.constant 0 : i32
    %c0_i32_1 = arith.constant 0 : i32
    %c0_i32_2 = arith.constant 0 : i32
    return %c0_i32, %c0_i32_0, %c0_i32_1 : i32, i32, i32
  }
  func.func @transform_3(%arg0: i32) -> (i32, i32, i32) {
    %c0_i32 = arith.constant 0 : i32
    %c0_i32_0 = arith.constant 0 : i32
    %c0_i32_1 = arith.constant 0 : i32
    %c0_i32_2 = arith.constant 0 : i32
    return %c0_i32, %c0_i32_0, %c0_i32_1 : i32, i32, i32
  }
  func.func @transform_4(%arg0: i32) -> (i32, i32, i32) {
    %c0_i32 = arith.constant 0 : i32
    %c0_i32_0 = arith.constant 0 : i32
    %c0_i32_1 = arith.constant 0 : i32
    %c0_i32_2 = arith.constant 0 : i32
    return %c0_i32, %c0_i32_0, %c0_i32_1 : i32, i32, i32
  }
  func.func @transform_5(%arg0: i32) -> (i32, i32, i32) {
    %c0_i32 = arith.constant 0 : i32
    %c0_i32_0 = arith.constant 0 : i32
    %c0_i32_1 = arith.constant 0 : i32
    %c0_i32_2 = arith.constant 0 : i32
    return %c0_i32, %c0_i32_0, %c0_i32_1 : i32, i32, i32
  }
  func.func @transform_6(%arg0: i32) -> (i32, i32, i32) {
    %c0_i32 = arith.constant 0 : i32
    %c0_i32_0 = arith.constant 0 : i32
    %c0_i32_1 = arith.constant 0 : i32
    %c0_i32_2 = arith.constant 0 : i32
    return %c0_i32, %c0_i32_0, %c0_i32_1 : i32, i32, i32
  }
  func.func @transform_7(%arg0: i32) -> (i32, i32) {
    %c0_i32 = arith.constant 0 : i32
    %c0_i32_0 = arith.constant 0 : i32
    %c0_i32_1 = arith.constant 0 : i32
    return %c0_i32, %c0_i32_0 : i32, i32
  }
  func.func @transform_8(%arg0: i32) -> (i32, i32) {
    %c0_i32 = arith.constant 0 : i32
    %c0_i32_0 = arith.constant 0 : i32
    %c0_i32_1 = arith.constant 0 : i32
    return %c0_i32, %c0_i32_0 : i32, i32
  }
  func.func @transform_9(%arg0: i32) -> (i32, i32) {
    %c0_i32 = arith.constant 0 : i32
    %c0_i32_0 = arith.constant 0 : i32
    %c0_i32_1 = arith.constant 0 : i32
    return %c0_i32, %c0_i32_0 : i32, i32
  }
  func.func @transform_10(%arg0: i32) -> (i32, i32) {
    %c0_i32 = arith.constant 0 : i32
    %c0_i32_0 = arith.constant 0 : i32
    %c0_i32_1 = arith.constant 0 : i32
    return %c0_i32, %c0_i32_0 : i32, i32
  }
  func.func @transform_11(%arg0: i32) -> (i32, i32) {
    %c0_i32 = arith.constant 0 : i32
    %c0_i32_0 = arith.constant 0 : i32
    %c0_i32_1 = arith.constant 0 : i32
    return %c0_i32, %c0_i32_0 : i32, i32
  }
  func.func @transform_12(%arg0: i32) -> (i32, i32) {
    %c0_i32 = arith.constant 0 : i32
    %c0_i32_0 = arith.constant 0 : i32
    %c0_i32_1 = arith.constant 0 : i32
    return %c0_i32, %c0_i32_0 : i32, i32
  }
  func.func @transform_13(%arg0: i32) -> (i32, i32) {
    %c0_i32 = arith.constant 0 : i32
    %c0_i32_0 = arith.constant 0 : i32
    %c0_i32_1 = arith.constant 0 : i32
    return %c0_i32, %c0_i32_0 : i32, i32
  }
  func.func @transform_14(%arg0: i32) -> (i32, i32) {
    %c0_i32 = arith.constant 0 : i32
    %c0_i32_0 = arith.constant 0 : i32
    %c0_i32_1 = arith.constant 0 : i32
    return %c0_i32, %c0_i32_0 : i32, i32
  }
  func.func @transform_15(%arg0: i32) -> (i32, i32) {
    %c0_i32 = arith.constant 0 : i32
    %c0_i32_0 = arith.constant 0 : i32
    %c0_i32_1 = arith.constant 0 : i32
    return %c0_i32, %c0_i32_0 : i32, i32
  }
  func.func @transform_16(%arg0: i32) -> (i32, i32) {
    %c0_i32 = arith.constant 0 : i32
    %c0_i32_0 = arith.constant 0 : i32
    %c0_i32_1 = arith.constant 0 : i32
    return %c0_i32, %c0_i32_0 : i32, i32
  }
  func.func @transform_17(%arg0: i32) -> (i32, i32) {
    %c0_i32 = arith.constant 0 : i32
    %c0_i32_0 = arith.constant 0 : i32
    %c0_i32_1 = arith.constant 0 : i32
    return %c0_i32, %c0_i32_0 : i32, i32
  }
  func.func @transform_18(%arg0: i32) -> (i32, i32) {
    %c0_i32 = arith.constant 0 : i32
    %c0_i32_0 = arith.constant 0 : i32
    %c0_i32_1 = arith.constant 0 : i32
    return %c0_i32, %c0_i32_0 : i32, i32
  }
  func.func @transform_19(%arg0: i32) -> (i32, i32, i32) {
    %c0_i32 = arith.constant 0 : i32
    %c0_i32_0 = arith.constant 0 : i32
    %c0_i32_1 = arith.constant 0 : i32
    return %arg0, %c0_i32, %c0_i32_0 : i32, i32, i32
  }
}

module attributes {stable_mosaic.version = 11 : i64} {
  func.func @_bilstm_kernel(%arg0: i32, %arg1: memref<1x8x64xf32, #tpu.memory_space<vmem>>, %arg2: memref<1x8x64xf32, #tpu.memory_space<vmem>>, %arg3: memref<4x64x16xf32, #tpu.memory_space<vmem>>, %arg4: memref<4x16x16xf32, #tpu.memory_space<vmem>>, %arg5: memref<4x1x16xf32, #tpu.memory_space<vmem>>, %arg6: memref<4x1x16xf32, #tpu.memory_space<vmem>>, %arg7: memref<4x64x16xf32, #tpu.memory_space<vmem>>, %arg8: memref<4x16x16xf32, #tpu.memory_space<vmem>>, %arg9: memref<4x1x16xf32, #tpu.memory_space<vmem>>, %arg10: memref<4x1x16xf32, #tpu.memory_space<vmem>>, %arg11: memref<1x8x16xf32, #tpu.memory_space<vmem>>, %arg12: memref<1x8x16xf32, #tpu.memory_space<vmem>>, %arg13: memref<8x16xf32, #tpu.memory_space<vmem>>, %arg14: memref<8x16xf32, #tpu.memory_space<vmem>>, %arg15: memref<8x16xf32, #tpu.memory_space<vmem>>, %arg16: memref<8x16xf32, #tpu.memory_space<vmem>>) attributes {dimension_semantics = [#tpu.dimension_semantics<arbitrary>], iteration_bounds = array<i64: 4>, scalar_prefetch = 0 : i64, scratch_operands = 4 : i64, tpu.core_type = #tpu.core_type<tc>, window_params = [{transform_indices = @transform_0, window_bounds = array<i64: 1, 8, 64>}, {transform_indices = @transform_1, window_bounds = array<i64: 1, 8, 64>}, {pipeline_mode = #tpu.pipeline_mode<synchronous>, transform_indices = @transform_2, window_bounds = array<i64: 4, 64, 16>}, {pipeline_mode = #tpu.pipeline_mode<synchronous>, transform_indices = @transform_3, window_bounds = array<i64: 4, 16, 16>}, {pipeline_mode = #tpu.pipeline_mode<synchronous>, transform_indices = @transform_4, window_bounds = array<i64: 4, 1, 16>}, {pipeline_mode = #tpu.pipeline_mode<synchronous>, transform_indices = @transform_5, window_bounds = array<i64: 4, 1, 16>}, {pipeline_mode = #tpu.pipeline_mode<synchronous>, transform_indices = @transform_6, window_bounds = array<i64: 4, 64, 16>}, {pipeline_mode = #tpu.pipeline_mode<synchronous>, transform_indices = @transform_7, window_bounds = array<i64: 4, 16, 16>}, {pipeline_mode = #tpu.pipeline_mode<synchronous>, transform_indices = @transform_8, window_bounds = array<i64: 4, 1, 16>}, {pipeline_mode = #tpu.pipeline_mode<synchronous>, transform_indices = @transform_9, window_bounds = array<i64: 4, 1, 16>}, {transform_indices = @transform_10, window_bounds = array<i64: 1, 8, 16>}, {transform_indices = @transform_11, window_bounds = array<i64: 1, 8, 16>}]} {
    %c0_i32 = arith.constant 0 : i32
    %0 = arith.cmpi eq, %arg0, %c0_i32 : i32
    %1 = arith.extui %0 : i1 to i32
    %c0_i32_0 = arith.constant 0 : i32
    %2 = arith.cmpi ne, %1, %c0_i32_0 : i32
    scf.if %2 {
      %cst_142 = arith.constant 0.000000e+00 : f32
      %183 = vector.broadcast %cst_142 : f32 to vector<8x16xf32>
      %c0_143 = arith.constant 0 : index
      %c0_144 = arith.constant 0 : index
      %184 = vector.load %arg13[%c0_143, %c0_144] : memref<8x16xf32, #tpu.memory_space<vmem>>, vector<8x16xf32>
      tpu.vector_store %arg13[%c0_143, %c0_144], %183 {strides = array<i32>} : memref<8x16xf32, #tpu.memory_space<vmem>>, vector<8x16xf32>,
      %cst_145 = arith.constant 0.000000e+00 : f32
      %185 = vector.broadcast %cst_145 : f32 to vector<8x16xf32>
      %c0_146 = arith.constant 0 : index
      %c0_147 = arith.constant 0 : index
      %186 = vector.load %arg14[%c0_146, %c0_147] : memref<8x16xf32, #tpu.memory_space<vmem>>, vector<8x16xf32>
      tpu.vector_store %arg14[%c0_146, %c0_147], %185 {strides = array<i32>} : memref<8x16xf32, #tpu.memory_space<vmem>>, vector<8x16xf32>,
      %cst_148 = arith.constant 0.000000e+00 : f32
      %187 = vector.broadcast %cst_148 : f32 to vector<8x16xf32>
      %c0_149 = arith.constant 0 : index
      %c0_150 = arith.constant 0 : index
      %188 = vector.load %arg15[%c0_149, %c0_150] : memref<8x16xf32, #tpu.memory_space<vmem>>, vector<8x16xf32>
      tpu.vector_store %arg15[%c0_149, %c0_150], %187 {strides = array<i32>} : memref<8x16xf32, #tpu.memory_space<vmem>>, vector<8x16xf32>,
      %cst_151 = arith.constant 0.000000e+00 : f32
      %189 = vector.broadcast %cst_151 : f32 to vector<8x16xf32>
      %c0_152 = arith.constant 0 : index
      %c0_153 = arith.constant 0 : index
      %190 = vector.load %arg16[%c0_152, %c0_153] : memref<8x16xf32, #tpu.memory_space<vmem>>, vector<8x16xf32>
      tpu.vector_store %arg16[%c0_152, %c0_153], %189 {strides = array<i32>} : memref<8x16xf32, #tpu.memory_space<vmem>>, vector<8x16xf32>,
    } else {
    }
    %c0 = arith.constant 0 : index
    %c0_1 = arith.constant 0 : index
    %c0_2 = arith.constant 0 : index
    %3 = vector.load %arg1[%c0, %c0_1, %c0_2] : memref<1x8x64xf32, #tpu.memory_space<vmem>>, vector<1x8x64xf32>
    %4 = vector.shape_cast %3 : vector<1x8x64xf32> to vector<8x64xf32>
    %c0_3 = arith.constant 0 : index
    %c0_4 = arith.constant 0 : index
    %5 = vector.load %arg13[%c0_3, %c0_4] : memref<8x16xf32, #tpu.memory_space<vmem>>, vector<8x16xf32>
    %c0_5 = arith.constant 0 : index
    %c0_6 = arith.constant 0 : index
    %6 = vector.load %arg14[%c0_5, %c0_6] : memref<8x16xf32, #tpu.memory_space<vmem>>, vector<8x16xf32>
    %c0_7 = arith.constant 0 : index
    %c0_8 = arith.constant 0 : index
    %c0_9 = arith.constant 0 : index
    %7 = vector.load %arg3[%c0_7, %c0_8, %c0_9] : memref<4x64x16xf32, #tpu.memory_space<vmem>>, vector<1x64x16xf32>
    %8 = vector.shape_cast %7 : vector<1x64x16xf32> to vector<64x16xf32>
    %cst = arith.constant dense<0.000000e+00> : vector<8x16xf32>
    %9 = tpu.matmul %4, %8, %cst {dimension_numbers = #tpu.dot_dimension_numbers<[1], [0], [0], [1], [0, 0, 1, 1], [], []>} : vector<8x64xf32>, vector<64x16xf32>, vector<8x16xf32> -> vector<8x16xf32>
    %c0_10 = arith.constant 0 : index
    %c0_11 = arith.constant 0 : index
    %c0_12 = arith.constant 0 : index
    %10 = vector.load %arg4[%c0_10, %c0_11, %c0_12] : memref<4x16x16xf32, #tpu.memory_space<vmem>>, vector<1x16x16xf32>
    %11 = vector.shape_cast %10 : vector<1x16x16xf32> to vector<16x16xf32>
    %cst_13 = arith.constant dense<0.000000e+00> : vector<8x16xf32>
    %12 = tpu.matmul %5, %11, %cst_13 {dimension_numbers = #tpu.dot_dimension_numbers<[1], [0], [0], [1], [0, 0, 1, 1], [], []>} : vector<8x16xf32>, vector<16x16xf32>, vector<8x16xf32> -> vector<8x16xf32>
    %13 = arith.addf %9, %12 : vector<8x16xf32>
    %c0_14 = arith.constant 0 : index
    %c0_15 = arith.constant 0 : index
    %c0_16 = arith.constant 0 : index
    %14 = vector.load %arg5[%c0_14, %c0_15, %c0_16] : memref<4x1x16xf32, #tpu.memory_space<vmem>>, vector<1x1x16xf32>
    %15 = vector.shape_cast %14 : vector<1x1x16xf32> to vector<1x16xf32>
    %16 = vector.broadcast %15 : vector<1x16xf32> to vector<8x16xf32>
    %17 = arith.addf %13, %16 : vector<8x16xf32>
    %c0_17 = arith.constant 0 : index
    %c0_18 = arith.constant 0 : index
    %c0_19 = arith.constant 0 : index
    %18 = vector.load %arg6[%c0_17, %c0_18, %c0_19] : memref<4x1x16xf32, #tpu.memory_space<vmem>>, vector<1x1x16xf32>
    %19 = vector.shape_cast %18 : vector<1x1x16xf32> to vector<1x16xf32>
    %20 = vector.broadcast %19 : vector<1x16xf32> to vector<8x16xf32>
    %21 = arith.addf %17, %20 : vector<8x16xf32>
    %c1 = arith.constant 1 : index
    %c0_20 = arith.constant 0 : index
    %c0_21 = arith.constant 0 : index
    %22 = vector.load %arg3[%c1, %c0_20, %c0_21] : memref<4x64x16xf32, #tpu.memory_space<vmem>>, vector<1x64x16xf32>
    %23 = vector.shape_cast %22 : vector<1x64x16xf32> to vector<64x16xf32>
    %cst_22 = arith.constant dense<0.000000e+00> : vector<8x16xf32>
    %24 = tpu.matmul %4, %23, %cst_22 {dimension_numbers = #tpu.dot_dimension_numbers<[1], [0], [0], [1], [0, 0, 1, 1], [], []>} : vector<8x64xf32>, vector<64x16xf32>, vector<8x16xf32> -> vector<8x16xf32>
    %c1_23 = arith.constant 1 : index
    %c0_24 = arith.constant 0 : index
    %c0_25 = arith.constant 0 : index
    %25 = vector.load %arg4[%c1_23, %c0_24, %c0_25] : memref<4x16x16xf32, #tpu.memory_space<vmem>>, vector<1x16x16xf32>
    %26 = vector.shape_cast %25 : vector<1x16x16xf32> to vector<16x16xf32>
    %cst_26 = arith.constant dense<0.000000e+00> : vector<8x16xf32>
    %27 = tpu.matmul %5, %26, %cst_26 {dimension_numbers = #tpu.dot_dimension_numbers<[1], [0], [0], [1], [0, 0, 1, 1], [], []>} : vector<8x16xf32>, vector<16x16xf32>, vector<8x16xf32> -> vector<8x16xf32>
    %28 = arith.addf %24, %27 : vector<8x16xf32>
    %c1_27 = arith.constant 1 : index
    %c0_28 = arith.constant 0 : index
    %c0_29 = arith.constant 0 : index
    %29 = vector.load %arg5[%c1_27, %c0_28, %c0_29] : memref<4x1x16xf32, #tpu.memory_space<vmem>>, vector<1x1x16xf32>
    %30 = vector.shape_cast %29 : vector<1x1x16xf32> to vector<1x16xf32>
    %31 = vector.broadcast %30 : vector<1x16xf32> to vector<8x16xf32>
    %32 = arith.addf %28, %31 : vector<8x16xf32>
    %c1_30 = arith.constant 1 : index
    %c0_31 = arith.constant 0 : index
    %c0_32 = arith.constant 0 : index
    %33 = vector.load %arg6[%c1_30, %c0_31, %c0_32] : memref<4x1x16xf32, #tpu.memory_space<vmem>>, vector<1x1x16xf32>
    %34 = vector.shape_cast %33 : vector<1x1x16xf32> to vector<1x16xf32>
    %35 = vector.broadcast %34 : vector<1x16xf32> to vector<8x16xf32>
    %36 = arith.addf %32, %35 : vector<8x16xf32>
    %c2 = arith.constant 2 : index
    %c0_33 = arith.constant 0 : index
    %c0_34 = arith.constant 0 : index
    %37 = vector.load %arg3[%c2, %c0_33, %c0_34] : memref<4x64x16xf32, #tpu.memory_space<vmem>>, vector<1x64x16xf32>
    %38 = vector.shape_cast %37 : vector<1x64x16xf32> to vector<64x16xf32>
    %cst_35 = arith.constant dense<0.000000e+00> : vector<8x16xf32>
    %39 = tpu.matmul %4, %38, %cst_35 {dimension_numbers = #tpu.dot_dimension_numbers<[1], [0], [0], [1], [0, 0, 1, 1], [], []>} : vector<8x64xf32>, vector<64x16xf32>, vector<8x16xf32> -> vector<8x16xf32>
    %c2_36 = arith.constant 2 : index
    %c0_37 = arith.constant 0 : index
    %c0_38 = arith.constant 0 : index
    %40 = vector.load %arg4[%c2_36, %c0_37, %c0_38] : memref<4x16x16xf32, #tpu.memory_space<vmem>>, vector<1x16x16xf32>
    %41 = vector.shape_cast %40 : vector<1x16x16xf32> to vector<16x16xf32>
    %cst_39 = arith.constant dense<0.000000e+00> : vector<8x16xf32>
    %42 = tpu.matmul %5, %41, %cst_39 {dimension_numbers = #tpu.dot_dimension_numbers<[1], [0], [0], [1], [0, 0, 1, 1], [], []>} : vector<8x16xf32>, vector<16x16xf32>, vector<8x16xf32> -> vector<8x16xf32>
    %43 = arith.addf %39, %42 : vector<8x16xf32>
    %c2_40 = arith.constant 2 : index
    %c0_41 = arith.constant 0 : index
    %c0_42 = arith.constant 0 : index
    %44 = vector.load %arg5[%c2_40, %c0_41, %c0_42] : memref<4x1x16xf32, #tpu.memory_space<vmem>>, vector<1x1x16xf32>
    %45 = vector.shape_cast %44 : vector<1x1x16xf32> to vector<1x16xf32>
    %46 = vector.broadcast %45 : vector<1x16xf32> to vector<8x16xf32>
    %47 = arith.addf %43, %46 : vector<8x16xf32>
    %c2_43 = arith.constant 2 : index
    %c0_44 = arith.constant 0 : index
    %c0_45 = arith.constant 0 : index
    %48 = vector.load %arg6[%c2_43, %c0_44, %c0_45] : memref<4x1x16xf32, #tpu.memory_space<vmem>>, vector<1x1x16xf32>
    %49 = vector.shape_cast %48 : vector<1x1x16xf32> to vector<1x16xf32>
    %50 = vector.broadcast %49 : vector<1x16xf32> to vector<8x16xf32>
    %51 = arith.addf %47, %50 : vector<8x16xf32>
    %c3 = arith.constant 3 : index
    %c0_46 = arith.constant 0 : index
    %c0_47 = arith.constant 0 : index
    %52 = vector.load %arg3[%c3, %c0_46, %c0_47] : memref<4x64x16xf32, #tpu.memory_space<vmem>>, vector<1x64x16xf32>
    %53 = vector.shape_cast %52 : vector<1x64x16xf32> to vector<64x16xf32>
    %cst_48 = arith.constant dense<0.000000e+00> : vector<8x16xf32>
    %54 = tpu.matmul %4, %53, %cst_48 {dimension_numbers = #tpu.dot_dimension_numbers<[1], [0], [0], [1], [0, 0, 1, 1], [], []>} : vector<8x64xf32>, vector<64x16xf32>, vector<8x16xf32> -> vector<8x16xf32>
    %c3_49 = arith.constant 3 : index
    %c0_50 = arith.constant 0 : index
    %c0_51 = arith.constant 0 : index
    %55 = vector.load %arg4[%c3_49, %c0_50, %c0_51] : memref<4x16x16xf32, #tpu.memory_space<vmem>>, vector<1x16x16xf32>
    %56 = vector.shape_cast %55 : vector<1x16x16xf32> to vector<16x16xf32>
    %cst_52 = arith.constant dense<0.000000e+00> : vector<8x16xf32>
    %57 = tpu.matmul %5, %56, %cst_52 {dimension_numbers = #tpu.dot_dimension_numbers<[1], [0], [0], [1], [0, 0, 1, 1], [], []>} : vector<8x16xf32>, vector<16x16xf32>, vector<8x16xf32> -> vector<8x16xf32>
    %58 = arith.addf %54, %57 : vector<8x16xf32>
    %c3_53 = arith.constant 3 : index
    %c0_54 = arith.constant 0 : index
    %c0_55 = arith.constant 0 : index
    %59 = vector.load %arg5[%c3_53, %c0_54, %c0_55] : memref<4x1x16xf32, #tpu.memory_space<vmem>>, vector<1x1x16xf32>
    %60 = vector.shape_cast %59 : vector<1x1x16xf32> to vector<1x16xf32>
    %61 = vector.broadcast %60 : vector<1x16xf32> to vector<8x16xf32>
    %62 = arith.addf %58, %61 : vector<8x16xf32>
    %c3_56 = arith.constant 3 : index
    %c0_57 = arith.constant 0 : index
    %c0_58 = arith.constant 0 : index
    %63 = vector.load %arg6[%c3_56, %c0_57, %c0_58] : memref<4x1x16xf32, #tpu.memory_space<vmem>>, vector<1x1x16xf32>
    %64 = vector.shape_cast %63 : vector<1x1x16xf32> to vector<1x16xf32>
    %65 = vector.broadcast %64 : vector<1x16xf32> to vector<8x16xf32>
    %66 = arith.addf %62, %65 : vector<8x16xf32>
    %67 = arith.negf %21 : vector<8x16xf32>
    %68 = math.exp %67 : vector<8x16xf32>
    %cst_59 = arith.constant 1.000000e+00 : f32
    %69 = vector.broadcast %cst_59 : f32 to vector<8x16xf32>
    %70 = arith.addf %69, %68 : vector<8x16xf32>
    %71 = arith.divf %69, %70 : vector<8x16xf32>
    %72 = arith.negf %36 : vector<8x16xf32>
    %73 = math.exp %72 : vector<8x16xf32>
    %cst_60 = arith.constant 1.000000e+00 : f32
    %74 = vector.broadcast %cst_60 : f32 to vector<8x16xf32>
    %75 = arith.addf %74, %73 : vector<8x16xf32>
    %76 = arith.divf %74, %75 : vector<8x16xf32>
    %77 = math.tanh %51 : vector<8x16xf32>
    %78 = arith.negf %66 : vector<8x16xf32>
    %79 = math.exp %78 : vector<8x16xf32>
    %cst_61 = arith.constant 1.000000e+00 : f32
    %80 = vector.broadcast %cst_61 : f32 to vector<8x16xf32>
    %81 = arith.addf %80, %79 : vector<8x16xf32>
    %82 = arith.divf %80, %81 : vector<8x16xf32>
    %83 = arith.mulf %76, %6 : vector<8x16xf32>
    %84 = arith.mulf %71, %77 : vector<8x16xf32>
    %85 = arith.addf %83, %84 : vector<8x16xf32>
    %86 = math.tanh %85 : vector<8x16xf32>
    %87 = arith.mulf %82, %86 : vector<8x16xf32>
    %c0_62 = arith.constant 0 : index
    %c0_63 = arith.constant 0 : index
    %c0_64 = arith.constant 0 : index
    %88 = vector.load %arg2[%c0_62, %c0_63, %c0_64] : memref<1x8x64xf32, #tpu.memory_space<vmem>>, vector<1x8x64xf32>
    %89 = vector.shape_cast %88 : vector<1x8x64xf32> to vector<8x64xf32>
    %c0_65 = arith.constant 0 : index
    %c0_66 = arith.constant 0 : index
    %90 = vector.load %arg15[%c0_65, %c0_66] : memref<8x16xf32, #tpu.memory_space<vmem>>, vector<8x16xf32>
    %c0_67 = arith.constant 0 : index
    %c0_68 = arith.constant 0 : index
    %91 = vector.load %arg16[%c0_67, %c0_68] : memref<8x16xf32, #tpu.memory_space<vmem>>, vector<8x16xf32>
    %c0_69 = arith.constant 0 : index
    %c0_70 = arith.constant 0 : index
    %c0_71 = arith.constant 0 : index
    %92 = vector.load %arg7[%c0_69, %c0_70, %c0_71] : memref<4x64x16xf32, #tpu.memory_space<vmem>>, vector<1x64x16xf32>
    %93 = vector.shape_cast %92 : vector<1x64x16xf32> to vector<64x16xf32>
    %cst_72 = arith.constant dense<0.000000e+00> : vector<8x16xf32>
    %94 = tpu.matmul %89, %93, %cst_72 {dimension_numbers = #tpu.dot_dimension_numbers<[1], [0], [0], [1], [0, 0, 1, 1], [], []>} : vector<8x64xf32>, vector<64x16xf32>, vector<8x16xf32> -> vector<8x16xf32>
    %c0_73 = arith.constant 0 : index
    %c0_74 = arith.constant 0 : index
    %c0_75 = arith.constant 0 : index
    %95 = vector.load %arg8[%c0_73, %c0_74, %c0_75] : memref<4x16x16xf32, #tpu.memory_space<vmem>>, vector<1x16x16xf32>
    %96 = vector.shape_cast %95 : vector<1x16x16xf32> to vector<16x16xf32>
    %cst_76 = arith.constant dense<0.000000e+00> : vector<8x16xf32>
    %97 = tpu.matmul %90, %96, %cst_76 {dimension_numbers = #tpu.dot_dimension_numbers<[1], [0], [0], [1], [0, 0, 1, 1], [], []>} : vector<8x16xf32>, vector<16x16xf32>, vector<8x16xf32> -> vector<8x16xf32>
    %98 = arith.addf %94, %97 : vector<8x16xf32>
    %c0_77 = arith.constant 0 : index
    %c0_78 = arith.constant 0 : index
    %c0_79 = arith.constant 0 : index
    %99 = vector.load %arg9[%c0_77, %c0_78, %c0_79] : memref<4x1x16xf32, #tpu.memory_space<vmem>>, vector<1x1x16xf32>
    %100 = vector.shape_cast %99 : vector<1x1x16xf32> to vector<1x16xf32>
    %101 = vector.broadcast %100 : vector<1x16xf32> to vector<8x16xf32>
    %102 = arith.addf %98, %101 : vector<8x16xf32>
    %c0_80 = arith.constant 0 : index
    %c0_81 = arith.constant 0 : index
    %c0_82 = arith.constant 0 : index
    %103 = vector.load %arg10[%c0_80, %c0_81, %c0_82] : memref<4x1x16xf32, #tpu.memory_space<vmem>>, vector<1x1x16xf32>
    %104 = vector.shape_cast %103 : vector<1x1x16xf32> to vector<1x16xf32>
    %105 = vector.broadcast %104 : vector<1x16xf32> to vector<8x16xf32>
    %106 = arith.addf %102, %105 : vector<8x16xf32>
    %c1_83 = arith.constant 1 : index
    %c0_84 = arith.constant 0 : index
    %c0_85 = arith.constant 0 : index
    %107 = vector.load %arg7[%c1_83, %c0_84, %c0_85] : memref<4x64x16xf32, #tpu.memory_space<vmem>>, vector<1x64x16xf32>
    %108 = vector.shape_cast %107 : vector<1x64x16xf32> to vector<64x16xf32>
    %cst_86 = arith.constant dense<0.000000e+00> : vector<8x16xf32>
    %109 = tpu.matmul %89, %108, %cst_86 {dimension_numbers = #tpu.dot_dimension_numbers<[1], [0], [0], [1], [0, 0, 1, 1], [], []>} : vector<8x64xf32>, vector<64x16xf32>, vector<8x16xf32> -> vector<8x16xf32>
    %c1_87 = arith.constant 1 : index
    %c0_88 = arith.constant 0 : index
    %c0_89 = arith.constant 0 : index
    %110 = vector.load %arg8[%c1_87, %c0_88, %c0_89] : memref<4x16x16xf32, #tpu.memory_space<vmem>>, vector<1x16x16xf32>
    %111 = vector.shape_cast %110 : vector<1x16x16xf32> to vector<16x16xf32>
    %cst_90 = arith.constant dense<0.000000e+00> : vector<8x16xf32>
    %112 = tpu.matmul %90, %111, %cst_90 {dimension_numbers = #tpu.dot_dimension_numbers<[1], [0], [0], [1], [0, 0, 1, 1], [], []>} : vector<8x16xf32>, vector<16x16xf32>, vector<8x16xf32> -> vector<8x16xf32>
    %113 = arith.addf %109, %112 : vector<8x16xf32>
    %c1_91 = arith.constant 1 : index
    %c0_92 = arith.constant 0 : index
    %c0_93 = arith.constant 0 : index
    %114 = vector.load %arg9[%c1_91, %c0_92, %c0_93] : memref<4x1x16xf32, #tpu.memory_space<vmem>>, vector<1x1x16xf32>
    %115 = vector.shape_cast %114 : vector<1x1x16xf32> to vector<1x16xf32>
    %116 = vector.broadcast %115 : vector<1x16xf32> to vector<8x16xf32>
    %117 = arith.addf %113, %116 : vector<8x16xf32>
    %c1_94 = arith.constant 1 : index
    %c0_95 = arith.constant 0 : index
    %c0_96 = arith.constant 0 : index
    %118 = vector.load %arg10[%c1_94, %c0_95, %c0_96] : memref<4x1x16xf32, #tpu.memory_space<vmem>>, vector<1x1x16xf32>
    %119 = vector.shape_cast %118 : vector<1x1x16xf32> to vector<1x16xf32>
    %120 = vector.broadcast %119 : vector<1x16xf32> to vector<8x16xf32>
    %121 = arith.addf %117, %120 : vector<8x16xf32>
    %c2_97 = arith.constant 2 : index
    %c0_98 = arith.constant 0 : index
    %c0_99 = arith.constant 0 : index
    %122 = vector.load %arg7[%c2_97, %c0_98, %c0_99] : memref<4x64x16xf32, #tpu.memory_space<vmem>>, vector<1x64x16xf32>
    %123 = vector.shape_cast %122 : vector<1x64x16xf32> to vector<64x16xf32>
    %cst_100 = arith.constant dense<0.000000e+00> : vector<8x16xf32>
    %124 = tpu.matmul %89, %123, %cst_100 {dimension_numbers = #tpu.dot_dimension_numbers<[1], [0], [0], [1], [0, 0, 1, 1], [], []>} : vector<8x64xf32>, vector<64x16xf32>, vector<8x16xf32> -> vector<8x16xf32>
    %c2_101 = arith.constant 2 : index
    %c0_102 = arith.constant 0 : index
    %c0_103 = arith.constant 0 : index
    %125 = vector.load %arg8[%c2_101, %c0_102, %c0_103] : memref<4x16x16xf32, #tpu.memory_space<vmem>>, vector<1x16x16xf32>
    %126 = vector.shape_cast %125 : vector<1x16x16xf32> to vector<16x16xf32>
    %cst_104 = arith.constant dense<0.000000e+00> : vector<8x16xf32>
    %127 = tpu.matmul %90, %126, %cst_104 {dimension_numbers = #tpu.dot_dimension_numbers<[1], [0], [0], [1], [0, 0, 1, 1], [], []>} : vector<8x16xf32>, vector<16x16xf32>, vector<8x16xf32> -> vector<8x16xf32>
    %128 = arith.addf %124, %127 : vector<8x16xf32>
    %c2_105 = arith.constant 2 : index
    %c0_106 = arith.constant 0 : index
    %c0_107 = arith.constant 0 : index
    %129 = vector.load %arg9[%c2_105, %c0_106, %c0_107] : memref<4x1x16xf32, #tpu.memory_space<vmem>>, vector<1x1x16xf32>
    %130 = vector.shape_cast %129 : vector<1x1x16xf32> to vector<1x16xf32>
    %131 = vector.broadcast %130 : vector<1x16xf32> to vector<8x16xf32>
    %132 = arith.addf %128, %131 : vector<8x16xf32>
    %c2_108 = arith.constant 2 : index
    %c0_109 = arith.constant 0 : index
    %c0_110 = arith.constant 0 : index
    %133 = vector.load %arg10[%c2_108, %c0_109, %c0_110] : memref<4x1x16xf32, #tpu.memory_space<vmem>>, vector<1x1x16xf32>
    %134 = vector.shape_cast %133 : vector<1x1x16xf32> to vector<1x16xf32>
    %135 = vector.broadcast %134 : vector<1x16xf32> to vector<8x16xf32>
    %136 = arith.addf %132, %135 : vector<8x16xf32>
    %c3_111 = arith.constant 3 : index
    %c0_112 = arith.constant 0 : index
    %c0_113 = arith.constant 0 : index
    %137 = vector.load %arg7[%c3_111, %c0_112, %c0_113] : memref<4x64x16xf32, #tpu.memory_space<vmem>>, vector<1x64x16xf32>
    %138 = vector.shape_cast %137 : vector<1x64x16xf32> to vector<64x16xf32>
    %cst_114 = arith.constant dense<0.000000e+00> : vector<8x16xf32>
    %139 = tpu.matmul %89, %138, %cst_114 {dimension_numbers = #tpu.dot_dimension_numbers<[1], [0], [0], [1], [0, 0, 1, 1], [], []>} : vector<8x64xf32>, vector<64x16xf32>, vector<8x16xf32> -> vector<8x16xf32>
    %c3_115 = arith.constant 3 : index
    %c0_116 = arith.constant 0 : index
    %c0_117 = arith.constant 0 : index
    %140 = vector.load %arg8[%c3_115, %c0_116, %c0_117] : memref<4x16x16xf32, #tpu.memory_space<vmem>>, vector<1x16x16xf32>
    %141 = vector.shape_cast %140 : vector<1x16x16xf32> to vector<16x16xf32>
    %cst_118 = arith.constant dense<0.000000e+00> : vector<8x16xf32>
    %142 = tpu.matmul %90, %141, %cst_118 {dimension_numbers = #tpu.dot_dimension_numbers<[1], [0], [0], [1], [0, 0, 1, 1], [], []>} : vector<8x16xf32>, vector<16x16xf32>, vector<8x16xf32> -> vector<8x16xf32>
    %143 = arith.addf %139, %142 : vector<8x16xf32>
    %c3_119 = arith.constant 3 : index
    %c0_120 = arith.constant 0 : index
    %c0_121 = arith.constant 0 : index
    %144 = vector.load %arg9[%c3_119, %c0_120, %c0_121] : memref<4x1x16xf32, #tpu.memory_space<vmem>>, vector<1x1x16xf32>
    %145 = vector.shape_cast %144 : vector<1x1x16xf32> to vector<1x16xf32>
    %146 = vector.broadcast %145 : vector<1x16xf32> to vector<8x16xf32>
    %147 = arith.addf %143, %146 : vector<8x16xf32>
    %c3_122 = arith.constant 3 : index
    %c0_123 = arith.constant 0 : index
    %c0_124 = arith.constant 0 : index
    %148 = vector.load %arg10[%c3_122, %c0_123, %c0_124] : memref<4x1x16xf32, #tpu.memory_space<vmem>>, vector<1x1x16xf32>
    %149 = vector.shape_cast %148 : vector<1x1x16xf32> to vector<1x16xf32>
    %150 = vector.broadcast %149 : vector<1x16xf32> to vector<8x16xf32>
    %151 = arith.addf %147, %150 : vector<8x16xf32>
    %152 = arith.negf %106 : vector<8x16xf32>
    %153 = math.exp %152 : vector<8x16xf32>
    %cst_125 = arith.constant 1.000000e+00 : f32
    %154 = vector.broadcast %cst_125 : f32 to vector<8x16xf32>
    %155 = arith.addf %154, %153 : vector<8x16xf32>
    %156 = arith.divf %154, %155 : vector<8x16xf32>
    %157 = arith.negf %121 : vector<8x16xf32>
    %158 = math.exp %157 : vector<8x16xf32>
    %cst_126 = arith.constant 1.000000e+00 : f32
    %159 = vector.broadcast %cst_126 : f32 to vector<8x16xf32>
    %160 = arith.addf %159, %158 : vector<8x16xf32>
    %161 = arith.divf %159, %160 : vector<8x16xf32>
    %162 = math.tanh %136 : vector<8x16xf32>
    %163 = arith.negf %151 : vector<8x16xf32>
    %164 = math.exp %163 : vector<8x16xf32>
    %cst_127 = arith.constant 1.000000e+00 : f32
    %165 = vector.broadcast %cst_127 : f32 to vector<8x16xf32>
    %166 = arith.addf %165, %164 : vector<8x16xf32>
    %167 = arith.divf %165, %166 : vector<8x16xf32>
    %168 = arith.mulf %161, %91 : vector<8x16xf32>
    %169 = arith.mulf %156, %162 : vector<8x16xf32>
    %170 = arith.addf %168, %169 : vector<8x16xf32>
    %171 = math.tanh %170 : vector<8x16xf32>
    %172 = arith.mulf %167, %171 : vector<8x16xf32>
    %c0_128 = arith.constant 0 : index
    %c0_129 = arith.constant 0 : index
    %173 = vector.load %arg13[%c0_128, %c0_129] : memref<8x16xf32, #tpu.memory_space<vmem>>, vector<8x16xf32>
    tpu.vector_store %arg13[%c0_128, %c0_129], %87 {strides = array<i32>} : memref<8x16xf32, #tpu.memory_space<vmem>>, vector<8x16xf32>,
    %c0_130 = arith.constant 0 : index
    %c0_131 = arith.constant 0 : index
    %174 = vector.load %arg14[%c0_130, %c0_131] : memref<8x16xf32, #tpu.memory_space<vmem>>, vector<8x16xf32>
    tpu.vector_store %arg14[%c0_130, %c0_131], %85 {strides = array<i32>} : memref<8x16xf32, #tpu.memory_space<vmem>>, vector<8x16xf32>,
    %c0_132 = arith.constant 0 : index
    %c0_133 = arith.constant 0 : index
    %175 = vector.load %arg15[%c0_132, %c0_133] : memref<8x16xf32, #tpu.memory_space<vmem>>, vector<8x16xf32>
    tpu.vector_store %arg15[%c0_132, %c0_133], %172 {strides = array<i32>} : memref<8x16xf32, #tpu.memory_space<vmem>>, vector<8x16xf32>,
    %c0_134 = arith.constant 0 : index
    %c0_135 = arith.constant 0 : index
    %176 = vector.load %arg16[%c0_134, %c0_135] : memref<8x16xf32, #tpu.memory_space<vmem>>, vector<8x16xf32>
    tpu.vector_store %arg16[%c0_134, %c0_135], %170 {strides = array<i32>} : memref<8x16xf32, #tpu.memory_space<vmem>>, vector<8x16xf32>,
    %c0_136 = arith.constant 0 : index
    %c0_137 = arith.constant 0 : index
    %c0_138 = arith.constant 0 : index
    %177 = vector.load %arg11[%c0_136, %c0_137, %c0_138] : memref<1x8x16xf32, #tpu.memory_space<vmem>>, vector<1x8x16xf32>
    %178 = vector.shape_cast %177 : vector<1x8x16xf32> to vector<8x16xf32>
    %179 = vector.shape_cast %87 : vector<8x16xf32> to vector<1x8x16xf32>
    tpu.vector_store %arg11[%c0_136, %c0_137, %c0_138], %179 {strides = array<i32>} : memref<1x8x16xf32, #tpu.memory_space<vmem>>, vector<1x8x16xf32>,
    %c0_139 = arith.constant 0 : index
    %c0_140 = arith.constant 0 : index
    %c0_141 = arith.constant 0 : index
    %180 = vector.load %arg12[%c0_139, %c0_140, %c0_141] : memref<1x8x16xf32, #tpu.memory_space<vmem>>, vector<1x8x16xf32>
    %181 = vector.shape_cast %180 : vector<1x8x16xf32> to vector<8x16xf32>
    %182 = vector.shape_cast %172 : vector<8x16xf32> to vector<1x8x16xf32>
    tpu.vector_store %arg12[%c0_139, %c0_140, %c0_141], %182 {strides = array<i32>} : memref<1x8x16xf32, #tpu.memory_space<vmem>>, vector<1x8x16xf32>,
    return
  }
  func.func @transform_0(%arg0: i32) -> (i32, i32, i32) {
    %c0_i32 = arith.constant 0 : i32
    %c0_i32_0 = arith.constant 0 : i32
    %c0_i32_1 = arith.constant 0 : i32
    return %arg0, %c0_i32, %c0_i32_0 : i32, i32, i32
  }
  func.func @transform_1(%arg0: i32) -> (i32, i32, i32) {
    %c3_i32 = arith.constant 3 : i32
    %0 = arith.subi %c3_i32, %arg0 : i32
    %c0_i32 = arith.constant 0 : i32
    %c0_i32_0 = arith.constant 0 : i32
    %c0_i32_1 = arith.constant 0 : i32
    return %0, %c0_i32, %c0_i32_0 : i32, i32, i32
  }
  func.func @transform_2(%arg0: i32) -> (i32, i32, i32) {
    %c0_i32 = arith.constant 0 : i32
    %c0_i32_0 = arith.constant 0 : i32
    %c0_i32_1 = arith.constant 0 : i32
    %c0_i32_2 = arith.constant 0 : i32
    return %c0_i32, %c0_i32_0, %c0_i32_1 : i32, i32, i32
  }
  func.func @transform_3(%arg0: i32) -> (i32, i32, i32) {
    %c0_i32 = arith.constant 0 : i32
    %c0_i32_0 = arith.constant 0 : i32
    %c0_i32_1 = arith.constant 0 : i32
    %c0_i32_2 = arith.constant 0 : i32
    return %c0_i32, %c0_i32_0, %c0_i32_1 : i32, i32, i32
  }
  func.func @transform_4(%arg0: i32) -> (i32, i32, i32) {
    %c0_i32 = arith.constant 0 : i32
    %c0_i32_0 = arith.constant 0 : i32
    %c0_i32_1 = arith.constant 0 : i32
    %c0_i32_2 = arith.constant 0 : i32
    return %c0_i32, %c0_i32_0, %c0_i32_1 : i32, i32, i32
  }
  func.func @transform_5(%arg0: i32) -> (i32, i32, i32) {
    %c0_i32 = arith.constant 0 : i32
    %c0_i32_0 = arith.constant 0 : i32
    %c0_i32_1 = arith.constant 0 : i32
    %c0_i32_2 = arith.constant 0 : i32
    return %c0_i32, %c0_i32_0, %c0_i32_1 : i32, i32, i32
  }
  func.func @transform_6(%arg0: i32) -> (i32, i32, i32) {
    %c0_i32 = arith.constant 0 : i32
    %c0_i32_0 = arith.constant 0 : i32
    %c0_i32_1 = arith.constant 0 : i32
    %c0_i32_2 = arith.constant 0 : i32
    return %c0_i32, %c0_i32_0, %c0_i32_1 : i32, i32, i32
  }
  func.func @transform_7(%arg0: i32) -> (i32, i32, i32) {
    %c0_i32 = arith.constant 0 : i32
    %c0_i32_0 = arith.constant 0 : i32
    %c0_i32_1 = arith.constant 0 : i32
    %c0_i32_2 = arith.constant 0 : i32
    return %c0_i32, %c0_i32_0, %c0_i32_1 : i32, i32, i32
  }
  func.func @transform_8(%arg0: i32) -> (i32, i32, i32) {
    %c0_i32 = arith.constant 0 : i32
    %c0_i32_0 = arith.constant 0 : i32
    %c0_i32_1 = arith.constant 0 : i32
    %c0_i32_2 = arith.constant 0 : i32
    return %c0_i32, %c0_i32_0, %c0_i32_1 : i32, i32, i32
  }
  func.func @transform_9(%arg0: i32) -> (i32, i32, i32) {
    %c0_i32 = arith.constant 0 : i32
    %c0_i32_0 = arith.constant 0 : i32
    %c0_i32_1 = arith.constant 0 : i32
    %c0_i32_2 = arith.constant 0 : i32
    return %c0_i32, %c0_i32_0, %c0_i32_1 : i32, i32, i32
  }
  func.func @transform_10(%arg0: i32) -> (i32, i32, i32) {
    %c0_i32 = arith.constant 0 : i32
    %c0_i32_0 = arith.constant 0 : i32
    %c0_i32_1 = arith.constant 0 : i32
    return %arg0, %c0_i32, %c0_i32_0 : i32, i32, i32
  }
  func.func @transform_11(%arg0: i32) -> (i32, i32, i32) {
    %c3_i32 = arith.constant 3 : i32
    %0 = arith.subi %c3_i32, %arg0 : i32
    %c0_i32 = arith.constant 0 : i32
    %c0_i32_0 = arith.constant 0 : i32
    %c0_i32_1 = arith.constant 0 : i32
    return %0, %c0_i32, %c0_i32_0 : i32, i32, i32
  }
}

</mosaic_0001>

<llo_original>
// kernel: im2latex_forward.8
$region0: #{im2latex_forward.8}
  #allocation0 [shape = 'u32[]', space=smem, size = 0x4, offset = 0x4, fixed_abs, tag = 'smem constant byte address 0x4 - core index']
  #allocation1 [shape = 'u32[72,128]{1,0:T(1,128)}', space=vmem, size = 0x9000, scoped, tag = 'internal scratch']
  %s0 = inlined_call_operand.vmem [shape: f32[4608,27], index: 0, kind: input, shape index: {}]
  %s1 = inlined_call_operand.vmem [shape: f32[27,8], index: 1, kind: input, shape index: {}]
  %s2 = inlined_call_operand.vmem [shape: f32[1,8], index: 2, kind: input, shape index: {}]
  %s3 = inlined_call_operand.vmem [shape: f32[4608,8], index: 3, kind: output, shape index: {}]
  %s4 = sld [smem:[#allocation0]]
  $region45: #{im2latex_forward.8} parent=0
    _
  %s6 = ssub.s32 1, %s4
  %s7 = scalar_select 0, %s6, %s4
  loop: start=0, step=1, limit=8
  $region2: #{im2latex_forward.8} parent=0 // loop_pre_header
    _
  $region3: #{im2latex_forward.8} parent=0 // loop_header
    %s9 = sphi 0, %s13
    %p10 = scmp.ge.s32.totalorder %s9, 8
    %s19 = sphi 0, %s21
    %s22 = sphi 0, %s19
    %s23 = sphi 0, %s22
    %s39 = sphi 0, %s23
    %s43 = sphi 0, %s43
    %s45 = sphi 0, %s43
    %s46 = sphi 0, %s45
    %s60 = sphi 0, %s46
    %s64 = sphi 0, %s64
    %s66 = sphi 0, %s64
    %s67 = sphi 0, %s66
    %s81 = sphi 0, %s67
    %s87 = sphi 0, %s89
    %s90 = sphi 0, %s87
    %s91 = sphi 0, %s90
    %s107 = sphi 0, %s91
  $region4: #{im2latex_forward.8} parent=0 // loop_header_branch
    %12 = sbr.rel (%p10) target = $region8
  $region5: #{im2latex_forward.8} parent=0 // loop_body
    %s14 = ssub.s32 %s9, 1
    %s15 = ssub.s32 %s9, 2
    %s16 = sadd.s32 %s9, 1
    %s17 = ssub.s32 %s9, %s16
    %p18 = scmp.eq.s32.totalorder %s17, 0
    %s20 = sadd.s32 %s19, 1
    %s21 = scalar_select %p18, %s19, %s20
    %p24 = pneg %p18
    %p25 = scmp.eq.s32.totalorder %s9, 5
    %p26 = por %p24, %p25
    %p27 = scmp.ne.s32.totalorder %s19, %s22
    %p28 = scmp.eq.s32.totalorder %s9, 0
    %p29 = por %p27, %p28
    %p30 = scmp.ne.s32.totalorder %s19, %s22
    %p31 = scmp.eq.s32.totalorder %s14, 5
    %p32 = por %p30, %p31
    %p33 = scmp.ne.s32.totalorder %s22, %s23
    %p34 = scmp.eq.s32.totalorder %s14, 0
    %p35 = por %p33, %p34
    %p36 = scmp.ne.s32.totalorder %s22, %s23
    %p37 = scmp.eq.s32.totalorder %s15, 5
    %p38 = por %p36, %p37
    %p40 = scmp.ne.s32.totalorder %s23, %s39
    %p41 = scmp.eq.s32.totalorder %s15, 0
    %p42 = por %p40, %p41
    %s44 = sadd.s32 %s43, 1
    %p47 = scmp.eq.s32.totalorder %s9, 5
    %p48 = scmp.ne.s32.totalorder %s43, %s45
    %p49 = scmp.eq.s32.totalorder %s9, 0
    %p50 = por %p48, %p49
    %p51 = scmp.ne.s32.totalorder %s43, %s45
    %p52 = scmp.eq.s32.totalorder %s14, 5
    %p53 = por %p51, %p52
    %p54 = scmp.ne.s32.totalorder %s45, %s46
    %p55 = scmp.eq.s32.totalorder %s14, 0
    %p56 = por %p54, %p55
    %p57 = scmp.ne.s32.totalorder %s45, %s46
    %p58 = scmp.eq.s32.totalorder %s15, 5
    %p59 = por %p57, %p58
    %p61 = scmp.ne.s32.totalorder %s46, %s60
    %p62 = scmp.eq.s32.totalorder %s15, 0
    %p63 = por %p61, %p62
    %s65 = sadd.s32 %s64, 1
    %p68 = scmp.eq.s32.totalorder %s9, 5
    %p69 = scmp.ne.s32.totalorder %s64, %s66
    %p70 = scmp.eq.s32.totalorder %s9, 0
    %p71 = por %p69, %p70
    %p72 = scmp.ne.s32.totalorder %s64, %s66
    %p73 = scmp.eq.s32.totalorder %s14, 5
    %p74 = por %p72, %p73
    %p75 = scmp.ne.s32.totalorder %s66, %s67
    %p76 = scmp.eq.s32.totalorder %s14, 0
    %p77 = por %p75, %p76
    %p78 = scmp.ne.s32.totalorder %s66, %s67
    %p79 = scmp.eq.s32.totalorder %s15, 5
    %p80 = por %p78, %p79
    %p82 = scmp.ne.s32.totalorder %s67, %s81
    %p83 = scmp.eq.s32.totalorder %s15, 0
    %p84 = por %p82, %p83
    %s85 = ssub.s32 %s9, %s16
    %p86 = scmp.eq.s32.totalorder %s85, 0
    %s88 = sadd.s32 %s87, 1
    %s89 = scalar_select %p86, %s87, %s88
    %p92 = pneg %p86
    %p93 = scmp.eq.s32.totalorder %s9, 5
    %p94 = por %p92, %p93
    %p95 = scmp.ne.s32.totalorder %s87, %s90
    %p96 = scmp.eq.s32.totalorder %s9, 0
    %p97 = por %p95, %p96
    %p98 = scmp.ne.s32.totalorder %s87, %s90
    %p99 = scmp.eq.s32.totalorder %s14, 5
    %p100 = por %p98, %p99
    %p101 = scmp.ne.s32.totalorder %s90, %s91
    %p102 = scmp.eq.s32.totalorder %s14, 0
    %p103 = por %p101, %p102
    %p104 = scmp.ne.s32.totalorder %s90, %s91
    %p105 = scmp.eq.s32.totalorder %s15, 5
    %p106 = por %p104, %p105
    %p108 = scmp.ne.s32.totalorder %s91, %s107
    %p109 = scmp.eq.s32.totalorder %s15, 0
    %p110 = por %p108, %p109
    %p111 = scmp.le.s32.totalorder 1, %s9
    %p112 = scmp.lt.s32.totalorder %s9, 7
    %p113 = pnand %p111, %p112
    %p114 = pneg %p113
    // Predicated region
    $region9: #{im2latex_forward.8} parent=5 // pred_check
      _
    $region10: #{im2latex_forward.8} parent=5 // pred_check_branch
      %116 = sbr.rel (%p113) target = $region12
    $region11: #{im2latex_forward.8} parent=5 // pred_region
      %s117 = ssub.s32 %s9, 1
      // Predicated region
      $region13: #{im2latex_forward.8} parent=11 // pred_check
        %p118 = pneg %p56
      $region14: #{im2latex_forward.8} parent=11 // pred_check_branch
        %120 = sbr.rel (%p118) target = $region16
      $region15: #{im2latex_forward.8} parent=11 // pred_region
        _
      $region16: #{im2latex_forward.8} parent=11 // pred_fallthru
        _
      // Predicated region
      $region17: #{im2latex_forward.8} parent=11 // pred_check
        %p121 = pneg %p77
      $region18: #{im2latex_forward.8} parent=11 // pred_check_branch
        %123 = sbr.rel (%p121) target = $region20
      $region19: #{im2latex_forward.8} parent=11 // pred_region
        _
      $region20: #{im2latex_forward.8} parent=11 // pred_fallthru
        _
    $region12: #{im2latex_forward.8} parent=5 // pred_fallthru
      _
    %p124 = scmp.lt.s32.totalorder %s9, 6
    // Predicated region
    $region21: #{im2latex_forward.8} parent=5 // pred_check
      %p125 = pneg %p124
    $region22: #{im2latex_forward.8} parent=5 // pred_check_branch
      %127 = sbr.rel (%p125) target = $region24
    $region23: #{im2latex_forward.8} parent=5 // pred_region
      // Predicated region
      $region25: #{im2latex_forward.8} parent=23 // pred_check
        %p128 = pneg %p29
      $region26: #{im2latex_forward.8} parent=23 // pred_check_branch
        %130 = sbr.rel (%p128) target = $region28
      $region27: #{im2latex_forward.8} parent=23 // pred_region
        %s131 = smul.u32 96, %s9
        %p132 = scmp.lt.s32.totalorder %s131, 575
        %s133 = scalar_select %p132, %s131, 575
        %s134 = smul.addr %s133, 8
        %s135 = scalar_lea.vmem %s0, %s134
        %s136 = smul.u32 96, %s9
      $region28: #{im2latex_forward.8} parent=23 // pred_fallthru
        _
    $region24: #{im2latex_forward.8} parent=5 // pred_fallthru
      _
    %p137 = scmp.le.s32.totalorder 1, %s9
    %p138 = scmp.lt.s32.totalorder %s9, 7
    %p139 = pnand %p137, %p138
    %p140 = pneg %p139
    // Predicated region
    $region29: #{im2latex_forward.8} parent=5 // pred_check
      _
    $region30: #{im2latex_forward.8} parent=5 // pred_check_branch
      %142 = sbr.rel (%p139) target = $region32
    $region31: #{im2latex_forward.8} parent=5 // pred_region
      %s143 = ssub.s32 %s9, 1
      %s144 = smul.u32 96, %s14
      %p145 = scmp.lt.s32.totalorder %s144, 575
      %s146 = scalar_select %p145, %s144, 575
      %s147 = smul.addr %s146, 8
      %s148 = scalar_lea.vmem %s0, %s147
      %p149 = pneg %p35
      %p150 = pneg %p32
      %p151 = pneg %p56
      %p152 = pneg %p53
      %p153 = pneg %p77
      %p154 = pneg %p74
      %p155 = pneg %p103
      %p156 = pneg %p100
      %s157 = smul.u32 96, %s14
      %p158 = scmp.lt.s32.totalorder %s157, 575
      %s159 = scalar_select %p158, %s157, 575
      %s160 = smul.addr %s159, 8
      %s161 = scalar_lea.vmem %s3, %s160
      %s162 = smul.u32 96, %s14
      %p163 = scmp.lt.s32.totalorder %s162, 575
      %s164 = scalar_select %p163, %s162, 575
      %s165 = smul.addr %s164, 8
      %s166 = scalar_lea.vmem %s0, %s165
      %s167 = smul.u32 96, %s14
      %s168 = smul.u32 96, %s14
      %p169 = scmp.lt.s32.totalorder %s168, 575
      %s170 = scalar_select %p169, %s168, 575
      %s171 = smul.addr %s170, 8
      %s172 = scalar_lea.vmem %s3, %s171
      %s173 = smul.u32 96, %s14
      %v174 = vld [vmem:[%s166] sm:$0xff]
      %v175 = vld [vmem:[%s166 + $0x8] sm:$0xff]
      %v176 = vld [vmem:[%s166 + $0x10] sm:$0xff]
      %v177 = vld [vmem:[%s166 + $0x18] sm:$0xff]
      %v178 = vld [vmem:[%s166 + $0x20] sm:$0xff]
      %v179 = vld [vmem:[%s166 + $0x28] sm:$0xff]
      %v180 = vld [vmem:[%s166 + $0x30] sm:$0xff]
      %v181 = vld [vmem:[%s166 + $0x38] sm:$0xff]
      %v182 = vld [vmem:[%s166 + $0x40] sm:$0xff]
      %v183 = vld [vmem:[%s166 + $0x48] sm:$0xff]
      %v184 = vld [vmem:[%s166 + $0x50] sm:$0xff]
      %v185 = vld [vmem:[%s166 + $0x58] sm:$0xff]
      %v186 = vld [vmem:[%s166 + $0x60] sm:$0xff]
      %v187 = vld [vmem:[%s166 + $0x68] sm:$0xff]
      %v188 = vld [vmem:[%s166 + $0x70] sm:$0xff]
      %v189 = vld [vmem:[%s166 + $0x78] sm:$0xff]
      %v190 = vld [vmem:[%s166 + $0x80] sm:$0xff]
      %v191 = vld [vmem:[%s166 + $0x88] sm:$0xff]
      %v192 = vld [vmem:[%s166 + $0x90] sm:$0xff]
      %v193 = vld [vmem:[%s166 + $0x98] sm:$0xff]
      %v194 = vld [vmem:[%s166 + $0xa0] sm:$0xff]
      %v195 = vld [vmem:[%s166 + $0xa8] sm:$0xff]
      %v196 = vld [vmem:[%s166 + $0xb0] sm:$0xff]
      %v197 = vld [vmem:[%s166 + $0xb8] sm:$0xff]
      %v198 = vld [vmem:[%s166 + $0xc0] sm:$0xff]
      %v199 = vld [vmem:[%s166 + $0xc8] sm:$0xff]
      %v200 = vld [vmem:[%s166 + $0xd0] sm:$0xff]
      %v201 = vld [vmem:[%s166 + $0xd8] sm:$0xff]
      %v202 = vld [vmem:[%s166 + $0xe0] sm:$0xff]
      %v203 = vld [vmem:[%s166 + $0xe8] sm:$0xff]
      %v204 = vld [vmem:[%s166 + $0xf0] sm:$0xff]
      %v205 = vld [vmem:[%s166 + $0xf8] sm:$0xff]
      %v206 = vld [vmem:[%s166 + $0x100] sm:$0xff]
      %v207 = vld [vmem:[%s166 + $0x108] sm:$0xff]
      %v208 = vld [vmem:[%s166 + $0x110] sm:$0xff]
      %v209 = vld [vmem:[%s166 + $0x118] sm:$0xff]
      %v210 = vld [vmem:[%s166 + $0x120] sm:$0xff]
      %v211 = vld [vmem:[%s166 + $0x128] sm:$0xff]
      %v212 = vld [vmem:[%s166 + $0x130] sm:$0xff]
      %v213 = vld [vmem:[%s166 + $0x138] sm:$0xff]
      %v214 = vld [vmem:[%s166 + $0x140] sm:$0xff]
      %v215 = vld [vmem:[%s166 + $0x148] sm:$0xff]
      %v216 = vld [vmem:[%s166 + $0x150] sm:$0xff]
      %v217 = vld [vmem:[%s166 + $0x158] sm:$0xff]
      %v218 = vld [vmem:[%s166 + $0x160] sm:$0xff]
      %v219 = vld [vmem:[%s166 + $0x168] sm:$0xff]
      %v220 = vld [vmem:[%s166 + $0x170] sm:$0xff]
      %v221 = vld [vmem:[%s166 + $0x178] sm:$0xff]
      %v222 = vld [vmem:[%s166 + $0x180] sm:$0xff]
      %v223 = vld [vmem:[%s166 + $0x188] sm:$0xff]
      %v224 = vld [vmem:[%s166 + $0x190] sm:$0xff]
      %v225 = vld [vmem:[%s166 + $0x198] sm:$0xff]
      %v226 = vld [vmem:[%s166 + $0x1a0] sm:$0xff]
      %v227 = vld [vmem:[%s166 + $0x1a8] sm:$0xff]
      %v228 = vld [vmem:[%s166 + $0x1b0] sm:$0xff]
      %v229 = vld [vmem:[%s166 + $0x1b8] sm:$0xff]
      %v230 = vld [vmem:[%s166 + $0x1c0] sm:$0xff]
      %v231 = vld [vmem:[%s166 + $0x1c8] sm:$0xff]
      %v232 = vld [vmem:[%s166 + $0x1d0] sm:$0xff]
      %v233 = vld [vmem:[%s166 + $0x1d8] sm:$0xff]
      %v234 = vld [vmem:[%s166 + $0x1e0] sm:$0xff]
      %v235 = vld [vmem:[%s166 + $0x1e8] sm:$0xff]
      %v236 = vld [vmem:[%s166 + $0x1f0] sm:$0xff]
      %v237 = vld [vmem:[%s166 + $0x1f8] sm:$0xff]
      %v238 = vld [vmem:[%s166 + $0x200] sm:$0xff]
      %v239 = vld [vmem:[%s166 + $0x208] sm:$0xff]
      %v240 = vld [vmem:[%s166 + $0x210] sm:$0xff]
      %v241 = vld [vmem:[%s166 + $0x218] sm:$0xff]
      %v242 = vld [vmem:[%s166 + $0x220] sm:$0xff]
      %v243 = vld [vmem:[%s166 + $0x228] sm:$0xff]
      %v244 = vld [vmem:[%s166 + $0x230] sm:$0xff]
      %v245 = vld [vmem:[%s166 + $0x238] sm:$0xff]
      %v246 = vld [vmem:[%s166 + $0x240] sm:$0xff]
      %v247 = vld [vmem:[%s166 + $0x248] sm:$0xff]
      %v248 = vld [vmem:[%s166 + $0x250] sm:$0xff]
      %v249 = vld [vmem:[%s166 + $0x258] sm:$0xff]
      %v250 = vld [vmem:[%s166 + $0x260] sm:$0xff]
      %v251 = vld [vmem:[%s166 + $0x268] sm:$0xff]
      %v252 = vld [vmem:[%s166 + $0x270] sm:$0xff]
      %v253 = vld [vmem:[%s166 + $0x278] sm:$0xff]
      %v254 = vld [vmem:[%s166 + $0x280] sm:$0xff]
      %v255 = vld [vmem:[%s166 + $0x288] sm:$0xff]
      %v256 = vld [vmem:[%s166 + $0x290] sm:$0xff]
      %v257 = vld [vmem:[%s166 + $0x298] sm:$0xff]
      %v258 = vld [vmem:[%s166 + $0x2a0] sm:$0xff]
      %v259 = vld [vmem:[%s166 + $0x2a8] sm:$0xff]
      %v260 = vld [vmem:[%s166 + $0x2b0] sm:$0xff]
      %v261 = vld [vmem:[%s166 + $0x2b8] sm:$0xff]
      %v262 = vld [vmem:[%s166 + $0x2c0] sm:$0xff]
      %v263 = vld [vmem:[%s166 + $0x2c8] sm:$0xff]
      %v264 = vld [vmem:[%s166 + $0x2d0] sm:$0xff]
      %v265 = vld [vmem:[%s166 + $0x2d8] sm:$0xff]
      %v266 = vld [vmem:[%s166 + $0x2e0] sm:$0xff]
      %v267 = vld [vmem:[%s166 + $0x2e8] sm:$0xff]
      %v268 = vld [vmem:[%s166 + $0x2f0] sm:$0xff]
      %v269 = vld [vmem:[%s166 + $0x2f8] sm:$0xff]
      %v270 = vld [vmem:[%s1] sm:$0xff]
      %v271 = vld [vmem:[%s1 + $0x8] sm:$0xff]
      %v272 = vld [vmem:[%s1 + $0x10] sm:$0xff]
      %v273 = vld [vmem:[%s1 + $0x18] sm:$0x7]
      %v274 = vld [vmem:[%s2] sm:$0x1]
      %v276 = vperm.slane %v274, 0
      %vm278 = vcmask 220160
      %v280 = vsel %vm278, %v174, 0
      %v283 = vsel %vm278, %v175, 0
      %v286 = vsel %vm278, %v176, 0
      %v289 = vsel %vm278, %v177, 0
      %v292 = vsel %vm278, %v178, 0
      %v295 = vsel %vm278, %v179, 0
      %v298 = vsel %vm278, %v180, 0
      %v301 = vsel %vm278, %v181, 0
      %v304 = vsel %vm278, %v182, 0
      %v307 = vsel %vm278, %v183, 0
      %v310 = vsel %vm278, %v184, 0
      %v313 = vsel %vm278, %v185, 0
      %v316 = vsel %vm278, %v186, 0
      %v319 = vsel %vm278, %v187, 0
      %v322 = vsel %vm278, %v188, 0
      %v325 = vsel %vm278, %v189, 0
      %v328 = vsel %vm278, %v190, 0
      %v331 = vsel %vm278, %v191, 0
      %v334 = vsel %vm278, %v192, 0
      %v337 = vsel %vm278, %v193, 0
      %v340 = vsel %vm278, %v194, 0
      %v343 = vsel %vm278, %v195, 0
      %v346 = vsel %vm278, %v196, 0
      %v349 = vsel %vm278, %v197, 0
      %v352 = vsel %vm278, %v198, 0
      %v355 = vsel %vm278, %v199, 0
      %v358 = vsel %vm278, %v200, 0
      %v361 = vsel %vm278, %v201, 0
      %v364 = vsel %vm278, %v202, 0
      %v367 = vsel %vm278, %v203, 0
      %v370 = vsel %vm278, %v204, 0
      %v373 = vsel %vm278, %v205, 0
      %v376 = vsel %vm278, %v206, 0
      %v379 = vsel %vm278, %v207, 0
      %v382 = vsel %vm278, %v208, 0
      %v385 = vsel %vm278, %v209, 0
      %v388 = vsel %vm278, %v210, 0
      %v391 = vsel %vm278, %v211, 0
      %v394 = vsel %vm278, %v212, 0
      %v397 = vsel %vm278, %v213, 0
      %v400 = vsel %vm278, %v214, 0
      %v403 = vsel %vm278, %v215, 0
      %v406 = vsel %vm278, %v216, 0
      %v409 = vsel %vm278, %v217, 0
      %v412 = vsel %vm278, %v218, 0
      %v415 = vsel %vm278, %v219, 0
      %v418 = vsel %vm278, %v220, 0
      %v421 = vsel %vm278, %v221, 0
      %v424 = vsel %vm278, %v222, 0
      %v427 = vsel %vm278, %v223, 0
      %v430 = vsel %vm278, %v224, 0
      %v433 = vsel %vm278, %v225, 0
      %v436 = vsel %vm278, %v226, 0
      %v439 = vsel %vm278, %v227, 0
      %v442 = vsel %vm278, %v228, 0
      %v445 = vsel %vm278, %v229, 0
      %v448 = vsel %vm278, %v230, 0
      %v451 = vsel %vm278, %v231, 0
      %v454 = vsel %vm278, %v232, 0
      %v457 = vsel %vm278, %v233, 0
      %v460 = vsel %vm278, %v234, 0
      %v463 = vsel %vm278, %v235, 0
      %v466 = vsel %vm278, %v236, 0
      %v469 = vsel %vm278, %v237, 0
      %v472 = vsel %vm278, %v238, 0
      %v475 = vsel %vm278, %v239, 0
      %v478 = vsel %vm278, %v240, 0
      %v481 = vsel %vm278, %v241, 0
      %v484 = vsel %vm278, %v242, 0
      %v487 = vsel %vm278, %v243, 0
      %v490 = vsel %vm278, %v244, 0
      %v493 = vsel %vm278, %v245, 0
      %v496 = vsel %vm278, %v246, 0
      %v499 = vsel %vm278, %v247, 0
      %v502 = vsel %vm278, %v248, 0
      %v505 = vsel %vm278, %v249, 0
      %v508 = vsel %vm278, %v250, 0
      %v511 = vsel %vm278, %v251, 0
      %v514 = vsel %vm278, %v252, 0
      %v517 = vsel %vm278, %v253, 0
      %v520 = vsel %vm278, %v254, 0
      %v523 = vsel %vm278, %v255, 0
      %v526 = vsel %vm278, %v256, 0
      %v529 = vsel %vm278, %v257, 0
      %v532 = vsel %vm278, %v258, 0
      %v535 = vsel %vm278, %v259, 0
      %v538 = vsel %vm278, %v260, 0
      %v541 = vsel %vm278, %v261, 0
      %v544 = vsel %vm278, %v262, 0
      %v547 = vsel %vm278, %v263, 0
      %v550 = vsel %vm278, %v264, 0
      %v553 = vsel %vm278, %v265, 0
      %v556 = vsel %vm278, %v266, 0
      %v559 = vsel %vm278, %v267, 0
      %v562 = vsel %vm278, %v268, 0
      %v565 = vsel %vm278, %v269, 0
      %vm567 = vcmask 1042432
      %v569 = vsel %vm567, %v273, 0
      %571 = vmatpush.msra.mxu0 0.0
      %572 = vmatpush.msra.mxu0 0.0
      %573 = vmatpush.msra.mxu0 0.0
      %574 = vmatpush.msra.mxu0 0.0
      %575 = vmatpush.msra.mxu0 0.0
      %576 = vmatpush.msra.mxu0 0.0
      %577 = vmatpush.msra.mxu0 0.0
      %578 = vmatpush.msra.mxu0 0.0
      %579 = vmatpush.msra.mxu0 0.0
      %580 = vmatpush.msra.mxu0 0.0
      %581 = vmatpush.msra.mxu0 0.0
      %582 = vmatpush.msra.mxu0 0.0
      %583 = vmatpush.msra.mxu0 %v569
      %584 = vmatpush.msra.mxu0 %v272
      %585 = vmatpush.msra.mxu0 %v271
      %586 = vmatpush.msra.mxu0 %v270
      %587 = vmatmul.f32.gmra.mxu0 %v280
      %v588 = vpop.f32.mrf.mxu0
      %v589 = vadd.f32 %v276, %v588
      %590 = vmatmul.f32.gmra.mxu0 %v283
      %v591 = vpop.f32.mrf.mxu0
      %v592 = vadd.f32 %v276, %v591
      %593 = vmatmul.f32.gmra.mxu0 %v286
      %v594 = vpop.f32.mrf.mxu0
      %v595 = vadd.f32 %v276, %v594
      %596 = vmatmul.f32.gmra.mxu0 %v289
      %v597 = vpop.f32.mrf.mxu0
      %v598 = vadd.f32 %v276, %v597
      %599 = vmatmul.f32.gmra.mxu0 %v292
      %v600 = vpop.f32.mrf.mxu0
      %v601 = vadd.f32 %v276, %v600
      %602 = vmatmul.f32.gmra.mxu0 %v295
      %v603 = vpop.f32.mrf.mxu0
      %v604 = vadd.f32 %v276, %v603
      %605 = vmatmul.f32.gmra.mxu0 %v298
      %v606 = vpop.f32.mrf.mxu0
      %v607 = vadd.f32 %v276, %v606
      %608 = vmatmul.f32.gmra.mxu0 %v301
      %v609 = vpop.f32.mrf.mxu0
      %v610 = vadd.f32 %v276, %v609
      %611 = vmatmul.f32.gmra.mxu0 %v304
      %v612 = vpop.f32.mrf.mxu0
      %v613 = vadd.f32 %v276, %v612
      %614 = vmatmul.f32.gmra.mxu0 %v307
      %v615 = vpop.f32.mrf.mxu0
      %v616 = vadd.f32 %v276, %v615
      %617 = vmatmul.f32.gmra.mxu0 %v310
      %v618 = vpop.f32.mrf.mxu0
      %v619 = vadd.f32 %v276, %v618
      %620 = vmatmul.f32.gmra.mxu0 %v313
      %v621 = vpop.f32.mrf.mxu0
      %v622 = vadd.f32 %v276, %v621
      %623 = vmatmul.f32.gmra.mxu0 %v316
      %v624 = vpop.f32.mrf.mxu0
      %v625 = vadd.f32 %v276, %v624
      %626 = vmatmul.f32.gmra.mxu0 %v319
      %v627 = vpop.f32.mrf.mxu0
      %v628 = vadd.f32 %v276, %v627
      %629 = vmatmul.f32.gmra.mxu0 %v322
      %v630 = vpop.f32.mrf.mxu0
      %v631 = vadd.f32 %v276, %v630
      %632 = vmatmul.f32.gmra.mxu0 %v325
      %v633 = vpop.f32.mrf.mxu0
      %v634 = vadd.f32 %v276, %v633
      %635 = vmatmul.f32.gmra.mxu0 %v328
      %v636 = vpop.f32.mrf.mxu0
      %v637 = vadd.f32 %v276, %v636
      %638 = vmatmul.f32.gmra.mxu0 %v331
      %v639 = vpop.f32.mrf.mxu0
      %v640 = vadd.f32 %v276, %v639
      %641 = vmatmul.f32.gmra.mxu0 %v334
      %v642 = vpop.f32.mrf.mxu0
      %v643 = vadd.f32 %v276, %v642
      %644 = vmatmul.f32.gmra.mxu0 %v337
      %v645 = vpop.f32.mrf.mxu0
      %v646 = vadd.f32 %v276, %v645
      %647 = vmatmul.f32.gmra.mxu0 %v340
      %v648 = vpop.f32.mrf.mxu0
      %v649 = vadd.f32 %v276, %v648
      %650 = vmatmul.f32.gmra.mxu0 %v343
      %v651 = vpop.f32.mrf.mxu0
      %v652 = vadd.f32 %v276, %v651
      %653 = vmatmul.f32.gmra.mxu0 %v346
      %v654 = vpop.f32.mrf.mxu0
      %v655 = vadd.f32 %v276, %v654
      %656 = vmatmul.f32.gmra.mxu0 %v349
      %v657 = vpop.f32.mrf.mxu0
      %v658 = vadd.f32 %v276, %v657
      %659 = vmatmul.f32.gmra.mxu0 %v352
      %v660 = vpop.f32.mrf.mxu0
      %v661 = vadd.f32 %v276, %v660
      %662 = vmatmul.f32.gmra.mxu0 %v355
      %v663 = vpop.f32.mrf.mxu0
      %v664 = vadd.f32 %v276, %v663
      %665 = vmatmul.f32.gmra.mxu0 %v358
      %v666 = vpop.f32.mrf.mxu0
      %v667 = vadd.f32 %v276, %v666
      %668 = vmatmul.f32.gmra.mxu0 %v361
      %v669 = vpop.f32.mrf.mxu0
      %v670 = vadd.f32 %v276, %v669
      %671 = vmatmul.f32.gmra.mxu0 %v364
      %v672 = vpop.f32.mrf.mxu0
      %v673 = vadd.f32 %v276, %v672
      %674 = vmatmul.f32.gmra.mxu0 %v367
      %v675 = vpop.f32.mrf.mxu0
      %v676 = vadd.f32 %v276, %v675
      %677 = vmatmul.f32.gmra.mxu0 %v370
      %v678 = vpop.f32.mrf.mxu0
      %v679 = vadd.f32 %v276, %v678
      %680 = vmatmul.f32.gmra.mxu0 %v373
      %v681 = vpop.f32.mrf.mxu0
      %v682 = vadd.f32 %v276, %v681
      %683 = vmatmul.f32.gmra.mxu0 %v376
      %v684 = vpop.f32.mrf.mxu0
      %v685 = vadd.f32 %v276, %v684
      %686 = vmatmul.f32.gmra.mxu0 %v379
      %v687 = vpop.f32.mrf.mxu0
      %v688 = vadd.f32 %v276, %v687
      %689 = vmatmul.f32.gmra.mxu0 %v382
      %v690 = vpop.f32.mrf.mxu0
      %v691 = vadd.f32 %v276, %v690
      %692 = vmatmul.f32.gmra.mxu0 %v385
      %v693 = vpop.f32.mrf.mxu0
      %v694 = vadd.f32 %v276, %v693
      %695 = vmatmul.f32.gmra.mxu0 %v388
      %v696 = vpop.f32.mrf.mxu0
      %v697 = vadd.f32 %v276, %v696
      %698 = vmatmul.f32.gmra.mxu0 %v391
      %v699 = vpop.f32.mrf.mxu0
      %v700 = vadd.f32 %v276, %v699
      %701 = vmatmul.f32.gmra.mxu0 %v394
      %v702 = vpop.f32.mrf.mxu0
      %v703 = vadd.f32 %v276, %v702
      %704 = vmatmul.f32.gmra.mxu0 %v397
      %v705 = vpop.f32.mrf.mxu0
      %v706 = vadd.f32 %v276, %v705
      %707 = vmatmul.f32.gmra.mxu0 %v400
      %v708 = vpop.f32.mrf.mxu0
      %v709 = vadd.f32 %v276, %v708
      %710 = vmatmul.f32.gmra.mxu0 %v403
      %v711 = vpop.f32.mrf.mxu0
      %v712 = vadd.f32 %v276, %v711
      %713 = vmatmul.f32.gmra.mxu0 %v406
      %v714 = vpop.f32.mrf.mxu0
      %v715 = vadd.f32 %v276, %v714
      %716 = vmatmul.f32.gmra.mxu0 %v409
      %v717 = vpop.f32.mrf.mxu0
      %v718 = vadd.f32 %v276, %v717
      %719 = vmatmul.f32.gmra.mxu0 %v412
      %v720 = vpop.f32.mrf.mxu0
      %v721 = vadd.f32 %v276, %v720
      %722 = vmatmul.f32.gmra.mxu0 %v415
      %v723 = vpop.f32.mrf.mxu0
      %v724 = vadd.f32 %v276, %v723
      %725 = vmatmul.f32.gmra.mxu0 %v418
      %v726 = vpop.f32.mrf.mxu0
      %v727 = vadd.f32 %v276, %v726
      %728 = vmatmul.f32.gmra.mxu0 %v421
      %v729 = vpop.f32.mrf.mxu0
      %v730 = vadd.f32 %v276, %v729
      %731 = vmatmul.f32.gmra.mxu0 %v424
      %v732 = vpop.f32.mrf.mxu0
      %v733 = vadd.f32 %v276, %v732
      %734 = vmatmul.f32.gmra.mxu0 %v427
      %v735 = vpop.f32.mrf.mxu0
      %v736 = vadd.f32 %v276, %v735
      %737 = vmatmul.f32.gmra.mxu0 %v430
      %v738 = vpop.f32.mrf.mxu0
      %v739 = vadd.f32 %v276, %v738
      %740 = vmatmul.f32.gmra.mxu0 %v433
      %v741 = vpop.f32.mrf.mxu0
      %v742 = vadd.f32 %v276, %v741
      %743 = vmatmul.f32.gmra.mxu0 %v436
      %v744 = vpop.f32.mrf.mxu0
      %v745 = vadd.f32 %v276, %v744
      %746 = vmatmul.f32.gmra.mxu0 %v439
      %v747 = vpop.f32.mrf.mxu0
      %v748 = vadd.f32 %v276, %v747
      %749 = vmatmul.f32.gmra.mxu0 %v442
      %v750 = vpop.f32.mrf.mxu0
      %v751 = vadd.f32 %v276, %v750
      %752 = vmatmul.f32.gmra.mxu0 %v445
      %v753 = vpop.f32.mrf.mxu0
      %v754 = vadd.f32 %v276, %v753
      %755 = vmatmul.f32.gmra.mxu0 %v448
      %v756 = vpop.f32.mrf.mxu0
      %v757 = vadd.f32 %v276, %v756
      %758 = vmatmul.f32.gmra.mxu0 %v451
      %v759 = vpop.f32.mrf.mxu0
      %v760 = vadd.f32 %v276, %v759
      %761 = vmatmul.f32.gmra.mxu0 %v454
      %v762 = vpop.f32.mrf.mxu0
      %v763 = vadd.f32 %v276, %v762
      %764 = vmatmul.f32.gmra.mxu0 %v457
      %v765 = vpop.f32.mrf.mxu0
      %v766 = vadd.f32 %v276, %v765
      %767 = vmatmul.f32.gmra.mxu0 %v460
      %v768 = vpop.f32.mrf.mxu0
      %v769 = vadd.f32 %v276, %v768
      %770 = vmatmul.f32.gmra.mxu0 %v463
      %v771 = vpop.f32.mrf.mxu0
      %v772 = vadd.f32 %v276, %v771
      %773 = vmatmul.f32.gmra.mxu0 %v466
      %v774 = vpop.f32.mrf.mxu0
      %v775 = vadd.f32 %v276, %v774
      %776 = vmatmul.f32.gmra.mxu0 %v469
      %v777 = vpop.f32.mrf.mxu0
      %v778 = vadd.f32 %v276, %v777
      %779 = vmatmul.f32.gmra.mxu0 %v472
      %v780 = vpop.f32.mrf.mxu0
      %v781 = vadd.f32 %v276, %v780
      %782 = vmatmul.f32.gmra.mxu0 %v475
      %v783 = vpop.f32.mrf.mxu0
      %v784 = vadd.f32 %v276, %v783
      %785 = vmatmul.f32.gmra.mxu0 %v478
      %v786 = vpop.f32.mrf.mxu0
      %v787 = vadd.f32 %v276, %v786
      %788 = vmatmul.f32.gmra.mxu0 %v481
      %v789 = vpop.f32.mrf.mxu0
      %v790 = vadd.f32 %v276, %v789
      %791 = vmatmul.f32.gmra.mxu0 %v484
      %v792 = vpop.f32.mrf.mxu0
      %v793 = vadd.f32 %v276, %v792
      %794 = vmatmul.f32.gmra.mxu0 %v487
      %v795 = vpop.f32.mrf.mxu0
      %v796 = vadd.f32 %v276, %v795
      %797 = vmatmul.f32.gmra.mxu0 %v490
      %v798 = vpop.f32.mrf.mxu0
      %v799 = vadd.f32 %v276, %v798
      %800 = vmatmul.f32.gmra.mxu0 %v493
      %v801 = vpop.f32.mrf.mxu0
      %v802 = vadd.f32 %v276, %v801
      %803 = vmatmul.f32.gmra.mxu0 %v496
      %v804 = vpop.f32.mrf.mxu0
      %v805 = vadd.f32 %v276, %v804
      %806 = vmatmul.f32.gmra.mxu0 %v499
      %v807 = vpop.f32.mrf.mxu0
      %v808 = vadd.f32 %v276, %v807
      %809 = vmatmul.f32.gmra.mxu0 %v502
      %v810 = vpop.f32.mrf.mxu0
      %v811 = vadd.f32 %v276, %v810
      %812 = vmatmul.f32.gmra.mxu0 %v505
      %v813 = vpop.f32.mrf.mxu0
      %v814 = vadd.f32 %v276, %v813
      %815 = vmatmul.f32.gmra.mxu0 %v508
      %v816 = vpop.f32.mrf.mxu0
      %v817 = vadd.f32 %v276, %v816
      %818 = vmatmul.f32.gmra.mxu0 %v511
      %v819 = vpop.f32.mrf.mxu0
      %v820 = vadd.f32 %v276, %v819
      %821 = vmatmul.f32.gmra.mxu0 %v514
      %v822 = vpop.f32.mrf.mxu0
      %v823 = vadd.f32 %v276, %v822
      %824 = vmatmul.f32.gmra.mxu0 %v517
      %v825 = vpop.f32.mrf.mxu0
      %v826 = vadd.f32 %v276, %v825
      %827 = vmatmul.f32.gmra.mxu0 %v520
      %v828 = vpop.f32.mrf.mxu0
      %v829 = vadd.f32 %v276, %v828
      %830 = vmatmul.f32.gmra.mxu0 %v523
      %v831 = vpop.f32.mrf.mxu0
      %v832 = vadd.f32 %v276, %v831
      %833 = vmatmul.f32.gmra.mxu0 %v526
      %v834 = vpop.f32.mrf.mxu0
      %v835 = vadd.f32 %v276, %v834
      %836 = vmatmul.f32.gmra.mxu0 %v529
      %v837 = vpop.f32.mrf.mxu0
      %v838 = vadd.f32 %v276, %v837
      %839 = vmatmul.f32.gmra.mxu0 %v532
      %v840 = vpop.f32.mrf.mxu0
      %v841 = vadd.f32 %v276, %v840
      %842 = vmatmul.f32.gmra.mxu0 %v535
      %v843 = vpop.f32.mrf.mxu0
      %v844 = vadd.f32 %v276, %v843
      %845 = vmatmul.f32.gmra.mxu0 %v538
      %v846 = vpop.f32.mrf.mxu0
      %v847 = vadd.f32 %v276, %v846
      %848 = vmatmul.f32.gmra.mxu0 %v541
      %v849 = vpop.f32.mrf.mxu0
      %v850 = vadd.f32 %v276, %v849
      %851 = vmatmul.f32.gmra.mxu0 %v544
      %v852 = vpop.f32.mrf.mxu0
      %v853 = vadd.f32 %v276, %v852
      %854 = vmatmul.f32.gmra.mxu0 %v547
      %v855 = vpop.f32.mrf.mxu0
      %v856 = vadd.f32 %v276, %v855
      %857 = vmatmul.f32.gmra.mxu0 %v550
      %v858 = vpop.f32.mrf.mxu0
      %v859 = vadd.f32 %v276, %v858
      %860 = vmatmul.f32.gmra.mxu0 %v553
      %v861 = vpop.f32.mrf.mxu0
      %v862 = vadd.f32 %v276, %v861
      %863 = vmatmul.f32.gmra.mxu0 %v556
      %v864 = vpop.f32.mrf.mxu0
      %v865 = vadd.f32 %v276, %v864
      %866 = vmatmul.f32.gmra.mxu0 %v559
      %v867 = vpop.f32.mrf.mxu0
      %v868 = vadd.f32 %v276, %v867
      %869 = vmatmul.f32.gmra.mxu0 %v562
      %v870 = vpop.f32.mrf.mxu0
      %v871 = vadd.f32 %v276, %v870
      %872 = vmatmul.f32.gmra.mxu0 %v565
      %v873 = vpop.f32.mrf.mxu0
      %v874 = vadd.f32 %v276, %v873
      %875 = vdwg.mxu0
      %v876 = vmax.f32 %v589, 0.0
      %v877 = vmax.f32 %v592, 0.0
      %v878 = vmax.f32 %v595, 0.0
      %v879 = vmax.f32 %v598, 0.0
      %v880 = vmax.f32 %v601, 0.0
      %v881 = vmax.f32 %v604, 0.0
      %v882 = vmax.f32 %v607, 0.0
      %v883 = vmax.f32 %v610, 0.0
      %v884 = vmax.f32 %v613, 0.0
      %v885 = vmax.f32 %v616, 0.0
      %v886 = vmax.f32 %v619, 0.0
      %v887 = vmax.f32 %v622, 0.0
      %v888 = vmax.f32 %v625, 0.0
      %v889 = vmax.f32 %v628, 0.0
      %v890 = vmax.f32 %v631, 0.0
      %v891 = vmax.f32 %v634, 0.0
      %v892 = vmax.f32 %v637, 0.0
      %v893 = vmax.f32 %v640, 0.0
      %v894 = vmax.f32 %v643, 0.0
      %v895 = vmax.f32 %v646, 0.0
      %v896 = vmax.f32 %v649, 0.0
      %v897 = vmax.f32 %v652, 0.0
      %v898 = vmax.f32 %v655, 0.0
      %v899 = vmax.f32 %v658, 0.0
      %v900 = vmax.f32 %v661, 0.0
      %v901 = vmax.f32 %v664, 0.0
      %v902 = vmax.f32 %v667, 0.0
      %v903 = vmax.f32 %v670, 0.0
      %v904 = vmax.f32 %v673, 0.0
      %v905 = vmax.f32 %v676, 0.0
      %v906 = vmax.f32 %v679, 0.0
      %v907 = vmax.f32 %v682, 0.0
      %v908 = vmax.f32 %v685, 0.0
      %v909 = vmax.f32 %v688, 0.0
      %v910 = vmax.f32 %v691, 0.0
      %v911 = vmax.f32 %v694, 0.0
      %v912 = vmax.f32 %v697, 0.0
      %v913 = vmax.f32 %v700, 0.0
      %v914 = vmax.f32 %v703, 0.0
      %v915 = vmax.f32 %v706, 0.0
      %v916 = vmax.f32 %v709, 0.0
      %v917 = vmax.f32 %v712, 0.0
      %v918 = vmax.f32 %v715, 0.0
      %v919 = vmax.f32 %v718, 0.0
      %v920 = vmax.f32 %v721, 0.0
      %v921 = vmax.f32 %v724, 0.0
      %v922 = vmax.f32 %v727, 0.0
      %v923 = vmax.f32 %v730, 0.0
      %v924 = vmax.f32 %v733, 0.0
      %v925 = vmax.f32 %v736, 0.0
      %v926 = vmax.f32 %v739, 0.0
      %v927 = vmax.f32 %v742, 0.0
      %v928 = vmax.f32 %v745, 0.0
      %v929 = vmax.f32 %v748, 0.0
      %v930 = vmax.f32 %v751, 0.0
      %v931 = vmax.f32 %v754, 0.0
      %v932 = vmax.f32 %v757, 0.0
      %v933 = vmax.f32 %v760, 0.0
      %v934 = vmax.f32 %v763, 0.0
      %v935 = vmax.f32 %v766, 0.0
      %v936 = vmax.f32 %v769, 0.0
      %v937 = vmax.f32 %v772, 0.0
      %v938 = vmax.f32 %v775, 0.0
      %v939 = vmax.f32 %v778, 0.0
      %v940 = vmax.f32 %v781, 0.0
      %v941 = vmax.f32 %v784, 0.0
      %v942 = vmax.f32 %v787, 0.0
      %v943 = vmax.f32 %v790, 0.0
      %v944 = vmax.f32 %v793, 0.0
      %v945 = vmax.f32 %v796, 0.0
      %v946 = vmax.f32 %v799, 0.0
      %v947 = vmax.f32 %v802, 0.0
      %v948 = vmax.f32 %v805, 0.0
      %v949 = vmax.f32 %v808, 0.0
      %v950 = vmax.f32 %v811, 0.0
      %v951 = vmax.f32 %v814, 0.0
      %v952 = vmax.f32 %v817, 0.0
      %v953 = vmax.f32 %v820, 0.0
      %v954 = vmax.f32 %v823, 0.0
      %v955 = vmax.f32 %v826, 0.0
      %v956 = vmax.f32 %v829, 0.0
      %v957 = vmax.f32 %v832, 0.0
      %v958 = vmax.f32 %v835, 0.0
      %v959 = vmax.f32 %v838, 0.0
      %v960 = vmax.f32 %v841, 0.0
      %v961 = vmax.f32 %v844, 0.0
      %v962 = vmax.f32 %v847, 0.0
      %v963 = vmax.f32 %v850, 0.0
      %v964 = vmax.f32 %v853, 0.0
      %v965 = vmax.f32 %v856, 0.0
      %v966 = vmax.f32 %v859, 0.0
      %v967 = vmax.f32 %v862, 0.0
      %v968 = vmax.f32 %v865, 0.0
      %v969 = vmax.f32 %v868, 0.0
      %v970 = vmax.f32 %v871, 0.0
      %v971 = vmax.f32 %v874, 0.0
      %vm972 = vcmask 64512
      %973 = vst.msk [vmem:[%s172] sm:$0xff] %vm972, %v876
      %974 = vst.msk [vmem:[%s172 + $0x8] sm:$0xff] %vm972, %v877
      %975 = vst.msk [vmem:[%s172 + $0x10] sm:$0xff] %vm972, %v878
      %976 = vst.msk [vmem:[%s172 + $0x18] sm:$0xff] %vm972, %v879
      %977 = vst.msk [vmem:[%s172 + $0x20] sm:$0xff] %vm972, %v880
      %978 = vst.msk [vmem:[%s172 + $0x28] sm:$0xff] %vm972, %v881
      %979 = vst.msk [vmem:[%s172 + $0x30] sm:$0xff] %vm972, %v882
      %980 = vst.msk [vmem:[%s172 + $0x38] sm:$0xff] %vm972, %v883
      %981 = vst.msk [vmem:[%s172 + $0x40] sm:$0xff] %vm972, %v884
      %982 = vst.msk [vmem:[%s172 + $0x48] sm:$0xff] %vm972, %v885
      %983 = vst.msk [vmem:[%s172 + $0x50] sm:$0xff] %vm972, %v886
      %984 = vst.msk [vmem:[%s172 + $0x58] sm:$0xff] %vm972, %v887
      %985 = vst.msk [vmem:[%s172 + $0x60] sm:$0xff] %vm972, %v888
      %986 = vst.msk [vmem:[%s172 + $0x68] sm:$0xff] %vm972, %v889
      %987 = vst.msk [vmem:[%s172 + $0x70] sm:$0xff] %vm972, %v890
      %988 = vst.msk [vmem:[%s172 + $0x78] sm:$0xff] %vm972, %v891
      %989 = vst.msk [vmem:[%s172 + $0x80] sm:$0xff] %vm972, %v892
      %990 = vst.msk [vmem:[%s172 + $0x88] sm:$0xff] %vm972, %v893
      %991 = vst.msk [vmem:[%s172 + $0x90] sm:$0xff] %vm972, %v894
      %992 = vst.msk [vmem:[%s172 + $0x98] sm:$0xff] %vm972, %v895
      %993 = vst.msk [vmem:[%s172 + $0xa0] sm:$0xff] %vm972, %v896
      %994 = vst.msk [vmem:[%s172 + $0xa8] sm:$0xff] %vm972, %v897
      %995 = vst.msk [vmem:[%s172 + $0xb0] sm:$0xff] %vm972, %v898
      %996 = vst.msk [vmem:[%s172 + $0xb8] sm:$0xff] %vm972, %v899
      %997 = vst.msk [vmem:[%s172 + $0xc0] sm:$0xff] %vm972, %v900
      %998 = vst.msk [vmem:[%s172 + $0xc8] sm:$0xff] %vm972, %v901
      %999 = vst.msk [vmem:[%s172 + $0xd0] sm:$0xff] %vm972, %v902
      %1000 = vst.msk [vmem:[%s172 + $0xd8] sm:$0xff] %vm972, %v903
      %1001 = vst.msk [vmem:[%s172 + $0xe0] sm:$0xff] %vm972, %v904
      %1002 = vst.msk [vmem:[%s172 + $0xe8] sm:$0xff] %vm972, %v905
      %1003 = vst.msk [vmem:[%s172 + $0xf0] sm:$0xff] %vm972, %v906
      %1004 = vst.msk [vmem:[%s172 + $0xf8] sm:$0xff] %vm972, %v907
      %1005 = vst.msk [vmem:[%s172 + $0x100] sm:$0xff] %vm972, %v908
      %1006 = vst.msk [vmem:[%s172 + $0x108] sm:$0xff] %vm972, %v909
      %1007 = vst.msk [vmem:[%s172 + $0x110] sm:$0xff] %vm972, %v910
      %1008 = vst.msk [vmem:[%s172 + $0x118] sm:$0xff] %vm972, %v911
      %1009 = vst.msk [vmem:[%s172 + $0x120] sm:$0xff] %vm972, %v912
      %1010 = vst.msk [vmem:[%s172 + $0x128] sm:$0xff] %vm972, %v913
      %1011 = vst.msk [vmem:[%s172 + $0x130] sm:$0xff] %vm972, %v914
      %1012 = vst.msk [vmem:[%s172 + $0x138] sm:$0xff] %vm972, %v915
      %1013 = vst.msk [vmem:[%s172 + $0x140] sm:$0xff] %vm972, %v916
      %1014 = vst.msk [vmem:[%s172 + $0x148] sm:$0xff] %vm972, %v917
      %1015 = vst.msk [vmem:[%s172 + $0x150] sm:$0xff] %vm972, %v918
      %1016 = vst.msk [vmem:[%s172 + $0x158] sm:$0xff] %vm972, %v919
      %1017 = vst.msk [vmem:[%s172 + $0x160] sm:$0xff] %vm972, %v920
      %1018 = vst.msk [vmem:[%s172 + $0x168] sm:$0xff] %vm972, %v921
      %1019 = vst.msk [vmem:[%s172 + $0x170] sm:$0xff] %vm972, %v922
      %1020 = vst.msk [vmem:[%s172 + $0x178] sm:$0xff] %vm972, %v923
      %1021 = vst.msk [vmem:[%s172 + $0x180] sm:$0xff] %vm972, %v924
      %1022 = vst.msk [vmem:[%s172 + $0x188] sm:$0xff] %vm972, %v925
      %1023 = vst.msk [vmem:[%s172 + $0x190] sm:$0xff] %vm972, %v926
      %1024 = vst.msk [vmem:[%s172 + $0x198] sm:$0xff] %vm972, %v927
      %1025 = vst.msk [vmem:[%s172 + $0x1a0] sm:$0xff] %vm972, %v928
      %1026 = vst.msk [vmem:[%s172 + $0x1a8] sm:$0xff] %vm972, %v929
      %1027 = vst.msk [vmem:[%s172 + $0x1b0] sm:$0xff] %vm972, %v930
      %1028 = vst.msk [vmem:[%s172 + $0x1b8] sm:$0xff] %vm972, %v931
      %1029 = vst.msk [vmem:[%s172 + $0x1c0] sm:$0xff] %vm972, %v932
      %1030 = vst.msk [vmem:[%s172 + $0x1c8] sm:$0xff] %vm972, %v933
      %1031 = vst.msk [vmem:[%s172 + $0x1d0] sm:$0xff] %vm972, %v934
      %1032 = vst.msk [vmem:[%s172 + $0x1d8] sm:$0xff] %vm972, %v935
      %1033 = vst.msk [vmem:[%s172 + $0x1e0] sm:$0xff] %vm972, %v936
      %1034 = vst.msk [vmem:[%s172 + $0x1e8] sm:$0xff] %vm972, %v937
      %1035 = vst.msk [vmem:[%s172 + $0x1f0] sm:$0xff] %vm972, %v938
      %1036 = vst.msk [vmem:[%s172 + $0x1f8] sm:$0xff] %vm972, %v939
      %1037 = vst.msk [vmem:[%s172 + $0x200] sm:$0xff] %vm972, %v940
      %1038 = vst.msk [vmem:[%s172 + $0x208] sm:$0xff] %vm972, %v941
      %1039 = vst.msk [vmem:[%s172 + $0x210] sm:$0xff] %vm972, %v942
      %1040 = vst.msk [vmem:[%s172 + $0x218] sm:$0xff] %vm972, %v943
      %1041 = vst.msk [vmem:[%s172 + $0x220] sm:$0xff] %vm972, %v944
      %1042 = vst.msk [vmem:[%s172 + $0x228] sm:$0xff] %vm972, %v945
      %1043 = vst.msk [vmem:[%s172 + $0x230] sm:$0xff] %vm972, %v946
      %1044 = vst.msk [vmem:[%s172 + $0x238] sm:$0xff] %vm972, %v947
      %1045 = vst.msk [vmem:[%s172 + $0x240] sm:$0xff] %vm972, %v948
      %1046 = vst.msk [vmem:[%s172 + $0x248] sm:$0xff] %vm972, %v949
      %1047 = vst.msk [vmem:[%s172 + $0x250] sm:$0xff] %vm972, %v950
      %1048 = vst.msk [vmem:[%s172 + $0x258] sm:$0xff] %vm972, %v951
      %1049 = vst.msk [vmem:[%s172 + $0x260] sm:$0xff] %vm972, %v952
      %1050 = vst.msk [vmem:[%s172 + $0x268] sm:$0xff] %vm972, %v953
      %1051 = vst.msk [vmem:[%s172 + $0x270] sm:$0xff] %vm972, %v954
      %1052 = vst.msk [vmem:[%s172 + $0x278] sm:$0xff] %vm972, %v955
      %1053 = vst.msk [vmem:[%s172 + $0x280] sm:$0xff] %vm972, %v956
      %1054 = vst.msk [vmem:[%s172 + $0x288] sm:$0xff] %vm972, %v957
      %1055 = vst.msk [vmem:[%s172 + $0x290] sm:$0xff] %vm972, %v958
      %1056 = vst.msk [vmem:[%s172 + $0x298] sm:$0xff] %vm972, %v959
      %1057 = vst.msk [vmem:[%s172 + $0x2a0] sm:$0xff] %vm972, %v960
      %1058 = vst.msk [vmem:[%s172 + $0x2a8] sm:$0xff] %vm972, %v961
      %1059 = vst.msk [vmem:[%s172 + $0x2b0] sm:$0xff] %vm972, %v962
      %1060 = vst.msk [vmem:[%s172 + $0x2b8] sm:$0xff] %vm972, %v963
      %1061 = vst.msk [vmem:[%s172 + $0x2c0] sm:$0xff] %vm972, %v964
      %1062 = vst.msk [vmem:[%s172 + $0x2c8] sm:$0xff] %vm972, %v965
      %1063 = vst.msk [vmem:[%s172 + $0x2d0] sm:$0xff] %vm972, %v966
      %1064 = vst.msk [vmem:[%s172 + $0x2d8] sm:$0xff] %vm972, %v967
      %1065 = vst.msk [vmem:[%s172 + $0x2e0] sm:$0xff] %vm972, %v968
      %1066 = vst.msk [vmem:[%s172 + $0x2e8] sm:$0xff] %vm972, %v969
      %1067 = vst.msk [vmem:[%s172 + $0x2f0] sm:$0xff] %vm972, %v970
      %1068 = vst.msk [vmem:[%s172 + $0x2f8] sm:$0xff] %vm972, %v971
      %s1069 = smul.u32 96, %s14
      %p1070 = scmp.lt.s32.totalorder %s1069, 575
      %s1071 = scalar_select %p1070, %s1069, 575
      %s1072 = smul.addr %s1071, 8
      %s1073 = scalar_lea.vmem %s3, %s1072
      // Predicated region
      $region33: #{im2latex_forward.8} parent=31 // pred_check
        %p1074 = pneg %p100
      $region34: #{im2latex_forward.8} parent=31 // pred_check_branch
        %1076 = sbr.rel (%p1074) target = $region36
      $region35: #{im2latex_forward.8} parent=31 // pred_region
        %s1077 = smul.u32 96, %s14
      $region36: #{im2latex_forward.8} parent=31 // pred_fallthru
        _
    $region32: #{im2latex_forward.8} parent=5 // pred_fallthru
      _
    %p1078 = scmp.le.s32.totalorder 2, %s9
    // Predicated region
    $region37: #{im2latex_forward.8} parent=5 // pred_check
      %p1079 = pneg %p1078
    $region38: #{im2latex_forward.8} parent=5 // pred_check_branch
      %1081 = sbr.rel (%p1079) target = $region40
    $region39: #{im2latex_forward.8} parent=5 // pred_region
      %s1082 = ssub.s32 %s9, 2
      // Predicated region
      $region41: #{im2latex_forward.8} parent=39 // pred_check
        %p1083 = pneg %p106
      $region42: #{im2latex_forward.8} parent=39 // pred_check_branch
        %1085 = sbr.rel (%p1083) target = $region44
      $region43: #{im2latex_forward.8} parent=39 // pred_region
        %s1086 = smul.u32 96, %s15
        %p1087 = scmp.lt.s32.totalorder %s1086, 575
        %s1088 = scalar_select %p1087, %s1086, 575
        %s1089 = smul.addr %s1088, 8
        %s1090 = scalar_lea.vmem %s3, %s1089
      $region44: #{im2latex_forward.8} parent=39 // pred_fallthru
        _
    $region40: #{im2latex_forward.8} parent=5 // pred_fallthru
      _
  $region6: #{im2latex_forward.8} parent=0 // loop_footer
    %s13 = sadd.s32 1, %s9
  $region7: #{im2latex_forward.8} parent=0 // loop_footer_branch
    %8 = sbr.rel target = $region3
  $region8: #{im2latex_forward.8} parent=0 // loop_exit
    _

// kernel: im2latex_forward.9
$region0: #{im2latex_forward.9}
  #allocation0 [shape = 'u32[]', space=smem, size = 0x4, offset = 0x4, fixed_abs, tag = 'smem constant byte address 0x4 - core index']
  #allocation1 [shape = 'u32[72,128]{1,0:T(1,128)}', space=vmem, size = 0x9000, scoped, tag = 'internal scratch']
  %s0 = inlined_call_operand.vmem [shape: f32[1152,72], index: 0, kind: input, shape index: {}]
  %s1 = inlined_call_operand.vmem [shape: f32[72,16], index: 1, kind: input, shape index: {}]
  %s2 = inlined_call_operand.vmem [shape: f32[1,16], index: 2, kind: input, shape index: {}]
  %s3 = inlined_call_operand.vmem [shape: f32[1152,16], index: 3, kind: output, shape index: {}]
  %s4 = sld [smem:[#allocation0]]
  $region45: #{im2latex_forward.9} parent=0
    _
  %s6 = ssub.s32 1, %s4
  %s7 = scalar_select 0, %s6, %s4
  loop: start=0, step=1, limit=4
  $region2: #{im2latex_forward.9} parent=0 // loop_pre_header
    _
  $region3: #{im2latex_forward.9} parent=0 // loop_header
    %s9 = sphi 0, %s13
    %p10 = scmp.ge.s32.totalorder %s9, 4
    %s19 = sphi 0, %s21
    %s22 = sphi 0, %s19
    %s23 = sphi 0, %s22
    %s39 = sphi 0, %s23
    %s43 = sphi 0, %s43
    %s45 = sphi 0, %s43
    %s46 = sphi 0, %s45
    %s60 = sphi 0, %s46
    %s64 = sphi 0, %s64
    %s66 = sphi 0, %s64
    %s67 = sphi 0, %s66
    %s81 = sphi 0, %s67
    %s87 = sphi 0, %s89
    %s90 = sphi 0, %s87
    %s91 = sphi 0, %s90
    %s107 = sphi 0, %s91
  $region4: #{im2latex_forward.9} parent=0 // loop_header_branch
    %12 = sbr.rel (%p10) target = $region8
  $region5: #{im2latex_forward.9} parent=0 // loop_body
    %s14 = ssub.s32 %s9, 1
    %s15 = ssub.s32 %s9, 2
    %s16 = sadd.s32 %s9, 1
    %s17 = ssub.s32 %s9, %s16
    %p18 = scmp.eq.s32.totalorder %s17, 0
    %s20 = sadd.s32 %s19, 1
    %s21 = scalar_select %p18, %s19, %s20
    %p24 = pneg %p18
    %p25 = scmp.eq.s32.totalorder %s9, 1
    %p26 = por %p24, %p25
    %p27 = scmp.ne.s32.totalorder %s19, %s22
    %p28 = scmp.eq.s32.totalorder %s9, 0
    %p29 = por %p27, %p28
    %p30 = scmp.ne.s32.totalorder %s19, %s22
    %p31 = scmp.eq.s32.totalorder %s14, 1
    %p32 = por %p30, %p31
    %p33 = scmp.ne.s32.totalorder %s22, %s23
    %p34 = scmp.eq.s32.totalorder %s14, 0
    %p35 = por %p33, %p34
    %p36 = scmp.ne.s32.totalorder %s22, %s23
    %p37 = scmp.eq.s32.totalorder %s15, 1
    %p38 = por %p36, %p37
    %p40 = scmp.ne.s32.totalorder %s23, %s39
    %p41 = scmp.eq.s32.totalorder %s15, 0
    %p42 = por %p40, %p41
    %s44 = sadd.s32 %s43, 1
    %p47 = scmp.eq.s32.totalorder %s9, 1
    %p48 = scmp.ne.s32.totalorder %s43, %s45
    %p49 = scmp.eq.s32.totalorder %s9, 0
    %p50 = por %p48, %p49
    %p51 = scmp.ne.s32.totalorder %s43, %s45
    %p52 = scmp.eq.s32.totalorder %s14, 1
    %p53 = por %p51, %p52
    %p54 = scmp.ne.s32.totalorder %s45, %s46
    %p55 = scmp.eq.s32.totalorder %s14, 0
    %p56 = por %p54, %p55
    %p57 = scmp.ne.s32.totalorder %s45, %s46
    %p58 = scmp.eq.s32.totalorder %s15, 1
    %p59 = por %p57, %p58
    %p61 = scmp.ne.s32.totalorder %s46, %s60
    %p62 = scmp.eq.s32.totalorder %s15, 0
    %p63 = por %p61, %p62
    %s65 = sadd.s32 %s64, 1
    %p68 = scmp.eq.s32.totalorder %s9, 1
    %p69 = scmp.ne.s32.totalorder %s64, %s66
    %p70 = scmp.eq.s32.totalorder %s9, 0
    %p71 = por %p69, %p70
    %p72 = scmp.ne.s32.totalorder %s64, %s66
    %p73 = scmp.eq.s32.totalorder %s14, 1
    %p74 = por %p72, %p73
    %p75 = scmp.ne.s32.totalorder %s66, %s67
    %p76 = scmp.eq.s32.totalorder %s14, 0
    %p77 = por %p75, %p76
    %p78 = scmp.ne.s32.totalorder %s66, %s67
    %p79 = scmp.eq.s32.totalorder %s15, 1
    %p80 = por %p78, %p79
    %p82 = scmp.ne.s32.totalorder %s67, %s81
    %p83 = scmp.eq.s32.totalorder %s15, 0
    %p84 = por %p82, %p83
    %s85 = ssub.s32 %s9, %s16
    %p86 = scmp.eq.s32.totalorder %s85, 0
    %s88 = sadd.s32 %s87, 1
    %s89 = scalar_select %p86, %s87, %s88
    %p92 = pneg %p86
    %p93 = scmp.eq.s32.totalorder %s9, 1
    %p94 = por %p92, %p93
    %p95 = scmp.ne.s32.totalorder %s87, %s90
    %p96 = scmp.eq.s32.totalorder %s9, 0
    %p97 = por %p95, %p96
    %p98 = scmp.ne.s32.totalorder %s87, %s90
    %p99 = scmp.eq.s32.totalorder %s14, 1
    %p100 = por %p98, %p99
    %p101 = scmp.ne.s32.totalorder %s90, %s91
    %p102 = scmp.eq.s32.totalorder %s14, 0
    %p103 = por %p101, %p102
    %p104 = scmp.ne.s32.totalorder %s90, %s91
    %p105 = scmp.eq.s32.totalorder %s15, 1
    %p106 = por %p104, %p105
    %p108 = scmp.ne.s32.totalorder %s91, %s107
    %p109 = scmp.eq.s32.totalorder %s15, 0
    %p110 = por %p108, %p109
    %p111 = scmp.le.s32.totalorder 1, %s9
    %p112 = scmp.lt.s32.totalorder %s9, 3
    %p113 = pnand %p111, %p112
    %p114 = pneg %p113
    // Predicated region
    $region9: #{im2latex_forward.9} parent=5 // pred_check
      _
    $region10: #{im2latex_forward.9} parent=5 // pred_check_branch
      %116 = sbr.rel (%p113) target = $region12
    $region11: #{im2latex_forward.9} parent=5 // pred_region
      %s117 = ssub.s32 %s9, 1
      // Predicated region
      $region13: #{im2latex_forward.9} parent=11 // pred_check
        %p118 = pneg %p56
      $region14: #{im2latex_forward.9} parent=11 // pred_check_branch
        %120 = sbr.rel (%p118) target = $region16
      $region15: #{im2latex_forward.9} parent=11 // pred_region
        _
      $region16: #{im2latex_forward.9} parent=11 // pred_fallthru
        _
      // Predicated region
      $region17: #{im2latex_forward.9} parent=11 // pred_check
        %p121 = pneg %p77
      $region18: #{im2latex_forward.9} parent=11 // pred_check_branch
        %123 = sbr.rel (%p121) target = $region20
      $region19: #{im2latex_forward.9} parent=11 // pred_region
        _
      $region20: #{im2latex_forward.9} parent=11 // pred_fallthru
        _
    $region12: #{im2latex_forward.9} parent=5 // pred_fallthru
      _
    %p124 = scmp.lt.s32.totalorder %s9, 2
    // Predicated region
    $region21: #{im2latex_forward.9} parent=5 // pred_check
      %p125 = pneg %p124
    $region22: #{im2latex_forward.9} parent=5 // pred_check_branch
      %127 = sbr.rel (%p125) target = $region24
    $region23: #{im2latex_forward.9} parent=5 // pred_region
      // Predicated region
      $region25: #{im2latex_forward.9} parent=23 // pred_check
        %p128 = pneg %p29
      $region26: #{im2latex_forward.9} parent=23 // pred_check_branch
        %130 = sbr.rel (%p128) target = $region28
      $region27: #{im2latex_forward.9} parent=23 // pred_region
        %s131 = smul.u32 72, %s9
        %p132 = scmp.lt.s32.totalorder %s131, 143
        %s133 = scalar_select %p132, %s131, 143
        %s134 = smul.addr %s133, 8
        %s135 = scalar_lea.vmem %s0, %s134
        %s136 = smul.u32 72, %s9
      $region28: #{im2latex_forward.9} parent=23 // pred_fallthru
        _
    $region24: #{im2latex_forward.9} parent=5 // pred_fallthru
      _
    %p137 = scmp.le.s32.totalorder 1, %s9
    %p138 = scmp.lt.s32.totalorder %s9, 3
    %p139 = pnand %p137, %p138
    %p140 = pneg %p139
    // Predicated region
    $region29: #{im2latex_forward.9} parent=5 // pred_check
      _
    $region30: #{im2latex_forward.9} parent=5 // pred_check_branch
      %142 = sbr.rel (%p139) target = $region32
    $region31: #{im2latex_forward.9} parent=5 // pred_region
      %s143 = ssub.s32 %s9, 1
      %s144 = smul.u32 72, %s14
      %p145 = scmp.lt.s32.totalorder %s144, 143
      %s146 = scalar_select %p145, %s144, 143
      %s147 = smul.addr %s146, 8
      %s148 = scalar_lea.vmem %s0, %s147
      %p149 = pneg %p35
      %p150 = pneg %p32
      %p151 = pneg %p56
      %p152 = pneg %p53
      %p153 = pneg %p77
      %p154 = pneg %p74
      %p155 = pneg %p103
      %p156 = pneg %p100
      %s157 = smul.u32 72, %s14
      %p158 = scmp.lt.s32.totalorder %s157, 143
      %s159 = scalar_select %p158, %s157, 143
      %s160 = smul.addr %s159, 8
      %s161 = scalar_lea.vmem %s3, %s160
      %s162 = smul.u32 72, %s14
      %p163 = scmp.lt.s32.totalorder %s162, 143
      %s164 = scalar_select %p163, %s162, 143
      %s165 = smul.addr %s164, 8
      %s166 = scalar_lea.vmem %s0, %s165
      %s167 = smul.u32 72, %s14
      %s168 = smul.u32 72, %s14
      %p169 = scmp.lt.s32.totalorder %s168, 143
      %s170 = scalar_select %p169, %s168, 143
      %s171 = smul.addr %s170, 8
      %s172 = scalar_lea.vmem %s3, %s171
      %s173 = smul.u32 72, %s14
      %v174 = vld [vmem:[%s166] sm:$0xff]
      %v175 = vld [vmem:[%s166 + $0x8] sm:$0xff]
      %v176 = vld [vmem:[%s166 + $0x10] sm:$0xff]
      %v177 = vld [vmem:[%s166 + $0x18] sm:$0xff]
      %v178 = vld [vmem:[%s166 + $0x20] sm:$0xff]
      %v179 = vld [vmem:[%s166 + $0x28] sm:$0xff]
      %v180 = vld [vmem:[%s166 + $0x30] sm:$0xff]
      %v181 = vld [vmem:[%s166 + $0x38] sm:$0xff]
      %v182 = vld [vmem:[%s166 + $0x40] sm:$0xff]
      %v183 = vld [vmem:[%s166 + $0x48] sm:$0xff]
      %v184 = vld [vmem:[%s166 + $0x50] sm:$0xff]
      %v185 = vld [vmem:[%s166 + $0x58] sm:$0xff]
      %v186 = vld [vmem:[%s166 + $0x60] sm:$0xff]
      %v187 = vld [vmem:[%s166 + $0x68] sm:$0xff]
      %v188 = vld [vmem:[%s166 + $0x70] sm:$0xff]
      %v189 = vld [vmem:[%s166 + $0x78] sm:$0xff]
      %v190 = vld [vmem:[%s166 + $0x80] sm:$0xff]
      %v191 = vld [vmem:[%s166 + $0x88] sm:$0xff]
      %v192 = vld [vmem:[%s166 + $0x90] sm:$0xff]
      %v193 = vld [vmem:[%s166 + $0x98] sm:$0xff]
      %v194 = vld [vmem:[%s166 + $0xa0] sm:$0xff]
      %v195 = vld [vmem:[%s166 + $0xa8] sm:$0xff]
      %v196 = vld [vmem:[%s166 + $0xb0] sm:$0xff]
      %v197 = vld [vmem:[%s166 + $0xb8] sm:$0xff]
      %v198 = vld [vmem:[%s166 + $0xc0] sm:$0xff]
      %v199 = vld [vmem:[%s166 + $0xc8] sm:$0xff]
      %v200 = vld [vmem:[%s166 + $0xd0] sm:$0xff]
      %v201 = vld [vmem:[%s166 + $0xd8] sm:$0xff]
      %v202 = vld [vmem:[%s166 + $0xe0] sm:$0xff]
      %v203 = vld [vmem:[%s166 + $0xe8] sm:$0xff]
      %v204 = vld [vmem:[%s166 + $0xf0] sm:$0xff]
      %v205 = vld [vmem:[%s166 + $0xf8] sm:$0xff]
      %v206 = vld [vmem:[%s166 + $0x100] sm:$0xff]
      %v207 = vld [vmem:[%s166 + $0x108] sm:$0xff]
      %v208 = vld [vmem:[%s166 + $0x110] sm:$0xff]
      %v209 = vld [vmem:[%s166 + $0x118] sm:$0xff]
      %v210 = vld [vmem:[%s166 + $0x120] sm:$0xff]
      %v211 = vld [vmem:[%s166 + $0x128] sm:$0xff]
      %v212 = vld [vmem:[%s166 + $0x130] sm:$0xff]
      %v213 = vld [vmem:[%s166 + $0x138] sm:$0xff]
      %v214 = vld [vmem:[%s166 + $0x140] sm:$0xff]
      %v215 = vld [vmem:[%s166 + $0x148] sm:$0xff]
      %v216 = vld [vmem:[%s166 + $0x150] sm:$0xff]
      %v217 = vld [vmem:[%s166 + $0x158] sm:$0xff]
      %v218 = vld [vmem:[%s166 + $0x160] sm:$0xff]
      %v219 = vld [vmem:[%s166 + $0x168] sm:$0xff]
      %v220 = vld [vmem:[%s166 + $0x170] sm:$0xff]
      %v221 = vld [vmem:[%s166 + $0x178] sm:$0xff]
      %v222 = vld [vmem:[%s166 + $0x180] sm:$0xff]
      %v223 = vld [vmem:[%s166 + $0x188] sm:$0xff]
      %v224 = vld [vmem:[%s166 + $0x190] sm:$0xff]
      %v225 = vld [vmem:[%s166 + $0x198] sm:$0xff]
      %v226 = vld [vmem:[%s166 + $0x1a0] sm:$0xff]
      %v227 = vld [vmem:[%s166 + $0x1a8] sm:$0xff]
      %v228 = vld [vmem:[%s166 + $0x1b0] sm:$0xff]
      %v229 = vld [vmem:[%s166 + $0x1b8] sm:$0xff]
      %v230 = vld [vmem:[%s166 + $0x1c0] sm:$0xff]
      %v231 = vld [vmem:[%s166 + $0x1c8] sm:$0xff]
      %v232 = vld [vmem:[%s166 + $0x1d0] sm:$0xff]
      %v233 = vld [vmem:[%s166 + $0x1d8] sm:$0xff]
      %v234 = vld [vmem:[%s166 + $0x1e0] sm:$0xff]
      %v235 = vld [vmem:[%s166 + $0x1e8] sm:$0xff]
      %v236 = vld [vmem:[%s166 + $0x1f0] sm:$0xff]
      %v237 = vld [vmem:[%s166 + $0x1f8] sm:$0xff]
      %v238 = vld [vmem:[%s166 + $0x200] sm:$0xff]
      %v239 = vld [vmem:[%s166 + $0x208] sm:$0xff]
      %v240 = vld [vmem:[%s166 + $0x210] sm:$0xff]
      %v241 = vld [vmem:[%s166 + $0x218] sm:$0xff]
      %v242 = vld [vmem:[%s166 + $0x220] sm:$0xff]
      %v243 = vld [vmem:[%s166 + $0x228] sm:$0xff]
      %v244 = vld [vmem:[%s166 + $0x230] sm:$0xff]
      %v245 = vld [vmem:[%s166 + $0x238] sm:$0xff]
      %v246 = vld [vmem:[%s1] sm:$0xff]
      %v247 = vld [vmem:[%s1 + $0x8] sm:$0xff]
      %v248 = vld [vmem:[%s1 + $0x10] sm:$0xff]
      %v249 = vld [vmem:[%s1 + $0x18] sm:$0xff]
      %v250 = vld [vmem:[%s1 + $0x20] sm:$0xff]
      %v251 = vld [vmem:[%s1 + $0x28] sm:$0xff]
      %v252 = vld [vmem:[%s1 + $0x30] sm:$0xff]
      %v253 = vld [vmem:[%s1 + $0x38] sm:$0xff]
      %v254 = vld [vmem:[%s1 + $0x40] sm:$0xff]
      %v255 = vld [vmem:[%s2] sm:$0x1]
      %v257 = vperm.slane %v255, 0
      %vm259 = vcmask 588800
      %v261 = vsel %vm259, %v174, 0
      %v264 = vsel %vm259, %v175, 0
      %v267 = vsel %vm259, %v176, 0
      %v270 = vsel %vm259, %v177, 0
      %v273 = vsel %vm259, %v178, 0
      %v276 = vsel %vm259, %v179, 0
      %v279 = vsel %vm259, %v180, 0
      %v282 = vsel %vm259, %v181, 0
      %v285 = vsel %vm259, %v182, 0
      %v288 = vsel %vm259, %v183, 0
      %v291 = vsel %vm259, %v184, 0
      %v294 = vsel %vm259, %v185, 0
      %v297 = vsel %vm259, %v186, 0
      %v300 = vsel %vm259, %v187, 0
      %v303 = vsel %vm259, %v188, 0
      %v306 = vsel %vm259, %v189, 0
      %v309 = vsel %vm259, %v190, 0
      %v312 = vsel %vm259, %v191, 0
      %v315 = vsel %vm259, %v192, 0
      %v318 = vsel %vm259, %v193, 0
      %v321 = vsel %vm259, %v194, 0
      %v324 = vsel %vm259, %v195, 0
      %v327 = vsel %vm259, %v196, 0
      %v330 = vsel %vm259, %v197, 0
      %v333 = vsel %vm259, %v198, 0
      %v336 = vsel %vm259, %v199, 0
      %v339 = vsel %vm259, %v200, 0
      %v342 = vsel %vm259, %v201, 0
      %v345 = vsel %vm259, %v202, 0
      %v348 = vsel %vm259, %v203, 0
      %v351 = vsel %vm259, %v204, 0
      %v354 = vsel %vm259, %v205, 0
      %v357 = vsel %vm259, %v206, 0
      %v360 = vsel %vm259, %v207, 0
      %v363 = vsel %vm259, %v208, 0
      %v366 = vsel %vm259, %v209, 0
      %v369 = vsel %vm259, %v210, 0
      %v372 = vsel %vm259, %v211, 0
      %v375 = vsel %vm259, %v212, 0
      %v378 = vsel %vm259, %v213, 0
      %v381 = vsel %vm259, %v214, 0
      %v384 = vsel %vm259, %v215, 0
      %v387 = vsel %vm259, %v216, 0
      %v390 = vsel %vm259, %v217, 0
      %v393 = vsel %vm259, %v218, 0
      %v396 = vsel %vm259, %v219, 0
      %v399 = vsel %vm259, %v220, 0
      %v402 = vsel %vm259, %v221, 0
      %v405 = vsel %vm259, %v222, 0
      %v408 = vsel %vm259, %v223, 0
      %v411 = vsel %vm259, %v224, 0
      %v414 = vsel %vm259, %v225, 0
      %v417 = vsel %vm259, %v226, 0
      %v420 = vsel %vm259, %v227, 0
      %v423 = vsel %vm259, %v228, 0
      %v426 = vsel %vm259, %v229, 0
      %v429 = vsel %vm259, %v230, 0
      %v432 = vsel %vm259, %v231, 0
      %v435 = vsel %vm259, %v232, 0
      %v438 = vsel %vm259, %v233, 0
      %v441 = vsel %vm259, %v234, 0
      %v444 = vsel %vm259, %v235, 0
      %v447 = vsel %vm259, %v236, 0
      %v450 = vsel %vm259, %v237, 0
      %v453 = vsel %vm259, %v238, 0
      %v456 = vsel %vm259, %v239, 0
      %v459 = vsel %vm259, %v240, 0
      %v462 = vsel %vm259, %v241, 0
      %v465 = vsel %vm259, %v242, 0
      %v468 = vsel %vm259, %v243, 0
      %v471 = vsel %vm259, %v244, 0
      %v474 = vsel %vm259, %v245, 0
      %476 = vmatpush.msra.mxu0 0.0
      %477 = vmatpush.msra.mxu0 0.0
      %478 = vmatpush.msra.mxu0 0.0
      %479 = vmatpush.msra.mxu0 0.0
      %480 = vmatpush.msra.mxu0 0.0
      %481 = vmatpush.msra.mxu0 0.0
      %482 = vmatpush.msra.mxu0 0.0
      %483 = vmatpush.msra.mxu0 %v254
      %484 = vmatpush.msra.mxu0 %v253
      %485 = vmatpush.msra.mxu0 %v252
      %486 = vmatpush.msra.mxu0 %v251
      %487 = vmatpush.msra.mxu0 %v250
      %488 = vmatpush.msra.mxu0 %v249
      %489 = vmatpush.msra.mxu0 %v248
      %490 = vmatpush.msra.mxu0 %v247
      %491 = vmatpush.msra.mxu0 %v246
      %492 = vmatmul.f32.gmra.mxu0 %v261
      %v493 = vpop.f32.mrf.mxu0
      %v494 = vadd.f32 %v257, %v493
      %495 = vmatmul.f32.gmra.mxu0 %v264
      %v496 = vpop.f32.mrf.mxu0
      %v497 = vadd.f32 %v257, %v496
      %498 = vmatmul.f32.gmra.mxu0 %v267
      %v499 = vpop.f32.mrf.mxu0
      %v500 = vadd.f32 %v257, %v499
      %501 = vmatmul.f32.gmra.mxu0 %v270
      %v502 = vpop.f32.mrf.mxu0
      %v503 = vadd.f32 %v257, %v502
      %504 = vmatmul.f32.gmra.mxu0 %v273
      %v505 = vpop.f32.mrf.mxu0
      %v506 = vadd.f32 %v257, %v505
      %507 = vmatmul.f32.gmra.mxu0 %v276
      %v508 = vpop.f32.mrf.mxu0
      %v509 = vadd.f32 %v257, %v508
      %510 = vmatmul.f32.gmra.mxu0 %v279
      %v511 = vpop.f32.mrf.mxu0
      %v512 = vadd.f32 %v257, %v511
      %513 = vmatmul.f32.gmra.mxu0 %v282
      %v514 = vpop.f32.mrf.mxu0
      %v515 = vadd.f32 %v257, %v514
      %516 = vmatmul.f32.gmra.mxu0 %v285
      %v517 = vpop.f32.mrf.mxu0
      %v518 = vadd.f32 %v257, %v517
      %519 = vmatmul.f32.gmra.mxu0 %v288
      %v520 = vpop.f32.mrf.mxu0
      %v521 = vadd.f32 %v257, %v520
      %522 = vmatmul.f32.gmra.mxu0 %v291
      %v523 = vpop.f32.mrf.mxu0
      %v524 = vadd.f32 %v257, %v523
      %525 = vmatmul.f32.gmra.mxu0 %v294
      %v526 = vpop.f32.mrf.mxu0
      %v527 = vadd.f32 %v257, %v526
      %528 = vmatmul.f32.gmra.mxu0 %v297
      %v529 = vpop.f32.mrf.mxu0
      %v530 = vadd.f32 %v257, %v529
      %531 = vmatmul.f32.gmra.mxu0 %v300
      %v532 = vpop.f32.mrf.mxu0
      %v533 = vadd.f32 %v257, %v532
      %534 = vmatmul.f32.gmra.mxu0 %v303
      %v535 = vpop.f32.mrf.mxu0
      %v536 = vadd.f32 %v257, %v535
      %537 = vmatmul.f32.gmra.mxu0 %v306
      %v538 = vpop.f32.mrf.mxu0
      %v539 = vadd.f32 %v257, %v538
      %540 = vmatmul.f32.gmra.mxu0 %v309
      %v541 = vpop.f32.mrf.mxu0
      %v542 = vadd.f32 %v257, %v541
      %543 = vmatmul.f32.gmra.mxu0 %v312
      %v544 = vpop.f32.mrf.mxu0
      %v545 = vadd.f32 %v257, %v544
      %546 = vmatmul.f32.gmra.mxu0 %v315
      %v547 = vpop.f32.mrf.mxu0
      %v548 = vadd.f32 %v257, %v547
      %549 = vmatmul.f32.gmra.mxu0 %v318
      %v550 = vpop.f32.mrf.mxu0
      %v551 = vadd.f32 %v257, %v550
      %552 = vmatmul.f32.gmra.mxu0 %v321
      %v553 = vpop.f32.mrf.mxu0
      %v554 = vadd.f32 %v257, %v553
      %555 = vmatmul.f32.gmra.mxu0 %v324
      %v556 = vpop.f32.mrf.mxu0
      %v557 = vadd.f32 %v257, %v556
      %558 = vmatmul.f32.gmra.mxu0 %v327
      %v559 = vpop.f32.mrf.mxu0
      %v560 = vadd.f32 %v257, %v559
      %561 = vmatmul.f32.gmra.mxu0 %v330
      %v562 = vpop.f32.mrf.mxu0
      %v563 = vadd.f32 %v257, %v562
      %564 = vmatmul.f32.gmra.mxu0 %v333
      %v565 = vpop.f32.mrf.mxu0
      %v566 = vadd.f32 %v257, %v565
      %567 = vmatmul.f32.gmra.mxu0 %v336
      %v568 = vpop.f32.mrf.mxu0
      %v569 = vadd.f32 %v257, %v568
      %570 = vmatmul.f32.gmra.mxu0 %v339
      %v571 = vpop.f32.mrf.mxu0
      %v572 = vadd.f32 %v257, %v571
      %573 = vmatmul.f32.gmra.mxu0 %v342
      %v574 = vpop.f32.mrf.mxu0
      %v575 = vadd.f32 %v257, %v574
      %576 = vmatmul.f32.gmra.mxu0 %v345
      %v577 = vpop.f32.mrf.mxu0
      %v578 = vadd.f32 %v257, %v577
      %579 = vmatmul.f32.gmra.mxu0 %v348
      %v580 = vpop.f32.mrf.mxu0
      %v581 = vadd.f32 %v257, %v580
      %582 = vmatmul.f32.gmra.mxu0 %v351
      %v583 = vpop.f32.mrf.mxu0
      %v584 = vadd.f32 %v257, %v583
      %585 = vmatmul.f32.gmra.mxu0 %v354
      %v586 = vpop.f32.mrf.mxu0
      %v587 = vadd.f32 %v257, %v586
      %588 = vmatmul.f32.gmra.mxu0 %v357
      %v589 = vpop.f32.mrf.mxu0
      %v590 = vadd.f32 %v257, %v589
      %591 = vmatmul.f32.gmra.mxu0 %v360
      %v592 = vpop.f32.mrf.mxu0
      %v593 = vadd.f32 %v257, %v592
      %594 = vmatmul.f32.gmra.mxu0 %v363
      %v595 = vpop.f32.mrf.mxu0
      %v596 = vadd.f32 %v257, %v595
      %597 = vmatmul.f32.gmra.mxu0 %v366
      %v598 = vpop.f32.mrf.mxu0
      %v599 = vadd.f32 %v257, %v598
      %600 = vmatmul.f32.gmra.mxu0 %v369
      %v601 = vpop.f32.mrf.mxu0
      %v602 = vadd.f32 %v257, %v601
      %603 = vmatmul.f32.gmra.mxu0 %v372
      %v604 = vpop.f32.mrf.mxu0
      %v605 = vadd.f32 %v257, %v604
      %606 = vmatmul.f32.gmra.mxu0 %v375
      %v607 = vpop.f32.mrf.mxu0
      %v608 = vadd.f32 %v257, %v607
      %609 = vmatmul.f32.gmra.mxu0 %v378
      %v610 = vpop.f32.mrf.mxu0
      %v611 = vadd.f32 %v257, %v610
      %612 = vmatmul.f32.gmra.mxu0 %v381
      %v613 = vpop.f32.mrf.mxu0
      %v614 = vadd.f32 %v257, %v613
      %615 = vmatmul.f32.gmra.mxu0 %v384
      %v616 = vpop.f32.mrf.mxu0
      %v617 = vadd.f32 %v257, %v616
      %618 = vmatmul.f32.gmra.mxu0 %v387
      %v619 = vpop.f32.mrf.mxu0
      %v620 = vadd.f32 %v257, %v619
      %621 = vmatmul.f32.gmra.mxu0 %v390
      %v622 = vpop.f32.mrf.mxu0
      %v623 = vadd.f32 %v257, %v622
      %624 = vmatmul.f32.gmra.mxu0 %v393
      %v625 = vpop.f32.mrf.mxu0
      %v626 = vadd.f32 %v257, %v625
      %627 = vmatmul.f32.gmra.mxu0 %v396
      %v628 = vpop.f32.mrf.mxu0
      %v629 = vadd.f32 %v257, %v628
      %630 = vmatmul.f32.gmra.mxu0 %v399
      %v631 = vpop.f32.mrf.mxu0
      %v632 = vadd.f32 %v257, %v631
      %633 = vmatmul.f32.gmra.mxu0 %v402
      %v634 = vpop.f32.mrf.mxu0
      %v635 = vadd.f32 %v257, %v634
      %636 = vmatmul.f32.gmra.mxu0 %v405
      %v637 = vpop.f32.mrf.mxu0
      %v638 = vadd.f32 %v257, %v637
      %639 = vmatmul.f32.gmra.mxu0 %v408
      %v640 = vpop.f32.mrf.mxu0
      %v641 = vadd.f32 %v257, %v640
      %642 = vmatmul.f32.gmra.mxu0 %v411
      %v643 = vpop.f32.mrf.mxu0
      %v644 = vadd.f32 %v257, %v643
      %645 = vmatmul.f32.gmra.mxu0 %v414
      %v646 = vpop.f32.mrf.mxu0
      %v647 = vadd.f32 %v257, %v646
      %648 = vmatmul.f32.gmra.mxu0 %v417
      %v649 = vpop.f32.mrf.mxu0
      %v650 = vadd.f32 %v257, %v649
      %651 = vmatmul.f32.gmra.mxu0 %v420
      %v652 = vpop.f32.mrf.mxu0
      %v653 = vadd.f32 %v257, %v652
      %654 = vmatmul.f32.gmra.mxu0 %v423
      %v655 = vpop.f32.mrf.mxu0
      %v656 = vadd.f32 %v257, %v655
      %657 = vmatmul.f32.gmra.mxu0 %v426
      %v658 = vpop.f32.mrf.mxu0
      %v659 = vadd.f32 %v257, %v658
      %660 = vmatmul.f32.gmra.mxu0 %v429
      %v661 = vpop.f32.mrf.mxu0
      %v662 = vadd.f32 %v257, %v661
      %663 = vmatmul.f32.gmra.mxu0 %v432
      %v664 = vpop.f32.mrf.mxu0
      %v665 = vadd.f32 %v257, %v664
      %666 = vmatmul.f32.gmra.mxu0 %v435
      %v667 = vpop.f32.mrf.mxu0
      %v668 = vadd.f32 %v257, %v667
      %669 = vmatmul.f32.gmra.mxu0 %v438
      %v670 = vpop.f32.mrf.mxu0
      %v671 = vadd.f32 %v257, %v670
      %672 = vmatmul.f32.gmra.mxu0 %v441
      %v673 = vpop.f32.mrf.mxu0
      %v674 = vadd.f32 %v257, %v673
      %675 = vmatmul.f32.gmra.mxu0 %v444
      %v676 = vpop.f32.mrf.mxu0
      %v677 = vadd.f32 %v257, %v676
      %678 = vmatmul.f32.gmra.mxu0 %v447
      %v679 = vpop.f32.mrf.mxu0
      %v680 = vadd.f32 %v257, %v679
      %681 = vmatmul.f32.gmra.mxu0 %v450
      %v682 = vpop.f32.mrf.mxu0
      %v683 = vadd.f32 %v257, %v682
      %684 = vmatmul.f32.gmra.mxu0 %v453
      %v685 = vpop.f32.mrf.mxu0
      %v686 = vadd.f32 %v257, %v685
      %687 = vmatmul.f32.gmra.mxu0 %v456
      %v688 = vpop.f32.mrf.mxu0
      %v689 = vadd.f32 %v257, %v688
      %690 = vmatmul.f32.gmra.mxu0 %v459
      %v691 = vpop.f32.mrf.mxu0
      %v692 = vadd.f32 %v257, %v691
      %693 = vmatmul.f32.gmra.mxu0 %v462
      %v694 = vpop.f32.mrf.mxu0
      %v695 = vadd.f32 %v257, %v694
      %696 = vmatmul.f32.gmra.mxu0 %v465
      %v697 = vpop.f32.mrf.mxu0
      %v698 = vadd.f32 %v257, %v697
      %699 = vmatmul.f32.gmra.mxu0 %v468
      %v700 = vpop.f32.mrf.mxu0
      %v701 = vadd.f32 %v257, %v700
      %702 = vmatmul.f32.gmra.mxu0 %v471
      %v703 = vpop.f32.mrf.mxu0
      %v704 = vadd.f32 %v257, %v703
      %705 = vmatmul.f32.gmra.mxu0 %v474
      %v706 = vpop.f32.mrf.mxu0
      %v707 = vadd.f32 %v257, %v706
      %708 = vdwg.mxu0
      %v709 = vmax.f32 %v494, 0.0
      %v710 = vmax.f32 %v497, 0.0
      %v711 = vmax.f32 %v500, 0.0
      %v712 = vmax.f32 %v503, 0.0
      %v713 = vmax.f32 %v506, 0.0
      %v714 = vmax.f32 %v509, 0.0
      %v715 = vmax.f32 %v512, 0.0
      %v716 = vmax.f32 %v515, 0.0
      %v717 = vmax.f32 %v518, 0.0
      %v718 = vmax.f32 %v521, 0.0
      %v719 = vmax.f32 %v524, 0.0
      %v720 = vmax.f32 %v527, 0.0
      %v721 = vmax.f32 %v530, 0.0
      %v722 = vmax.f32 %v533, 0.0
      %v723 = vmax.f32 %v536, 0.0
      %v724 = vmax.f32 %v539, 0.0
      %v725 = vmax.f32 %v542, 0.0
      %v726 = vmax.f32 %v545, 0.0
      %v727 = vmax.f32 %v548, 0.0
      %v728 = vmax.f32 %v551, 0.0
      %v729 = vmax.f32 %v554, 0.0
      %v730 = vmax.f32 %v557, 0.0
      %v731 = vmax.f32 %v560, 0.0
      %v732 = vmax.f32 %v563, 0.0
      %v733 = vmax.f32 %v566, 0.0
      %v734 = vmax.f32 %v569, 0.0
      %v735 = vmax.f32 %v572, 0.0
      %v736 = vmax.f32 %v575, 0.0
      %v737 = vmax.f32 %v578, 0.0
      %v738 = vmax.f32 %v581, 0.0
      %v739 = vmax.f32 %v584, 0.0
      %v740 = vmax.f32 %v587, 0.0
      %v741 = vmax.f32 %v590, 0.0
      %v742 = vmax.f32 %v593, 0.0
      %v743 = vmax.f32 %v596, 0.0
      %v744 = vmax.f32 %v599, 0.0
      %v745 = vmax.f32 %v602, 0.0
      %v746 = vmax.f32 %v605, 0.0
      %v747 = vmax.f32 %v608, 0.0
      %v748 = vmax.f32 %v611, 0.0
      %v749 = vmax.f32 %v614, 0.0
      %v750 = vmax.f32 %v617, 0.0
      %v751 = vmax.f32 %v620, 0.0
      %v752 = vmax.f32 %v623, 0.0
      %v753 = vmax.f32 %v626, 0.0
      %v754 = vmax.f32 %v629, 0.0
      %v755 = vmax.f32 %v632, 0.0
      %v756 = vmax.f32 %v635, 0.0
      %v757 = vmax.f32 %v638, 0.0
      %v758 = vmax.f32 %v641, 0.0
      %v759 = vmax.f32 %v644, 0.0
      %v760 = vmax.f32 %v647, 0.0
      %v761 = vmax.f32 %v650, 0.0
      %v762 = vmax.f32 %v653, 0.0
      %v763 = vmax.f32 %v656, 0.0
      %v764 = vmax.f32 %v659, 0.0
      %v765 = vmax.f32 %v662, 0.0
      %v766 = vmax.f32 %v665, 0.0
      %v767 = vmax.f32 %v668, 0.0
      %v768 = vmax.f32 %v671, 0.0
      %v769 = vmax.f32 %v674, 0.0
      %v770 = vmax.f32 %v677, 0.0
      %v771 = vmax.f32 %v680, 0.0
      %v772 = vmax.f32 %v683, 0.0
      %v773 = vmax.f32 %v686, 0.0
      %v774 = vmax.f32 %v689, 0.0
      %v775 = vmax.f32 %v692, 0.0
      %v776 = vmax.f32 %v695, 0.0
      %v777 = vmax.f32 %v698, 0.0
      %v778 = vmax.f32 %v701, 0.0
      %v779 = vmax.f32 %v704, 0.0
      %v780 = vmax.f32 %v707, 0.0
      %vm781 = vcmask 130048
      %782 = vst.msk [vmem:[%s172] sm:$0xff] %vm781, %v709
      %783 = vst.msk [vmem:[%s172 + $0x8] sm:$0xff] %vm781, %v710
      %784 = vst.msk [vmem:[%s172 + $0x10] sm:$0xff] %vm781, %v711
      %785 = vst.msk [vmem:[%s172 + $0x18] sm:$0xff] %vm781, %v712
      %786 = vst.msk [vmem:[%s172 + $0x20] sm:$0xff] %vm781, %v713
      %787 = vst.msk [vmem:[%s172 + $0x28] sm:$0xff] %vm781, %v714
      %788 = vst.msk [vmem:[%s172 + $0x30] sm:$0xff] %vm781, %v715
      %789 = vst.msk [vmem:[%s172 + $0x38] sm:$0xff] %vm781, %v716
      %790 = vst.msk [vmem:[%s172 + $0x40] sm:$0xff] %vm781, %v717
      %791 = vst.msk [vmem:[%s172 + $0x48] sm:$0xff] %vm781, %v718
      %792 = vst.msk [vmem:[%s172 + $0x50] sm:$0xff] %vm781, %v719
      %793 = vst.msk [vmem:[%s172 + $0x58] sm:$0xff] %vm781, %v720
      %794 = vst.msk [vmem:[%s172 + $0x60] sm:$0xff] %vm781, %v721
      %795 = vst.msk [vmem:[%s172 + $0x68] sm:$0xff] %vm781, %v722
      %796 = vst.msk [vmem:[%s172 + $0x70] sm:$0xff] %vm781, %v723
      %797 = vst.msk [vmem:[%s172 + $0x78] sm:$0xff] %vm781, %v724
      %798 = vst.msk [vmem:[%s172 + $0x80] sm:$0xff] %vm781, %v725
      %799 = vst.msk [vmem:[%s172 + $0x88] sm:$0xff] %vm781, %v726
      %800 = vst.msk [vmem:[%s172 + $0x90] sm:$0xff] %vm781, %v727
      %801 = vst.msk [vmem:[%s172 + $0x98] sm:$0xff] %vm781, %v728
      %802 = vst.msk [vmem:[%s172 + $0xa0] sm:$0xff] %vm781, %v729
      %803 = vst.msk [vmem:[%s172 + $0xa8] sm:$0xff] %vm781, %v730
      %804 = vst.msk [vmem:[%s172 + $0xb0] sm:$0xff] %vm781, %v731
      %805 = vst.msk [vmem:[%s172 + $0xb8] sm:$0xff] %vm781, %v732
      %806 = vst.msk [vmem:[%s172 + $0xc0] sm:$0xff] %vm781, %v733
      %807 = vst.msk [vmem:[%s172 + $0xc8] sm:$0xff] %vm781, %v734
      %808 = vst.msk [vmem:[%s172 + $0xd0] sm:$0xff] %vm781, %v735
      %809 = vst.msk [vmem:[%s172 + $0xd8] sm:$0xff] %vm781, %v736
      %810 = vst.msk [vmem:[%s172 + $0xe0] sm:$0xff] %vm781, %v737
      %811 = vst.msk [vmem:[%s172 + $0xe8] sm:$0xff] %vm781, %v738
      %812 = vst.msk [vmem:[%s172 + $0xf0] sm:$0xff] %vm781, %v739
      %813 = vst.msk [vmem:[%s172 + $0xf8] sm:$0xff] %vm781, %v740
      %814 = vst.msk [vmem:[%s172 + $0x100] sm:$0xff] %vm781, %v741
      %815 = vst.msk [vmem:[%s172 + $0x108] sm:$0xff] %vm781, %v742
      %816 = vst.msk [vmem:[%s172 + $0x110] sm:$0xff] %vm781, %v743
      %817 = vst.msk [vmem:[%s172 + $0x118] sm:$0xff] %vm781, %v744
      %818 = vst.msk [vmem:[%s172 + $0x120] sm:$0xff] %vm781, %v745
      %819 = vst.msk [vmem:[%s172 + $0x128] sm:$0xff] %vm781, %v746
      %820 = vst.msk [vmem:[%s172 + $0x130] sm:$0xff] %vm781, %v747
      %821 = vst.msk [vmem:[%s172 + $0x138] sm:$0xff] %vm781, %v748
      %822 = vst.msk [vmem:[%s172 + $0x140] sm:$0xff] %vm781, %v749
      %823 = vst.msk [vmem:[%s172 + $0x148] sm:$0xff] %vm781, %v750
      %824 = vst.msk [vmem:[%s172 + $0x150] sm:$0xff] %vm781, %v751
      %825 = vst.msk [vmem:[%s172 + $0x158] sm:$0xff] %vm781, %v752
      %826 = vst.msk [vmem:[%s172 + $0x160] sm:$0xff] %vm781, %v753
      %827 = vst.msk [vmem:[%s172 + $0x168] sm:$0xff] %vm781, %v754
      %828 = vst.msk [vmem:[%s172 + $0x170] sm:$0xff] %vm781, %v755
      %829 = vst.msk [vmem:[%s172 + $0x178] sm:$0xff] %vm781, %v756
      %830 = vst.msk [vmem:[%s172 + $0x180] sm:$0xff] %vm781, %v757
      %831 = vst.msk [vmem:[%s172 + $0x188] sm:$0xff] %vm781, %v758
      %832 = vst.msk [vmem:[%s172 + $0x190] sm:$0xff] %vm781, %v759
      %833 = vst.msk [vmem:[%s172 + $0x198] sm:$0xff] %vm781, %v760
      %834 = vst.msk [vmem:[%s172 + $0x1a0] sm:$0xff] %vm781, %v761
      %835 = vst.msk [vmem:[%s172 + $0x1a8] sm:$0xff] %vm781, %v762
      %836 = vst.msk [vmem:[%s172 + $0x1b0] sm:$0xff] %vm781, %v763
      %837 = vst.msk [vmem:[%s172 + $0x1b8] sm:$0xff] %vm781, %v764
      %838 = vst.msk [vmem:[%s172 + $0x1c0] sm:$0xff] %vm781, %v765
      %839 = vst.msk [vmem:[%s172 + $0x1c8] sm:$0xff] %vm781, %v766
      %840 = vst.msk [vmem:[%s172 + $0x1d0] sm:$0xff] %vm781, %v767
      %841 = vst.msk [vmem:[%s172 + $0x1d8] sm:$0xff] %vm781, %v768
      %842 = vst.msk [vmem:[%s172 + $0x1e0] sm:$0xff] %vm781, %v769
      %843 = vst.msk [vmem:[%s172 + $0x1e8] sm:$0xff] %vm781, %v770
      %844 = vst.msk [vmem:[%s172 + $0x1f0] sm:$0xff] %vm781, %v771
      %845 = vst.msk [vmem:[%s172 + $0x1f8] sm:$0xff] %vm781, %v772
      %846 = vst.msk [vmem:[%s172 + $0x200] sm:$0xff] %vm781, %v773
      %847 = vst.msk [vmem:[%s172 + $0x208] sm:$0xff] %vm781, %v774
      %848 = vst.msk [vmem:[%s172 + $0x210] sm:$0xff] %vm781, %v775
      %849 = vst.msk [vmem:[%s172 + $0x218] sm:$0xff] %vm781, %v776
      %850 = vst.msk [vmem:[%s172 + $0x220] sm:$0xff] %vm781, %v777
      %851 = vst.msk [vmem:[%s172 + $0x228] sm:$0xff] %vm781, %v778
      %852 = vst.msk [vmem:[%s172 + $0x230] sm:$0xff] %vm781, %v779
      %853 = vst.msk [vmem:[%s172 + $0x238] sm:$0xff] %vm781, %v780
      %s854 = smul.u32 72, %s14
      %p855 = scmp.lt.s32.totalorder %s854, 143
      %s856 = scalar_select %p855, %s854, 143
      %s857 = smul.addr %s856, 8
      %s858 = scalar_lea.vmem %s3, %s857
      // Predicated region
      $region33: #{im2latex_forward.9} parent=31 // pred_check
        %p859 = pneg %p100
      $region34: #{im2latex_forward.9} parent=31 // pred_check_branch
        %861 = sbr.rel (%p859) target = $region36
      $region35: #{im2latex_forward.9} parent=31 // pred_region
        %s862 = smul.u32 72, %s14
      $region36: #{im2latex_forward.9} parent=31 // pred_fallthru
        _
    $region32: #{im2latex_forward.9} parent=5 // pred_fallthru
      _
    %p863 = scmp.le.s32.totalorder 2, %s9
    // Predicated region
    $region37: #{im2latex_forward.9} parent=5 // pred_check
      %p864 = pneg %p863
    $region38: #{im2latex_forward.9} parent=5 // pred_check_branch
      %866 = sbr.rel (%p864) target = $region40
    $region39: #{im2latex_forward.9} parent=5 // pred_region
      %s867 = ssub.s32 %s9, 2
      // Predicated region
      $region41: #{im2latex_forward.9} parent=39 // pred_check
        %p868 = pneg %p106
      $region42: #{im2latex_forward.9} parent=39 // pred_check_branch
        %870 = sbr.rel (%p868) target = $region44
      $region43: #{im2latex_forward.9} parent=39 // pred_region
        %s871 = smul.u32 72, %s15
        %p872 = scmp.lt.s32.totalorder %s871, 143
        %s873 = scalar_select %p872, %s871, 143
        %s874 = smul.addr %s873, 8
        %s875 = scalar_lea.vmem %s3, %s874
      $region44: #{im2latex_forward.9} parent=39 // pred_fallthru
        _
    $region40: #{im2latex_forward.9} parent=5 // pred_fallthru
      _
  $region6: #{im2latex_forward.9} parent=0 // loop_footer
    %s13 = sadd.s32 1, %s9
  $region7: #{im2latex_forward.9} parent=0 // loop_footer_branch
    %8 = sbr.rel target = $region3
  $region8: #{im2latex_forward.9} parent=0 // loop_exit
    _

// kernel: im2latex_forward.10
$region0: #{im2latex_forward.10}
  #allocation0 [shape = 'u32[]', space=smem, size = 0x4, offset = 0x4, fixed_abs, tag = 'smem constant byte address 0x4 - core index']
  #allocation1 [shape = 'u32[72,128]{1,0:T(1,128)}', space=vmem, size = 0x9000, scoped, tag = 'internal scratch']
  %s0 = inlined_call_operand.vmem [shape: f32[288,144], index: 0, kind: input, shape index: {}]
  %s1 = inlined_call_operand.vmem [shape: f32[144,32], index: 1, kind: input, shape index: {}]
  %s2 = inlined_call_operand.vmem [shape: f32[1,32], index: 2, kind: input, shape index: {}]
  %s3 = inlined_call_operand.vmem [shape: f32[1,32], index: 3, kind: input, shape index: {}]
  %s4 = inlined_call_operand.vmem [shape: f32[1,32], index: 4, kind: input, shape index: {}]
  %s5 = inlined_call_operand.vmem [shape: f32[288,32], index: 5, kind: output, shape index: {}]
  %s6 = sld [smem:[#allocation0]]
  $region30: #{im2latex_forward.10} parent=0
    _
  %s8 = ssub.s32 1, %s6
  %s9 = scalar_select 0, %s8, %s6
  // Predicated region
  $region2: #{im2latex_forward.10} parent=0 // pred_check
    _
  $region3: #{im2latex_forward.10} parent=0 // pred_check_branch
    %11 = sbr.rel (0) target = $region5
  $region4: #{im2latex_forward.10} parent=0 // pred_region
    _
  $region5: #{im2latex_forward.10} parent=0 // pred_fallthru
    _
  // Predicated region
  $region6: #{im2latex_forward.10} parent=0 // pred_check
    _
  $region7: #{im2latex_forward.10} parent=0 // pred_check_branch
    %13 = sbr.rel (0) target = $region9
  $region8: #{im2latex_forward.10} parent=0 // pred_region
    _
  $region9: #{im2latex_forward.10} parent=0 // pred_fallthru
    _
  // Predicated region
  $region10: #{im2latex_forward.10} parent=0 // pred_check
    _
  $region11: #{im2latex_forward.10} parent=0 // pred_check_branch
    %15 = sbr.rel (0) target = $region13
  $region12: #{im2latex_forward.10} parent=0 // pred_region
    _
  $region13: #{im2latex_forward.10} parent=0 // pred_fallthru
    _
  // Predicated region
  $region14: #{im2latex_forward.10} parent=0 // pred_check
    _
  $region15: #{im2latex_forward.10} parent=0 // pred_check_branch
    %17 = sbr.rel (0) target = $region17
  $region16: #{im2latex_forward.10} parent=0 // pred_region
    _
  $region17: #{im2latex_forward.10} parent=0 // pred_fallthru
    _
  // Predicated region
  $region18: #{im2latex_forward.10} parent=0 // pred_check
    _
  $region19: #{im2latex_forward.10} parent=0 // pred_check_branch
    %19 = sbr.rel (0) target = $region21
  $region20: #{im2latex_forward.10} parent=0 // pred_region
    _
  $region21: #{im2latex_forward.10} parent=0 // pred_fallthru
    _
  %v20 = vld [vmem:[%s0] sm:$0xff]
  %v21 = vld [vmem:[%s0 + $0x8] sm:$0xff]
  %v22 = vld [vmem:[%s0 + $0x10] sm:$0xff]
  %v23 = vld [vmem:[%s0 + $0x18] sm:$0xff]
  %v24 = vld [vmem:[%s0 + $0x20] sm:$0xff]
  %v25 = vld [vmem:[%s0 + $0x28] sm:$0xff]
  %v26 = vld [vmem:[%s0 + $0x30] sm:$0xff]
  %v27 = vld [vmem:[%s0 + $0x38] sm:$0xff]
  %v28 = vld [vmem:[%s0 + $0x40] sm:$0xff]
  %v29 = vld [vmem:[%s0 + $0x48] sm:$0xff]
  %v30 = vld [vmem:[%s0 + $0x50] sm:$0xff]
  %v31 = vld [vmem:[%s0 + $0x58] sm:$0xff]
  %v32 = vld [vmem:[%s0 + $0x60] sm:$0xff]
  %v33 = vld [vmem:[%s0 + $0x68] sm:$0xff]
  %v34 = vld [vmem:[%s0 + $0x70] sm:$0xff]
  %v35 = vld [vmem:[%s0 + $0x78] sm:$0xff]
  %v36 = vld [vmem:[%s0 + $0x80] sm:$0xff]
  %v37 = vld [vmem:[%s0 + $0x88] sm:$0xff]
  %v38 = vld [vmem:[%s0 + $0x90] sm:$0xff]
  %v39 = vld [vmem:[%s0 + $0x98] sm:$0xff]
  %v40 = vld [vmem:[%s0 + $0xa0] sm:$0xff]
  %v41 = vld [vmem:[%s0 + $0xa8] sm:$0xff]
  %v42 = vld [vmem:[%s0 + $0xb0] sm:$0xff]
  %v43 = vld [vmem:[%s0 + $0xb8] sm:$0xff]
  %v44 = vld [vmem:[%s0 + $0xc0] sm:$0xff]
  %v45 = vld [vmem:[%s0 + $0xc8] sm:$0xff]
  %v46 = vld [vmem:[%s0 + $0xd0] sm:$0xff]
  %v47 = vld [vmem:[%s0 + $0xd8] sm:$0xff]
  %v48 = vld [vmem:[%s0 + $0xe0] sm:$0xff]
  %v49 = vld [vmem:[%s0 + $0xe8] sm:$0xff]
  %v50 = vld [vmem:[%s0 + $0xf0] sm:$0xff]
  %v51 = vld [vmem:[%s0 + $0xf8] sm:$0xff]
  %v52 = vld [vmem:[%s0 + $0x100] sm:$0xff]
  %v53 = vld [vmem:[%s0 + $0x108] sm:$0xff]
  %v54 = vld [vmem:[%s0 + $0x110] sm:$0xff]
  %v55 = vld [vmem:[%s0 + $0x118] sm:$0xff]
  %v56 = vld [vmem:[%s0 + $0x120] sm:$0xff]
  %v57 = vld [vmem:[%s0 + $0x128] sm:$0xff]
  %v58 = vld [vmem:[%s0 + $0x130] sm:$0xff]
  %v59 = vld [vmem:[%s0 + $0x138] sm:$0xff]
  %v60 = vld [vmem:[%s0 + $0x140] sm:$0xff]
  %v61 = vld [vmem:[%s0 + $0x148] sm:$0xff]
  %v62 = vld [vmem:[%s0 + $0x150] sm:$0xff]
  %v63 = vld [vmem:[%s0 + $0x158] sm:$0xff]
  %v64 = vld [vmem:[%s0 + $0x160] sm:$0xff]
  %v65 = vld [vmem:[%s0 + $0x168] sm:$0xff]
  %v66 = vld [vmem:[%s0 + $0x170] sm:$0xff]
  %v67 = vld [vmem:[%s0 + $0x178] sm:$0xff]
  %v68 = vld [vmem:[%s0 + $0x180] sm:$0xff]
  %v69 = vld [vmem:[%s0 + $0x188] sm:$0xff]
  %v70 = vld [vmem:[%s0 + $0x190] sm:$0xff]
  %v71 = vld [vmem:[%s0 + $0x198] sm:$0xff]
  %v72 = vld [vmem:[%s0 + $0x1a0] sm:$0xff]
  %v73 = vld [vmem:[%s0 + $0x1a8] sm:$0xff]
  %v74 = vld [vmem:[%s0 + $0x1b0] sm:$0xff]
  %v75 = vld [vmem:[%s0 + $0x1b8] sm:$0xff]
  %v76 = vld [vmem:[%s0 + $0x1c0] sm:$0xff]
  %v77 = vld [vmem:[%s0 + $0x1c8] sm:$0xff]
  %v78 = vld [vmem:[%s0 + $0x1d0] sm:$0xff]
  %v79 = vld [vmem:[%s0 + $0x1d8] sm:$0xff]
  %v80 = vld [vmem:[%s0 + $0x1e0] sm:$0xff]
  %v81 = vld [vmem:[%s0 + $0x1e8] sm:$0xff]
  %v82 = vld [vmem:[%s0 + $0x1f0] sm:$0xff]
  %v83 = vld [vmem:[%s0 + $0x1f8] sm:$0xff]
  %v84 = vld [vmem:[%s0 + $0x200] sm:$0xff]
  %v85 = vld [vmem:[%s0 + $0x208] sm:$0xff]
  %v86 = vld [vmem:[%s0 + $0x210] sm:$0xff]
  %v87 = vld [vmem:[%s0 + $0x218] sm:$0xff]
  %v88 = vld [vmem:[%s0 + $0x220] sm:$0xff]
  %v89 = vld [vmem:[%s0 + $0x228] sm:$0xff]
  %v90 = vld [vmem:[%s0 + $0x230] sm:$0xff]
  %v91 = vld [vmem:[%s0 + $0x238] sm:$0xff]
  %v92 = vld [vmem:[%s1] sm:$0xff]
  %v93 = vld [vmem:[%s1 + $0x8] sm:$0xff]
  %v94 = vld [vmem:[%s1 + $0x10] sm:$0xff]
  %v95 = vld [vmem:[%s1 + $0x18] sm:$0xff]
  %v96 = vld [vmem:[%s1 + $0x20] sm:$0xff]
  %v97 = vld [vmem:[%s1 + $0x28] sm:$0xff]
  %v98 = vld [vmem:[%s1 + $0x30] sm:$0xff]
  %v99 = vld [vmem:[%s1 + $0x38] sm:$0xff]
  %v100 = vld [vmem:[%s1 + $0x40] sm:$0xff]
  %v101 = vld [vmem:[%s1 + $0x48] sm:$0xff]
  %v102 = vld [vmem:[%s1 + $0x50] sm:$0xff]
  %v103 = vld [vmem:[%s1 + $0x58] sm:$0xff]
  %v104 = vld [vmem:[%s1 + $0x60] sm:$0xff]
  %v105 = vld [vmem:[%s1 + $0x68] sm:$0xff]
  %v106 = vld [vmem:[%s1 + $0x70] sm:$0xff]
  %v107 = vld [vmem:[%s1 + $0x78] sm:$0xff]
  %v108 = vld [vmem:[%s1 + $0x80] sm:$0xff]
  %v109 = vld [vmem:[%s1 + $0x88] sm:$0xff]
  %v110 = vld [vmem:[%s2] sm:$0x1]
  %v112 = vperm.slane %v110, 0
  %vm114 = vcmask 130048
  %v116 = vsel %vm114, %v21, 0
  %v119 = vsel %vm114, %v23, 0
  %v122 = vsel %vm114, %v25, 0
  %v125 = vsel %vm114, %v27, 0
  %v128 = vsel %vm114, %v29, 0
  %v131 = vsel %vm114, %v31, 0
  %v134 = vsel %vm114, %v33, 0
  %v137 = vsel %vm114, %v35, 0
  %v140 = vsel %vm114, %v37, 0
  %v143 = vsel %vm114, %v39, 0
  %v146 = vsel %vm114, %v41, 0
  %v149 = vsel %vm114, %v43, 0
  %v152 = vsel %vm114, %v45, 0
  %v155 = vsel %vm114, %v47, 0
  %v158 = vsel %vm114, %v49, 0
  %v161 = vsel %vm114, %v51, 0
  %v164 = vsel %vm114, %v53, 0
  %v167 = vsel %vm114, %v55, 0
  %v170 = vsel %vm114, %v57, 0
  %v173 = vsel %vm114, %v59, 0
  %v176 = vsel %vm114, %v61, 0
  %v179 = vsel %vm114, %v63, 0
  %v182 = vsel %vm114, %v65, 0
  %v185 = vsel %vm114, %v67, 0
  %v188 = vsel %vm114, %v69, 0
  %v191 = vsel %vm114, %v71, 0
  %v194 = vsel %vm114, %v73, 0
  %v197 = vsel %vm114, %v75, 0
  %v200 = vsel %vm114, %v77, 0
  %v203 = vsel %vm114, %v79, 0
  %v206 = vsel %vm114, %v81, 0
  %v209 = vsel %vm114, %v83, 0
  %v212 = vsel %vm114, %v85, 0
  %v215 = vsel %vm114, %v87, 0
  %v218 = vsel %vm114, %v89, 0
  %v221 = vsel %vm114, %v91, 0
  %223 = vmatpush.msra.mxu0 %v107
  %224 = vmatpush.msra.mxu0 %v106
  %225 = vmatpush.msra.mxu0 %v105
  %226 = vmatpush.msra.mxu0 %v104
  %227 = vmatpush.msra.mxu0 %v103
  %228 = vmatpush.msra.mxu0 %v102
  %229 = vmatpush.msra.mxu0 %v101
  %230 = vmatpush.msra.mxu0 %v100
  %231 = vmatpush.msra.mxu0 %v99
  %232 = vmatpush.msra.mxu0 %v98
  %233 = vmatpush.msra.mxu0 %v97
  %234 = vmatpush.msra.mxu0 %v96
  %235 = vmatpush.msra.mxu0 %v95
  %236 = vmatpush.msra.mxu0 %v94
  %237 = vmatpush.msra.mxu0 %v93
  %238 = vmatpush.msra.mxu0 %v92
  %239 = vmatmul.f32.gmra.mxu0 %v20
  %v240 = vpop.f32.mrf.mxu0
  %v241 = vadd.f32 %v112, %v240
  %242 = vmatmul.f32.gmra.mxu0 %v22
  %v243 = vpop.f32.mrf.mxu0
  %v244 = vadd.f32 %v112, %v243
  %245 = vmatmul.f32.gmra.mxu0 %v24
  %v246 = vpop.f32.mrf.mxu0
  %v247 = vadd.f32 %v112, %v246
  %248 = vmatmul.f32.gmra.mxu0 %v26
  %v249 = vpop.f32.mrf.mxu0
  %v250 = vadd.f32 %v112, %v249
  %251 = vmatmul.f32.gmra.mxu0 %v28
  %v252 = vpop.f32.mrf.mxu0
  %v253 = vadd.f32 %v112, %v252
  %254 = vmatmul.f32.gmra.mxu0 %v30
  %v255 = vpop.f32.mrf.mxu0
  %v256 = vadd.f32 %v112, %v255
  %257 = vmatmul.f32.gmra.mxu0 %v32
  %v258 = vpop.f32.mrf.mxu0
  %v259 = vadd.f32 %v112, %v258
  %260 = vmatmul.f32.gmra.mxu0 %v34
  %v261 = vpop.f32.mrf.mxu0
  %v262 = vadd.f32 %v112, %v261
  %263 = vmatmul.f32.gmra.mxu0 %v36
  %v264 = vpop.f32.mrf.mxu0
  %v265 = vadd.f32 %v112, %v264
  %266 = vmatmul.f32.gmra.mxu0 %v38
  %v267 = vpop.f32.mrf.mxu0
  %v268 = vadd.f32 %v112, %v267
  %269 = vmatmul.f32.gmra.mxu0 %v40
  %v270 = vpop.f32.mrf.mxu0
  %v271 = vadd.f32 %v112, %v270
  %272 = vmatmul.f32.gmra.mxu0 %v42
  %v273 = vpop.f32.mrf.mxu0
  %v274 = vadd.f32 %v112, %v273
  %275 = vmatmul.f32.gmra.mxu0 %v44
  %v276 = vpop.f32.mrf.mxu0
  %v277 = vadd.f32 %v112, %v276
  %278 = vmatmul.f32.gmra.mxu0 %v46
  %v279 = vpop.f32.mrf.mxu0
  %v280 = vadd.f32 %v112, %v279
  %281 = vmatmul.f32.gmra.mxu0 %v48
  %v282 = vpop.f32.mrf.mxu0
  %v283 = vadd.f32 %v112, %v282
  %284 = vmatmul.f32.gmra.mxu0 %v50
  %v285 = vpop.f32.mrf.mxu0
  %v286 = vadd.f32 %v112, %v285
  %287 = vmatmul.f32.gmra.mxu0 %v52
  %v288 = vpop.f32.mrf.mxu0
  %v289 = vadd.f32 %v112, %v288
  %290 = vmatmul.f32.gmra.mxu0 %v54
  %v291 = vpop.f32.mrf.mxu0
  %v292 = vadd.f32 %v112, %v291
  %293 = vmatmul.f32.gmra.mxu0 %v56
  %v294 = vpop.f32.mrf.mxu0
  %v295 = vadd.f32 %v112, %v294
  %296 = vmatmul.f32.gmra.mxu0 %v58
  %v297 = vpop.f32.mrf.mxu0
  %v298 = vadd.f32 %v112, %v297
  %299 = vmatmul.f32.gmra.mxu0 %v60
  %v300 = vpop.f32.mrf.mxu0
  %v301 = vadd.f32 %v112, %v300
  %302 = vmatmul.f32.gmra.mxu0 %v62
  %v303 = vpop.f32.mrf.mxu0
  %v304 = vadd.f32 %v112, %v303
  %305 = vmatmul.f32.gmra.mxu0 %v64
  %v306 = vpop.f32.mrf.mxu0
  %v307 = vadd.f32 %v112, %v306
  %308 = vmatmul.f32.gmra.mxu0 %v66
  %v309 = vpop.f32.mrf.mxu0
  %v310 = vadd.f32 %v112, %v309
  %311 = vmatmul.f32.gmra.mxu0 %v68
  %v312 = vpop.f32.mrf.mxu0
  %v313 = vadd.f32 %v112, %v312
  %314 = vmatmul.f32.gmra.mxu0 %v70
  %v315 = vpop.f32.mrf.mxu0
  %v316 = vadd.f32 %v112, %v315
  %317 = vmatmul.f32.gmra.mxu0 %v72
  %v318 = vpop.f32.mrf.mxu0
  %v319 = vadd.f32 %v112, %v318
  %320 = vmatmul.f32.gmra.mxu0 %v74
  %v321 = vpop.f32.mrf.mxu0
  %v322 = vadd.f32 %v112, %v321
  %323 = vmatmul.f32.gmra.mxu0 %v76
  %v324 = vpop.f32.mrf.mxu0
  %v325 = vadd.f32 %v112, %v324
  %326 = vmatmul.f32.gmra.mxu0 %v78
  %v327 = vpop.f32.mrf.mxu0
  %v328 = vadd.f32 %v112, %v327
  %329 = vmatmul.f32.gmra.mxu0 %v80
  %v330 = vpop.f32.mrf.mxu0
  %v331 = vadd.f32 %v112, %v330
  %332 = vmatmul.f32.gmra.mxu0 %v82
  %v333 = vpop.f32.mrf.mxu0
  %v334 = vadd.f32 %v112, %v333
  %335 = vmatmul.f32.gmra.mxu0 %v84
  %v336 = vpop.f32.mrf.mxu0
  %v337 = vadd.f32 %v112, %v336
  %338 = vmatmul.f32.gmra.mxu0 %v86
  %v339 = vpop.f32.mrf.mxu0
  %v340 = vadd.f32 %v112, %v339
  %341 = vmatmul.f32.gmra.mxu0 %v88
  %v342 = vpop.f32.mrf.mxu0
  %v343 = vadd.f32 %v112, %v342
  %344 = vmatmul.f32.gmra.mxu0 %v90
  %v345 = vpop.f32.mrf.mxu0
  %v346 = vadd.f32 %v112, %v345
  %347 = vdwg.mxu0
  %348 = vmatpush.msra.mxu0 0.0
  %349 = vmatpush.msra.mxu0 0.0
  %350 = vmatpush.msra.mxu0 0.0
  %351 = vmatpush.msra.mxu0 0.0
  %352 = vmatpush.msra.mxu0 0.0
  %353 = vmatpush.msra.mxu0 0.0
  %354 = vmatpush.msra.mxu0 0.0
  %355 = vmatpush.msra.mxu0 0.0
  %356 = vmatpush.msra.mxu0 0.0
  %357 = vmatpush.msra.mxu0 0.0
  %358 = vmatpush.msra.mxu0 0.0
  %359 = vmatpush.msra.mxu0 0.0
  %360 = vmatpush.msra.mxu0 0.0
  %361 = vmatpush.msra.mxu0 0.0
  %362 = vmatpush.msra.mxu0 %v109
  %363 = vmatpush.msra.mxu0 %v108
  %364 = vmatmul.f32.gmra.mxu0 %v116
  %v365 = vpop.f32.mrf.mxu0
  %v366 = vadd.f32 %v241, %v365
  %367 = vmatmul.f32.gmra.mxu0 %v119
  %v368 = vpop.f32.mrf.mxu0
  %v369 = vadd.f32 %v244, %v368
  %370 = vmatmul.f32.gmra.mxu0 %v122
  %v371 = vpop.f32.mrf.mxu0
  %v372 = vadd.f32 %v247, %v371
  %373 = vmatmul.f32.gmra.mxu0 %v125
  %v374 = vpop.f32.mrf.mxu0
  %v375 = vadd.f32 %v250, %v374
  %376 = vmatmul.f32.gmra.mxu0 %v128
  %v377 = vpop.f32.mrf.mxu0
  %v378 = vadd.f32 %v253, %v377
  %379 = vmatmul.f32.gmra.mxu0 %v131
  %v380 = vpop.f32.mrf.mxu0
  %v381 = vadd.f32 %v256, %v380
  %382 = vmatmul.f32.gmra.mxu0 %v134
  %v383 = vpop.f32.mrf.mxu0
  %v384 = vadd.f32 %v259, %v383
  %385 = vmatmul.f32.gmra.mxu0 %v137
  %v386 = vpop.f32.mrf.mxu0
  %v387 = vadd.f32 %v262, %v386
  %388 = vmatmul.f32.gmra.mxu0 %v140
  %v389 = vpop.f32.mrf.mxu0
  %v390 = vadd.f32 %v265, %v389
  %391 = vmatmul.f32.gmra.mxu0 %v143
  %v392 = vpop.f32.mrf.mxu0
  %v393 = vadd.f32 %v268, %v392
  %394 = vmatmul.f32.gmra.mxu0 %v146
  %v395 = vpop.f32.mrf.mxu0
  %v396 = vadd.f32 %v271, %v395
  %397 = vmatmul.f32.gmra.mxu0 %v149
  %v398 = vpop.f32.mrf.mxu0
  %v399 = vadd.f32 %v274, %v398
  %400 = vmatmul.f32.gmra.mxu0 %v152
  %v401 = vpop.f32.mrf.mxu0
  %v402 = vadd.f32 %v277, %v401
  %403 = vmatmul.f32.gmra.mxu0 %v155
  %v404 = vpop.f32.mrf.mxu0
  %v405 = vadd.f32 %v280, %v404
  %406 = vmatmul.f32.gmra.mxu0 %v158
  %v407 = vpop.f32.mrf.mxu0
  %v408 = vadd.f32 %v283, %v407
  %409 = vmatmul.f32.gmra.mxu0 %v161
  %v410 = vpop.f32.mrf.mxu0
  %v411 = vadd.f32 %v286, %v410
  %412 = vmatmul.f32.gmra.mxu0 %v164
  %v413 = vpop.f32.mrf.mxu0
  %v414 = vadd.f32 %v289, %v413
  %415 = vmatmul.f32.gmra.mxu0 %v167
  %v416 = vpop.f32.mrf.mxu0
  %v417 = vadd.f32 %v292, %v416
  %418 = vmatmul.f32.gmra.mxu0 %v170
  %v419 = vpop.f32.mrf.mxu0
  %v420 = vadd.f32 %v295, %v419
  %421 = vmatmul.f32.gmra.mxu0 %v173
  %v422 = vpop.f32.mrf.mxu0
  %v423 = vadd.f32 %v298, %v422
  %424 = vmatmul.f32.gmra.mxu0 %v176
  %v425 = vpop.f32.mrf.mxu0
  %v426 = vadd.f32 %v301, %v425
  %427 = vmatmul.f32.gmra.mxu0 %v179
  %v428 = vpop.f32.mrf.mxu0
  %v429 = vadd.f32 %v304, %v428
  %430 = vmatmul.f32.gmra.mxu0 %v182
  %v431 = vpop.f32.mrf.mxu0
  %v432 = vadd.f32 %v307, %v431
  %433 = vmatmul.f32.gmra.mxu0 %v185
  %v434 = vpop.f32.mrf.mxu0
  %v435 = vadd.f32 %v310, %v434
  %436 = vmatmul.f32.gmra.mxu0 %v188
  %v437 = vpop.f32.mrf.mxu0
  %v438 = vadd.f32 %v313, %v437
  %439 = vmatmul.f32.gmra.mxu0 %v191
  %v440 = vpop.f32.mrf.mxu0
  %v441 = vadd.f32 %v316, %v440
  %442 = vmatmul.f32.gmra.mxu0 %v194
  %v443 = vpop.f32.mrf.mxu0
  %v444 = vadd.f32 %v319, %v443
  %445 = vmatmul.f32.gmra.mxu0 %v197
  %v446 = vpop.f32.mrf.mxu0
  %v447 = vadd.f32 %v322, %v446
  %448 = vmatmul.f32.gmra.mxu0 %v200
  %v449 = vpop.f32.mrf.mxu0
  %v450 = vadd.f32 %v325, %v449
  %451 = vmatmul.f32.gmra.mxu0 %v203
  %v452 = vpop.f32.mrf.mxu0
  %v453 = vadd.f32 %v328, %v452
  %454 = vmatmul.f32.gmra.mxu0 %v206
  %v455 = vpop.f32.mrf.mxu0
  %v456 = vadd.f32 %v331, %v455
  %457 = vmatmul.f32.gmra.mxu0 %v209
  %v458 = vpop.f32.mrf.mxu0
  %v459 = vadd.f32 %v334, %v458
  %460 = vmatmul.f32.gmra.mxu0 %v212
  %v461 = vpop.f32.mrf.mxu0
  %v462 = vadd.f32 %v337, %v461
  %463 = vmatmul.f32.gmra.mxu0 %v215
  %v464 = vpop.f32.mrf.mxu0
  %v465 = vadd.f32 %v340, %v464
  %466 = vmatmul.f32.gmra.mxu0 %v218
  %v467 = vpop.f32.mrf.mxu0
  %v468 = vadd.f32 %v343, %v467
  %469 = vmatmul.f32.gmra.mxu0 %v221
  %v470 = vpop.f32.mrf.mxu0
  %v471 = vadd.f32 %v346, %v470
  %472 = vdwg.mxu0
  %vm473 = vcmask 261120
  %v474 = vsel %vm473, %v366, 0.0
  %v475 = vsel %vm473, %v369, 0.0
  %v476 = vadd.f32 %v474, %v475
  %v477 = vsel %vm473, %v372, 0.0
  %v478 = vadd.f32 %v476, %v477
  %v479 = vsel %vm473, %v375, 0.0
  %v480 = vadd.f32 %v478, %v479
  %v481 = vsel %vm473, %v378, 0.0
  %v482 = vadd.f32 %v480, %v481
  %v483 = vsel %vm473, %v381, 0.0
  %v484 = vadd.f32 %v482, %v483
  %v485 = vsel %vm473, %v384, 0.0
  %v486 = vadd.f32 %v484, %v485
  %v487 = vsel %vm473, %v387, 0.0
  %v488 = vadd.f32 %v486, %v487
  %v489 = vsel %vm473, %v390, 0.0
  %v490 = vadd.f32 %v488, %v489
  %v491 = vsel %vm473, %v393, 0.0
  %v492 = vadd.f32 %v490, %v491
  %v493 = vsel %vm473, %v396, 0.0
  %v494 = vadd.f32 %v492, %v493
  %v495 = vsel %vm473, %v399, 0.0
  %v496 = vadd.f32 %v494, %v495
  %v497 = vsel %vm473, %v402, 0.0
  %v498 = vadd.f32 %v496, %v497
  %v499 = vsel %vm473, %v405, 0.0
  %v500 = vadd.f32 %v498, %v499
  %v501 = vsel %vm473, %v408, 0.0
  %v502 = vadd.f32 %v500, %v501
  %v503 = vsel %vm473, %v411, 0.0
  %v504 = vadd.f32 %v502, %v503
  %v505 = vsel %vm473, %v414, 0.0
  %v506 = vadd.f32 %v504, %v505
  %v507 = vsel %vm473, %v417, 0.0
  %v508 = vadd.f32 %v506, %v507
  %v509 = vsel %vm473, %v420, 0.0
  %v510 = vadd.f32 %v508, %v509
  %v511 = vsel %vm473, %v423, 0.0
  %v512 = vadd.f32 %v510, %v511
  %v513 = vsel %vm473, %v426, 0.0
  %v514 = vadd.f32 %v512, %v513
  %v515 = vsel %vm473, %v429, 0.0
  %v516 = vadd.f32 %v514, %v515
  %v517 = vsel %vm473, %v432, 0.0
  %v518 = vadd.f32 %v516, %v517
  %v519 = vsel %vm473, %v435, 0.0
  %v520 = vadd.f32 %v518, %v519
  %v521 = vsel %vm473, %v438, 0.0
  %v522 = vadd.f32 %v520, %v521
  %v523 = vsel %vm473, %v441, 0.0
  %v524 = vadd.f32 %v522, %v523
  %v525 = vsel %vm473, %v444, 0.0
  %v526 = vadd.f32 %v524, %v525
  %v527 = vsel %vm473, %v447, 0.0
  %v528 = vadd.f32 %v526, %v527
  %v529 = vsel %vm473, %v450, 0.0
  %v530 = vadd.f32 %v528, %v529
  %v531 = vsel %vm473, %v453, 0.0
  %v532 = vadd.f32 %v530, %v531
  %v533 = vsel %vm473, %v456, 0.0
  %v534 = vadd.f32 %v532, %v533
  %v535 = vsel %vm473, %v459, 0.0
  %v536 = vadd.f32 %v534, %v535
  %v537 = vsel %vm473, %v462, 0.0
  %v538 = vadd.f32 %v536, %v537
  %v539 = vsel %vm473, %v465, 0.0
  %v540 = vadd.f32 %v538, %v539
  %v541 = vsel %vm473, %v468, 0.0
  %v542 = vadd.f32 %v540, %v541
  %v543 = vsel %vm473, %v471, 0.0
  %v544 = vadd.f32 %v542, %v543
  %v545 = vrot.slane %v544, 4
  %v546 = vadd.f32 %v544, %v545
  %v547 = vrot.slane %v546, 2
  %v548 = vadd.f32 %v546, %v547
  %v549 = vrot.slane %v548, 1
  %v550 = vadd.f32 %v548, %v549
  %v551 = vmul.f32 %v550, 0.0034722222
  %v552 = vmul.f32 %v366, %v366
  %v553 = vmul.f32 %v369, %v369
  %v554 = vmul.f32 %v372, %v372
  %v555 = vmul.f32 %v375, %v375
  %v556 = vmul.f32 %v378, %v378
  %v557 = vmul.f32 %v381, %v381
  %v558 = vmul.f32 %v384, %v384
  %v559 = vmul.f32 %v387, %v387
  %v560 = vmul.f32 %v390, %v390
  %v561 = vmul.f32 %v393, %v393
  %v562 = vmul.f32 %v396, %v396
  %v563 = vmul.f32 %v399, %v399
  %v564 = vmul.f32 %v402, %v402
  %v565 = vmul.f32 %v405, %v405
  %v566 = vmul.f32 %v408, %v408
  %v567 = vmul.f32 %v411, %v411
  %v568 = vmul.f32 %v414, %v414
  %v569 = vmul.f32 %v417, %v417
  %v570 = vmul.f32 %v420, %v420
  %v571 = vmul.f32 %v423, %v423
  %v572 = vmul.f32 %v426, %v426
  %v573 = vmul.f32 %v429, %v429
  %v574 = vmul.f32 %v432, %v432
  %v575 = vmul.f32 %v435, %v435
  %v576 = vmul.f32 %v438, %v438
  %v577 = vmul.f32 %v441, %v441
  %v578 = vmul.f32 %v444, %v444
  %v579 = vmul.f32 %v447, %v447
  %v580 = vmul.f32 %v450, %v450
  %v581 = vmul.f32 %v453, %v453
  %v582 = vmul.f32 %v456, %v456
  %v583 = vmul.f32 %v459, %v459
  %v584 = vmul.f32 %v462, %v462
  %v585 = vmul.f32 %v465, %v465
  %v586 = vmul.f32 %v468, %v468
  %v587 = vmul.f32 %v471, %v471
  %v588 = vsel %vm473, %v552, 0.0
  %v589 = vsel %vm473, %v553, 0.0
  %v590 = vadd.f32 %v588, %v589
  %v591 = vsel %vm473, %v554, 0.0
  %v592 = vadd.f32 %v590, %v591
  %v593 = vsel %vm473, %v555, 0.0
  %v594 = vadd.f32 %v592, %v593
  %v595 = vsel %vm473, %v556, 0.0
  %v596 = vadd.f32 %v594, %v595
  %v597 = vsel %vm473, %v557, 0.0
  %v598 = vadd.f32 %v596, %v597
  %v599 = vsel %vm473, %v558, 0.0
  %v600 = vadd.f32 %v598, %v599
  %v601 = vsel %vm473, %v559, 0.0
  %v602 = vadd.f32 %v600, %v601
  %v603 = vsel %vm473, %v560, 0.0
  %v604 = vadd.f32 %v602, %v603
  %v605 = vsel %vm473, %v561, 0.0
  %v606 = vadd.f32 %v604, %v605
  %v607 = vsel %vm473, %v562, 0.0
  %v608 = vadd.f32 %v606, %v607
  %v609 = vsel %vm473, %v563, 0.0
  %v610 = vadd.f32 %v608, %v609
  %v611 = vsel %vm473, %v564, 0.0
  %v612 = vadd.f32 %v610, %v611
  %v613 = vsel %vm473, %v565, 0.0
  %v614 = vadd.f32 %v612, %v613
  %v615 = vsel %vm473, %v566, 0.0
  %v616 = vadd.f32 %v614, %v615
  %v617 = vsel %vm473, %v567, 0.0
  %v618 = vadd.f32 %v616, %v617
  %v619 = vsel %vm473, %v568, 0.0
  %v620 = vadd.f32 %v618, %v619
  %v621 = vsel %vm473, %v569, 0.0
  %v622 = vadd.f32 %v620, %v621
  %v623 = vsel %vm473, %v570, 0.0
  %v624 = vadd.f32 %v622, %v623
  %v625 = vsel %vm473, %v571, 0.0
  %v626 = vadd.f32 %v624, %v625
  %v627 = vsel %vm473, %v572, 0.0
  %v628 = vadd.f32 %v626, %v627
  %v629 = vsel %vm473, %v573, 0.0
  %v630 = vadd.f32 %v628, %v629
  %v631 = vsel %vm473, %v574, 0.0
  %v632 = vadd.f32 %v630, %v631
  %v633 = vsel %vm473, %v575, 0.0
  %v634 = vadd.f32 %v632, %v633
  %v635 = vsel %vm473, %v576, 0.0
  %v636 = vadd.f32 %v634, %v635
  %v637 = vsel %vm473, %v577, 0.0
  %v638 = vadd.f32 %v636, %v637
  %v639 = vsel %vm473, %v578, 0.0
  %v640 = vadd.f32 %v638, %v639
  %v641 = vsel %vm473, %v579, 0.0
  %v642 = vadd.f32 %v640, %v641
  %v643 = vsel %vm473, %v580, 0.0
  %v644 = vadd.f32 %v642, %v643
  %v645 = vsel %vm473, %v581, 0.0
  %v646 = vadd.f32 %v644, %v645
  %v647 = vsel %vm473, %v582, 0.0
  %v648 = vadd.f32 %v646, %v647
  %v649 = vsel %vm473, %v583, 0.0
  %v650 = vadd.f32 %v648, %v649
  %v651 = vsel %vm473, %v584, 0.0
  %v652 = vadd.f32 %v650, %v651
  %v653 = vsel %vm473, %v585, 0.0
  %v654 = vadd.f32 %v652, %v653
  %v655 = vsel %vm473, %v586, 0.0
  %v656 = vadd.f32 %v654, %v655
  %v657 = vsel %vm473, %v587, 0.0
  %v658 = vadd.f32 %v656, %v657
  %v659 = vrot.slane %v658, 4
  %v660 = vadd.f32 %v658, %v659
  %v661 = vrot.slane %v660, 2
  %v662 = vadd.f32 %v660, %v661
  %v663 = vrot.slane %v662, 1
  %v664 = vadd.f32 %v662, %v663
  %v665 = vmul.f32 %v664, 0.0034722222
  %v666 = vmul.f32 %v551, %v551
  %v667 = vsub.f32 %v665, %v666
  %v668 = vsub.f32 %v366, %v551
  %v669 = vsub.f32 %v369, %v551
  %v670 = vsub.f32 %v372, %v551
  %v671 = vsub.f32 %v375, %v551
  %v672 = vsub.f32 %v378, %v551
  %v673 = vsub.f32 %v381, %v551
  %v674 = vsub.f32 %v384, %v551
  %v675 = vsub.f32 %v387, %v551
  %v676 = vsub.f32 %v390, %v551
  %v677 = vsub.f32 %v393, %v551
  %v678 = vsub.f32 %v396, %v551
  %v679 = vsub.f32 %v399, %v551
  %v680 = vsub.f32 %v402, %v551
  %v681 = vsub.f32 %v405, %v551
  %v682 = vsub.f32 %v408, %v551
  %v683 = vsub.f32 %v411, %v551
  %v684 = vsub.f32 %v414, %v551
  %v685 = vsub.f32 %v417, %v551
  %v686 = vsub.f32 %v420, %v551
  %v687 = vsub.f32 %v423, %v551
  %v688 = vsub.f32 %v426, %v551
  %v689 = vsub.f32 %v429, %v551
  %v690 = vsub.f32 %v432, %v551
  %v691 = vsub.f32 %v435, %v551
  %v692 = vsub.f32 %v438, %v551
  %v693 = vsub.f32 %v441, %v551
  %v694 = vsub.f32 %v444, %v551
  %v695 = vsub.f32 %v447, %v551
  %v696 = vsub.f32 %v450, %v551
  %v697 = vsub.f32 %v453, %v551
  %v698 = vsub.f32 %v456, %v551
  %v699 = vsub.f32 %v459, %v551
  %v700 = vsub.f32 %v462, %v551
  %v701 = vsub.f32 %v465, %v551
  %v702 = vsub.f32 %v468, %v551
  %v703 = vsub.f32 %v471, %v551
  %v704 = vadd.f32 %v667, 1e-05
  %v705 = vrsqrt.pop %v704
  %v706 = vmul.f32 %v705, %v704
  %v707 = vmul.f32 %v706, %v705
  %v708 = vmul.f32 0.5, %v707
  %v709 = vsub.f32 1.5, %v708
  %v710 = vmul.f32 %v705, %v709
  %vm711 = vweird.f32 %v704
  %vm712 = vweird.f32 %v705
  %vm713 = vmor %vm711, %vm712
  %v714 = vsel %vm713, %v705, %v710
  %v715 = vmul.f32 %v668, %v714
  %v716 = vmul.f32 %v669, %v714
  %v717 = vmul.f32 %v670, %v714
  %v718 = vmul.f32 %v671, %v714
  %v719 = vmul.f32 %v672, %v714
  %v720 = vmul.f32 %v673, %v714
  %v721 = vmul.f32 %v674, %v714
  %v722 = vmul.f32 %v675, %v714
  %v723 = vmul.f32 %v676, %v714
  %v724 = vmul.f32 %v677, %v714
  %v725 = vmul.f32 %v678, %v714
  %v726 = vmul.f32 %v679, %v714
  %v727 = vmul.f32 %v680, %v714
  %v728 = vmul.f32 %v681, %v714
  %v729 = vmul.f32 %v682, %v714
  %v730 = vmul.f32 %v683, %v714
  %v731 = vmul.f32 %v684, %v714
  %v732 = vmul.f32 %v685, %v714
  %v733 = vmul.f32 %v686, %v714
  %v734 = vmul.f32 %v687, %v714
  %v735 = vmul.f32 %v688, %v714
  %v736 = vmul.f32 %v689, %v714
  %v737 = vmul.f32 %v690, %v714
  %v738 = vmul.f32 %v691, %v714
  %v739 = vmul.f32 %v692, %v714
  %v740 = vmul.f32 %v693, %v714
  %v741 = vmul.f32 %v694, %v714
  %v742 = vmul.f32 %v695, %v714
  %v743 = vmul.f32 %v696, %v714
  %v744 = vmul.f32 %v697, %v714
  %v745 = vmul.f32 %v698, %v714
  %v746 = vmul.f32 %v699, %v714
  %v747 = vmul.f32 %v700, %v714
  %v748 = vmul.f32 %v701, %v714
  %v749 = vmul.f32 %v702, %v714
  %v750 = vmul.f32 %v703, %v714
  %v751 = vld [vmem:[%s3] sm:$0x1]
  %v753 = vperm.slane %v751, 0
  %v755 = vmul.f32 %v715, %v753
  %v756 = vmul.f32 %v716, %v753
  %v757 = vmul.f32 %v717, %v753
  %v758 = vmul.f32 %v718, %v753
  %v759 = vmul.f32 %v719, %v753
  %v760 = vmul.f32 %v720, %v753
  %v761 = vmul.f32 %v721, %v753
  %v762 = vmul.f32 %v722, %v753
  %v763 = vmul.f32 %v723, %v753
  %v764 = vmul.f32 %v724, %v753
  %v765 = vmul.f32 %v725, %v753
  %v766 = vmul.f32 %v726, %v753
  %v767 = vmul.f32 %v727, %v753
  %v768 = vmul.f32 %v728, %v753
  %v769 = vmul.f32 %v729, %v753
  %v770 = vmul.f32 %v730, %v753
  %v771 = vmul.f32 %v731, %v753
  %v772 = vmul.f32 %v732, %v753
  %v773 = vmul.f32 %v733, %v753
  %v774 = vmul.f32 %v734, %v753
  %v775 = vmul.f32 %v735, %v753
  %v776 = vmul.f32 %v736, %v753
  %v777 = vmul.f32 %v737, %v753
  %v778 = vmul.f32 %v738, %v753
  %v779 = vmul.f32 %v739, %v753
  %v780 = vmul.f32 %v740, %v753
  %v781 = vmul.f32 %v741, %v753
  %v782 = vmul.f32 %v742, %v753
  %v783 = vmul.f32 %v743, %v753
  %v784 = vmul.f32 %v744, %v753
  %v785 = vmul.f32 %v745, %v753
  %v786 = vmul.f32 %v746, %v753
  %v787 = vmul.f32 %v747, %v753
  %v788 = vmul.f32 %v748, %v753
  %v789 = vmul.f32 %v749, %v753
  %v790 = vmul.f32 %v750, %v753
  %v791 = vld [vmem:[%s4] sm:$0x1]
  %v793 = vperm.slane %v791, 0
  %v795 = vadd.f32 %v755, %v793
  %v796 = vadd.f32 %v756, %v793
  %v797 = vadd.f32 %v757, %v793
  %v798 = vadd.f32 %v758, %v793
  %v799 = vadd.f32 %v759, %v793
  %v800 = vadd.f32 %v760, %v793
  %v801 = vadd.f32 %v761, %v793
  %v802 = vadd.f32 %v762, %v793
  %v803 = vadd.f32 %v763, %v793
  %v804 = vadd.f32 %v764, %v793
  %v805 = vadd.f32 %v765, %v793
  %v806 = vadd.f32 %v766, %v793
  %v807 = vadd.f32 %v767, %v793
  %v808 = vadd.f32 %v768, %v793
  %v809 = vadd.f32 %v769, %v793
  %v810 = vadd.f32 %v770, %v793
  %v811 = vadd.f32 %v771, %v793
  %v812 = vadd.f32 %v772, %v793
  %v813 = vadd.f32 %v773, %v793
  %v814 = vadd.f32 %v774, %v793
  %v815 = vadd.f32 %v775, %v793
  %v816 = vadd.f32 %v776, %v793
  %v817 = vadd.f32 %v777, %v793
  %v818 = vadd.f32 %v778, %v793
  %v819 = vadd.f32 %v779, %v793
  %v820 = vadd.f32 %v780, %v793
  %v821 = vadd.f32 %v781, %v793
  %v822 = vadd.f32 %v782, %v793
  %v823 = vadd.f32 %v783, %v793
  %v824 = vadd.f32 %v784, %v793
  %v825 = vadd.f32 %v785, %v793
  %v826 = vadd.f32 %v786, %v793
  %v827 = vadd.f32 %v787, %v793
  %v828 = vadd.f32 %v788, %v793
  %v829 = vadd.f32 %v789, %v793
  %v830 = vadd.f32 %v790, %v793
  %v831 = vmax.f32 %v795, 0.0
  %v832 = vmax.f32 %v796, 0.0
  %v833 = vmax.f32 %v797, 0.0
  %v834 = vmax.f32 %v798, 0.0
  %v835 = vmax.f32 %v799, 0.0
  %v836 = vmax.f32 %v800, 0.0
  %v837 = vmax.f32 %v801, 0.0
  %v838 = vmax.f32 %v802, 0.0
  %v839 = vmax.f32 %v803, 0.0
  %v840 = vmax.f32 %v804, 0.0
  %v841 = vmax.f32 %v805, 0.0
  %v842 = vmax.f32 %v806, 0.0
  %v843 = vmax.f32 %v807, 0.0
  %v844 = vmax.f32 %v808, 0.0
  %v845 = vmax.f32 %v809, 0.0
  %v846 = vmax.f32 %v810, 0.0
  %v847 = vmax.f32 %v811, 0.0
  %v848 = vmax.f32 %v812, 0.0
  %v849 = vmax.f32 %v813, 0.0
  %v850 = vmax.f32 %v814, 0.0
  %v851 = vmax.f32 %v815, 0.0
  %v852 = vmax.f32 %v816, 0.0
  %v853 = vmax.f32 %v817, 0.0
  %v854 = vmax.f32 %v818, 0.0
  %v855 = vmax.f32 %v819, 0.0
  %v856 = vmax.f32 %v820, 0.0
  %v857 = vmax.f32 %v821, 0.0
  %v858 = vmax.f32 %v822, 0.0
  %v859 = vmax.f32 %v823, 0.0
  %v860 = vmax.f32 %v824, 0.0
  %v861 = vmax.f32 %v825, 0.0
  %v862 = vmax.f32 %v826, 0.0
  %v863 = vmax.f32 %v827, 0.0
  %v864 = vmax.f32 %v828, 0.0
  %v865 = vmax.f32 %v829, 0.0
  %v866 = vmax.f32 %v830, 0.0
  %867 = vst.msk [vmem:[%s5] sm:$0xff] %vm473, %v831
  %868 = vst.msk [vmem:[%s5 + $0x8] sm:$0xff] %vm473, %v832
  %869 = vst.msk [vmem:[%s5 + $0x10] sm:$0xff] %vm473, %v833
  %870 = vst.msk [vmem:[%s5 + $0x18] sm:$0xff] %vm473, %v834
  %871 = vst.msk [vmem:[%s5 + $0x20] sm:$0xff] %vm473, %v835
  %872 = vst.msk [vmem:[%s5 + $0x28] sm:$0xff] %vm473, %v836
  %873 = vst.msk [vmem:[%s5 + $0x30] sm:$0xff] %vm473, %v837
  %874 = vst.msk [vmem:[%s5 + $0x38] sm:$0xff] %vm473, %v838
  %875 = vst.msk [vmem:[%s5 + $0x40] sm:$0xff] %vm473, %v839
  %876 = vst.msk [vmem:[%s5 + $0x48] sm:$0xff] %vm473, %v840
  %877 = vst.msk [vmem:[%s5 + $0x50] sm:$0xff] %vm473, %v841
  %878 = vst.msk [vmem:[%s5 + $0x58] sm:$0xff] %vm473, %v842
  %879 = vst.msk [vmem:[%s5 + $0x60] sm:$0xff] %vm473, %v843
  %880 = vst.msk [vmem:[%s5 + $0x68] sm:$0xff] %vm473, %v844
  %881 = vst.msk [vmem:[%s5 + $0x70] sm:$0xff] %vm473, %v845
  %882 = vst.msk [vmem:[%s5 + $0x78] sm:$0xff] %vm473, %v846
  %883 = vst.msk [vmem:[%s5 + $0x80] sm:$0xff] %vm473, %v847
  %884 = vst.msk [vmem:[%s5 + $0x88] sm:$0xff] %vm473, %v848
  %885 = vst.msk [vmem:[%s5 + $0x90] sm:$0xff] %vm473, %v849
  %886 = vst.msk [vmem:[%s5 + $0x98] sm:$0xff] %vm473, %v850
  %887 = vst.msk [vmem:[%s5 + $0xa0] sm:$0xff] %vm473, %v851
  %888 = vst.msk [vmem:[%s5 + $0xa8] sm:$0xff] %vm473, %v852
  %889 = vst.msk [vmem:[%s5 + $0xb0] sm:$0xff] %vm473, %v853
  %890 = vst.msk [vmem:[%s5 + $0xb8] sm:$0xff] %vm473, %v854
  %891 = vst.msk [vmem:[%s5 + $0xc0] sm:$0xff] %vm473, %v855
  %892 = vst.msk [vmem:[%s5 + $0xc8] sm:$0xff] %vm473, %v856
  %893 = vst.msk [vmem:[%s5 + $0xd0] sm:$0xff] %vm473, %v857
  %894 = vst.msk [vmem:[%s5 + $0xd8] sm:$0xff] %vm473, %v858
  %895 = vst.msk [vmem:[%s5 + $0xe0] sm:$0xff] %vm473, %v859
  %896 = vst.msk [vmem:[%s5 + $0xe8] sm:$0xff] %vm473, %v860
  %897 = vst.msk [vmem:[%s5 + $0xf0] sm:$0xff] %vm473, %v861
  %898 = vst.msk [vmem:[%s5 + $0xf8] sm:$0xff] %vm473, %v862
  %899 = vst.msk [vmem:[%s5 + $0x100] sm:$0xff] %vm473, %v863
  %900 = vst.msk [vmem:[%s5 + $0x108] sm:$0xff] %vm473, %v864
  %901 = vst.msk [vmem:[%s5 + $0x110] sm:$0xff] %vm473, %v865
  %902 = vst.msk [vmem:[%s5 + $0x118] sm:$0xff] %vm473, %v866
  // Predicated region
  $region22: #{im2latex_forward.10} parent=0 // pred_check
    _
  $region23: #{im2latex_forward.10} parent=0 // pred_check_branch
    %904 = sbr.rel (0) target = $region25
  $region24: #{im2latex_forward.10} parent=0 // pred_region
    _
  $region25: #{im2latex_forward.10} parent=0 // pred_fallthru
    _
  // Predicated region
  $region26: #{im2latex_forward.10} parent=0 // pred_check
    _
  $region27: #{im2latex_forward.10} parent=0 // pred_check_branch
    %906 = sbr.rel (0) target = $region29
  $region28: #{im2latex_forward.10} parent=0 // pred_region
    _
  $region29: #{im2latex_forward.10} parent=0 // pred_fallthru
    _

// kernel: im2latex_forward.11
$region0: #{im2latex_forward.11}
  #allocation0 [shape = 'u32[]', space=smem, size = 0x4, offset = 0x4, fixed_abs, tag = 'smem constant byte address 0x4 - core index']
  #allocation1 [shape = 'u32[72,128]{1,0:T(1,128)}', space=vmem, size = 0x9000, scoped, tag = 'internal scratch']
  %s0 = inlined_call_operand.vmem [shape: f32[288,288], index: 0, kind: input, shape index: {}]
  %s1 = inlined_call_operand.vmem [shape: f32[288,32], index: 1, kind: input, shape index: {}]
  %s2 = inlined_call_operand.vmem [shape: f32[1,32], index: 2, kind: input, shape index: {}]
  %s3 = inlined_call_operand.vmem [shape: f32[288,32], index: 3, kind: output, shape index: {}]
  %s4 = sld [smem:[#allocation0]]
  $region22: #{im2latex_forward.11} parent=0
    _
  %s6 = ssub.s32 1, %s4
  %s7 = scalar_select 0, %s6, %s4
  // Predicated region
  $region2: #{im2latex_forward.11} parent=0 // pred_check
    _
  $region3: #{im2latex_forward.11} parent=0 // pred_check_branch
    %9 = sbr.rel (0) target = $region5
  $region4: #{im2latex_forward.11} parent=0 // pred_region
    _
  $region5: #{im2latex_forward.11} parent=0 // pred_fallthru
    _
  // Predicated region
  $region6: #{im2latex_forward.11} parent=0 // pred_check
    _
  $region7: #{im2latex_forward.11} parent=0 // pred_check_branch
    %11 = sbr.rel (0) target = $region9
  $region8: #{im2latex_forward.11} parent=0 // pred_region
    _
  $region9: #{im2latex_forward.11} parent=0 // pred_fallthru
    _
  // Predicated region
  $region10: #{im2latex_forward.11} parent=0 // pred_check
    _
  $region11: #{im2latex_forward.11} parent=0 // pred_check_branch
    %13 = sbr.rel (0) target = $region13
  $region12: #{im2latex_forward.11} parent=0 // pred_region
    _
  $region13: #{im2latex_forward.11} parent=0 // pred_fallthru
    _
  %v14 = vld [vmem:[%s0] sm:$0xff]
  %v15 = vld [vmem:[%s0 + $0x8] sm:$0xff]
  %v16 = vld [vmem:[%s0 + $0x10] sm:$0xff]
  %v17 = vld [vmem:[%s0 + $0x18] sm:$0xff]
  %v18 = vld [vmem:[%s0 + $0x20] sm:$0xff]
  %v19 = vld [vmem:[%s0 + $0x28] sm:$0xff]
  %v20 = vld [vmem:[%s0 + $0x30] sm:$0xff]
  %v21 = vld [vmem:[%s0 + $0x38] sm:$0xff]
  %v22 = vld [vmem:[%s0 + $0x40] sm:$0xff]
  %v23 = vld [vmem:[%s0 + $0x48] sm:$0xff]
  %v24 = vld [vmem:[%s0 + $0x50] sm:$0xff]
  %v25 = vld [vmem:[%s0 + $0x58] sm:$0xff]
  %v26 = vld [vmem:[%s0 + $0x60] sm:$0xff]
  %v27 = vld [vmem:[%s0 + $0x68] sm:$0xff]
  %v28 = vld [vmem:[%s0 + $0x70] sm:$0xff]
  %v29 = vld [vmem:[%s0 + $0x78] sm:$0xff]
  %v30 = vld [vmem:[%s0 + $0x80] sm:$0xff]
  %v31 = vld [vmem:[%s0 + $0x88] sm:$0xff]
  %v32 = vld [vmem:[%s0 + $0x90] sm:$0xff]
  %v33 = vld [vmem:[%s0 + $0x98] sm:$0xff]
  %v34 = vld [vmem:[%s0 + $0xa0] sm:$0xff]
  %v35 = vld [vmem:[%s0 + $0xa8] sm:$0xff]
  %v36 = vld [vmem:[%s0 + $0xb0] sm:$0xff]
  %v37 = vld [vmem:[%s0 + $0xb8] sm:$0xff]
  %v38 = vld [vmem:[%s0 + $0xc0] sm:$0xff]
  %v39 = vld [vmem:[%s0 + $0xc8] sm:$0xff]
  %v40 = vld [vmem:[%s0 + $0xd0] sm:$0xff]
  %v41 = vld [vmem:[%s0 + $0xd8] sm:$0xff]
  %v42 = vld [vmem:[%s0 + $0xe0] sm:$0xff]
  %v43 = vld [vmem:[%s0 + $0xe8] sm:$0xff]
  %v44 = vld [vmem:[%s0 + $0xf0] sm:$0xff]
  %v45 = vld [vmem:[%s0 + $0xf8] sm:$0xff]
  %v46 = vld [vmem:[%s0 + $0x100] sm:$0xff]
  %v47 = vld [vmem:[%s0 + $0x108] sm:$0xff]
  %v48 = vld [vmem:[%s0 + $0x110] sm:$0xff]
  %v49 = vld [vmem:[%s0 + $0x118] sm:$0xff]
  %v50 = vld [vmem:[%s0 + $0x120] sm:$0xff]
  %v51 = vld [vmem:[%s0 + $0x128] sm:$0xff]
  %v52 = vld [vmem:[%s0 + $0x130] sm:$0xff]
  %v53 = vld [vmem:[%s0 + $0x138] sm:$0xff]
  %v54 = vld [vmem:[%s0 + $0x140] sm:$0xff]
  %v55 = vld [vmem:[%s0 + $0x148] sm:$0xff]
  %v56 = vld [vmem:[%s0 + $0x150] sm:$0xff]
  %v57 = vld [vmem:[%s0 + $0x158] sm:$0xff]
  %v58 = vld [vmem:[%s0 + $0x160] sm:$0xff]
  %v59 = vld [vmem:[%s0 + $0x168] sm:$0xff]
  %v60 = vld [vmem:[%s0 + $0x170] sm:$0xff]
  %v61 = vld [vmem:[%s0 + $0x178] sm:$0xff]
  %v62 = vld [vmem:[%s0 + $0x180] sm:$0xff]
  %v63 = vld [vmem:[%s0 + $0x188] sm:$0xff]
  %v64 = vld [vmem:[%s0 + $0x190] sm:$0xff]
  %v65 = vld [vmem:[%s0 + $0x198] sm:$0xff]
  %v66 = vld [vmem:[%s0 + $0x1a0] sm:$0xff]
  %v67 = vld [vmem:[%s0 + $0x1a8] sm:$0xff]
  %v68 = vld [vmem:[%s0 + $0x1b0] sm:$0xff]
  %v69 = vld [vmem:[%s0 + $0x1b8] sm:$0xff]
  %v70 = vld [vmem:[%s0 + $0x1c0] sm:$0xff]
  %v71 = vld [vmem:[%s0 + $0x1c8] sm:$0xff]
  %v72 = vld [vmem:[%s0 + $0x1d0] sm:$0xff]
  %v73 = vld [vmem:[%s0 + $0x1d8] sm:$0xff]
  %v74 = vld [vmem:[%s0 + $0x1e0] sm:$0xff]
  %v75 = vld [vmem:[%s0 + $0x1e8] sm:$0xff]
  %v76 = vld [vmem:[%s0 + $0x1f0] sm:$0xff]
  %v77 = vld [vmem:[%s0 + $0x1f8] sm:$0xff]
  %v78 = vld [vmem:[%s0 + $0x200] sm:$0xff]
  %v79 = vld [vmem:[%s0 + $0x208] sm:$0xff]
  %v80 = vld [vmem:[%s0 + $0x210] sm:$0xff]
  %v81 = vld [vmem:[%s0 + $0x218] sm:$0xff]
  %v82 = vld [vmem:[%s0 + $0x220] sm:$0xff]
  %v83 = vld [vmem:[%s0 + $0x228] sm:$0xff]
  %v84 = vld [vmem:[%s0 + $0x230] sm:$0xff]
  %v85 = vld [vmem:[%s0 + $0x238] sm:$0xff]
  %v86 = vld [vmem:[%s0 + $0x240] sm:$0xff]
  %v87 = vld [vmem:[%s0 + $0x248] sm:$0xff]
  %v88 = vld [vmem:[%s0 + $0x250] sm:$0xff]
  %v89 = vld [vmem:[%s0 + $0x258] sm:$0xff]
  %v90 = vld [vmem:[%s0 + $0x260] sm:$0xff]
  %v91 = vld [vmem:[%s0 + $0x268] sm:$0xff]
  %v92 = vld [vmem:[%s0 + $0x270] sm:$0xff]
  %v93 = vld [vmem:[%s0 + $0x278] sm:$0xff]
  %v94 = vld [vmem:[%s0 + $0x280] sm:$0xff]
  %v95 = vld [vmem:[%s0 + $0x288] sm:$0xff]
  %v96 = vld [vmem:[%s0 + $0x290] sm:$0xff]
  %v97 = vld [vmem:[%s0 + $0x298] sm:$0xff]
  %v98 = vld [vmem:[%s0 + $0x2a0] sm:$0xff]
  %v99 = vld [vmem:[%s0 + $0x2a8] sm:$0xff]
  %v100 = vld [vmem:[%s0 + $0x2b0] sm:$0xff]
  %v101 = vld [vmem:[%s0 + $0x2b8] sm:$0xff]
  %v102 = vld [vmem:[%s0 + $0x2c0] sm:$0xff]
  %v103 = vld [vmem:[%s0 + $0x2c8] sm:$0xff]
  %v104 = vld [vmem:[%s0 + $0x2d0] sm:$0xff]
  %v105 = vld [vmem:[%s0 + $0x2d8] sm:$0xff]
  %v106 = vld [vmem:[%s0 + $0x2e0] sm:$0xff]
  %v107 = vld [vmem:[%s0 + $0x2e8] sm:$0xff]
  %v108 = vld [vmem:[%s0 + $0x2f0] sm:$0xff]
  %v109 = vld [vmem:[%s0 + $0x2f8] sm:$0xff]
  %v110 = vld [vmem:[%s0 + $0x300] sm:$0xff]
  %v111 = vld [vmem:[%s0 + $0x308] sm:$0xff]
  %v112 = vld [vmem:[%s0 + $0x310] sm:$0xff]
  %v113 = vld [vmem:[%s0 + $0x318] sm:$0xff]
  %v114 = vld [vmem:[%s0 + $0x320] sm:$0xff]
  %v115 = vld [vmem:[%s0 + $0x328] sm:$0xff]
  %v116 = vld [vmem:[%s0 + $0x330] sm:$0xff]
  %v117 = vld [vmem:[%s0 + $0x338] sm:$0xff]
  %v118 = vld [vmem:[%s0 + $0x340] sm:$0xff]
  %v119 = vld [vmem:[%s0 + $0x348] sm:$0xff]
  %v120 = vld [vmem:[%s0 + $0x350] sm:$0xff]
  %v121 = vld [vmem:[%s0 + $0x358] sm:$0xff]
  %v122 = vld [vmem:[%s1] sm:$0xff]
  %v123 = vld [vmem:[%s1 + $0x8] sm:$0xff]
  %v124 = vld [vmem:[%s1 + $0x10] sm:$0xff]
  %v125 = vld [vmem:[%s1 + $0x18] sm:$0xff]
  %v126 = vld [vmem:[%s1 + $0x20] sm:$0xff]
  %v127 = vld [vmem:[%s1 + $0x28] sm:$0xff]
  %v128 = vld [vmem:[%s1 + $0x30] sm:$0xff]
  %v129 = vld [vmem:[%s1 + $0x38] sm:$0xff]
  %v130 = vld [vmem:[%s1 + $0x40] sm:$0xff]
  %v131 = vld [vmem:[%s1 + $0x48] sm:$0xff]
  %v132 = vld [vmem:[%s1 + $0x50] sm:$0xff]
  %v133 = vld [vmem:[%s1 + $0x58] sm:$0xff]
  %v134 = vld [vmem:[%s1 + $0x60] sm:$0xff]
  %v135 = vld [vmem:[%s1 + $0x68] sm:$0xff]
  %v136 = vld [vmem:[%s1 + $0x70] sm:$0xff]
  %v137 = vld [vmem:[%s1 + $0x78] sm:$0xff]
  %v138 = vld [vmem:[%s1 + $0x80] sm:$0xff]
  %v139 = vld [vmem:[%s1 + $0x88] sm:$0xff]
  %v140 = vld [vmem:[%s1 + $0x90] sm:$0xff]
  %v141 = vld [vmem:[%s1 + $0x98] sm:$0xff]
  %v142 = vld [vmem:[%s1 + $0xa0] sm:$0xff]
  %v143 = vld [vmem:[%s1 + $0xa8] sm:$0xff]
  %v144 = vld [vmem:[%s1 + $0xb0] sm:$0xff]
  %v145 = vld [vmem:[%s1 + $0xb8] sm:$0xff]
  %v146 = vld [vmem:[%s1 + $0xc0] sm:$0xff]
  %v147 = vld [vmem:[%s1 + $0xc8] sm:$0xff]
  %v148 = vld [vmem:[%s1 + $0xd0] sm:$0xff]
  %v149 = vld [vmem:[%s1 + $0xd8] sm:$0xff]
  %v150 = vld [vmem:[%s1 + $0xe0] sm:$0xff]
  %v151 = vld [vmem:[%s1 + $0xe8] sm:$0xff]
  %v152 = vld [vmem:[%s1 + $0xf0] sm:$0xff]
  %v153 = vld [vmem:[%s1 + $0xf8] sm:$0xff]
  %v154 = vld [vmem:[%s1 + $0x100] sm:$0xff]
  %v155 = vld [vmem:[%s1 + $0x108] sm:$0xff]
  %v156 = vld [vmem:[%s1 + $0x110] sm:$0xff]
  %v157 = vld [vmem:[%s1 + $0x118] sm:$0xff]
  %v158 = vld [vmem:[%s2] sm:$0x1]
  %v160 = vperm.slane %v158, 0
  %vm162 = vcmask 261120
  %v164 = vsel %vm162, %v16, 0
  %v167 = vsel %vm162, %v19, 0
  %v170 = vsel %vm162, %v22, 0
  %v173 = vsel %vm162, %v25, 0
  %v176 = vsel %vm162, %v28, 0
  %v179 = vsel %vm162, %v31, 0
  %v182 = vsel %vm162, %v34, 0
  %v185 = vsel %vm162, %v37, 0
  %v188 = vsel %vm162, %v40, 0
  %v191 = vsel %vm162, %v43, 0
  %v194 = vsel %vm162, %v46, 0
  %v197 = vsel %vm162, %v49, 0
  %v200 = vsel %vm162, %v52, 0
  %v203 = vsel %vm162, %v55, 0
  %v206 = vsel %vm162, %v58, 0
  %v209 = vsel %vm162, %v61, 0
  %v212 = vsel %vm162, %v64, 0
  %v215 = vsel %vm162, %v67, 0
  %v218 = vsel %vm162, %v70, 0
  %v221 = vsel %vm162, %v73, 0
  %v224 = vsel %vm162, %v76, 0
  %v227 = vsel %vm162, %v79, 0
  %v230 = vsel %vm162, %v82, 0
  %v233 = vsel %vm162, %v85, 0
  %v236 = vsel %vm162, %v88, 0
  %v239 = vsel %vm162, %v91, 0
  %v242 = vsel %vm162, %v94, 0
  %v245 = vsel %vm162, %v97, 0
  %v248 = vsel %vm162, %v100, 0
  %v251 = vsel %vm162, %v103, 0
  %v254 = vsel %vm162, %v106, 0
  %v257 = vsel %vm162, %v109, 0
  %v260 = vsel %vm162, %v112, 0
  %v263 = vsel %vm162, %v115, 0
  %v266 = vsel %vm162, %v118, 0
  %v269 = vsel %vm162, %v121, 0
  %271 = vmatpush.msra.mxu0 %v137
  %272 = vmatpush.msra.mxu0 %v136
  %273 = vmatpush.msra.mxu0 %v135
  %274 = vmatpush.msra.mxu0 %v134
  %275 = vmatpush.msra.mxu0 %v133
  %276 = vmatpush.msra.mxu0 %v132
  %277 = vmatpush.msra.mxu0 %v131
  %278 = vmatpush.msra.mxu0 %v130
  %279 = vmatpush.msra.mxu0 %v129
  %280 = vmatpush.msra.mxu0 %v128
  %281 = vmatpush.msra.mxu0 %v127
  %282 = vmatpush.msra.mxu0 %v126
  %283 = vmatpush.msra.mxu0 %v125
  %284 = vmatpush.msra.mxu0 %v124
  %285 = vmatpush.msra.mxu0 %v123
  %286 = vmatpush.msra.mxu0 %v122
  %287 = vmatmul.f32.gmra.mxu0 %v14
  %v288 = vpop.f32.mrf.mxu0
  %v289 = vadd.f32 %v160, %v288
  %290 = vmatmul.f32.gmra.mxu0 %v17
  %v291 = vpop.f32.mrf.mxu0
  %v292 = vadd.f32 %v160, %v291
  %293 = vmatmul.f32.gmra.mxu0 %v20
  %v294 = vpop.f32.mrf.mxu0
  %v295 = vadd.f32 %v160, %v294
  %296 = vmatmul.f32.gmra.mxu0 %v23
  %v297 = vpop.f32.mrf.mxu0
  %v298 = vadd.f32 %v160, %v297
  %299 = vmatmul.f32.gmra.mxu0 %v26
  %v300 = vpop.f32.mrf.mxu0
  %v301 = vadd.f32 %v160, %v300
  %302 = vmatmul.f32.gmra.mxu0 %v29
  %v303 = vpop.f32.mrf.mxu0
  %v304 = vadd.f32 %v160, %v303
  %305 = vmatmul.f32.gmra.mxu0 %v32
  %v306 = vpop.f32.mrf.mxu0
  %v307 = vadd.f32 %v160, %v306
  %308 = vmatmul.f32.gmra.mxu0 %v35
  %v309 = vpop.f32.mrf.mxu0
  %v310 = vadd.f32 %v160, %v309
  %311 = vmatmul.f32.gmra.mxu0 %v38
  %v312 = vpop.f32.mrf.mxu0
  %v313 = vadd.f32 %v160, %v312
  %314 = vmatmul.f32.gmra.mxu0 %v41
  %v315 = vpop.f32.mrf.mxu0
  %v316 = vadd.f32 %v160, %v315
  %317 = vmatmul.f32.gmra.mxu0 %v44
  %v318 = vpop.f32.mrf.mxu0
  %v319 = vadd.f32 %v160, %v318
  %320 = vmatmul.f32.gmra.mxu0 %v47
  %v321 = vpop.f32.mrf.mxu0
  %v322 = vadd.f32 %v160, %v321
  %323 = vmatmul.f32.gmra.mxu0 %v50
  %v324 = vpop.f32.mrf.mxu0
  %v325 = vadd.f32 %v160, %v324
  %326 = vmatmul.f32.gmra.mxu0 %v53
  %v327 = vpop.f32.mrf.mxu0
  %v328 = vadd.f32 %v160, %v327
  %329 = vmatmul.f32.gmra.mxu0 %v56
  %v330 = vpop.f32.mrf.mxu0
  %v331 = vadd.f32 %v160, %v330
  %332 = vmatmul.f32.gmra.mxu0 %v59
  %v333 = vpop.f32.mrf.mxu0
  %v334 = vadd.f32 %v160, %v333
  %335 = vmatmul.f32.gmra.mxu0 %v62
  %v336 = vpop.f32.mrf.mxu0
  %v337 = vadd.f32 %v160, %v336
  %338 = vmatmul.f32.gmra.mxu0 %v65
  %v339 = vpop.f32.mrf.mxu0
  %v340 = vadd.f32 %v160, %v339
  %341 = vmatmul.f32.gmra.mxu0 %v68
  %v342 = vpop.f32.mrf.mxu0
  %v343 = vadd.f32 %v160, %v342
  %344 = vmatmul.f32.gmra.mxu0 %v71
  %v345 = vpop.f32.mrf.mxu0
  %v346 = vadd.f32 %v160, %v345
  %347 = vmatmul.f32.gmra.mxu0 %v74
  %v348 = vpop.f32.mrf.mxu0
  %v349 = vadd.f32 %v160, %v348
  %350 = vmatmul.f32.gmra.mxu0 %v77
  %v351 = vpop.f32.mrf.mxu0
  %v352 = vadd.f32 %v160, %v351
  %353 = vmatmul.f32.gmra.mxu0 %v80
  %v354 = vpop.f32.mrf.mxu0
  %v355 = vadd.f32 %v160, %v354
  %356 = vmatmul.f32.gmra.mxu0 %v83
  %v357 = vpop.f32.mrf.mxu0
  %v358 = vadd.f32 %v160, %v357
  %359 = vmatmul.f32.gmra.mxu0 %v86
  %v360 = vpop.f32.mrf.mxu0
  %v361 = vadd.f32 %v160, %v360
  %362 = vmatmul.f32.gmra.mxu0 %v89
  %v363 = vpop.f32.mrf.mxu0
  %v364 = vadd.f32 %v160, %v363
  %365 = vmatmul.f32.gmra.mxu0 %v92
  %v366 = vpop.f32.mrf.mxu0
  %v367 = vadd.f32 %v160, %v366
  %368 = vmatmul.f32.gmra.mxu0 %v95
  %v369 = vpop.f32.mrf.mxu0
  %v370 = vadd.f32 %v160, %v369
  %371 = vmatmul.f32.gmra.mxu0 %v98
  %v372 = vpop.f32.mrf.mxu0
  %v373 = vadd.f32 %v160, %v372
  %374 = vmatmul.f32.gmra.mxu0 %v101
  %v375 = vpop.f32.mrf.mxu0
  %v376 = vadd.f32 %v160, %v375
  %377 = vmatmul.f32.gmra.mxu0 %v104
  %v378 = vpop.f32.mrf.mxu0
  %v379 = vadd.f32 %v160, %v378
  %380 = vmatmul.f32.gmra.mxu0 %v107
  %v381 = vpop.f32.mrf.mxu0
  %v382 = vadd.f32 %v160, %v381
  %383 = vmatmul.f32.gmra.mxu0 %v110
  %v384 = vpop.f32.mrf.mxu0
  %v385 = vadd.f32 %v160, %v384
  %386 = vmatmul.f32.gmra.mxu0 %v113
  %v387 = vpop.f32.mrf.mxu0
  %v388 = vadd.f32 %v160, %v387
  %389 = vmatmul.f32.gmra.mxu0 %v116
  %v390 = vpop.f32.mrf.mxu0
  %v391 = vadd.f32 %v160, %v390
  %392 = vmatmul.f32.gmra.mxu0 %v119
  %v393 = vpop.f32.mrf.mxu0
  %v394 = vadd.f32 %v160, %v393
  %395 = vdwg.mxu0
  %396 = vmatpush.msra.mxu0 %v153
  %397 = vmatpush.msra.mxu0 %v152
  %398 = vmatpush.msra.mxu0 %v151
  %399 = vmatpush.msra.mxu0 %v150
  %400 = vmatpush.msra.mxu0 %v149
  %401 = vmatpush.msra.mxu0 %v148
  %402 = vmatpush.msra.mxu0 %v147
  %403 = vmatpush.msra.mxu0 %v146
  %404 = vmatpush.msra.mxu0 %v145
  %405 = vmatpush.msra.mxu0 %v144
  %406 = vmatpush.msra.mxu0 %v143
  %407 = vmatpush.msra.mxu0 %v142
  %408 = vmatpush.msra.mxu0 %v141
  %409 = vmatpush.msra.mxu0 %v140
  %410 = vmatpush.msra.mxu0 %v139
  %411 = vmatpush.msra.mxu0 %v138
  %412 = vmatmul.f32.gmra.mxu0 %v15
  %v413 = vpop.f32.mrf.mxu0
  %v414 = vadd.f32 %v289, %v413
  %415 = vmatmul.f32.gmra.mxu0 %v18
  %v416 = vpop.f32.mrf.mxu0
  %v417 = vadd.f32 %v292, %v416
  %418 = vmatmul.f32.gmra.mxu0 %v21
  %v419 = vpop.f32.mrf.mxu0
  %v420 = vadd.f32 %v295, %v419
  %421 = vmatmul.f32.gmra.mxu0 %v24
  %v422 = vpop.f32.mrf.mxu0
  %v423 = vadd.f32 %v298, %v422
  %424 = vmatmul.f32.gmra.mxu0 %v27
  %v425 = vpop.f32.mrf.mxu0
  %v426 = vadd.f32 %v301, %v425
  %427 = vmatmul.f32.gmra.mxu0 %v30
  %v428 = vpop.f32.mrf.mxu0
  %v429 = vadd.f32 %v304, %v428
  %430 = vmatmul.f32.gmra.mxu0 %v33
  %v431 = vpop.f32.mrf.mxu0
  %v432 = vadd.f32 %v307, %v431
  %433 = vmatmul.f32.gmra.mxu0 %v36
  %v434 = vpop.f32.mrf.mxu0
  %v435 = vadd.f32 %v310, %v434
  %436 = vmatmul.f32.gmra.mxu0 %v39
  %v437 = vpop.f32.mrf.mxu0
  %v438 = vadd.f32 %v313, %v437
  %439 = vmatmul.f32.gmra.mxu0 %v42
  %v440 = vpop.f32.mrf.mxu0
  %v441 = vadd.f32 %v316, %v440
  %442 = vmatmul.f32.gmra.mxu0 %v45
  %v443 = vpop.f32.mrf.mxu0
  %v444 = vadd.f32 %v319, %v443
  %445 = vmatmul.f32.gmra.mxu0 %v48
  %v446 = vpop.f32.mrf.mxu0
  %v447 = vadd.f32 %v322, %v446
  %448 = vmatmul.f32.gmra.mxu0 %v51
  %v449 = vpop.f32.mrf.mxu0
  %v450 = vadd.f32 %v325, %v449
  %451 = vmatmul.f32.gmra.mxu0 %v54
  %v452 = vpop.f32.mrf.mxu0
  %v453 = vadd.f32 %v328, %v452
  %454 = vmatmul.f32.gmra.mxu0 %v57
  %v455 = vpop.f32.mrf.mxu0
  %v456 = vadd.f32 %v331, %v455
  %457 = vmatmul.f32.gmra.mxu0 %v60
  %v458 = vpop.f32.mrf.mxu0
  %v459 = vadd.f32 %v334, %v458
  %460 = vmatmul.f32.gmra.mxu0 %v63
  %v461 = vpop.f32.mrf.mxu0
  %v462 = vadd.f32 %v337, %v461
  %463 = vmatmul.f32.gmra.mxu0 %v66
  %v464 = vpop.f32.mrf.mxu0
  %v465 = vadd.f32 %v340, %v464
  %466 = vmatmul.f32.gmra.mxu0 %v69
  %v467 = vpop.f32.mrf.mxu0
  %v468 = vadd.f32 %v343, %v467
  %469 = vmatmul.f32.gmra.mxu0 %v72
  %v470 = vpop.f32.mrf.mxu0
  %v471 = vadd.f32 %v346, %v470
  %472 = vmatmul.f32.gmra.mxu0 %v75
  %v473 = vpop.f32.mrf.mxu0
  %v474 = vadd.f32 %v349, %v473
  %475 = vmatmul.f32.gmra.mxu0 %v78
  %v476 = vpop.f32.mrf.mxu0
  %v477 = vadd.f32 %v352, %v476
  %478 = vmatmul.f32.gmra.mxu0 %v81
  %v479 = vpop.f32.mrf.mxu0
  %v480 = vadd.f32 %v355, %v479
  %481 = vmatmul.f32.gmra.mxu0 %v84
  %v482 = vpop.f32.mrf.mxu0
  %v483 = vadd.f32 %v358, %v482
  %484 = vmatmul.f32.gmra.mxu0 %v87
  %v485 = vpop.f32.mrf.mxu0
  %v486 = vadd.f32 %v361, %v485
  %487 = vmatmul.f32.gmra.mxu0 %v90
  %v488 = vpop.f32.mrf.mxu0
  %v489 = vadd.f32 %v364, %v488
  %490 = vmatmul.f32.gmra.mxu0 %v93
  %v491 = vpop.f32.mrf.mxu0
  %v492 = vadd.f32 %v367, %v491
  %493 = vmatmul.f32.gmra.mxu0 %v96
  %v494 = vpop.f32.mrf.mxu0
  %v495 = vadd.f32 %v370, %v494
  %496 = vmatmul.f32.gmra.mxu0 %v99
  %v497 = vpop.f32.mrf.mxu0
  %v498 = vadd.f32 %v373, %v497
  %499 = vmatmul.f32.gmra.mxu0 %v102
  %v500 = vpop.f32.mrf.mxu0
  %v501 = vadd.f32 %v376, %v500
  %502 = vmatmul.f32.gmra.mxu0 %v105
  %v503 = vpop.f32.mrf.mxu0
  %v504 = vadd.f32 %v379, %v503
  %505 = vmatmul.f32.gmra.mxu0 %v108
  %v506 = vpop.f32.mrf.mxu0
  %v507 = vadd.f32 %v382, %v506
  %508 = vmatmul.f32.gmra.mxu0 %v111
  %v509 = vpop.f32.mrf.mxu0
  %v510 = vadd.f32 %v385, %v509
  %511 = vmatmul.f32.gmra.mxu0 %v114
  %v512 = vpop.f32.mrf.mxu0
  %v513 = vadd.f32 %v388, %v512
  %514 = vmatmul.f32.gmra.mxu0 %v117
  %v515 = vpop.f32.mrf.mxu0
  %v516 = vadd.f32 %v391, %v515
  %517 = vmatmul.f32.gmra.mxu0 %v120
  %v518 = vpop.f32.mrf.mxu0
  %v519 = vadd.f32 %v394, %v518
  %520 = vdwg.mxu0
  %521 = vmatpush.msra.mxu0 0.0
  %522 = vmatpush.msra.mxu0 0.0
  %523 = vmatpush.msra.mxu0 0.0
  %524 = vmatpush.msra.mxu0 0.0
  %525 = vmatpush.msra.mxu0 0.0
  %526 = vmatpush.msra.mxu0 0.0
  %527 = vmatpush.msra.mxu0 0.0
  %528 = vmatpush.msra.mxu0 0.0
  %529 = vmatpush.msra.mxu0 0.0
  %530 = vmatpush.msra.mxu0 0.0
  %531 = vmatpush.msra.mxu0 0.0
  %532 = vmatpush.msra.mxu0 0.0
  %533 = vmatpush.msra.mxu0 %v157
  %534 = vmatpush.msra.mxu0 %v156
  %535 = vmatpush.msra.mxu0 %v155
  %536 = vmatpush.msra.mxu0 %v154
  %537 = vmatmul.f32.gmra.mxu0 %v164
  %v538 = vpop.f32.mrf.mxu0
  %v539 = vadd.f32 %v414, %v538
  %540 = vmatmul.f32.gmra.mxu0 %v167
  %v541 = vpop.f32.mrf.mxu0
  %v542 = vadd.f32 %v417, %v541
  %543 = vmatmul.f32.gmra.mxu0 %v170
  %v544 = vpop.f32.mrf.mxu0
  %v545 = vadd.f32 %v420, %v544
  %546 = vmatmul.f32.gmra.mxu0 %v173
  %v547 = vpop.f32.mrf.mxu0
  %v548 = vadd.f32 %v423, %v547
  %549 = vmatmul.f32.gmra.mxu0 %v176
  %v550 = vpop.f32.mrf.mxu0
  %v551 = vadd.f32 %v426, %v550
  %552 = vmatmul.f32.gmra.mxu0 %v179
  %v553 = vpop.f32.mrf.mxu0
  %v554 = vadd.f32 %v429, %v553
  %555 = vmatmul.f32.gmra.mxu0 %v182
  %v556 = vpop.f32.mrf.mxu0
  %v557 = vadd.f32 %v432, %v556
  %558 = vmatmul.f32.gmra.mxu0 %v185
  %v559 = vpop.f32.mrf.mxu0
  %v560 = vadd.f32 %v435, %v559
  %561 = vmatmul.f32.gmra.mxu0 %v188
  %v562 = vpop.f32.mrf.mxu0
  %v563 = vadd.f32 %v438, %v562
  %564 = vmatmul.f32.gmra.mxu0 %v191
  %v565 = vpop.f32.mrf.mxu0
  %v566 = vadd.f32 %v441, %v565
  %567 = vmatmul.f32.gmra.mxu0 %v194
  %v568 = vpop.f32.mrf.mxu0
  %v569 = vadd.f32 %v444, %v568
  %570 = vmatmul.f32.gmra.mxu0 %v197
  %v571 = vpop.f32.mrf.mxu0
  %v572 = vadd.f32 %v447, %v571
  %573 = vmatmul.f32.gmra.mxu0 %v200
  %v574 = vpop.f32.mrf.mxu0
  %v575 = vadd.f32 %v450, %v574
  %576 = vmatmul.f32.gmra.mxu0 %v203
  %v577 = vpop.f32.mrf.mxu0
  %v578 = vadd.f32 %v453, %v577
  %579 = vmatmul.f32.gmra.mxu0 %v206
  %v580 = vpop.f32.mrf.mxu0
  %v581 = vadd.f32 %v456, %v580
  %582 = vmatmul.f32.gmra.mxu0 %v209
  %v583 = vpop.f32.mrf.mxu0
  %v584 = vadd.f32 %v459, %v583
  %585 = vmatmul.f32.gmra.mxu0 %v212
  %v586 = vpop.f32.mrf.mxu0
  %v587 = vadd.f32 %v462, %v586
  %588 = vmatmul.f32.gmra.mxu0 %v215
  %v589 = vpop.f32.mrf.mxu0
  %v590 = vadd.f32 %v465, %v589
  %591 = vmatmul.f32.gmra.mxu0 %v218
  %v592 = vpop.f32.mrf.mxu0
  %v593 = vadd.f32 %v468, %v592
  %594 = vmatmul.f32.gmra.mxu0 %v221
  %v595 = vpop.f32.mrf.mxu0
  %v596 = vadd.f32 %v471, %v595
  %597 = vmatmul.f32.gmra.mxu0 %v224
  %v598 = vpop.f32.mrf.mxu0
  %v599 = vadd.f32 %v474, %v598
  %600 = vmatmul.f32.gmra.mxu0 %v227
  %v601 = vpop.f32.mrf.mxu0
  %v602 = vadd.f32 %v477, %v601
  %603 = vmatmul.f32.gmra.mxu0 %v230
  %v604 = vpop.f32.mrf.mxu0
  %v605 = vadd.f32 %v480, %v604
  %606 = vmatmul.f32.gmra.mxu0 %v233
  %v607 = vpop.f32.mrf.mxu0
  %v608 = vadd.f32 %v483, %v607
  %609 = vmatmul.f32.gmra.mxu0 %v236
  %v610 = vpop.f32.mrf.mxu0
  %v611 = vadd.f32 %v486, %v610
  %612 = vmatmul.f32.gmra.mxu0 %v239
  %v613 = vpop.f32.mrf.mxu0
  %v614 = vadd.f32 %v489, %v613
  %615 = vmatmul.f32.gmra.mxu0 %v242
  %v616 = vpop.f32.mrf.mxu0
  %v617 = vadd.f32 %v492, %v616
  %618 = vmatmul.f32.gmra.mxu0 %v245
  %v619 = vpop.f32.mrf.mxu0
  %v620 = vadd.f32 %v495, %v619
  %621 = vmatmul.f32.gmra.mxu0 %v248
  %v622 = vpop.f32.mrf.mxu0
  %v623 = vadd.f32 %v498, %v622
  %624 = vmatmul.f32.gmra.mxu0 %v251
  %v625 = vpop.f32.mrf.mxu0
  %v626 = vadd.f32 %v501, %v625
  %627 = vmatmul.f32.gmra.mxu0 %v254
  %v628 = vpop.f32.mrf.mxu0
  %v629 = vadd.f32 %v504, %v628
  %630 = vmatmul.f32.gmra.mxu0 %v257
  %v631 = vpop.f32.mrf.mxu0
  %v632 = vadd.f32 %v507, %v631
  %633 = vmatmul.f32.gmra.mxu0 %v260
  %v634 = vpop.f32.mrf.mxu0
  %v635 = vadd.f32 %v510, %v634
  %636 = vmatmul.f32.gmra.mxu0 %v263
  %v637 = vpop.f32.mrf.mxu0
  %v638 = vadd.f32 %v513, %v637
  %639 = vmatmul.f32.gmra.mxu0 %v266
  %v640 = vpop.f32.mrf.mxu0
  %v641 = vadd.f32 %v516, %v640
  %642 = vmatmul.f32.gmra.mxu0 %v269
  %v643 = vpop.f32.mrf.mxu0
  %v644 = vadd.f32 %v519, %v643
  %645 = vdwg.mxu0
  %v646 = vmax.f32 %v539, 0.0
  %v647 = vmax.f32 %v542, 0.0
  %v648 = vmax.f32 %v545, 0.0
  %v649 = vmax.f32 %v548, 0.0
  %v650 = vmax.f32 %v551, 0.0
  %v651 = vmax.f32 %v554, 0.0
  %v652 = vmax.f32 %v557, 0.0
  %v653 = vmax.f32 %v560, 0.0
  %v654 = vmax.f32 %v563, 0.0
  %v655 = vmax.f32 %v566, 0.0
  %v656 = vmax.f32 %v569, 0.0
  %v657 = vmax.f32 %v572, 0.0
  %v658 = vmax.f32 %v575, 0.0
  %v659 = vmax.f32 %v578, 0.0
  %v660 = vmax.f32 %v581, 0.0
  %v661 = vmax.f32 %v584, 0.0
  %v662 = vmax.f32 %v587, 0.0
  %v663 = vmax.f32 %v590, 0.0
  %v664 = vmax.f32 %v593, 0.0
  %v665 = vmax.f32 %v596, 0.0
  %v666 = vmax.f32 %v599, 0.0
  %v667 = vmax.f32 %v602, 0.0
  %v668 = vmax.f32 %v605, 0.0
  %v669 = vmax.f32 %v608, 0.0
  %v670 = vmax.f32 %v611, 0.0
  %v671 = vmax.f32 %v614, 0.0
  %v672 = vmax.f32 %v617, 0.0
  %v673 = vmax.f32 %v620, 0.0
  %v674 = vmax.f32 %v623, 0.0
  %v675 = vmax.f32 %v626, 0.0
  %v676 = vmax.f32 %v629, 0.0
  %v677 = vmax.f32 %v632, 0.0
  %v678 = vmax.f32 %v635, 0.0
  %v679 = vmax.f32 %v638, 0.0
  %v680 = vmax.f32 %v641, 0.0
  %v681 = vmax.f32 %v644, 0.0
  %682 = vst.msk [vmem:[%s3] sm:$0xff] %vm162, %v646
  %683 = vst.msk [vmem:[%s3 + $0x8] sm:$0xff] %vm162, %v647
  %684 = vst.msk [vmem:[%s3 + $0x10] sm:$0xff] %vm162, %v648
  %685 = vst.msk [vmem:[%s3 + $0x18] sm:$0xff] %vm162, %v649
  %686 = vst.msk [vmem:[%s3 + $0x20] sm:$0xff] %vm162, %v650
  %687 = vst.msk [vmem:[%s3 + $0x28] sm:$0xff] %vm162, %v651
  %688 = vst.msk [vmem:[%s3 + $0x30] sm:$0xff] %vm162, %v652
  %689 = vst.msk [vmem:[%s3 + $0x38] sm:$0xff] %vm162, %v653
  %690 = vst.msk [vmem:[%s3 + $0x40] sm:$0xff] %vm162, %v654
  %691 = vst.msk [vmem:[%s3 + $0x48] sm:$0xff] %vm162, %v655
  %692 = vst.msk [vmem:[%s3 + $0x50] sm:$0xff] %vm162, %v656
  %693 = vst.msk [vmem:[%s3 + $0x58] sm:$0xff] %vm162, %v657
  %694 = vst.msk [vmem:[%s3 + $0x60] sm:$0xff] %vm162, %v658
  %695 = vst.msk [vmem:[%s3 + $0x68] sm:$0xff] %vm162, %v659
  %696 = vst.msk [vmem:[%s3 + $0x70] sm:$0xff] %vm162, %v660
  %697 = vst.msk [vmem:[%s3 + $0x78] sm:$0xff] %vm162, %v661
  %698 = vst.msk [vmem:[%s3 + $0x80] sm:$0xff] %vm162, %v662
  %699 = vst.msk [vmem:[%s3 + $0x88] sm:$0xff] %vm162, %v663
  %700 = vst.msk [vmem:[%s3 + $0x90] sm:$0xff] %vm162, %v664
  %701 = vst.msk [vmem:[%s3 + $0x98] sm:$0xff] %vm162, %v665
  %702 = vst.msk [vmem:[%s3 + $0xa0] sm:$0xff] %vm162, %v666
  %703 = vst.msk [vmem:[%s3 + $0xa8] sm:$0xff] %vm162, %v667
  %704 = vst.msk [vmem:[%s3 + $0xb0] sm:$0xff] %vm162, %v668
  %705 = vst.msk [vmem:[%s3 + $0xb8] sm:$0xff] %vm162, %v669
  %706 = vst.msk [vmem:[%s3 + $0xc0] sm:$0xff] %vm162, %v670
  %707 = vst.msk [vmem:[%s3 + $0xc8] sm:$0xff] %vm162, %v671
  %708 = vst.msk [vmem:[%s3 + $0xd0] sm:$0xff] %vm162, %v672
  %709 = vst.msk [vmem:[%s3 + $0xd8] sm:$0xff] %vm162, %v673
  %710 = vst.msk [vmem:[%s3 + $0xe0] sm:$0xff] %vm162, %v674
  %711 = vst.msk [vmem:[%s3 + $0xe8] sm:$0xff] %vm162, %v675
  %712 = vst.msk [vmem:[%s3 + $0xf0] sm:$0xff] %vm162, %v676
  %713 = vst.msk [vmem:[%s3 + $0xf8] sm:$0xff] %vm162, %v677
  %714 = vst.msk [vmem:[%s3 + $0x100] sm:$0xff] %vm162, %v678
  %715 = vst.msk [vmem:[%s3 + $0x108] sm:$0xff] %vm162, %v679
  %716 = vst.msk [vmem:[%s3 + $0x110] sm:$0xff] %vm162, %v680
  %717 = vst.msk [vmem:[%s3 + $0x118] sm:$0xff] %vm162, %v681
  // Predicated region
  $region14: #{im2latex_forward.11} parent=0 // pred_check
    _
  $region15: #{im2latex_forward.11} parent=0 // pred_check_branch
    %719 = sbr.rel (0) target = $region17
  $region16: #{im2latex_forward.11} parent=0 // pred_region
    _
  $region17: #{im2latex_forward.11} parent=0 // pred_fallthru
    _
  // Predicated region
  $region18: #{im2latex_forward.11} parent=0 // pred_check
    _
  $region19: #{im2latex_forward.11} parent=0 // pred_check_branch
    %721 = sbr.rel (0) target = $region21
  $region20: #{im2latex_forward.11} parent=0 // pred_region
    _
  $region21: #{im2latex_forward.11} parent=0 // pred_fallthru
    _

// kernel: im2latex_forward.12
$region0: #{im2latex_forward.12}
  #allocation0 [shape = 'u32[]', space=smem, size = 0x4, offset = 0x4, fixed_abs, tag = 'smem constant byte address 0x4 - core index']
  #allocation1 [shape = 'u32[72,128]{1,0:T(1,128)}', space=vmem, size = 0x9000, scoped, tag = 'internal scratch']
  %s0 = inlined_call_operand.vmem [shape: f32[144,288], index: 0, kind: input, shape index: {}]
  %s1 = inlined_call_operand.vmem [shape: f32[288,64], index: 1, kind: input, shape index: {}]
  %s2 = inlined_call_operand.vmem [shape: f32[1,64], index: 2, kind: input, shape index: {}]
  %s3 = inlined_call_operand.vmem [shape: f32[1,64], index: 3, kind: input, shape index: {}]
  %s4 = inlined_call_operand.vmem [shape: f32[1,64], index: 4, kind: input, shape index: {}]
  %s5 = inlined_call_operand.vmem [shape: f32[144,64], index: 5, kind: output, shape index: {}]
  %s6 = sld [smem:[#allocation0]]
  $region30: #{im2latex_forward.12} parent=0
    _
  %s8 = ssub.s32 1, %s6
  %s9 = scalar_select 0, %s8, %s6
  // Predicated region
  $region2: #{im2latex_forward.12} parent=0 // pred_check
    _
  $region3: #{im2latex_forward.12} parent=0 // pred_check_branch
    %11 = sbr.rel (0) target = $region5
  $region4: #{im2latex_forward.12} parent=0 // pred_region
    _
  $region5: #{im2latex_forward.12} parent=0 // pred_fallthru
    _
  // Predicated region
  $region6: #{im2latex_forward.12} parent=0 // pred_check
    _
  $region7: #{im2latex_forward.12} parent=0 // pred_check_branch
    %13 = sbr.rel (0) target = $region9
  $region8: #{im2latex_forward.12} parent=0 // pred_region
    _
  $region9: #{im2latex_forward.12} parent=0 // pred_fallthru
    _
  // Predicated region
  $region10: #{im2latex_forward.12} parent=0 // pred_check
    _
  $region11: #{im2latex_forward.12} parent=0 // pred_check_branch
    %15 = sbr.rel (0) target = $region13
  $region12: #{im2latex_forward.12} parent=0 // pred_region
    _
  $region13: #{im2latex_forward.12} parent=0 // pred_fallthru
    _
  // Predicated region
  $region14: #{im2latex_forward.12} parent=0 // pred_check
    _
  $region15: #{im2latex_forward.12} parent=0 // pred_check_branch
    %17 = sbr.rel (0) target = $region17
  $region16: #{im2latex_forward.12} parent=0 // pred_region
    _
  $region17: #{im2latex_forward.12} parent=0 // pred_fallthru
    _
  // Predicated region
  $region18: #{im2latex_forward.12} parent=0 // pred_check
    _
  $region19: #{im2latex_forward.12} parent=0 // pred_check_branch
    %19 = sbr.rel (0) target = $region21
  $region20: #{im2latex_forward.12} parent=0 // pred_region
    _
  $region21: #{im2latex_forward.12} parent=0 // pred_fallthru
    _
  %v20 = vld [vmem:[%s0] sm:$0xff]
  %v21 = vld [vmem:[%s0 + $0x8] sm:$0xff]
  %v22 = vld [vmem:[%s0 + $0x10] sm:$0xff]
  %v23 = vld [vmem:[%s0 + $0x18] sm:$0xff]
  %v24 = vld [vmem:[%s0 + $0x20] sm:$0xff]
  %v25 = vld [vmem:[%s0 + $0x28] sm:$0xff]
  %v26 = vld [vmem:[%s0 + $0x30] sm:$0xff]
  %v27 = vld [vmem:[%s0 + $0x38] sm:$0xff]
  %v28 = vld [vmem:[%s0 + $0x40] sm:$0xff]
  %v29 = vld [vmem:[%s0 + $0x48] sm:$0xff]
  %v30 = vld [vmem:[%s0 + $0x50] sm:$0xff]
  %v31 = vld [vmem:[%s0 + $0x58] sm:$0xff]
  %v32 = vld [vmem:[%s0 + $0x60] sm:$0xff]
  %v33 = vld [vmem:[%s0 + $0x68] sm:$0xff]
  %v34 = vld [vmem:[%s0 + $0x70] sm:$0xff]
  %v35 = vld [vmem:[%s0 + $0x78] sm:$0xff]
  %v36 = vld [vmem:[%s0 + $0x80] sm:$0xff]
  %v37 = vld [vmem:[%s0 + $0x88] sm:$0xff]
  %v38 = vld [vmem:[%s0 + $0x90] sm:$0xff]
  %v39 = vld [vmem:[%s0 + $0x98] sm:$0xff]
  %v40 = vld [vmem:[%s0 + $0xa0] sm:$0xff]
  %v41 = vld [vmem:[%s0 + $0xa8] sm:$0xff]
  %v42 = vld [vmem:[%s0 + $0xb0] sm:$0xff]
  %v43 = vld [vmem:[%s0 + $0xb8] sm:$0xff]
  %v44 = vld [vmem:[%s0 + $0xc0] sm:$0xff]
  %v45 = vld [vmem:[%s0 + $0xc8] sm:$0xff]
  %v46 = vld [vmem:[%s0 + $0xd0] sm:$0xff]
  %v47 = vld [vmem:[%s0 + $0xd8] sm:$0xff]
  %v48 = vld [vmem:[%s0 + $0xe0] sm:$0xff]
  %v49 = vld [vmem:[%s0 + $0xe8] sm:$0xff]
  %v50 = vld [vmem:[%s0 + $0xf0] sm:$0xff]
  %v51 = vld [vmem:[%s0 + $0xf8] sm:$0xff]
  %v52 = vld [vmem:[%s0 + $0x100] sm:$0xff]
  %v53 = vld [vmem:[%s0 + $0x108] sm:$0xff]
  %v54 = vld [vmem:[%s0 + $0x110] sm:$0xff]
  %v55 = vld [vmem:[%s0 + $0x118] sm:$0xff]
  %v56 = vld [vmem:[%s0 + $0x120] sm:$0xff]
  %v57 = vld [vmem:[%s0 + $0x128] sm:$0xff]
  %v58 = vld [vmem:[%s0 + $0x130] sm:$0xff]
  %v59 = vld [vmem:[%s0 + $0x138] sm:$0xff]
  %v60 = vld [vmem:[%s0 + $0x140] sm:$0xff]
  %v61 = vld [vmem:[%s0 + $0x148] sm:$0xff]
  %v62 = vld [vmem:[%s0 + $0x150] sm:$0xff]
  %v63 = vld [vmem:[%s0 + $0x158] sm:$0xff]
  %v64 = vld [vmem:[%s0 + $0x160] sm:$0xff]
  %v65 = vld [vmem:[%s0 + $0x168] sm:$0xff]
  %v66 = vld [vmem:[%s0 + $0x170] sm:$0xff]
  %v67 = vld [vmem:[%s0 + $0x178] sm:$0xff]
  %v68 = vld [vmem:[%s0 + $0x180] sm:$0xff]
  %v69 = vld [vmem:[%s0 + $0x188] sm:$0xff]
  %v70 = vld [vmem:[%s0 + $0x190] sm:$0xff]
  %v71 = vld [vmem:[%s0 + $0x198] sm:$0xff]
  %v72 = vld [vmem:[%s0 + $0x1a0] sm:$0xff]
  %v73 = vld [vmem:[%s0 + $0x1a8] sm:$0xff]
  %v74 = vld [vmem:[%s1] sm:$0xff]
  %v75 = vld [vmem:[%s1 + $0x8] sm:$0xff]
  %v76 = vld [vmem:[%s1 + $0x10] sm:$0xff]
  %v77 = vld [vmem:[%s1 + $0x18] sm:$0xff]
  %v78 = vld [vmem:[%s1 + $0x20] sm:$0xff]
  %v79 = vld [vmem:[%s1 + $0x28] sm:$0xff]
  %v80 = vld [vmem:[%s1 + $0x30] sm:$0xff]
  %v81 = vld [vmem:[%s1 + $0x38] sm:$0xff]
  %v82 = vld [vmem:[%s1 + $0x40] sm:$0xff]
  %v83 = vld [vmem:[%s1 + $0x48] sm:$0xff]
  %v84 = vld [vmem:[%s1 + $0x50] sm:$0xff]
  %v85 = vld [vmem:[%s1 + $0x58] sm:$0xff]
  %v86 = vld [vmem:[%s1 + $0x60] sm:$0xff]
  %v87 = vld [vmem:[%s1 + $0x68] sm:$0xff]
  %v88 = vld [vmem:[%s1 + $0x70] sm:$0xff]
  %v89 = vld [vmem:[%s1 + $0x78] sm:$0xff]
  %v90 = vld [vmem:[%s1 + $0x80] sm:$0xff]
  %v91 = vld [vmem:[%s1 + $0x88] sm:$0xff]
  %v92 = vld [vmem:[%s1 + $0x90] sm:$0xff]
  %v93 = vld [vmem:[%s1 + $0x98] sm:$0xff]
  %v94 = vld [vmem:[%s1 + $0xa0] sm:$0xff]
  %v95 = vld [vmem:[%s1 + $0xa8] sm:$0xff]
  %v96 = vld [vmem:[%s1 + $0xb0] sm:$0xff]
  %v97 = vld [vmem:[%s1 + $0xb8] sm:$0xff]
  %v98 = vld [vmem:[%s1 + $0xc0] sm:$0xff]
  %v99 = vld [vmem:[%s1 + $0xc8] sm:$0xff]
  %v100 = vld [vmem:[%s1 + $0xd0] sm:$0xff]
  %v101 = vld [vmem:[%s1 + $0xd8] sm:$0xff]
  %v102 = vld [vmem:[%s1 + $0xe0] sm:$0xff]
  %v103 = vld [vmem:[%s1 + $0xe8] sm:$0xff]
  %v104 = vld [vmem:[%s1 + $0xf0] sm:$0xff]
  %v105 = vld [vmem:[%s1 + $0xf8] sm:$0xff]
  %v106 = vld [vmem:[%s1 + $0x100] sm:$0xff]
  %v107 = vld [vmem:[%s1 + $0x108] sm:$0xff]
  %v108 = vld [vmem:[%s1 + $0x110] sm:$0xff]
  %v109 = vld [vmem:[%s1 + $0x118] sm:$0xff]
  %v110 = vld [vmem:[%s2] sm:$0x1]
  %v112 = vperm.slane %v110, 0
  %vm114 = vcmask 261120
  %v116 = vsel %vm114, %v22, 0
  %v119 = vsel %vm114, %v25, 0
  %v122 = vsel %vm114, %v28, 0
  %v125 = vsel %vm114, %v31, 0
  %v128 = vsel %vm114, %v34, 0
  %v131 = vsel %vm114, %v37, 0
  %v134 = vsel %vm114, %v40, 0
  %v137 = vsel %vm114, %v43, 0
  %v140 = vsel %vm114, %v46, 0
  %v143 = vsel %vm114, %v49, 0
  %v146 = vsel %vm114, %v52, 0
  %v149 = vsel %vm114, %v55, 0
  %v152 = vsel %vm114, %v58, 0
  %v155 = vsel %vm114, %v61, 0
  %v158 = vsel %vm114, %v64, 0
  %v161 = vsel %vm114, %v67, 0
  %v164 = vsel %vm114, %v70, 0
  %v167 = vsel %vm114, %v73, 0
  %169 = vmatpush.msra.mxu0 %v89
  %170 = vmatpush.msra.mxu0 %v88
  %171 = vmatpush.msra.mxu0 %v87
  %172 = vmatpush.msra.mxu0 %v86
  %173 = vmatpush.msra.mxu0 %v85
  %174 = vmatpush.msra.mxu0 %v84
  %175 = vmatpush.msra.mxu0 %v83
  %176 = vmatpush.msra.mxu0 %v82
  %177 = vmatpush.msra.mxu0 %v81
  %178 = vmatpush.msra.mxu0 %v80
  %179 = vmatpush.msra.mxu0 %v79
  %180 = vmatpush.msra.mxu0 %v78
  %181 = vmatpush.msra.mxu0 %v77
  %182 = vmatpush.msra.mxu0 %v76
  %183 = vmatpush.msra.mxu0 %v75
  %184 = vmatpush.msra.mxu0 %v74
  %185 = vmatmul.f32.gmra.mxu0 %v20
  %v186 = vpop.f32.mrf.mxu0
  %v187 = vadd.f32 %v112, %v186
  %188 = vmatmul.f32.gmra.mxu0 %v23
  %v189 = vpop.f32.mrf.mxu0
  %v190 = vadd.f32 %v112, %v189
  %191 = vmatmul.f32.gmra.mxu0 %v26
  %v192 = vpop.f32.mrf.mxu0
  %v193 = vadd.f32 %v112, %v192
  %194 = vmatmul.f32.gmra.mxu0 %v29
  %v195 = vpop.f32.mrf.mxu0
  %v196 = vadd.f32 %v112, %v195
  %197 = vmatmul.f32.gmra.mxu0 %v32
  %v198 = vpop.f32.mrf.mxu0
  %v199 = vadd.f32 %v112, %v198
  %200 = vmatmul.f32.gmra.mxu0 %v35
  %v201 = vpop.f32.mrf.mxu0
  %v202 = vadd.f32 %v112, %v201
  %203 = vmatmul.f32.gmra.mxu0 %v38
  %v204 = vpop.f32.mrf.mxu0
  %v205 = vadd.f32 %v112, %v204
  %206 = vmatmul.f32.gmra.mxu0 %v41
  %v207 = vpop.f32.mrf.mxu0
  %v208 = vadd.f32 %v112, %v207
  %209 = vmatmul.f32.gmra.mxu0 %v44
  %v210 = vpop.f32.mrf.mxu0
  %v211 = vadd.f32 %v112, %v210
  %212 = vmatmul.f32.gmra.mxu0 %v47
  %v213 = vpop.f32.mrf.mxu0
  %v214 = vadd.f32 %v112, %v213
  %215 = vmatmul.f32.gmra.mxu0 %v50
  %v216 = vpop.f32.mrf.mxu0
  %v217 = vadd.f32 %v112, %v216
  %218 = vmatmul.f32.gmra.mxu0 %v53
  %v219 = vpop.f32.mrf.mxu0
  %v220 = vadd.f32 %v112, %v219
  %221 = vmatmul.f32.gmra.mxu0 %v56
  %v222 = vpop.f32.mrf.mxu0
  %v223 = vadd.f32 %v112, %v222
  %224 = vmatmul.f32.gmra.mxu0 %v59
  %v225 = vpop.f32.mrf.mxu0
  %v226 = vadd.f32 %v112, %v225
  %227 = vmatmul.f32.gmra.mxu0 %v62
  %v228 = vpop.f32.mrf.mxu0
  %v229 = vadd.f32 %v112, %v228
  %230 = vmatmul.f32.gmra.mxu0 %v65
  %v231 = vpop.f32.mrf.mxu0
  %v232 = vadd.f32 %v112, %v231
  %233 = vmatmul.f32.gmra.mxu0 %v68
  %v234 = vpop.f32.mrf.mxu0
  %v235 = vadd.f32 %v112, %v234
  %236 = vmatmul.f32.gmra.mxu0 %v71
  %v237 = vpop.f32.mrf.mxu0
  %v238 = vadd.f32 %v112, %v237
  %239 = vdwg.mxu0
  %240 = vmatpush.msra.mxu0 %v105
  %241 = vmatpush.msra.mxu0 %v104
  %242 = vmatpush.msra.mxu0 %v103
  %243 = vmatpush.msra.mxu0 %v102
  %244 = vmatpush.msra.mxu0 %v101
  %245 = vmatpush.msra.mxu0 %v100
  %246 = vmatpush.msra.mxu0 %v99
  %247 = vmatpush.msra.mxu0 %v98
  %248 = vmatpush.msra.mxu0 %v97
  %249 = vmatpush.msra.mxu0 %v96
  %250 = vmatpush.msra.mxu0 %v95
  %251 = vmatpush.msra.mxu0 %v94
  %252 = vmatpush.msra.mxu0 %v93
  %253 = vmatpush.msra.mxu0 %v92
  %254 = vmatpush.msra.mxu0 %v91
  %255 = vmatpush.msra.mxu0 %v90
  %256 = vmatmul.f32.gmra.mxu0 %v21
  %v257 = vpop.f32.mrf.mxu0
  %v258 = vadd.f32 %v187, %v257
  %259 = vmatmul.f32.gmra.mxu0 %v24
  %v260 = vpop.f32.mrf.mxu0
  %v261 = vadd.f32 %v190, %v260
  %262 = vmatmul.f32.gmra.mxu0 %v27
  %v263 = vpop.f32.mrf.mxu0
  %v264 = vadd.f32 %v193, %v263
  %265 = vmatmul.f32.gmra.mxu0 %v30
  %v266 = vpop.f32.mrf.mxu0
  %v267 = vadd.f32 %v196, %v266
  %268 = vmatmul.f32.gmra.mxu0 %v33
  %v269 = vpop.f32.mrf.mxu0
  %v270 = vadd.f32 %v199, %v269
  %271 = vmatmul.f32.gmra.mxu0 %v36
  %v272 = vpop.f32.mrf.mxu0
  %v273 = vadd.f32 %v202, %v272
  %274 = vmatmul.f32.gmra.mxu0 %v39
  %v275 = vpop.f32.mrf.mxu0
  %v276 = vadd.f32 %v205, %v275
  %277 = vmatmul.f32.gmra.mxu0 %v42
  %v278 = vpop.f32.mrf.mxu0
  %v279 = vadd.f32 %v208, %v278
  %280 = vmatmul.f32.gmra.mxu0 %v45
  %v281 = vpop.f32.mrf.mxu0
  %v282 = vadd.f32 %v211, %v281
  %283 = vmatmul.f32.gmra.mxu0 %v48
  %v284 = vpop.f32.mrf.mxu0
  %v285 = vadd.f32 %v214, %v284
  %286 = vmatmul.f32.gmra.mxu0 %v51
  %v287 = vpop.f32.mrf.mxu0
  %v288 = vadd.f32 %v217, %v287
  %289 = vmatmul.f32.gmra.mxu0 %v54
  %v290 = vpop.f32.mrf.mxu0
  %v291 = vadd.f32 %v220, %v290
  %292 = vmatmul.f32.gmra.mxu0 %v57
  %v293 = vpop.f32.mrf.mxu0
  %v294 = vadd.f32 %v223, %v293
  %295 = vmatmul.f32.gmra.mxu0 %v60
  %v296 = vpop.f32.mrf.mxu0
  %v297 = vadd.f32 %v226, %v296
  %298 = vmatmul.f32.gmra.mxu0 %v63
  %v299 = vpop.f32.mrf.mxu0
  %v300 = vadd.f32 %v229, %v299
  %301 = vmatmul.f32.gmra.mxu0 %v66
  %v302 = vpop.f32.mrf.mxu0
  %v303 = vadd.f32 %v232, %v302
  %304 = vmatmul.f32.gmra.mxu0 %v69
  %v305 = vpop.f32.mrf.mxu0
  %v306 = vadd.f32 %v235, %v305
  %307 = vmatmul.f32.gmra.mxu0 %v72
  %v308 = vpop.f32.mrf.mxu0
  %v309 = vadd.f32 %v238, %v308
  %310 = vdwg.mxu0
  %311 = vmatpush.msra.mxu0 0.0
  %312 = vmatpush.msra.mxu0 0.0
  %313 = vmatpush.msra.mxu0 0.0
  %314 = vmatpush.msra.mxu0 0.0
  %315 = vmatpush.msra.mxu0 0.0
  %316 = vmatpush.msra.mxu0 0.0
  %317 = vmatpush.msra.mxu0 0.0
  %318 = vmatpush.msra.mxu0 0.0
  %319 = vmatpush.msra.mxu0 0.0
  %320 = vmatpush.msra.mxu0 0.0
  %321 = vmatpush.msra.mxu0 0.0
  %322 = vmatpush.msra.mxu0 0.0
  %323 = vmatpush.msra.mxu0 %v109
  %324 = vmatpush.msra.mxu0 %v108
  %325 = vmatpush.msra.mxu0 %v107
  %326 = vmatpush.msra.mxu0 %v106
  %327 = vmatmul.f32.gmra.mxu0 %v116
  %v328 = vpop.f32.mrf.mxu0
  %v329 = vadd.f32 %v258, %v328
  %330 = vmatmul.f32.gmra.mxu0 %v119
  %v331 = vpop.f32.mrf.mxu0
  %v332 = vadd.f32 %v261, %v331
  %333 = vmatmul.f32.gmra.mxu0 %v122
  %v334 = vpop.f32.mrf.mxu0
  %v335 = vadd.f32 %v264, %v334
  %336 = vmatmul.f32.gmra.mxu0 %v125
  %v337 = vpop.f32.mrf.mxu0
  %v338 = vadd.f32 %v267, %v337
  %339 = vmatmul.f32.gmra.mxu0 %v128
  %v340 = vpop.f32.mrf.mxu0
  %v341 = vadd.f32 %v270, %v340
  %342 = vmatmul.f32.gmra.mxu0 %v131
  %v343 = vpop.f32.mrf.mxu0
  %v344 = vadd.f32 %v273, %v343
  %345 = vmatmul.f32.gmra.mxu0 %v134
  %v346 = vpop.f32.mrf.mxu0
  %v347 = vadd.f32 %v276, %v346
  %348 = vmatmul.f32.gmra.mxu0 %v137
  %v349 = vpop.f32.mrf.mxu0
  %v350 = vadd.f32 %v279, %v349
  %351 = vmatmul.f32.gmra.mxu0 %v140
  %v352 = vpop.f32.mrf.mxu0
  %v353 = vadd.f32 %v282, %v352
  %354 = vmatmul.f32.gmra.mxu0 %v143
  %v355 = vpop.f32.mrf.mxu0
  %v356 = vadd.f32 %v285, %v355
  %357 = vmatmul.f32.gmra.mxu0 %v146
  %v358 = vpop.f32.mrf.mxu0
  %v359 = vadd.f32 %v288, %v358
  %360 = vmatmul.f32.gmra.mxu0 %v149
  %v361 = vpop.f32.mrf.mxu0
  %v362 = vadd.f32 %v291, %v361
  %363 = vmatmul.f32.gmra.mxu0 %v152
  %v364 = vpop.f32.mrf.mxu0
  %v365 = vadd.f32 %v294, %v364
  %366 = vmatmul.f32.gmra.mxu0 %v155
  %v367 = vpop.f32.mrf.mxu0
  %v368 = vadd.f32 %v297, %v367
  %369 = vmatmul.f32.gmra.mxu0 %v158
  %v370 = vpop.f32.mrf.mxu0
  %v371 = vadd.f32 %v300, %v370
  %372 = vmatmul.f32.gmra.mxu0 %v161
  %v373 = vpop.f32.mrf.mxu0
  %v374 = vadd.f32 %v303, %v373
  %375 = vmatmul.f32.gmra.mxu0 %v164
  %v376 = vpop.f32.mrf.mxu0
  %v377 = vadd.f32 %v306, %v376
  %378 = vmatmul.f32.gmra.mxu0 %v167
  %v379 = vpop.f32.mrf.mxu0
  %v380 = vadd.f32 %v309, %v379
  %381 = vdwg.mxu0
  %vm382 = vcmask 523264
  %v383 = vsel %vm382, %v329, 0.0
  %v384 = vsel %vm382, %v332, 0.0
  %v385 = vadd.f32 %v383, %v384
  %v386 = vsel %vm382, %v335, 0.0
  %v387 = vadd.f32 %v385, %v386
  %v388 = vsel %vm382, %v338, 0.0
  %v389 = vadd.f32 %v387, %v388
  %v390 = vsel %vm382, %v341, 0.0
  %v391 = vadd.f32 %v389, %v390
  %v392 = vsel %vm382, %v344, 0.0
  %v393 = vadd.f32 %v391, %v392
  %v394 = vsel %vm382, %v347, 0.0
  %v395 = vadd.f32 %v393, %v394
  %v396 = vsel %vm382, %v350, 0.0
  %v397 = vadd.f32 %v395, %v396
  %v398 = vsel %vm382, %v353, 0.0
  %v399 = vadd.f32 %v397, %v398
  %v400 = vsel %vm382, %v356, 0.0
  %v401 = vadd.f32 %v399, %v400
  %v402 = vsel %vm382, %v359, 0.0
  %v403 = vadd.f32 %v401, %v402
  %v404 = vsel %vm382, %v362, 0.0
  %v405 = vadd.f32 %v403, %v404
  %v406 = vsel %vm382, %v365, 0.0
  %v407 = vadd.f32 %v405, %v406
  %v408 = vsel %vm382, %v368, 0.0
  %v409 = vadd.f32 %v407, %v408
  %v410 = vsel %vm382, %v371, 0.0
  %v411 = vadd.f32 %v409, %v410
  %v412 = vsel %vm382, %v374, 0.0
  %v413 = vadd.f32 %v411, %v412
  %v414 = vsel %vm382, %v377, 0.0
  %v415 = vadd.f32 %v413, %v414
  %v416 = vsel %vm382, %v380, 0.0
  %v417 = vadd.f32 %v415, %v416
  %v418 = vrot.slane %v417, 4
  %v419 = vadd.f32 %v417, %v418
  %v420 = vrot.slane %v419, 2
  %v421 = vadd.f32 %v419, %v420
  %v422 = vrot.slane %v421, 1
  %v423 = vadd.f32 %v421, %v422
  %v424 = vmul.f32 %v423, 0.0069444445
  %v425 = vmul.f32 %v329, %v329
  %v426 = vmul.f32 %v332, %v332
  %v427 = vmul.f32 %v335, %v335
  %v428 = vmul.f32 %v338, %v338
  %v429 = vmul.f32 %v341, %v341
  %v430 = vmul.f32 %v344, %v344
  %v431 = vmul.f32 %v347, %v347
  %v432 = vmul.f32 %v350, %v350
  %v433 = vmul.f32 %v353, %v353
  %v434 = vmul.f32 %v356, %v356
  %v435 = vmul.f32 %v359, %v359
  %v436 = vmul.f32 %v362, %v362
  %v437 = vmul.f32 %v365, %v365
  %v438 = vmul.f32 %v368, %v368
  %v439 = vmul.f32 %v371, %v371
  %v440 = vmul.f32 %v374, %v374
  %v441 = vmul.f32 %v377, %v377
  %v442 = vmul.f32 %v380, %v380
  %v443 = vsel %vm382, %v425, 0.0
  %v444 = vsel %vm382, %v426, 0.0
  %v445 = vadd.f32 %v443, %v444
  %v446 = vsel %vm382, %v427, 0.0
  %v447 = vadd.f32 %v445, %v446
  %v448 = vsel %vm382, %v428, 0.0
  %v449 = vadd.f32 %v447, %v448
  %v450 = vsel %vm382, %v429, 0.0
  %v451 = vadd.f32 %v449, %v450
  %v452 = vsel %vm382, %v430, 0.0
  %v453 = vadd.f32 %v451, %v452
  %v454 = vsel %vm382, %v431, 0.0
  %v455 = vadd.f32 %v453, %v454
  %v456 = vsel %vm382, %v432, 0.0
  %v457 = vadd.f32 %v455, %v456
  %v458 = vsel %vm382, %v433, 0.0
  %v459 = vadd.f32 %v457, %v458
  %v460 = vsel %vm382, %v434, 0.0
  %v461 = vadd.f32 %v459, %v460
  %v462 = vsel %vm382, %v435, 0.0
  %v463 = vadd.f32 %v461, %v462
  %v464 = vsel %vm382, %v436, 0.0
  %v465 = vadd.f32 %v463, %v464
  %v466 = vsel %vm382, %v437, 0.0
  %v467 = vadd.f32 %v465, %v466
  %v468 = vsel %vm382, %v438, 0.0
  %v469 = vadd.f32 %v467, %v468
  %v470 = vsel %vm382, %v439, 0.0
  %v471 = vadd.f32 %v469, %v470
  %v472 = vsel %vm382, %v440, 0.0
  %v473 = vadd.f32 %v471, %v472
  %v474 = vsel %vm382, %v441, 0.0
  %v475 = vadd.f32 %v473, %v474
  %v476 = vsel %vm382, %v442, 0.0
  %v477 = vadd.f32 %v475, %v476
  %v478 = vrot.slane %v477, 4
  %v479 = vadd.f32 %v477, %v478
  %v480 = vrot.slane %v479, 2
  %v481 = vadd.f32 %v479, %v480
  %v482 = vrot.slane %v481, 1
  %v483 = vadd.f32 %v481, %v482
  %v484 = vmul.f32 %v483, 0.0069444445
  %v485 = vmul.f32 %v424, %v424
  %v486 = vsub.f32 %v484, %v485
  %v487 = vsub.f32 %v329, %v424
  %v488 = vsub.f32 %v332, %v424
  %v489 = vsub.f32 %v335, %v424
  %v490 = vsub.f32 %v338, %v424
  %v491 = vsub.f32 %v341, %v424
  %v492 = vsub.f32 %v344, %v424
  %v493 = vsub.f32 %v347, %v424
  %v494 = vsub.f32 %v350, %v424
  %v495 = vsub.f32 %v353, %v424
  %v496 = vsub.f32 %v356, %v424
  %v497 = vsub.f32 %v359, %v424
  %v498 = vsub.f32 %v362, %v424
  %v499 = vsub.f32 %v365, %v424
  %v500 = vsub.f32 %v368, %v424
  %v501 = vsub.f32 %v371, %v424
  %v502 = vsub.f32 %v374, %v424
  %v503 = vsub.f32 %v377, %v424
  %v504 = vsub.f32 %v380, %v424
  %v505 = vadd.f32 %v486, 1e-05
  %v506 = vrsqrt.pop %v505
  %v507 = vmul.f32 %v506, %v505
  %v508 = vmul.f32 %v507, %v506
  %v509 = vmul.f32 0.5, %v508
  %v510 = vsub.f32 1.5, %v509
  %v511 = vmul.f32 %v506, %v510
  %vm512 = vweird.f32 %v505
  %vm513 = vweird.f32 %v506
  %vm514 = vmor %vm512, %vm513
  %v515 = vsel %vm514, %v506, %v511
  %v516 = vmul.f32 %v487, %v515
  %v517 = vmul.f32 %v488, %v515
  %v518 = vmul.f32 %v489, %v515
  %v519 = vmul.f32 %v490, %v515
  %v520 = vmul.f32 %v491, %v515
  %v521 = vmul.f32 %v492, %v515
  %v522 = vmul.f32 %v493, %v515
  %v523 = vmul.f32 %v494, %v515
  %v524 = vmul.f32 %v495, %v515
  %v525 = vmul.f32 %v496, %v515
  %v526 = vmul.f32 %v497, %v515
  %v527 = vmul.f32 %v498, %v515
  %v528 = vmul.f32 %v499, %v515
  %v529 = vmul.f32 %v500, %v515
  %v530 = vmul.f32 %v501, %v515
  %v531 = vmul.f32 %v502, %v515
  %v532 = vmul.f32 %v503, %v515
  %v533 = vmul.f32 %v504, %v515
  %v534 = vld [vmem:[%s3] sm:$0x1]
  %v536 = vperm.slane %v534, 0
  %v538 = vmul.f32 %v516, %v536
  %v539 = vmul.f32 %v517, %v536
  %v540 = vmul.f32 %v518, %v536
  %v541 = vmul.f32 %v519, %v536
  %v542 = vmul.f32 %v520, %v536
  %v543 = vmul.f32 %v521, %v536
  %v544 = vmul.f32 %v522, %v536
  %v545 = vmul.f32 %v523, %v536
  %v546 = vmul.f32 %v524, %v536
  %v547 = vmul.f32 %v525, %v536
  %v548 = vmul.f32 %v526, %v536
  %v549 = vmul.f32 %v527, %v536
  %v550 = vmul.f32 %v528, %v536
  %v551 = vmul.f32 %v529, %v536
  %v552 = vmul.f32 %v530, %v536
  %v553 = vmul.f32 %v531, %v536
  %v554 = vmul.f32 %v532, %v536
  %v555 = vmul.f32 %v533, %v536
  %v556 = vld [vmem:[%s4] sm:$0x1]
  %v558 = vperm.slane %v556, 0
  %v560 = vadd.f32 %v538, %v558
  %v561 = vadd.f32 %v539, %v558
  %v562 = vadd.f32 %v540, %v558
  %v563 = vadd.f32 %v541, %v558
  %v564 = vadd.f32 %v542, %v558
  %v565 = vadd.f32 %v543, %v558
  %v566 = vadd.f32 %v544, %v558
  %v567 = vadd.f32 %v545, %v558
  %v568 = vadd.f32 %v546, %v558
  %v569 = vadd.f32 %v547, %v558
  %v570 = vadd.f32 %v548, %v558
  %v571 = vadd.f32 %v549, %v558
  %v572 = vadd.f32 %v550, %v558
  %v573 = vadd.f32 %v551, %v558
  %v574 = vadd.f32 %v552, %v558
  %v575 = vadd.f32 %v553, %v558
  %v576 = vadd.f32 %v554, %v558
  %v577 = vadd.f32 %v555, %v558
  %v578 = vmax.f32 %v560, 0.0
  %v579 = vmax.f32 %v561, 0.0
  %v580 = vmax.f32 %v562, 0.0
  %v581 = vmax.f32 %v563, 0.0
  %v582 = vmax.f32 %v564, 0.0
  %v583 = vmax.f32 %v565, 0.0
  %v584 = vmax.f32 %v566, 0.0
  %v585 = vmax.f32 %v567, 0.0
  %v586 = vmax.f32 %v568, 0.0
  %v587 = vmax.f32 %v569, 0.0
  %v588 = vmax.f32 %v570, 0.0
  %v589 = vmax.f32 %v571, 0.0
  %v590 = vmax.f32 %v572, 0.0
  %v591 = vmax.f32 %v573, 0.0
  %v592 = vmax.f32 %v574, 0.0
  %v593 = vmax.f32 %v575, 0.0
  %v594 = vmax.f32 %v576, 0.0
  %v595 = vmax.f32 %v577, 0.0
  %596 = vst.msk [vmem:[%s5] sm:$0xff] %vm382, %v578
  %597 = vst.msk [vmem:[%s5 + $0x8] sm:$0xff] %vm382, %v579
  %598 = vst.msk [vmem:[%s5 + $0x10] sm:$0xff] %vm382, %v580
  %599 = vst.msk [vmem:[%s5 + $0x18] sm:$0xff] %vm382, %v581
  %600 = vst.msk [vmem:[%s5 + $0x20] sm:$0xff] %vm382, %v582
  %601 = vst.msk [vmem:[%s5 + $0x28] sm:$0xff] %vm382, %v583
  %602 = vst.msk [vmem:[%s5 + $0x30] sm:$0xff] %vm382, %v584
  %603 = vst.msk [vmem:[%s5 + $0x38] sm:$0xff] %vm382, %v585
  %604 = vst.msk [vmem:[%s5 + $0x40] sm:$0xff] %vm382, %v586
  %605 = vst.msk [vmem:[%s5 + $0x48] sm:$0xff] %vm382, %v587
  %606 = vst.msk [vmem:[%s5 + $0x50] sm:$0xff] %vm382, %v588
  %607 = vst.msk [vmem:[%s5 + $0x58] sm:$0xff] %vm382, %v589
  %608 = vst.msk [vmem:[%s5 + $0x60] sm:$0xff] %vm382, %v590
  %609 = vst.msk [vmem:[%s5 + $0x68] sm:$0xff] %vm382, %v591
  %610 = vst.msk [vmem:[%s5 + $0x70] sm:$0xff] %vm382, %v592
  %611 = vst.msk [vmem:[%s5 + $0x78] sm:$0xff] %vm382, %v593
  %612 = vst.msk [vmem:[%s5 + $0x80] sm:$0xff] %vm382, %v594
  %613 = vst.msk [vmem:[%s5 + $0x88] sm:$0xff] %vm382, %v595
  // Predicated region
  $region22: #{im2latex_forward.12} parent=0 // pred_check
    _
  $region23: #{im2latex_forward.12} parent=0 // pred_check_branch
    %615 = sbr.rel (0) target = $region25
  $region24: #{im2latex_forward.12} parent=0 // pred_region
    _
  $region25: #{im2latex_forward.12} parent=0 // pred_fallthru
    _
  // Predicated region
  $region26: #{im2latex_forward.12} parent=0 // pred_check
    _
  $region27: #{im2latex_forward.12} parent=0 // pred_check_branch
    %617 = sbr.rel (0) target = $region29
  $region28: #{im2latex_forward.12} parent=0 // pred_region
    _
  $region29: #{im2latex_forward.12} parent=0 // pred_fallthru
    _

// kernel: im2latex_forward.13
$region0: #{im2latex_forward.13}
  #allocation0 [shape = 'u32[]', space=smem, size = 0x4, offset = 0x4, fixed_abs, tag = 'smem constant byte address 0x4 - core index']
  #allocation1 [shape = 'u32[72,128]{1,0:T(1,128)}', space=vmem, size = 0x9000, scoped, tag = 'internal scratch']
  %s0 = inlined_call_operand.vmem [shape: f32[32,576], index: 0, kind: input, shape index: {}]
  %s1 = inlined_call_operand.vmem [shape: f32[576,64], index: 1, kind: input, shape index: {}]
  %s2 = inlined_call_operand.vmem [shape: f32[1,64], index: 2, kind: input, shape index: {}]
  %s3 = inlined_call_operand.vmem [shape: f32[1,64], index: 3, kind: input, shape index: {}]
  %s4 = inlined_call_operand.vmem [shape: f32[1,64], index: 4, kind: input, shape index: {}]
  %s5 = inlined_call_operand.vmem [shape: f32[32,64], index: 5, kind: output, shape index: {}]
  %s6 = sld [smem:[#allocation0]]
  $region30: #{im2latex_forward.13} parent=0
    _
  %s8 = ssub.s32 1, %s6
  %s9 = scalar_select 0, %s8, %s6
  // Predicated region
  $region2: #{im2latex_forward.13} parent=0 // pred_check
    _
  $region3: #{im2latex_forward.13} parent=0 // pred_check_branch
    %11 = sbr.rel (0) target = $region5
  $region4: #{im2latex_forward.13} parent=0 // pred_region
    _
  $region5: #{im2latex_forward.13} parent=0 // pred_fallthru
    _
  // Predicated region
  $region6: #{im2latex_forward.13} parent=0 // pred_check
    _
  $region7: #{im2latex_forward.13} parent=0 // pred_check_branch
    %13 = sbr.rel (0) target = $region9
  $region8: #{im2latex_forward.13} parent=0 // pred_region
    _
  $region9: #{im2latex_forward.13} parent=0 // pred_fallthru
    _
  // Predicated region
  $region10: #{im2latex_forward.13} parent=0 // pred_check
    _
  $region11: #{im2latex_forward.13} parent=0 // pred_check_branch
    %15 = sbr.rel (0) target = $region13
  $region12: #{im2latex_forward.13} parent=0 // pred_region
    _
  $region13: #{im2latex_forward.13} parent=0 // pred_fallthru
    _
  // Predicated region
  $region14: #{im2latex_forward.13} parent=0 // pred_check
    _
  $region15: #{im2latex_forward.13} parent=0 // pred_check_branch
    %17 = sbr.rel (0) target = $region17
  $region16: #{im2latex_forward.13} parent=0 // pred_region
    _
  $region17: #{im2latex_forward.13} parent=0 // pred_fallthru
    _
  // Predicated region
  $region18: #{im2latex_forward.13} parent=0 // pred_check
    _
  $region19: #{im2latex_forward.13} parent=0 // pred_check_branch
    %19 = sbr.rel (0) target = $region21
  $region20: #{im2latex_forward.13} parent=0 // pred_region
    _
  $region21: #{im2latex_forward.13} parent=0 // pred_fallthru
    _
  %v20 = vld [vmem:[%s0] sm:$0xff]
  %v21 = vld [vmem:[%s0 + $0x8] sm:$0xff]
  %v22 = vld [vmem:[%s0 + $0x10] sm:$0xff]
  %v23 = vld [vmem:[%s0 + $0x18] sm:$0xff]
  %v24 = vld [vmem:[%s0 + $0x20] sm:$0xff]
  %v25 = vld [vmem:[%s0 + $0x28] sm:$0xff]
  %v26 = vld [vmem:[%s0 + $0x30] sm:$0xff]
  %v27 = vld [vmem:[%s0 + $0x38] sm:$0xff]
  %v28 = vld [vmem:[%s0 + $0x40] sm:$0xff]
  %v29 = vld [vmem:[%s0 + $0x48] sm:$0xff]
  %v30 = vld [vmem:[%s0 + $0x50] sm:$0xff]
  %v31 = vld [vmem:[%s0 + $0x58] sm:$0xff]
  %v32 = vld [vmem:[%s0 + $0x60] sm:$0xff]
  %v33 = vld [vmem:[%s0 + $0x68] sm:$0xff]
  %v34 = vld [vmem:[%s0 + $0x70] sm:$0xff]
  %v35 = vld [vmem:[%s0 + $0x78] sm:$0xff]
  %v36 = vld [vmem:[%s0 + $0x80] sm:$0xff]
  %v37 = vld [vmem:[%s0 + $0x88] sm:$0xff]
  %v38 = vld [vmem:[%s0 + $0x90] sm:$0xff]
  %v39 = vld [vmem:[%s0 + $0x98] sm:$0xff]
  %v40 = vld [vmem:[%s1] sm:$0xff]
  %v41 = vld [vmem:[%s1 + $0x8] sm:$0xff]
  %v42 = vld [vmem:[%s1 + $0x10] sm:$0xff]
  %v43 = vld [vmem:[%s1 + $0x18] sm:$0xff]
  %v44 = vld [vmem:[%s1 + $0x20] sm:$0xff]
  %v45 = vld [vmem:[%s1 + $0x28] sm:$0xff]
  %v46 = vld [vmem:[%s1 + $0x30] sm:$0xff]
  %v47 = vld [vmem:[%s1 + $0x38] sm:$0xff]
  %v48 = vld [vmem:[%s1 + $0x40] sm:$0xff]
  %v49 = vld [vmem:[%s1 + $0x48] sm:$0xff]
  %v50 = vld [vmem:[%s1 + $0x50] sm:$0xff]
  %v51 = vld [vmem:[%s1 + $0x58] sm:$0xff]
  %v52 = vld [vmem:[%s1 + $0x60] sm:$0xff]
  %v53 = vld [vmem:[%s1 + $0x68] sm:$0xff]
  %v54 = vld [vmem:[%s1 + $0x70] sm:$0xff]
  %v55 = vld [vmem:[%s1 + $0x78] sm:$0xff]
  %v56 = vld [vmem:[%s1 + $0x80] sm:$0xff]
  %v57 = vld [vmem:[%s1 + $0x88] sm:$0xff]
  %v58 = vld [vmem:[%s1 + $0x90] sm:$0xff]
  %v59 = vld [vmem:[%s1 + $0x98] sm:$0xff]
  %v60 = vld [vmem:[%s1 + $0xa0] sm:$0xff]
  %v61 = vld [vmem:[%s1 + $0xa8] sm:$0xff]
  %v62 = vld [vmem:[%s1 + $0xb0] sm:$0xff]
  %v63 = vld [vmem:[%s1 + $0xb8] sm:$0xff]
  %v64 = vld [vmem:[%s1 + $0xc0] sm:$0xff]
  %v65 = vld [vmem:[%s1 + $0xc8] sm:$0xff]
  %v66 = vld [vmem:[%s1 + $0xd0] sm:$0xff]
  %v67 = vld [vmem:[%s1 + $0xd8] sm:$0xff]
  %v68 = vld [vmem:[%s1 + $0xe0] sm:$0xff]
  %v69 = vld [vmem:[%s1 + $0xe8] sm:$0xff]
  %v70 = vld [vmem:[%s1 + $0xf0] sm:$0xff]
  %v71 = vld [vmem:[%s1 + $0xf8] sm:$0xff]
  %v72 = vld [vmem:[%s1 + $0x100] sm:$0xff]
  %v73 = vld [vmem:[%s1 + $0x108] sm:$0xff]
  %v74 = vld [vmem:[%s1 + $0x110] sm:$0xff]
  %v75 = vld [vmem:[%s1 + $0x118] sm:$0xff]
  %v76 = vld [vmem:[%s1 + $0x120] sm:$0xff]
  %v77 = vld [vmem:[%s1 + $0x128] sm:$0xff]
  %v78 = vld [vmem:[%s1 + $0x130] sm:$0xff]
  %v79 = vld [vmem:[%s1 + $0x138] sm:$0xff]
  %v80 = vld [vmem:[%s1 + $0x140] sm:$0xff]
  %v81 = vld [vmem:[%s1 + $0x148] sm:$0xff]
  %v82 = vld [vmem:[%s1 + $0x150] sm:$0xff]
  %v83 = vld [vmem:[%s1 + $0x158] sm:$0xff]
  %v84 = vld [vmem:[%s1 + $0x160] sm:$0xff]
  %v85 = vld [vmem:[%s1 + $0x168] sm:$0xff]
  %v86 = vld [vmem:[%s1 + $0x170] sm:$0xff]
  %v87 = vld [vmem:[%s1 + $0x178] sm:$0xff]
  %v88 = vld [vmem:[%s1 + $0x180] sm:$0xff]
  %v89 = vld [vmem:[%s1 + $0x188] sm:$0xff]
  %v90 = vld [vmem:[%s1 + $0x190] sm:$0xff]
  %v91 = vld [vmem:[%s1 + $0x198] sm:$0xff]
  %v92 = vld [vmem:[%s1 + $0x1a0] sm:$0xff]
  %v93 = vld [vmem:[%s1 + $0x1a8] sm:$0xff]
  %v94 = vld [vmem:[%s1 + $0x1b0] sm:$0xff]
  %v95 = vld [vmem:[%s1 + $0x1b8] sm:$0xff]
  %v96 = vld [vmem:[%s1 + $0x1c0] sm:$0xff]
  %v97 = vld [vmem:[%s1 + $0x1c8] sm:$0xff]
  %v98 = vld [vmem:[%s1 + $0x1d0] sm:$0xff]
  %v99 = vld [vmem:[%s1 + $0x1d8] sm:$0xff]
  %v100 = vld [vmem:[%s1 + $0x1e0] sm:$0xff]
  %v101 = vld [vmem:[%s1 + $0x1e8] sm:$0xff]
  %v102 = vld [vmem:[%s1 + $0x1f0] sm:$0xff]
  %v103 = vld [vmem:[%s1 + $0x1f8] sm:$0xff]
  %v104 = vld [vmem:[%s1 + $0x200] sm:$0xff]
  %v105 = vld [vmem:[%s1 + $0x208] sm:$0xff]
  %v106 = vld [vmem:[%s1 + $0x210] sm:$0xff]
  %v107 = vld [vmem:[%s1 + $0x218] sm:$0xff]
  %v108 = vld [vmem:[%s1 + $0x220] sm:$0xff]
  %v109 = vld [vmem:[%s1 + $0x228] sm:$0xff]
  %v110 = vld [vmem:[%s1 + $0x230] sm:$0xff]
  %v111 = vld [vmem:[%s1 + $0x238] sm:$0xff]
  %v112 = vld [vmem:[%s2] sm:$0x1]
  %v114 = vperm.slane %v112, 0
  %vm116 = vcmask 523264
  %v118 = vsel %vm116, %v24, 0
  %v121 = vsel %vm116, %v29, 0
  %v124 = vsel %vm116, %v34, 0
  %v127 = vsel %vm116, %v39, 0
  %129 = vmatpush.msra.mxu0 %v55
  %130 = vmatpush.msra.mxu0 %v54
  %131 = vmatpush.msra.mxu0 %v53
  %132 = vmatpush.msra.mxu0 %v52
  %133 = vmatpush.msra.mxu0 %v51
  %134 = vmatpush.msra.mxu0 %v50
  %135 = vmatpush.msra.mxu0 %v49
  %136 = vmatpush.msra.mxu0 %v48
  %137 = vmatpush.msra.mxu0 %v47
  %138 = vmatpush.msra.mxu0 %v46
  %139 = vmatpush.msra.mxu0 %v45
  %140 = vmatpush.msra.mxu0 %v44
  %141 = vmatpush.msra.mxu0 %v43
  %142 = vmatpush.msra.mxu0 %v42
  %143 = vmatpush.msra.mxu0 %v41
  %144 = vmatpush.msra.mxu0 %v40
  %145 = vmatmul.f32.gmra.mxu0 %v20
  %v146 = vpop.f32.mrf.mxu0
  %v147 = vadd.f32 %v114, %v146
  %148 = vmatmul.f32.gmra.mxu0 %v25
  %v149 = vpop.f32.mrf.mxu0
  %v150 = vadd.f32 %v114, %v149
  %151 = vmatmul.f32.gmra.mxu0 %v30
  %v152 = vpop.f32.mrf.mxu0
  %v153 = vadd.f32 %v114, %v152
  %154 = vmatmul.f32.gmra.mxu0 %v35
  %v155 = vpop.f32.mrf.mxu0
  %v156 = vadd.f32 %v114, %v155
  %157 = vdwg.mxu0
  %158 = vmatpush.msra.mxu0 %v71
  %159 = vmatpush.msra.mxu0 %v70
  %160 = vmatpush.msra.mxu0 %v69
  %161 = vmatpush.msra.mxu0 %v68
  %162 = vmatpush.msra.mxu0 %v67
  %163 = vmatpush.msra.mxu0 %v66
  %164 = vmatpush.msra.mxu0 %v65
  %165 = vmatpush.msra.mxu0 %v64
  %166 = vmatpush.msra.mxu0 %v63
  %167 = vmatpush.msra.mxu0 %v62
  %168 = vmatpush.msra.mxu0 %v61
  %169 = vmatpush.msra.mxu0 %v60
  %170 = vmatpush.msra.mxu0 %v59
  %171 = vmatpush.msra.mxu0 %v58
  %172 = vmatpush.msra.mxu0 %v57
  %173 = vmatpush.msra.mxu0 %v56
  %174 = vmatmul.f32.gmra.mxu0 %v21
  %v175 = vpop.f32.mrf.mxu0
  %v176 = vadd.f32 %v147, %v175
  %177 = vmatmul.f32.gmra.mxu0 %v26
  %v178 = vpop.f32.mrf.mxu0
  %v179 = vadd.f32 %v150, %v178
  %180 = vmatmul.f32.gmra.mxu0 %v31
  %v181 = vpop.f32.mrf.mxu0
  %v182 = vadd.f32 %v153, %v181
  %183 = vmatmul.f32.gmra.mxu0 %v36
  %v184 = vpop.f32.mrf.mxu0
  %v185 = vadd.f32 %v156, %v184
  %186 = vdwg.mxu0
  %187 = vmatpush.msra.mxu0 %v87
  %188 = vmatpush.msra.mxu0 %v86
  %189 = vmatpush.msra.mxu0 %v85
  %190 = vmatpush.msra.mxu0 %v84
  %191 = vmatpush.msra.mxu0 %v83
  %192 = vmatpush.msra.mxu0 %v82
  %193 = vmatpush.msra.mxu0 %v81
  %194 = vmatpush.msra.mxu0 %v80
  %195 = vmatpush.msra.mxu0 %v79
  %196 = vmatpush.msra.mxu0 %v78
  %197 = vmatpush.msra.mxu0 %v77
  %198 = vmatpush.msra.mxu0 %v76
  %199 = vmatpush.msra.mxu0 %v75
  %200 = vmatpush.msra.mxu0 %v74
  %201 = vmatpush.msra.mxu0 %v73
  %202 = vmatpush.msra.mxu0 %v72
  %203 = vmatmul.f32.gmra.mxu0 %v22
  %v204 = vpop.f32.mrf.mxu0
  %v205 = vadd.f32 %v176, %v204
  %206 = vmatmul.f32.gmra.mxu0 %v27
  %v207 = vpop.f32.mrf.mxu0
  %v208 = vadd.f32 %v179, %v207
  %209 = vmatmul.f32.gmra.mxu0 %v32
  %v210 = vpop.f32.mrf.mxu0
  %v211 = vadd.f32 %v182, %v210
  %212 = vmatmul.f32.gmra.mxu0 %v37
  %v213 = vpop.f32.mrf.mxu0
  %v214 = vadd.f32 %v185, %v213
  %215 = vdwg.mxu0
  %216 = vmatpush.msra.mxu0 %v103
  %217 = vmatpush.msra.mxu0 %v102
  %218 = vmatpush.msra.mxu0 %v101
  %219 = vmatpush.msra.mxu0 %v100
  %220 = vmatpush.msra.mxu0 %v99
  %221 = vmatpush.msra.mxu0 %v98
  %222 = vmatpush.msra.mxu0 %v97
  %223 = vmatpush.msra.mxu0 %v96
  %224 = vmatpush.msra.mxu0 %v95
  %225 = vmatpush.msra.mxu0 %v94
  %226 = vmatpush.msra.mxu0 %v93
  %227 = vmatpush.msra.mxu0 %v92
  %228 = vmatpush.msra.mxu0 %v91
  %229 = vmatpush.msra.mxu0 %v90
  %230 = vmatpush.msra.mxu0 %v89
  %231 = vmatpush.msra.mxu0 %v88
  %232 = vmatmul.f32.gmra.mxu0 %v23
  %v233 = vpop.f32.mrf.mxu0
  %v234 = vadd.f32 %v205, %v233
  %235 = vmatmul.f32.gmra.mxu0 %v28
  %v236 = vpop.f32.mrf.mxu0
  %v237 = vadd.f32 %v208, %v236
  %238 = vmatmul.f32.gmra.mxu0 %v33
  %v239 = vpop.f32.mrf.mxu0
  %v240 = vadd.f32 %v211, %v239
  %241 = vmatmul.f32.gmra.mxu0 %v38
  %v242 = vpop.f32.mrf.mxu0
  %v243 = vadd.f32 %v214, %v242
  %244 = vdwg.mxu0
  %245 = vmatpush.msra.mxu0 0.0
  %246 = vmatpush.msra.mxu0 0.0
  %247 = vmatpush.msra.mxu0 0.0
  %248 = vmatpush.msra.mxu0 0.0
  %249 = vmatpush.msra.mxu0 0.0
  %250 = vmatpush.msra.mxu0 0.0
  %251 = vmatpush.msra.mxu0 0.0
  %252 = vmatpush.msra.mxu0 0.0
  %253 = vmatpush.msra.mxu0 %v111
  %254 = vmatpush.msra.mxu0 %v110
  %255 = vmatpush.msra.mxu0 %v109
  %256 = vmatpush.msra.mxu0 %v108
  %257 = vmatpush.msra.mxu0 %v107
  %258 = vmatpush.msra.mxu0 %v106
  %259 = vmatpush.msra.mxu0 %v105
  %260 = vmatpush.msra.mxu0 %v104
  %261 = vmatmul.f32.gmra.mxu0 %v118
  %v262 = vpop.f32.mrf.mxu0
  %v263 = vadd.f32 %v234, %v262
  %264 = vmatmul.f32.gmra.mxu0 %v121
  %v265 = vpop.f32.mrf.mxu0
  %v266 = vadd.f32 %v237, %v265
  %267 = vmatmul.f32.gmra.mxu0 %v124
  %v268 = vpop.f32.mrf.mxu0
  %v269 = vadd.f32 %v240, %v268
  %270 = vmatmul.f32.gmra.mxu0 %v127
  %v271 = vpop.f32.mrf.mxu0
  %v272 = vadd.f32 %v243, %v271
  %273 = vdwg.mxu0
  %v274 = vsel %vm116, %v263, 0.0
  %v275 = vsel %vm116, %v266, 0.0
  %v276 = vadd.f32 %v274, %v275
  %v277 = vsel %vm116, %v269, 0.0
  %v278 = vadd.f32 %v276, %v277
  %v279 = vsel %vm116, %v272, 0.0
  %v280 = vadd.f32 %v278, %v279
  %v281 = vrot.slane %v280, 4
  %v282 = vadd.f32 %v280, %v281
  %v283 = vrot.slane %v282, 2
  %v284 = vadd.f32 %v282, %v283
  %v285 = vrot.slane %v284, 1
  %v286 = vadd.f32 %v284, %v285
  %v287 = vmul.f32 %v286, 0.03125
  %v288 = vmul.f32 %v263, %v263
  %v289 = vmul.f32 %v266, %v266
  %v290 = vmul.f32 %v269, %v269
  %v291 = vmul.f32 %v272, %v272
  %v292 = vsel %vm116, %v288, 0.0
  %v293 = vsel %vm116, %v289, 0.0
  %v294 = vadd.f32 %v292, %v293
  %v295 = vsel %vm116, %v290, 0.0
  %v296 = vadd.f32 %v294, %v295
  %v297 = vsel %vm116, %v291, 0.0
  %v298 = vadd.f32 %v296, %v297
  %v299 = vrot.slane %v298, 4
  %v300 = vadd.f32 %v298, %v299
  %v301 = vrot.slane %v300, 2
  %v302 = vadd.f32 %v300, %v301
  %v303 = vrot.slane %v302, 1
  %v304 = vadd.f32 %v302, %v303
  %v305 = vmul.f32 %v304, 0.03125
  %v306 = vmul.f32 %v287, %v287
  %v307 = vsub.f32 %v305, %v306
  %v308 = vsub.f32 %v263, %v287
  %v309 = vsub.f32 %v266, %v287
  %v310 = vsub.f32 %v269, %v287
  %v311 = vsub.f32 %v272, %v287
  %v312 = vadd.f32 %v307, 1e-05
  %v313 = vrsqrt.pop %v312
  %v314 = vmul.f32 %v313, %v312
  %v315 = vmul.f32 %v314, %v313
  %v316 = vmul.f32 0.5, %v315
  %v317 = vsub.f32 1.5, %v316
  %v318 = vmul.f32 %v313, %v317
  %vm319 = vweird.f32 %v312
  %vm320 = vweird.f32 %v313
  %vm321 = vmor %vm319, %vm320
  %v322 = vsel %vm321, %v313, %v318
  %v323 = vmul.f32 %v308, %v322
  %v324 = vmul.f32 %v309, %v322
  %v325 = vmul.f32 %v310, %v322
  %v326 = vmul.f32 %v311, %v322
  %v327 = vld [vmem:[%s3] sm:$0x1]
  %v329 = vperm.slane %v327, 0
  %v331 = vmul.f32 %v323, %v329
  %v332 = vmul.f32 %v324, %v329
  %v333 = vmul.f32 %v325, %v329
  %v334 = vmul.f32 %v326, %v329
  %v335 = vld [vmem:[%s4] sm:$0x1]
  %v337 = vperm.slane %v335, 0
  %v339 = vadd.f32 %v331, %v337
  %v340 = vadd.f32 %v332, %v337
  %v341 = vadd.f32 %v333, %v337
  %v342 = vadd.f32 %v334, %v337
  %v343 = vmax.f32 %v339, 0.0
  %v344 = vmax.f32 %v340, 0.0
  %v345 = vmax.f32 %v341, 0.0
  %v346 = vmax.f32 %v342, 0.0
  %347 = vst.msk [vmem:[%s5] sm:$0xff] %vm116, %v343
  %348 = vst.msk [vmem:[%s5 + $0x8] sm:$0xff] %vm116, %v344
  %349 = vst.msk [vmem:[%s5 + $0x10] sm:$0xff] %vm116, %v345
  %350 = vst.msk [vmem:[%s5 + $0x18] sm:$0xff] %vm116, %v346
  // Predicated region
  $region22: #{im2latex_forward.13} parent=0 // pred_check
    _
  $region23: #{im2latex_forward.13} parent=0 // pred_check_branch
    %352 = sbr.rel (0) target = $region25
  $region24: #{im2latex_forward.13} parent=0 // pred_region
    _
  $region25: #{im2latex_forward.13} parent=0 // pred_fallthru
    _
  // Predicated region
  $region26: #{im2latex_forward.13} parent=0 // pred_check
    _
  $region27: #{im2latex_forward.13} parent=0 // pred_check_branch
    %354 = sbr.rel (0) target = $region29
  $region28: #{im2latex_forward.13} parent=0 // pred_region
    _
  $region29: #{im2latex_forward.13} parent=0 // pred_fallthru
    _

// kernel: im2latex_forward.14
$region0: #{im2latex_forward.14}
  #allocation0 [shape = 'u32[]', space=smem, size = 0x4, offset = 0x4, fixed_abs, tag = 'smem constant byte address 0x4 - core index']
  #allocation1 [shape = 'u32[72,128]{1,0:T(1,128)}', space=vmem, size = 0x9000, scoped, tag = 'internal scratch']
  #allocation2 [shape = 'f32[8,16]{1,0:T(8,128)}', space=vmem, size = 0x1000, scoped, tag = 'scratch operand']
  #allocation3 [shape = 'f32[8,16]{1,0:T(8,128)}', space=vmem, size = 0x1000, scoped, tag = 'scratch operand']
  #allocation4 [shape = 'f32[8,16]{1,0:T(8,128)}', space=vmem, size = 0x1000, scoped, tag = 'scratch operand']
  #allocation5 [shape = 'f32[8,16]{1,0:T(8,128)}', space=vmem, size = 0x1000, scoped, tag = 'scratch operand']
  %s0 = inlined_call_operand.vmem [shape: f32[4,8,64], index: 0, kind: input, shape index: {}, may-alias: {0,1}]
  %s1 = inlined_call_operand.vmem [shape: f32[4,8,64], index: 1, kind: input, shape index: {}, may-alias: {0,1}]
  %s2 = inlined_call_operand.vmem [shape: f32[4,64,16], index: 2, kind: input, shape index: {}]
  %s3 = inlined_call_operand.vmem [shape: f32[4,16,16], index: 3, kind: input, shape index: {}]
  %s4 = inlined_call_operand.vmem [shape: f32[4,1,16], index: 4, kind: input, shape index: {}]
  %s5 = inlined_call_operand.vmem [shape: f32[4,1,16], index: 5, kind: input, shape index: {}]
  %s6 = inlined_call_operand.vmem [shape: f32[4,64,16], index: 6, kind: input, shape index: {}]
  %s7 = inlined_call_operand.vmem [shape: f32[4,16,16], index: 7, kind: input, shape index: {}]
  %s8 = inlined_call_operand.vmem [shape: f32[4,1,16], index: 8, kind: input, shape index: {}]
  %s9 = inlined_call_operand.vmem [shape: f32[4,1,16], index: 9, kind: input, shape index: {}]
  %s10 = inlined_call_operand.vmem [shape: f32[4,8,16], index: 10, kind: output, shape index: {0}]
  %s11 = inlined_call_operand.vmem [shape: f32[4,8,16], index: 11, kind: output, shape index: {1}]
  %12 = xla_tuple %s10, %s11
  %s13 = sld [smem:[#allocation0]]
  $region85: #{im2latex_forward.14} parent=0
    _
  %s15 = ssub.s32 1, %s13
  %s16 = scalar_select 0, %s15, %s13
  loop: start=0, step=1, limit=6
  $region2: #{im2latex_forward.14} parent=0 // loop_pre_header
    _
  $region3: #{im2latex_forward.14} parent=0 // loop_header
    %s18 = sphi 0, %s22
    %p19 = scmp.ge.s32.totalorder %s18, 6
    %s28 = sphi 0, %s30
    %s31 = sphi 0, %s28
    %s32 = sphi 0, %s31
    %s48 = sphi 0, %s32
    %s56 = sphi 0, %s58
    %s59 = sphi 0, %s56
    %s60 = sphi 0, %s59
    %s76 = sphi 0, %s60
    %s80 = sphi 0, %s80
    %s82 = sphi 0, %s80
    %s83 = sphi 0, %s82
    %s97 = sphi 0, %s83
    %s101 = sphi 0, %s101
    %s103 = sphi 0, %s101
    %s104 = sphi 0, %s103
    %s118 = sphi 0, %s104
    %s122 = sphi 0, %s122
    %s124 = sphi 0, %s122
    %s125 = sphi 0, %s124
    %s139 = sphi 0, %s125
    %s143 = sphi 0, %s143
    %s145 = sphi 0, %s143
    %s146 = sphi 0, %s145
    %s160 = sphi 0, %s146
    %s164 = sphi 0, %s164
    %s166 = sphi 0, %s164
    %s167 = sphi 0, %s166
    %s181 = sphi 0, %s167
    %s185 = sphi 0, %s185
    %s187 = sphi 0, %s185
    %s188 = sphi 0, %s187
    %s202 = sphi 0, %s188
    %s206 = sphi 0, %s206
    %s208 = sphi 0, %s206
    %s209 = sphi 0, %s208
    %s223 = sphi 0, %s209
    %s227 = sphi 0, %s227
    %s229 = sphi 0, %s227
    %s230 = sphi 0, %s229
    %s244 = sphi 0, %s230
    %s250 = sphi 0, %s252
    %s253 = sphi 0, %s250
    %s254 = sphi 0, %s253
    %s270 = sphi 0, %s254
    %s278 = sphi 0, %s280
    %s281 = sphi 0, %s278
    %s282 = sphi 0, %s281
    %s298 = sphi 0, %s282
  $region4: #{im2latex_forward.14} parent=0 // loop_header_branch
    %21 = sbr.rel (%p19) target = $region8
  $region5: #{im2latex_forward.14} parent=0 // loop_body
    %s23 = ssub.s32 %s18, 1
    %s24 = ssub.s32 %s18, 2
    %s25 = sadd.s32 %s18, 1
    %s26 = ssub.s32 %s18, %s25
    %p27 = scmp.eq.s32.totalorder %s26, 0
    %s29 = sadd.s32 %s28, 1
    %s30 = scalar_select %p27, %s28, %s29
    %p33 = pneg %p27
    %p34 = scmp.eq.s32.totalorder %s18, 3
    %p35 = por %p33, %p34
    %p36 = scmp.ne.s32.totalorder %s28, %s31
    %p37 = scmp.eq.s32.totalorder %s18, 0
    %p38 = por %p36, %p37
    %p39 = scmp.ne.s32.totalorder %s28, %s31
    %p40 = scmp.eq.s32.totalorder %s23, 3
    %p41 = por %p39, %p40
    %p42 = scmp.ne.s32.totalorder %s31, %s32
    %p43 = scmp.eq.s32.totalorder %s23, 0
    %p44 = por %p42, %p43
    %p45 = scmp.ne.s32.totalorder %s31, %s32
    %p46 = scmp.eq.s32.totalorder %s24, 3
    %p47 = por %p45, %p46
    %p49 = scmp.ne.s32.totalorder %s32, %s48
    %p50 = scmp.eq.s32.totalorder %s24, 0
    %p51 = por %p49, %p50
    %s52 = ssub.s32 3, %s18
    %s53 = ssub.s32 3, %s25
    %s54 = ssub.s32 %s52, %s53
    %p55 = scmp.eq.s32.totalorder %s54, 0
    %s57 = sadd.s32 %s56, 1
    %s58 = scalar_select %p55, %s56, %s57
    %p61 = pneg %p55
    %p62 = scmp.eq.s32.totalorder %s18, 3
    %p63 = por %p61, %p62
    %p64 = scmp.ne.s32.totalorder %s56, %s59
    %p65 = scmp.eq.s32.totalorder %s18, 0
    %p66 = por %p64, %p65
    %p67 = scmp.ne.s32.totalorder %s56, %s59
    %p68 = scmp.eq.s32.totalorder %s23, 3
    %p69 = por %p67, %p68
    %p70 = scmp.ne.s32.totalorder %s59, %s60
    %p71 = scmp.eq.s32.totalorder %s23, 0
    %p72 = por %p70, %p71
    %p73 = scmp.ne.s32.totalorder %s59, %s60
    %p74 = scmp.eq.s32.totalorder %s24, 3
    %p75 = por %p73, %p74
    %p77 = scmp.ne.s32.totalorder %s60, %s76
    %p78 = scmp.eq.s32.totalorder %s24, 0
    %p79 = por %p77, %p78
    %s81 = sadd.s32 %s80, 1
    %p84 = scmp.eq.s32.totalorder %s18, 3
    %p85 = scmp.ne.s32.totalorder %s80, %s82
    %p86 = scmp.eq.s32.totalorder %s18, 0
    %p87 = por %p85, %p86
    %p88 = scmp.ne.s32.totalorder %s80, %s82
    %p89 = scmp.eq.s32.totalorder %s23, 3
    %p90 = por %p88, %p89
    %p91 = scmp.ne.s32.totalorder %s82, %s83
    %p92 = scmp.eq.s32.totalorder %s23, 0
    %p93 = por %p91, %p92
    %p94 = scmp.ne.s32.totalorder %s82, %s83
    %p95 = scmp.eq.s32.totalorder %s24, 3
    %p96 = por %p94, %p95
    %p98 = scmp.ne.s32.totalorder %s83, %s97
    %p99 = scmp.eq.s32.totalorder %s24, 0
    %p100 = por %p98, %p99
    %s102 = sadd.s32 %s101, 1
    %p105 = scmp.eq.s32.totalorder %s18, 3
    %p106 = scmp.ne.s32.totalorder %s101, %s103
    %p107 = scmp.eq.s32.totalorder %s18, 0
    %p108 = por %p106, %p107
    %p109 = scmp.ne.s32.totalorder %s101, %s103
    %p110 = scmp.eq.s32.totalorder %s23, 3
    %p111 = por %p109, %p110
    %p112 = scmp.ne.s32.totalorder %s103, %s104
    %p113 = scmp.eq.s32.totalorder %s23, 0
    %p114 = por %p112, %p113
    %p115 = scmp.ne.s32.totalorder %s103, %s104
    %p116 = scmp.eq.s32.totalorder %s24, 3
    %p117 = por %p115, %p116
    %p119 = scmp.ne.s32.totalorder %s104, %s118
    %p120 = scmp.eq.s32.totalorder %s24, 0
    %p121 = por %p119, %p120
    %s123 = sadd.s32 %s122, 1
    %p126 = scmp.eq.s32.totalorder %s18, 3
    %p127 = scmp.ne.s32.totalorder %s122, %s124
    %p128 = scmp.eq.s32.totalorder %s18, 0
    %p129 = por %p127, %p128
    %p130 = scmp.ne.s32.totalorder %s122, %s124
    %p131 = scmp.eq.s32.totalorder %s23, 3
    %p132 = por %p130, %p131
    %p133 = scmp.ne.s32.totalorder %s124, %s125
    %p134 = scmp.eq.s32.totalorder %s23, 0
    %p135 = por %p133, %p134
    %p136 = scmp.ne.s32.totalorder %s124, %s125
    %p137 = scmp.eq.s32.totalorder %s24, 3
    %p138 = por %p136, %p137
    %p140 = scmp.ne.s32.totalorder %s125, %s139
    %p141 = scmp.eq.s32.totalorder %s24, 0
    %p142 = por %p140, %p141
    %s144 = sadd.s32 %s143, 1
    %p147 = scmp.eq.s32.totalorder %s18, 3
    %p148 = scmp.ne.s32.totalorder %s143, %s145
    %p149 = scmp.eq.s32.totalorder %s18, 0
    %p150 = por %p148, %p149
    %p151 = scmp.ne.s32.totalorder %s143, %s145
    %p152 = scmp.eq.s32.totalorder %s23, 3
    %p153 = por %p151, %p152
    %p154 = scmp.ne.s32.totalorder %s145, %s146
    %p155 = scmp.eq.s32.totalorder %s23, 0
    %p156 = por %p154, %p155
    %p157 = scmp.ne.s32.totalorder %s145, %s146
    %p158 = scmp.eq.s32.totalorder %s24, 3
    %p159 = por %p157, %p158
    %p161 = scmp.ne.s32.totalorder %s146, %s160
    %p162 = scmp.eq.s32.totalorder %s24, 0
    %p163 = por %p161, %p162
    %s165 = sadd.s32 %s164, 1
    %p168 = scmp.eq.s32.totalorder %s18, 3
    %p169 = scmp.ne.s32.totalorder %s164, %s166
    %p170 = scmp.eq.s32.totalorder %s18, 0
    %p171 = por %p169, %p170
    %p172 = scmp.ne.s32.totalorder %s164, %s166
    %p173 = scmp.eq.s32.totalorder %s23, 3
    %p174 = por %p172, %p173
    %p175 = scmp.ne.s32.totalorder %s166, %s167
    %p176 = scmp.eq.s32.totalorder %s23, 0
    %p177 = por %p175, %p176
    %p178 = scmp.ne.s32.totalorder %s166, %s167
    %p179 = scmp.eq.s32.totalorder %s24, 3
    %p180 = por %p178, %p179
    %p182 = scmp.ne.s32.totalorder %s167, %s181
    %p183 = scmp.eq.s32.totalorder %s24, 0
    %p184 = por %p182, %p183
    %s186 = sadd.s32 %s185, 1
    %p189 = scmp.eq.s32.totalorder %s18, 3
    %p190 = scmp.ne.s32.totalorder %s185, %s187
    %p191 = scmp.eq.s32.totalorder %s18, 0
    %p192 = por %p190, %p191
    %p193 = scmp.ne.s32.totalorder %s185, %s187
    %p194 = scmp.eq.s32.totalorder %s23, 3
    %p195 = por %p193, %p194
    %p196 = scmp.ne.s32.totalorder %s187, %s188
    %p197 = scmp.eq.s32.totalorder %s23, 0
    %p198 = por %p196, %p197
    %p199 = scmp.ne.s32.totalorder %s187, %s188
    %p200 = scmp.eq.s32.totalorder %s24, 3
    %p201 = por %p199, %p200
    %p203 = scmp.ne.s32.totalorder %s188, %s202
    %p204 = scmp.eq.s32.totalorder %s24, 0
    %p205 = por %p203, %p204
    %s207 = sadd.s32 %s206, 1
    %p210 = scmp.eq.s32.totalorder %s18, 3
    %p211 = scmp.ne.s32.totalorder %s206, %s208
    %p212 = scmp.eq.s32.totalorder %s18, 0
    %p213 = por %p211, %p212
    %p214 = scmp.ne.s32.totalorder %s206, %s208
    %p215 = scmp.eq.s32.totalorder %s23, 3
    %p216 = por %p214, %p215
    %p217 = scmp.ne.s32.totalorder %s208, %s209
    %p218 = scmp.eq.s32.totalorder %s23, 0
    %p219 = por %p217, %p218
    %p220 = scmp.ne.s32.totalorder %s208, %s209
    %p221 = scmp.eq.s32.totalorder %s24, 3
    %p222 = por %p220, %p221
    %p224 = scmp.ne.s32.totalorder %s209, %s223
    %p225 = scmp.eq.s32.totalorder %s24, 0
    %p226 = por %p224, %p225
    %s228 = sadd.s32 %s227, 1
    %p231 = scmp.eq.s32.totalorder %s18, 3
    %p232 = scmp.ne.s32.totalorder %s227, %s229
    %p233 = scmp.eq.s32.totalorder %s18, 0
    %p234 = por %p232, %p233
    %p235 = scmp.ne.s32.totalorder %s227, %s229
    %p236 = scmp.eq.s32.totalorder %s23, 3
    %p237 = por %p235, %p236
    %p238 = scmp.ne.s32.totalorder %s229, %s230
    %p239 = scmp.eq.s32.totalorder %s23, 0
    %p240 = por %p238, %p239
    %p241 = scmp.ne.s32.totalorder %s229, %s230
    %p242 = scmp.eq.s32.totalorder %s24, 3
    %p243 = por %p241, %p242
    %p245 = scmp.ne.s32.totalorder %s230, %s244
    %p246 = scmp.eq.s32.totalorder %s24, 0
    %p247 = por %p245, %p246
    %s248 = ssub.s32 %s18, %s25
    %p249 = scmp.eq.s32.totalorder %s248, 0
    %s251 = sadd.s32 %s250, 1
    %s252 = scalar_select %p249, %s250, %s251
    %p255 = pneg %p249
    %p256 = scmp.eq.s32.totalorder %s18, 3
    %p257 = por %p255, %p256
    %p258 = scmp.ne.s32.totalorder %s250, %s253
    %p259 = scmp.eq.s32.totalorder %s18, 0
    %p260 = por %p258, %p259
    %p261 = scmp.ne.s32.totalorder %s250, %s253
    %p262 = scmp.eq.s32.totalorder %s23, 3
    %p263 = por %p261, %p262
    %p264 = scmp.ne.s32.totalorder %s253, %s254
    %p265 = scmp.eq.s32.totalorder %s23, 0
    %p266 = por %p264, %p265
    %p267 = scmp.ne.s32.totalorder %s253, %s254
    %p268 = scmp.eq.s32.totalorder %s24, 3
    %p269 = por %p267, %p268
    %p271 = scmp.ne.s32.totalorder %s254, %s270
    %p272 = scmp.eq.s32.totalorder %s24, 0
    %p273 = por %p271, %p272
    %s274 = ssub.s32 3, %s18
    %s275 = ssub.s32 3, %s25
    %s276 = ssub.s32 %s274, %s275
    %p277 = scmp.eq.s32.totalorder %s276, 0
    %s279 = sadd.s32 %s278, 1
    %s280 = scalar_select %p277, %s278, %s279
    %p283 = pneg %p277
    %p284 = scmp.eq.s32.totalorder %s18, 3
    %p285 = por %p283, %p284
    %p286 = scmp.ne.s32.totalorder %s278, %s281
    %p287 = scmp.eq.s32.totalorder %s18, 0
    %p288 = por %p286, %p287
    %p289 = scmp.ne.s32.totalorder %s278, %s281
    %p290 = scmp.eq.s32.totalorder %s23, 3
    %p291 = por %p289, %p290
    %p292 = scmp.ne.s32.totalorder %s281, %s282
    %p293 = scmp.eq.s32.totalorder %s23, 0
    %p294 = por %p292, %p293
    %p295 = scmp.ne.s32.totalorder %s281, %s282
    %p296 = scmp.eq.s32.totalorder %s24, 3
    %p297 = por %p295, %p296
    %p299 = scmp.ne.s32.totalorder %s282, %s298
    %p300 = scmp.eq.s32.totalorder %s24, 0
    %p301 = por %p299, %p300
    %p302 = scmp.le.s32.totalorder 1, %s18
    %p303 = scmp.lt.s32.totalorder %s18, 5
    %p304 = pnand %p302, %p303
    %p305 = pneg %p304
    // Predicated region
    $region9: #{im2latex_forward.14} parent=5 // pred_check
      _
    $region10: #{im2latex_forward.14} parent=5 // pred_check_branch
      %307 = sbr.rel (%p304) target = $region12
    $region11: #{im2latex_forward.14} parent=5 // pred_region
      %s308 = ssub.s32 %s18, 1
      // Predicated region
      $region13: #{im2latex_forward.14} parent=11 // pred_check
        %p309 = pneg %p93
      $region14: #{im2latex_forward.14} parent=11 // pred_check_branch
        %311 = sbr.rel (%p309) target = $region16
      $region15: #{im2latex_forward.14} parent=11 // pred_region
        _
      $region16: #{im2latex_forward.14} parent=11 // pred_fallthru
        _
      // Predicated region
      $region17: #{im2latex_forward.14} parent=11 // pred_check
        %p312 = pneg %p114
      $region18: #{im2latex_forward.14} parent=11 // pred_check_branch
        %314 = sbr.rel (%p312) target = $region20
      $region19: #{im2latex_forward.14} parent=11 // pred_region
        _
      $region20: #{im2latex_forward.14} parent=11 // pred_fallthru
        _
      // Predicated region
      $region21: #{im2latex_forward.14} parent=11 // pred_check
        %p315 = pneg %p135
      $region22: #{im2latex_forward.14} parent=11 // pred_check_branch
        %317 = sbr.rel (%p315) target = $region24
      $region23: #{im2latex_forward.14} parent=11 // pred_region
        _
      $region24: #{im2latex_forward.14} parent=11 // pred_fallthru
        _
      // Predicated region
      $region25: #{im2latex_forward.14} parent=11 // pred_check
        %p318 = pneg %p156
      $region26: #{im2latex_forward.14} parent=11 // pred_check_branch
        %320 = sbr.rel (%p318) target = $region28
      $region27: #{im2latex_forward.14} parent=11 // pred_region
        _
      $region28: #{im2latex_forward.14} parent=11 // pred_fallthru
        _
      // Predicated region
      $region29: #{im2latex_forward.14} parent=11 // pred_check
        %p321 = pneg %p177
      $region30: #{im2latex_forward.14} parent=11 // pred_check_branch
        %323 = sbr.rel (%p321) target = $region32
      $region31: #{im2latex_forward.14} parent=11 // pred_region
        _
      $region32: #{im2latex_forward.14} parent=11 // pred_fallthru
        _
      // Predicated region
      $region33: #{im2latex_forward.14} parent=11 // pred_check
        %p324 = pneg %p198
      $region34: #{im2latex_forward.14} parent=11 // pred_check_branch
        %326 = sbr.rel (%p324) target = $region36
      $region35: #{im2latex_forward.14} parent=11 // pred_region
        _
      $region36: #{im2latex_forward.14} parent=11 // pred_fallthru
        _
      // Predicated region
      $region37: #{im2latex_forward.14} parent=11 // pred_check
        %p327 = pneg %p219
      $region38: #{im2latex_forward.14} parent=11 // pred_check_branch
        %329 = sbr.rel (%p327) target = $region40
      $region39: #{im2latex_forward.14} parent=11 // pred_region
        _
      $region40: #{im2latex_forward.14} parent=11 // pred_fallthru
        _
      // Predicated region
      $region41: #{im2latex_forward.14} parent=11 // pred_check
        %p330 = pneg %p240
      $region42: #{im2latex_forward.14} parent=11 // pred_check_branch
        %332 = sbr.rel (%p330) target = $region44
      $region43: #{im2latex_forward.14} parent=11 // pred_region
        _
      $region44: #{im2latex_forward.14} parent=11 // pred_fallthru
        _
    $region12: #{im2latex_forward.14} parent=5 // pred_fallthru
      _
    %p333 = scmp.lt.s32.totalorder %s18, 4
    // Predicated region
    $region45: #{im2latex_forward.14} parent=5 // pred_check
      %p334 = pneg %p333
    $region46: #{im2latex_forward.14} parent=5 // pred_check_branch
      %336 = sbr.rel (%p334) target = $region48
    $region47: #{im2latex_forward.14} parent=5 // pred_region
      // Predicated region
      $region49: #{im2latex_forward.14} parent=47 // pred_check
        %p337 = pneg %p38
      $region50: #{im2latex_forward.14} parent=47 // pred_check_branch
        %339 = sbr.rel (%p337) target = $region52
      $region51: #{im2latex_forward.14} parent=47 // pred_region
        %p340 = scmp.lt.s32.totalorder %s18, 3
        %s341 = scalar_select %p340, %s18, 3
        %s342 = smul.addr %s341, 8
        %s343 = scalar_lea.vmem %s0, %s342
      $region52: #{im2latex_forward.14} parent=47 // pred_fallthru
        _
      // Predicated region
      $region53: #{im2latex_forward.14} parent=47 // pred_check
        %p344 = pneg %p66
      $region54: #{im2latex_forward.14} parent=47 // pred_check_branch
        %346 = sbr.rel (%p344) target = $region56
      $region55: #{im2latex_forward.14} parent=47 // pred_region
        %s347 = ssub.s32 3, %s18
        %p348 = scmp.lt.s32.totalorder %s347, 3
        %s349 = scalar_select %p348, %s347, 3
        %s350 = smul.addr %s349, 8
        %s351 = scalar_lea.vmem %s1, %s350
        %s352 = ssub.s32 3, %s18
      $region56: #{im2latex_forward.14} parent=47 // pred_fallthru
        _
    $region48: #{im2latex_forward.14} parent=5 // pred_fallthru
      _
    %p353 = scmp.le.s32.totalorder 1, %s18
    %p354 = scmp.lt.s32.totalorder %s18, 5
    %p355 = pnand %p353, %p354
    %p356 = pneg %p355
    // Predicated region
    $region57: #{im2latex_forward.14} parent=5 // pred_check
      _
    $region58: #{im2latex_forward.14} parent=5 // pred_check_branch
      %358 = sbr.rel (%p355) target = $region60
    $region59: #{im2latex_forward.14} parent=5 // pred_region
      %s359 = ssub.s32 %s18, 1
      %p360 = scmp.lt.s32.totalorder %s23, 3
      %s361 = scalar_select %p360, %s23, 3
      %s362 = smul.addr %s361, 8
      %s363 = scalar_lea.vmem %s0, %s362
      %p364 = pneg %p44
      %p365 = pneg %p41
      %s366 = ssub.s32 3, %s23
      %p367 = scmp.lt.s32.totalorder %s366, 3
      %s368 = scalar_select %p367, %s366, 3
      %s369 = smul.addr %s368, 8
      %s370 = scalar_lea.vmem %s1, %s369
      %p371 = pneg %p72
      %p372 = pneg %p69
      %p373 = pneg %p93
      %p374 = pneg %p90
      %p375 = pneg %p114
      %p376 = pneg %p111
      %p377 = pneg %p135
      %p378 = pneg %p132
      %p379 = pneg %p156
      %p380 = pneg %p153
      %p381 = pneg %p177
      %p382 = pneg %p174
      %p383 = pneg %p198
      %p384 = pneg %p195
      %p385 = pneg %p219
      %p386 = pneg %p216
      %p387 = pneg %p240
      %p388 = pneg %p237
      %p389 = pneg %p266
      %p390 = pneg %p263
      %p391 = scmp.lt.s32.totalorder %s23, 3
      %s392 = scalar_select %p391, %s23, 3
      %s393 = smul.addr %s392, 8
      %s394 = scalar_lea.vmem %s10, %s393
      %p395 = pneg %p294
      %p396 = pneg %p291
      %s397 = ssub.s32 3, %s23
      %p398 = scmp.lt.s32.totalorder %s397, 3
      %s399 = scalar_select %p398, %s397, 3
      %s400 = smul.addr %s399, 8
      %s401 = scalar_lea.vmem %s11, %s400
      %p402 = scmp.lt.s32.totalorder %s23, 3
      %s403 = scalar_select %p402, %s23, 3
      %s404 = smul.addr %s403, 8
      %s405 = scalar_lea.vmem %s0, %s404
      %s406 = ssub.s32 3, %s23
      %p407 = scmp.lt.s32.totalorder %s406, 3
      %s408 = scalar_select %p407, %s406, 3
      %s409 = smul.addr %s408, 8
      %s410 = scalar_lea.vmem %s1, %s409
      %s411 = ssub.s32 3, %s23
      %p412 = scmp.lt.s32.totalorder %s23, 3
      %s413 = scalar_select %p412, %s23, 3
      %s414 = smul.addr %s413, 8
      %s415 = scalar_lea.vmem %s10, %s414
      %s416 = ssub.s32 3, %s23
      %p417 = scmp.lt.s32.totalorder %s416, 3
      %s418 = scalar_select %p417, %s416, 3
      %s419 = smul.addr %s418, 8
      %s420 = scalar_lea.vmem %s11, %s419
      %s421 = ssub.s32 3, %s23
      %p422 = scmp.eq.s32.totalorder %s23, 0
      // Predicated region
      $region61: #{im2latex_forward.14} parent=59 // pred_check
        %p423 = pneg %p422
      $region62: #{im2latex_forward.14} parent=59 // pred_check_branch
        %425 = sbr.rel (%p423) target = $region64
      $region63: #{im2latex_forward.14} parent=59 // pred_region
        %vm426 = vcmask 130048
        %427 = vst.msk [vmem:[#allocation2] sm:$0xff] %vm426, 0.0
        %428 = vst.msk [vmem:[#allocation3] sm:$0xff] %vm426, 0.0
        %429 = vst.msk [vmem:[#allocation4] sm:$0xff] %vm426, 0.0
        %430 = vst.msk [vmem:[#allocation5] sm:$0xff] %vm426, 0.0
      $region64: #{im2latex_forward.14} parent=59 // pred_fallthru
        _
      %v431 = vld [vmem:[%s405] sm:$0xff]
      %v432 = vld [vmem:[#allocation2] sm:$0xff]
      %v433 = vld [vmem:[#allocation3] sm:$0xff]
      %v434 = vld [vmem:[%s2] sm:$0xff]
      %v435 = vld [vmem:[%s2 + $0x8] sm:$0xff]
      %v436 = vld [vmem:[%s2 + $0x10] sm:$0xff]
      %v437 = vld [vmem:[%s2 + $0x18] sm:$0xff]
      %v438 = vld [vmem:[%s2 + $0x20] sm:$0xff]
      %v439 = vld [vmem:[%s2 + $0x28] sm:$0xff]
      %v440 = vld [vmem:[%s2 + $0x30] sm:$0xff]
      %v441 = vld [vmem:[%s2 + $0x38] sm:$0xff]
      %v442 = vld [vmem:[%s3] sm:$0xff]
      %v443 = vld [vmem:[%s3 + $0x8] sm:$0xff]
      %vm444 = vcmask 130048
      %v446 = vsel %vm444, %v432, 0
      %448 = vmatpush.msra.mxu0 0.0
      %449 = vmatpush.msra.mxu0 0.0
      %450 = vmatpush.msra.mxu0 0.0
      %451 = vmatpush.msra.mxu0 0.0
      %452 = vmatpush.msra.mxu0 0.0
      %453 = vmatpush.msra.mxu0 0.0
      %454 = vmatpush.msra.mxu0 0.0
      %455 = vmatpush.msra.mxu0 0.0
      %456 = vmatpush.msra.mxu0 0.0
      %457 = vmatpush.msra.mxu0 0.0
      %458 = vmatpush.msra.mxu0 0.0
      %459 = vmatpush.msra.mxu0 0.0
      %460 = vmatpush.msra.mxu0 0.0
      %461 = vmatpush.msra.mxu0 0.0
      %462 = vmatpush.msra.mxu0 %v443
      %463 = vmatpush.msra.mxu0 %v442
      %464 = vmatmul.f32.gmra.mxu0 %v446
      %v465 = vpop.f32.mrf.mxu0
      %v466 = vadd.f32 0.0, %v465
      %467 = vdwg.mxu0
      %vm468 = vcmask 523264
      %v470 = vsel %vm468, %v431, 0
      %472 = vmatpush.msra.mxu0 0.0
      %473 = vmatpush.msra.mxu0 0.0
      %474 = vmatpush.msra.mxu0 0.0
      %475 = vmatpush.msra.mxu0 0.0
      %476 = vmatpush.msra.mxu0 0.0
      %477 = vmatpush.msra.mxu0 0.0
      %478 = vmatpush.msra.mxu0 0.0
      %479 = vmatpush.msra.mxu0 0.0
      %480 = vmatpush.msra.mxu0 %v441
      %481 = vmatpush.msra.mxu0 %v440
      %482 = vmatpush.msra.mxu0 %v439
      %483 = vmatpush.msra.mxu0 %v438
      %484 = vmatpush.msra.mxu0 %v437
      %485 = vmatpush.msra.mxu0 %v436
      %486 = vmatpush.msra.mxu0 %v435
      %487 = vmatpush.msra.mxu0 %v434
      %488 = vmatmul.f32.gmra.mxu0 %v470
      %v489 = vpop.f32.mrf.mxu0
      %v490 = vadd.f32 %v466, %v489
      %491 = vdwg.mxu0
      %v492 = vld [vmem:[%s4] sm:$0x1]
      %v494 = vperm.slane %v492, 0
      %v496 = vadd.f32 %v490, %v494
      %v497 = vld [vmem:[%s5] sm:$0x1]
      %v499 = vperm.slane %v497, 0
      %v501 = vadd.f32 %v496, %v499
      %s502 = scalar_lea.vmem %s2, 64
      %v503 = vld [vmem:[%s502] sm:$0xff]
      %v504 = vld [vmem:[%s502 + $0x8] sm:$0xff]
      %v505 = vld [vmem:[%s502 + $0x10] sm:$0xff]
      %v506 = vld [vmem:[%s502 + $0x18] sm:$0xff]
      %v507 = vld [vmem:[%s502 + $0x20] sm:$0xff]
      %v508 = vld [vmem:[%s502 + $0x28] sm:$0xff]
      %v509 = vld [vmem:[%s502 + $0x30] sm:$0xff]
      %v510 = vld [vmem:[%s502 + $0x38] sm:$0xff]
      %s511 = scalar_lea.vmem %s3, 16
      %v512 = vld [vmem:[%s511] sm:$0xff]
      %v513 = vld [vmem:[%s511 + $0x8] sm:$0xff]
      %514 = vmatpush.msra.mxu0 0.0
      %515 = vmatpush.msra.mxu0 0.0
      %516 = vmatpush.msra.mxu0 0.0
      %517 = vmatpush.msra.mxu0 0.0
      %518 = vmatpush.msra.mxu0 0.0
      %519 = vmatpush.msra.mxu0 0.0
      %520 = vmatpush.msra.mxu0 0.0
      %521 = vmatpush.msra.mxu0 0.0
      %522 = vmatpush.msra.mxu0 0.0
      %523 = vmatpush.msra.mxu0 0.0
      %524 = vmatpush.msra.mxu0 0.0
      %525 = vmatpush.msra.mxu0 0.0
      %526 = vmatpush.msra.mxu0 0.0
      %527 = vmatpush.msra.mxu0 0.0
      %528 = vmatpush.msra.mxu0 %v513
      %529 = vmatpush.msra.mxu0 %v512
      %530 = vmatmul.f32.gmra.mxu0 %v446
      %v531 = vpop.f32.mrf.mxu0
      %v532 = vadd.f32 0.0, %v531
      %533 = vdwg.mxu0
      %534 = vmatpush.msra.mxu0 0.0
      %535 = vmatpush.msra.mxu0 0.0
      %536 = vmatpush.msra.mxu0 0.0
      %537 = vmatpush.msra.mxu0 0.0
      %538 = vmatpush.msra.mxu0 0.0
      %539 = vmatpush.msra.mxu0 0.0
      %540 = vmatpush.msra.mxu0 0.0
      %541 = vmatpush.msra.mxu0 0.0
      %542 = vmatpush.msra.mxu0 %v510
      %543 = vmatpush.msra.mxu0 %v509
      %544 = vmatpush.msra.mxu0 %v508
      %545 = vmatpush.msra.mxu0 %v507
      %546 = vmatpush.msra.mxu0 %v506
      %547 = vmatpush.msra.mxu0 %v505
      %548 = vmatpush.msra.mxu0 %v504
      %549 = vmatpush.msra.mxu0 %v503
      %550 = vmatmul.f32.gmra.mxu0 %v470
      %v551 = vpop.f32.mrf.mxu0
      %v552 = vadd.f32 %v532, %v551
      %553 = vdwg.mxu0
      %s554 = scalar_lea.vmem %s4, 1
      %v555 = vld [vmem:[%s554] sm:$0x1]
      %v557 = vperm.slane %v555, 0
      %v559 = vadd.f32 %v552, %v557
      %s560 = scalar_lea.vmem %s5, 1
      %v561 = vld [vmem:[%s560] sm:$0x1]
      %v563 = vperm.slane %v561, 0
      %v565 = vadd.f32 %v559, %v563
      %s566 = scalar_lea.vmem %s2, 128
      %v567 = vld [vmem:[%s566] sm:$0xff]
      %v568 = vld [vmem:[%s566 + $0x8] sm:$0xff]
      %v569 = vld [vmem:[%s566 + $0x10] sm:$0xff]
      %v570 = vld [vmem:[%s566 + $0x18] sm:$0xff]
      %v571 = vld [vmem:[%s566 + $0x20] sm:$0xff]
      %v572 = vld [vmem:[%s566 + $0x28] sm:$0xff]
      %v573 = vld [vmem:[%s566 + $0x30] sm:$0xff]
      %v574 = vld [vmem:[%s566 + $0x38] sm:$0xff]
      %s575 = scalar_lea.vmem %s3, 32
      %v576 = vld [vmem:[%s575] sm:$0xff]
      %v577 = vld [vmem:[%s575 + $0x8] sm:$0xff]
      %578 = vmatpush.msra.mxu0 0.0
      %579 = vmatpush.msra.mxu0 0.0
      %580 = vmatpush.msra.mxu0 0.0
      %581 = vmatpush.msra.mxu0 0.0
      %582 = vmatpush.msra.mxu0 0.0
      %583 = vmatpush.msra.mxu0 0.0
      %584 = vmatpush.msra.mxu0 0.0
      %585 = vmatpush.msra.mxu0 0.0
      %586 = vmatpush.msra.mxu0 0.0
      %587 = vmatpush.msra.mxu0 0.0
      %588 = vmatpush.msra.mxu0 0.0
      %589 = vmatpush.msra.mxu0 0.0
      %590 = vmatpush.msra.mxu0 0.0
      %591 = vmatpush.msra.mxu0 0.0
      %592 = vmatpush.msra.mxu0 %v577
      %593 = vmatpush.msra.mxu0 %v576
      %594 = vmatmul.f32.gmra.mxu0 %v446
      %v595 = vpop.f32.mrf.mxu0
      %v596 = vadd.f32 0.0, %v595
      %597 = vdwg.mxu0
      %598 = vmatpush.msra.mxu0 0.0
      %599 = vmatpush.msra.mxu0 0.0
      %600 = vmatpush.msra.mxu0 0.0
      %601 = vmatpush.msra.mxu0 0.0
      %602 = vmatpush.msra.mxu0 0.0
      %603 = vmatpush.msra.mxu0 0.0
      %604 = vmatpush.msra.mxu0 0.0
      %605 = vmatpush.msra.mxu0 0.0
      %606 = vmatpush.msra.mxu0 %v574
      %607 = vmatpush.msra.mxu0 %v573
      %608 = vmatpush.msra.mxu0 %v572
      %609 = vmatpush.msra.mxu0 %v571
      %610 = vmatpush.msra.mxu0 %v570
      %611 = vmatpush.msra.mxu0 %v569
      %612 = vmatpush.msra.mxu0 %v568
      %613 = vmatpush.msra.mxu0 %v567
      %614 = vmatmul.f32.gmra.mxu0 %v470
      %v615 = vpop.f32.mrf.mxu0
      %v616 = vadd.f32 %v596, %v615
      %617 = vdwg.mxu0
      %s618 = scalar_lea.vmem %s4, 2
      %v619 = vld [vmem:[%s618] sm:$0x1]
      %v621 = vperm.slane %v619, 0
      %v623 = vadd.f32 %v616, %v621
      %s624 = scalar_lea.vmem %s5, 2
      %v625 = vld [vmem:[%s624] sm:$0x1]
      %v627 = vperm.slane %v625, 0
      %v629 = vadd.f32 %v623, %v627
      %s630 = scalar_lea.vmem %s2, 192
      %v631 = vld [vmem:[%s630] sm:$0xff]
      %v632 = vld [vmem:[%s630 + $0x8] sm:$0xff]
      %v633 = vld [vmem:[%s630 + $0x10] sm:$0xff]
      %v634 = vld [vmem:[%s630 + $0x18] sm:$0xff]
      %v635 = vld [vmem:[%s630 + $0x20] sm:$0xff]
      %v636 = vld [vmem:[%s630 + $0x28] sm:$0xff]
      %v637 = vld [vmem:[%s630 + $0x30] sm:$0xff]
      %v638 = vld [vmem:[%s630 + $0x38] sm:$0xff]
      %s639 = scalar_lea.vmem %s3, 48
      %v640 = vld [vmem:[%s639] sm:$0xff]
      %v641 = vld [vmem:[%s639 + $0x8] sm:$0xff]
      %642 = vmatpush.msra.mxu0 0.0
      %643 = vmatpush.msra.mxu0 0.0
      %644 = vmatpush.msra.mxu0 0.0
      %645 = vmatpush.msra.mxu0 0.0
      %646 = vmatpush.msra.mxu0 0.0
      %647 = vmatpush.msra.mxu0 0.0
      %648 = vmatpush.msra.mxu0 0.0
      %649 = vmatpush.msra.mxu0 0.0
      %650 = vmatpush.msra.mxu0 0.0
      %651 = vmatpush.msra.mxu0 0.0
      %652 = vmatpush.msra.mxu0 0.0
      %653 = vmatpush.msra.mxu0 0.0
      %654 = vmatpush.msra.mxu0 0.0
      %655 = vmatpush.msra.mxu0 0.0
      %656 = vmatpush.msra.mxu0 %v641
      %657 = vmatpush.msra.mxu0 %v640
      %658 = vmatmul.f32.gmra.mxu0 %v446
      %v659 = vpop.f32.mrf.mxu0
      %v660 = vadd.f32 0.0, %v659
      %661 = vdwg.mxu0
      %662 = vmatpush.msra.mxu0 0.0
      %663 = vmatpush.msra.mxu0 0.0
      %664 = vmatpush.msra.mxu0 0.0
      %665 = vmatpush.msra.mxu0 0.0
      %666 = vmatpush.msra.mxu0 0.0
      %667 = vmatpush.msra.mxu0 0.0
      %668 = vmatpush.msra.mxu0 0.0
      %669 = vmatpush.msra.mxu0 0.0
      %670 = vmatpush.msra.mxu0 %v638
      %671 = vmatpush.msra.mxu0 %v637
      %672 = vmatpush.msra.mxu0 %v636
      %673 = vmatpush.msra.mxu0 %v635
      %674 = vmatpush.msra.mxu0 %v634
      %675 = vmatpush.msra.mxu0 %v633
      %676 = vmatpush.msra.mxu0 %v632
      %677 = vmatpush.msra.mxu0 %v631
      %678 = vmatmul.f32.gmra.mxu0 %v470
      %v679 = vpop.f32.mrf.mxu0
      %v680 = vadd.f32 %v660, %v679
      %681 = vdwg.mxu0
      %s682 = scalar_lea.vmem %s4, 3
      %v683 = vld [vmem:[%s682] sm:$0x1]
      %v685 = vperm.slane %v683, 0
      %v687 = vadd.f32 %v680, %v685
      %s688 = scalar_lea.vmem %s5, 3
      %v689 = vld [vmem:[%s688] sm:$0x1]
      %v691 = vperm.slane %v689, 0
      %v693 = vadd.f32 %v687, %v691
      %v694 = vxor.u32 %v501, 2147483648
      %v695 = vmul.f32 %v694, 1.442695
      %v696 = vpow.pop %v695
      %v697 = vadd.f32 %v696, 1.0
      %v698 = vrcp.pop %v697
      %v699 = vmul.f32 %v697, %v698
      %v700 = vsub.f32 1.0, %v699
      %v701 = vmul.f32 %v698, %v700
      %v702 = vadd.f32 %v698, %v701
      %vm703 = vweird.f32 %v697
      %vm704 = vweird.f32 %v698
      %vm705 = vmor %vm703, %vm704
      %v706 = vsel %vm705, %v698, %v702
      %v707 = vand.u32 2147483647, %v697
      %vm708 = vcmp.eq.f32.partialorder %v707, 8.507059e+37
      %v709 = vand.u32 %v697, 2147483648
      %v710 = vor.u32 1.1754944e-38, %v709
      %v711 = vsel %vm708, %v710, %v706
      %v712 = vmul.f32 1.0, %v711
      %v713 = vxor.u32 %v565, 2147483648
      %v714 = vmul.f32 %v713, 1.442695
      %v715 = vpow.pop %v714
      %v716 = vadd.f32 %v715, 1.0
      %v717 = vrcp.pop %v716
      %v718 = vmul.f32 %v716, %v717
      %v719 = vsub.f32 1.0, %v718
      %v720 = vmul.f32 %v717, %v719
      %v721 = vadd.f32 %v717, %v720
      %vm722 = vweird.f32 %v716
      %vm723 = vweird.f32 %v717
      %vm724 = vmor %vm722, %vm723
      %v725 = vsel %vm724, %v717, %v721
      %v726 = vand.u32 2147483647, %v716
      %vm727 = vcmp.eq.f32.partialorder %v726, 8.507059e+37
      %v728 = vand.u32 %v716, 2147483648
      %v729 = vor.u32 1.1754944e-38, %v728
      %v730 = vsel %vm727, %v729, %v725
      %v731 = vmul.f32 1.0, %v730
      %v732 = vtanh.pop %v629
      %v733 = vxor.u32 %v693, 2147483648
      %v734 = vmul.f32 %v733, 1.442695
      %v735 = vpow.pop %v734
      %v736 = vadd.f32 %v735, 1.0
      %v737 = vrcp.pop %v736
      %v738 = vmul.f32 %v736, %v737
      %v739 = vsub.f32 1.0, %v738
      %v740 = vmul.f32 %v737, %v739
      %v741 = vadd.f32 %v737, %v740
      %vm742 = vweird.f32 %v736
      %vm743 = vweird.f32 %v737
      %vm744 = vmor %vm742, %vm743
      %v745 = vsel %vm744, %v737, %v741
      %v746 = vand.u32 2147483647, %v736
      %vm747 = vcmp.eq.f32.partialorder %v746, 8.507059e+37
      %v748 = vand.u32 %v736, 2147483648
      %v749 = vor.u32 1.1754944e-38, %v748
      %v750 = vsel %vm747, %v749, %v745
      %v751 = vmul.f32 1.0, %v750
      %v752 = vmul.f32 %v731, %v433
      %v753 = vmul.f32 %v712, %v732
      %v754 = vadd.f32 %v752, %v753
      %v755 = vtanh.pop %v754
      %v756 = vmul.f32 %v751, %v755
      %v757 = vld [vmem:[%s410] sm:$0xff]
      %v758 = vld [vmem:[#allocation4] sm:$0xff]
      %v759 = vld [vmem:[#allocation5] sm:$0xff]
      %v760 = vld [vmem:[%s6] sm:$0xff]
      %v761 = vld [vmem:[%s6 + $0x8] sm:$0xff]
      %v762 = vld [vmem:[%s6 + $0x10] sm:$0xff]
      %v763 = vld [vmem:[%s6 + $0x18] sm:$0xff]
      %v764 = vld [vmem:[%s6 + $0x20] sm:$0xff]
      %v765 = vld [vmem:[%s6 + $0x28] sm:$0xff]
      %v766 = vld [vmem:[%s6 + $0x30] sm:$0xff]
      %v767 = vld [vmem:[%s6 + $0x38] sm:$0xff]
      %v768 = vld [vmem:[%s7] sm:$0xff]
      %v769 = vld [vmem:[%s7 + $0x8] sm:$0xff]
      %v771 = vsel %vm444, %v758, 0
      %773 = vmatpush.msra.mxu0 0.0
      %774 = vmatpush.msra.mxu0 0.0
      %775 = vmatpush.msra.mxu0 0.0
      %776 = vmatpush.msra.mxu0 0.0
      %777 = vmatpush.msra.mxu0 0.0
      %778 = vmatpush.msra.mxu0 0.0
      %779 = vmatpush.msra.mxu0 0.0
      %780 = vmatpush.msra.mxu0 0.0
      %781 = vmatpush.msra.mxu0 0.0
      %782 = vmatpush.msra.mxu0 0.0
      %783 = vmatpush.msra.mxu0 0.0
      %784 = vmatpush.msra.mxu0 0.0
      %785 = vmatpush.msra.mxu0 0.0
      %786 = vmatpush.msra.mxu0 0.0
      %787 = vmatpush.msra.mxu0 %v769
      %788 = vmatpush.msra.mxu0 %v768
      %789 = vmatmul.f32.gmra.mxu0 %v771
      %v790 = vpop.f32.mrf.mxu0
      %v791 = vadd.f32 0.0, %v790
      %792 = vdwg.mxu0
      %v794 = vsel %vm468, %v757, 0
      %796 = vmatpush.msra.mxu0 0.0
      %797 = vmatpush.msra.mxu0 0.0
      %798 = vmatpush.msra.mxu0 0.0
      %799 = vmatpush.msra.mxu0 0.0
      %800 = vmatpush.msra.mxu0 0.0
      %801 = vmatpush.msra.mxu0 0.0
      %802 = vmatpush.msra.mxu0 0.0
      %803 = vmatpush.msra.mxu0 0.0
      %804 = vmatpush.msra.mxu0 %v767
      %805 = vmatpush.msra.mxu0 %v766
      %806 = vmatpush.msra.mxu0 %v765
      %807 = vmatpush.msra.mxu0 %v764
      %808 = vmatpush.msra.mxu0 %v763
      %809 = vmatpush.msra.mxu0 %v762
      %810 = vmatpush.msra.mxu0 %v761
      %811 = vmatpush.msra.mxu0 %v760
      %812 = vmatmul.f32.gmra.mxu0 %v794
      %v813 = vpop.f32.mrf.mxu0
      %v814 = vadd.f32 %v791, %v813
      %815 = vdwg.mxu0
      %v816 = vld [vmem:[%s8] sm:$0x1]
      %v818 = vperm.slane %v816, 0
      %v820 = vadd.f32 %v814, %v818
      %v821 = vld [vmem:[%s9] sm:$0x1]
      %v823 = vperm.slane %v821, 0
      %v825 = vadd.f32 %v820, %v823
      %s826 = scalar_lea.vmem %s6, 64
      %v827 = vld [vmem:[%s826] sm:$0xff]
      %v828 = vld [vmem:[%s826 + $0x8] sm:$0xff]
      %v829 = vld [vmem:[%s826 + $0x10] sm:$0xff]
      %v830 = vld [vmem:[%s826 + $0x18] sm:$0xff]
      %v831 = vld [vmem:[%s826 + $0x20] sm:$0xff]
      %v832 = vld [vmem:[%s826 + $0x28] sm:$0xff]
      %v833 = vld [vmem:[%s826 + $0x30] sm:$0xff]
      %v834 = vld [vmem:[%s826 + $0x38] sm:$0xff]
      %s835 = scalar_lea.vmem %s7, 16
      %v836 = vld [vmem:[%s835] sm:$0xff]
      %v837 = vld [vmem:[%s835 + $0x8] sm:$0xff]
      %838 = vmatpush.msra.mxu0 0.0
      %839 = vmatpush.msra.mxu0 0.0
      %840 = vmatpush.msra.mxu0 0.0
      %841 = vmatpush.msra.mxu0 0.0
      %842 = vmatpush.msra.mxu0 0.0
      %843 = vmatpush.msra.mxu0 0.0
      %844 = vmatpush.msra.mxu0 0.0
      %845 = vmatpush.msra.mxu0 0.0
      %846 = vmatpush.msra.mxu0 0.0
      %847 = vmatpush.msra.mxu0 0.0
      %848 = vmatpush.msra.mxu0 0.0
      %849 = vmatpush.msra.mxu0 0.0
      %850 = vmatpush.msra.mxu0 0.0
      %851 = vmatpush.msra.mxu0 0.0
      %852 = vmatpush.msra.mxu0 %v837
      %853 = vmatpush.msra.mxu0 %v836
      %854 = vmatmul.f32.gmra.mxu0 %v771
      %v855 = vpop.f32.mrf.mxu0
      %v856 = vadd.f32 0.0, %v855
      %857 = vdwg.mxu0
      %858 = vmatpush.msra.mxu0 0.0
      %859 = vmatpush.msra.mxu0 0.0
      %860 = vmatpush.msra.mxu0 0.0
      %861 = vmatpush.msra.mxu0 0.0
      %862 = vmatpush.msra.mxu0 0.0
      %863 = vmatpush.msra.mxu0 0.0
      %864 = vmatpush.msra.mxu0 0.0
      %865 = vmatpush.msra.mxu0 0.0
      %866 = vmatpush.msra.mxu0 %v834
      %867 = vmatpush.msra.mxu0 %v833
      %868 = vmatpush.msra.mxu0 %v832
      %869 = vmatpush.msra.mxu0 %v831
      %870 = vmatpush.msra.mxu0 %v830
      %871 = vmatpush.msra.mxu0 %v829
      %872 = vmatpush.msra.mxu0 %v828
      %873 = vmatpush.msra.mxu0 %v827
      %874 = vmatmul.f32.gmra.mxu0 %v794
      %v875 = vpop.f32.mrf.mxu0
      %v876 = vadd.f32 %v856, %v875
      %877 = vdwg.mxu0
      %s878 = scalar_lea.vmem %s8, 1
      %v879 = vld [vmem:[%s878] sm:$0x1]
      %v881 = vperm.slane %v879, 0
      %v883 = vadd.f32 %v876, %v881
      %s884 = scalar_lea.vmem %s9, 1
      %v885 = vld [vmem:[%s884] sm:$0x1]
      %v887 = vperm.slane %v885, 0
      %v889 = vadd.f32 %v883, %v887
      %s890 = scalar_lea.vmem %s6, 128
      %v891 = vld [vmem:[%s890] sm:$0xff]
      %v892 = vld [vmem:[%s890 + $0x8] sm:$0xff]
      %v893 = vld [vmem:[%s890 + $0x10] sm:$0xff]
      %v894 = vld [vmem:[%s890 + $0x18] sm:$0xff]
      %v895 = vld [vmem:[%s890 + $0x20] sm:$0xff]
      %v896 = vld [vmem:[%s890 + $0x28] sm:$0xff]
      %v897 = vld [vmem:[%s890 + $0x30] sm:$0xff]
      %v898 = vld [vmem:[%s890 + $0x38] sm:$0xff]
      %s899 = scalar_lea.vmem %s7, 32
      %v900 = vld [vmem:[%s899] sm:$0xff]
      %v901 = vld [vmem:[%s899 + $0x8] sm:$0xff]
      %902 = vmatpush.msra.mxu0 0.0
      %903 = vmatpush.msra.mxu0 0.0
      %904 = vmatpush.msra.mxu0 0.0
      %905 = vmatpush.msra.mxu0 0.0
      %906 = vmatpush.msra.mxu0 0.0
      %907 = vmatpush.msra.mxu0 0.0
      %908 = vmatpush.msra.mxu0 0.0
      %909 = vmatpush.msra.mxu0 0.0
      %910 = vmatpush.msra.mxu0 0.0
      %911 = vmatpush.msra.mxu0 0.0
      %912 = vmatpush.msra.mxu0 0.0
      %913 = vmatpush.msra.mxu0 0.0
      %914 = vmatpush.msra.mxu0 0.0
      %915 = vmatpush.msra.mxu0 0.0
      %916 = vmatpush.msra.mxu0 %v901
      %917 = vmatpush.msra.mxu0 %v900
      %918 = vmatmul.f32.gmra.mxu0 %v771
      %v919 = vpop.f32.mrf.mxu0
      %v920 = vadd.f32 0.0, %v919
      %921 = vdwg.mxu0
      %922 = vmatpush.msra.mxu0 0.0
      %923 = vmatpush.msra.mxu0 0.0
      %924 = vmatpush.msra.mxu0 0.0
      %925 = vmatpush.msra.mxu0 0.0
      %926 = vmatpush.msra.mxu0 0.0
      %927 = vmatpush.msra.mxu0 0.0
      %928 = vmatpush.msra.mxu0 0.0
      %929 = vmatpush.msra.mxu0 0.0
      %930 = vmatpush.msra.mxu0 %v898
      %931 = vmatpush.msra.mxu0 %v897
      %932 = vmatpush.msra.mxu0 %v896
      %933 = vmatpush.msra.mxu0 %v895
      %934 = vmatpush.msra.mxu0 %v894
      %935 = vmatpush.msra.mxu0 %v893
      %936 = vmatpush.msra.mxu0 %v892
      %937 = vmatpush.msra.mxu0 %v891
      %938 = vmatmul.f32.gmra.mxu0 %v794
      %v939 = vpop.f32.mrf.mxu0
      %v940 = vadd.f32 %v920, %v939
      %941 = vdwg.mxu0
      %s942 = scalar_lea.vmem %s8, 2
      %v943 = vld [vmem:[%s942] sm:$0x1]
      %v945 = vperm.slane %v943, 0
      %v947 = vadd.f32 %v940, %v945
      %s948 = scalar_lea.vmem %s9, 2
      %v949 = vld [vmem:[%s948] sm:$0x1]
      %v951 = vperm.slane %v949, 0
      %v953 = vadd.f32 %v947, %v951
      %s954 = scalar_lea.vmem %s6, 192
      %v955 = vld [vmem:[%s954] sm:$0xff]
      %v956 = vld [vmem:[%s954 + $0x8] sm:$0xff]
      %v957 = vld [vmem:[%s954 + $0x10] sm:$0xff]
      %v958 = vld [vmem:[%s954 + $0x18] sm:$0xff]
      %v959 = vld [vmem:[%s954 + $0x20] sm:$0xff]
      %v960 = vld [vmem:[%s954 + $0x28] sm:$0xff]
      %v961 = vld [vmem:[%s954 + $0x30] sm:$0xff]
      %v962 = vld [vmem:[%s954 + $0x38] sm:$0xff]
      %s963 = scalar_lea.vmem %s7, 48
      %v964 = vld [vmem:[%s963] sm:$0xff]
      %v965 = vld [vmem:[%s963 + $0x8] sm:$0xff]
      %966 = vmatpush.msra.mxu0 0.0
      %967 = vmatpush.msra.mxu0 0.0
      %968 = vmatpush.msra.mxu0 0.0
      %969 = vmatpush.msra.mxu0 0.0
      %970 = vmatpush.msra.mxu0 0.0
      %971 = vmatpush.msra.mxu0 0.0
      %972 = vmatpush.msra.mxu0 0.0
      %973 = vmatpush.msra.mxu0 0.0
      %974 = vmatpush.msra.mxu0 0.0
      %975 = vmatpush.msra.mxu0 0.0
      %976 = vmatpush.msra.mxu0 0.0
      %977 = vmatpush.msra.mxu0 0.0
      %978 = vmatpush.msra.mxu0 0.0
      %979 = vmatpush.msra.mxu0 0.0
      %980 = vmatpush.msra.mxu0 %v965
      %981 = vmatpush.msra.mxu0 %v964
      %982 = vmatmul.f32.gmra.mxu0 %v771
      %v983 = vpop.f32.mrf.mxu0
      %v984 = vadd.f32 0.0, %v983
      %985 = vdwg.mxu0
      %986 = vmatpush.msra.mxu0 0.0
      %987 = vmatpush.msra.mxu0 0.0
      %988 = vmatpush.msra.mxu0 0.0
      %989 = vmatpush.msra.mxu0 0.0
      %990 = vmatpush.msra.mxu0 0.0
      %991 = vmatpush.msra.mxu0 0.0
      %992 = vmatpush.msra.mxu0 0.0
      %993 = vmatpush.msra.mxu0 0.0
      %994 = vmatpush.msra.mxu0 %v962
      %995 = vmatpush.msra.mxu0 %v961
      %996 = vmatpush.msra.mxu0 %v960
      %997 = vmatpush.msra.mxu0 %v959
      %998 = vmatpush.msra.mxu0 %v958
      %999 = vmatpush.msra.mxu0 %v957
      %1000 = vmatpush.msra.mxu0 %v956
      %1001 = vmatpush.msra.mxu0 %v955
      %1002 = vmatmul.f32.gmra.mxu0 %v794
      %v1003 = vpop.f32.mrf.mxu0
      %v1004 = vadd.f32 %v984, %v1003
      %1005 = vdwg.mxu0
      %s1006 = scalar_lea.vmem %s8, 3
      %v1007 = vld [vmem:[%s1006] sm:$0x1]
      %v1009 = vperm.slane %v1007, 0
      %v1011 = vadd.f32 %v1004, %v1009
      %s1012 = scalar_lea.vmem %s9, 3
      %v1013 = vld [vmem:[%s1012] sm:$0x1]
      %v1015 = vperm.slane %v1013, 0
      %v1017 = vadd.f32 %v1011, %v1015
      %v1018 = vxor.u32 %v825, 2147483648
      %v1019 = vmul.f32 %v1018, 1.442695
      %v1020 = vpow.pop %v1019
      %v1021 = vadd.f32 %v1020, 1.0
      %v1022 = vrcp.pop %v1021
      %v1023 = vmul.f32 %v1021, %v1022
      %v1024 = vsub.f32 1.0, %v1023
      %v1025 = vmul.f32 %v1022, %v1024
      %v1026 = vadd.f32 %v1022, %v1025
      %vm1027 = vweird.f32 %v1021
      %vm1028 = vweird.f32 %v1022
      %vm1029 = vmor %vm1027, %vm1028
      %v1030 = vsel %vm1029, %v1022, %v1026
      %v1031 = vand.u32 2147483647, %v1021
      %vm1032 = vcmp.eq.f32.partialorder %v1031, 8.507059e+37
      %v1033 = vand.u32 %v1021, 2147483648
      %v1034 = vor.u32 1.1754944e-38, %v1033
      %v1035 = vsel %vm1032, %v1034, %v1030
      %v1036 = vmul.f32 1.0, %v1035
      %v1037 = vxor.u32 %v889, 2147483648
      %v1038 = vmul.f32 %v1037, 1.442695
      %v1039 = vpow.pop %v1038
      %v1040 = vadd.f32 %v1039, 1.0
      %v1041 = vrcp.pop %v1040
      %v1042 = vmul.f32 %v1040, %v1041
      %v1043 = vsub.f32 1.0, %v1042
      %v1044 = vmul.f32 %v1041, %v1043
      %v1045 = vadd.f32 %v1041, %v1044
      %vm1046 = vweird.f32 %v1040
      %vm1047 = vweird.f32 %v1041
      %vm1048 = vmor %vm1046, %vm1047
      %v1049 = vsel %vm1048, %v1041, %v1045
      %v1050 = vand.u32 2147483647, %v1040
      %vm1051 = vcmp.eq.f32.partialorder %v1050, 8.507059e+37
      %v1052 = vand.u32 %v1040, 2147483648
      %v1053 = vor.u32 1.1754944e-38, %v1052
      %v1054 = vsel %vm1051, %v1053, %v1049
      %v1055 = vmul.f32 1.0, %v1054
      %v1056 = vtanh.pop %v953
      %v1057 = vxor.u32 %v1017, 2147483648
      %v1058 = vmul.f32 %v1057, 1.442695
      %v1059 = vpow.pop %v1058
      %v1060 = vadd.f32 %v1059, 1.0
      %v1061 = vrcp.pop %v1060
      %v1062 = vmul.f32 %v1060, %v1061
      %v1063 = vsub.f32 1.0, %v1062
      %v1064 = vmul.f32 %v1061, %v1063
      %v1065 = vadd.f32 %v1061, %v1064
      %vm1066 = vweird.f32 %v1060
      %vm1067 = vweird.f32 %v1061
      %vm1068 = vmor %vm1066, %vm1067
      %v1069 = vsel %vm1068, %v1061, %v1065
      %v1070 = vand.u32 2147483647, %v1060
      %vm1071 = vcmp.eq.f32.partialorder %v1070, 8.507059e+37
      %v1072 = vand.u32 %v1060, 2147483648
      %v1073 = vor.u32 1.1754944e-38, %v1072
      %v1074 = vsel %vm1071, %v1073, %v1069
      %v1075 = vmul.f32 1.0, %v1074
      %v1076 = vmul.f32 %v1055, %v759
      %v1077 = vmul.f32 %v1036, %v1056
      %v1078 = vadd.f32 %v1076, %v1077
      %v1079 = vtanh.pop %v1078
      %v1080 = vmul.f32 %v1075, %v1079
      %1081 = vst.msk [vmem:[#allocation2] sm:$0xff] %vm444, %v756
      %1082 = vst.msk [vmem:[#allocation3] sm:$0xff] %vm444, %v754
      %1083 = vst.msk [vmem:[#allocation4] sm:$0xff] %vm444, %v1080
      %1084 = vst.msk [vmem:[#allocation5] sm:$0xff] %vm444, %v1078
      %1085 = vst.msk [vmem:[%s415] sm:$0xff] %vm444, %v756
      %1086 = vst.msk [vmem:[%s420] sm:$0xff] %vm444, %v1080
      %p1087 = scmp.lt.s32.totalorder %s23, 3
      %s1088 = scalar_select %p1087, %s23, 3
      %s1089 = smul.addr %s1088, 8
      %s1090 = scalar_lea.vmem %s10, %s1089
      %s1091 = ssub.s32 3, %s23
      %p1092 = scmp.lt.s32.totalorder %s1091, 3
      %s1093 = scalar_select %p1092, %s1091, 3
      %s1094 = smul.addr %s1093, 8
      %s1095 = scalar_lea.vmem %s11, %s1094
      // Predicated region
      $region65: #{im2latex_forward.14} parent=59 // pred_check
        %p1096 = pneg %p263
      $region66: #{im2latex_forward.14} parent=59 // pred_check_branch
        %1098 = sbr.rel (%p1096) target = $region68
      $region67: #{im2latex_forward.14} parent=59 // pred_region
        _
      $region68: #{im2latex_forward.14} parent=59 // pred_fallthru
        _
      // Predicated region
      $region69: #{im2latex_forward.14} parent=59 // pred_check
        %p1099 = pneg %p291
      $region70: #{im2latex_forward.14} parent=59 // pred_check_branch
        %1101 = sbr.rel (%p1099) target = $region72
      $region71: #{im2latex_forward.14} parent=59 // pred_region
        %s1102 = ssub.s32 3, %s23
      $region72: #{im2latex_forward.14} parent=59 // pred_fallthru
        _
    $region60: #{im2latex_forward.14} parent=5 // pred_fallthru
      _
    %p1103 = scmp.le.s32.totalorder 2, %s18
    // Predicated region
    $region73: #{im2latex_forward.14} parent=5 // pred_check
      %p1104 = pneg %p1103
    $region74: #{im2latex_forward.14} parent=5 // pred_check_branch
      %1106 = sbr.rel (%p1104) target = $region76
    $region75: #{im2latex_forward.14} parent=5 // pred_region
      %s1107 = ssub.s32 %s18, 2
      // Predicated region
      $region77: #{im2latex_forward.14} parent=75 // pred_check
        %p1108 = pneg %p269
      $region78: #{im2latex_forward.14} parent=75 // pred_check_branch
        %1110 = sbr.rel (%p1108) target = $region80
      $region79: #{im2latex_forward.14} parent=75 // pred_region
        %p1111 = scmp.lt.s32.totalorder %s24, 3
        %s1112 = scalar_select %p1111, %s24, 3
        %s1113 = smul.addr %s1112, 8
        %s1114 = scalar_lea.vmem %s10, %s1113
      $region80: #{im2latex_forward.14} parent=75 // pred_fallthru
        _
      // Predicated region
      $region81: #{im2latex_forward.14} parent=75 // pred_check
        %p1115 = pneg %p297
      $region82: #{im2latex_forward.14} parent=75 // pred_check_branch
        %1117 = sbr.rel (%p1115) target = $region84
      $region83: #{im2latex_forward.14} parent=75 // pred_region
        %s1118 = ssub.s32 3, %s24
        %p1119 = scmp.lt.s32.totalorder %s1118, 3
        %s1120 = scalar_select %p1119, %s1118, 3
        %s1121 = smul.addr %s1120, 8
        %s1122 = scalar_lea.vmem %s11, %s1121
      $region84: #{im2latex_forward.14} parent=75 // pred_fallthru
        _
    $region76: #{im2latex_forward.14} parent=5 // pred_fallthru
      _
  $region6: #{im2latex_forward.14} parent=0 // loop_footer
    %s22 = sadd.s32 1, %s18
  $region7: #{im2latex_forward.14} parent=0 // loop_footer_branch
    %17 = sbr.rel target = $region3
  $region8: #{im2latex_forward.14} parent=0 // loop_exit
    _

// kernel: im2latex_forward.15
$region0: #{im2latex_forward.15}
  #allocation0 [shape = 'u32[]', space=smem, size = 0x4, offset = 0x4, fixed_abs, tag = 'smem constant byte address 0x4 - core index']
  #allocation1 [shape = 'u32[72,128]{1,0:T(1,128)}', space=vmem, size = 0x9000, scoped, tag = 'internal scratch']
  #allocation2 [shape = 'f32[2,32]{1,0:T(2,128)}', space=vmem, size = 0x400, scoped, tag = 'scratch operand']
  #allocation3 [shape = 'f32[2,32]{1,0:T(2,128)}', space=vmem, size = 0x400, scoped, tag = 'scratch operand']
  #allocation4 [shape = 'f32[2,32]{1,0:T(2,128)}', space=vmem, size = 0x400, scoped, tag = 'scratch operand']
  #allocation5 [shape = 'f32[2,16]{1,0:T(2,128)}', space=vmem, size = 0x400, scoped, tag = 'scratch operand']
  #allocation6 [shape = 'f32[2,16,32]{2,1,0:T(8,128)}', space=vmem, size = 0x4000, scoped, tag = 'scratch operand']
  %s0 = inlined_call_operand.vmem [shape: f32[2,16,32], index: 0, kind: input, shape index: {}]
  %s1 = inlined_call_operand.vmem [shape: f32[32,16], index: 1, kind: input, shape index: {}]
  %s2 = inlined_call_operand.vmem [shape: f32[4,16,32], index: 2, kind: input, shape index: {}]
  %s3 = inlined_call_operand.vmem [shape: f32[4,32,32], index: 3, kind: input, shape index: {}]
  %s4 = inlined_call_operand.vmem [shape: f32[4,32,32], index: 4, kind: input, shape index: {}]
  %s5 = inlined_call_operand.vmem [shape: f32[4,1,32], index: 5, kind: input, shape index: {}]
  %s6 = inlined_call_operand.vmem [shape: f32[4,1,32], index: 6, kind: input, shape index: {}]
  %s7 = inlined_call_operand.vmem [shape: f32[32,32], index: 7, kind: input, shape index: {}]
  %s8 = inlined_call_operand.vmem [shape: f32[1,32], index: 8, kind: input, shape index: {}]
  %s9 = inlined_call_operand.vmem [shape: f32[32,32], index: 9, kind: input, shape index: {}]
  %s10 = inlined_call_operand.vmem [shape: f32[1,32], index: 10, kind: input, shape index: {}]
  %s11 = inlined_call_operand.vmem [shape: f32[32,32], index: 11, kind: input, shape index: {}]
  %s12 = inlined_call_operand.vmem [shape: f32[1,32], index: 12, kind: input, shape index: {}]
  %s13 = inlined_call_operand.vmem [shape: f32[32,32], index: 13, kind: input, shape index: {}]
  %s14 = inlined_call_operand.vmem [shape: f32[32,32], index: 14, kind: input, shape index: {}]
  %s15 = inlined_call_operand.vmem [shape: f32[1,32], index: 15, kind: input, shape index: {}]
  %s16 = inlined_call_operand.vmem [shape: f32[32,32], index: 16, kind: input, shape index: {}]
  %s17 = inlined_call_operand.vmem [shape: f32[32,32], index: 17, kind: input, shape index: {}]
  %s18 = inlined_call_operand.vmem [shape: f32[32,32], index: 18, kind: input, shape index: {}]
  %s19 = inlined_call_operand.vmem [shape: f32[8,2,32], index: 19, kind: output, shape index: {}]
  %s20 = sld [smem:[#allocation0]]
  $region113: #{im2latex_forward.15} parent=0
    _
  %s22 = ssub.s32 1, %s20
  %s23 = scalar_select 0, %s22, %s20
  loop: start=0, step=1, limit=10
  $region2: #{im2latex_forward.15} parent=0 // loop_pre_header
    _
  $region3: #{im2latex_forward.15} parent=0 // loop_header
    %s25 = sphi 0, %s29
    %p26 = scmp.ge.s32.totalorder %s25, 10
    %s33 = sphi 0, %s33
    %s35 = sphi 0, %s33
    %s36 = sphi 0, %s35
    %s50 = sphi 0, %s36
    %s54 = sphi 0, %s54
    %s56 = sphi 0, %s54
    %s57 = sphi 0, %s56
    %s71 = sphi 0, %s57
    %s75 = sphi 0, %s75
    %s77 = sphi 0, %s75
    %s78 = sphi 0, %s77
    %s92 = sphi 0, %s78
    %s96 = sphi 0, %s96
    %s98 = sphi 0, %s96
    %s99 = sphi 0, %s98
    %s113 = sphi 0, %s99
    %s117 = sphi 0, %s117
    %s119 = sphi 0, %s117
    %s120 = sphi 0, %s119
    %s134 = sphi 0, %s120
    %s138 = sphi 0, %s138
    %s140 = sphi 0, %s138
    %s141 = sphi 0, %s140
    %s155 = sphi 0, %s141
    %s159 = sphi 0, %s159
    %s161 = sphi 0, %s159
    %s162 = sphi 0, %s161
    %s176 = sphi 0, %s162
    %s180 = sphi 0, %s180
    %s182 = sphi 0, %s180
    %s183 = sphi 0, %s182
    %s197 = sphi 0, %s183
    %s201 = sphi 0, %s201
    %s203 = sphi 0, %s201
    %s204 = sphi 0, %s203
    %s218 = sphi 0, %s204
    %s222 = sphi 0, %s222
    %s224 = sphi 0, %s222
    %s225 = sphi 0, %s224
    %s239 = sphi 0, %s225
    %s243 = sphi 0, %s243
    %s245 = sphi 0, %s243
    %s246 = sphi 0, %s245
    %s260 = sphi 0, %s246
    %s264 = sphi 0, %s264
    %s266 = sphi 0, %s264
    %s267 = sphi 0, %s266
    %s281 = sphi 0, %s267
    %s285 = sphi 0, %s285
    %s287 = sphi 0, %s285
    %s288 = sphi 0, %s287
    %s302 = sphi 0, %s288
    %s306 = sphi 0, %s306
    %s308 = sphi 0, %s306
    %s309 = sphi 0, %s308
    %s323 = sphi 0, %s309
    %s327 = sphi 0, %s327
    %s329 = sphi 0, %s327
    %s330 = sphi 0, %s329
    %s344 = sphi 0, %s330
    %s348 = sphi 0, %s348
    %s350 = sphi 0, %s348
    %s351 = sphi 0, %s350
    %s365 = sphi 0, %s351
    %s369 = sphi 0, %s369
    %s371 = sphi 0, %s369
    %s372 = sphi 0, %s371
    %s386 = sphi 0, %s372
    %s390 = sphi 0, %s390
    %s392 = sphi 0, %s390
    %s393 = sphi 0, %s392
    %s407 = sphi 0, %s393
    %s411 = sphi 0, %s411
    %s413 = sphi 0, %s411
    %s414 = sphi 0, %s413
    %s428 = sphi 0, %s414
    %s434 = sphi 0, %s436
    %s437 = sphi 0, %s434
    %s438 = sphi 0, %s437
    %s454 = sphi 0, %s438
  $region4: #{im2latex_forward.15} parent=0 // loop_header_branch
    %28 = sbr.rel (%p26) target = $region8
  $region5: #{im2latex_forward.15} parent=0 // loop_body
    %s30 = ssub.s32 %s25, 1
    %s31 = ssub.s32 %s25, 2
    %s32 = sadd.s32 %s25, 1
    %s34 = sadd.s32 %s33, 1
    %p37 = scmp.eq.s32.totalorder %s25, 7
    %p38 = scmp.ne.s32.totalorder %s33, %s35
    %p39 = scmp.eq.s32.totalorder %s25, 0
    %p40 = por %p38, %p39
    %p41 = scmp.ne.s32.totalorder %s33, %s35
    %p42 = scmp.eq.s32.totalorder %s30, 7
    %p43 = por %p41, %p42
    %p44 = scmp.ne.s32.totalorder %s35, %s36
    %p45 = scmp.eq.s32.totalorder %s30, 0
    %p46 = por %p44, %p45
    %p47 = scmp.ne.s32.totalorder %s35, %s36
    %p48 = scmp.eq.s32.totalorder %s31, 7
    %p49 = por %p47, %p48
    %p51 = scmp.ne.s32.totalorder %s36, %s50
    %p52 = scmp.eq.s32.totalorder %s31, 0
    %p53 = por %p51, %p52
    %s55 = sadd.s32 %s54, 1
    %p58 = scmp.eq.s32.totalorder %s25, 7
    %p59 = scmp.ne.s32.totalorder %s54, %s56
    %p60 = scmp.eq.s32.totalorder %s25, 0
    %p61 = por %p59, %p60
    %p62 = scmp.ne.s32.totalorder %s54, %s56
    %p63 = scmp.eq.s32.totalorder %s30, 7
    %p64 = por %p62, %p63
    %p65 = scmp.ne.s32.totalorder %s56, %s57
    %p66 = scmp.eq.s32.totalorder %s30, 0
    %p67 = por %p65, %p66
    %p68 = scmp.ne.s32.totalorder %s56, %s57
    %p69 = scmp.eq.s32.totalorder %s31, 7
    %p70 = por %p68, %p69
    %p72 = scmp.ne.s32.totalorder %s57, %s71
    %p73 = scmp.eq.s32.totalorder %s31, 0
    %p74 = por %p72, %p73
    %s76 = sadd.s32 %s75, 1
    %p79 = scmp.eq.s32.totalorder %s25, 7
    %p80 = scmp.ne.s32.totalorder %s75, %s77
    %p81 = scmp.eq.s32.totalorder %s25, 0
    %p82 = por %p80, %p81
    %p83 = scmp.ne.s32.totalorder %s75, %s77
    %p84 = scmp.eq.s32.totalorder %s30, 7
    %p85 = por %p83, %p84
    %p86 = scmp.ne.s32.totalorder %s77, %s78
    %p87 = scmp.eq.s32.totalorder %s30, 0
    %p88 = por %p86, %p87
    %p89 = scmp.ne.s32.totalorder %s77, %s78
    %p90 = scmp.eq.s32.totalorder %s31, 7
    %p91 = por %p89, %p90
    %p93 = scmp.ne.s32.totalorder %s78, %s92
    %p94 = scmp.eq.s32.totalorder %s31, 0
    %p95 = por %p93, %p94
    %s97 = sadd.s32 %s96, 1
    %p100 = scmp.eq.s32.totalorder %s25, 7
    %p101 = scmp.ne.s32.totalorder %s96, %s98
    %p102 = scmp.eq.s32.totalorder %s25, 0
    %p103 = por %p101, %p102
    %p104 = scmp.ne.s32.totalorder %s96, %s98
    %p105 = scmp.eq.s32.totalorder %s30, 7
    %p106 = por %p104, %p105
    %p107 = scmp.ne.s32.totalorder %s98, %s99
    %p108 = scmp.eq.s32.totalorder %s30, 0
    %p109 = por %p107, %p108
    %p110 = scmp.ne.s32.totalorder %s98, %s99
    %p111 = scmp.eq.s32.totalorder %s31, 7
    %p112 = por %p110, %p111
    %p114 = scmp.ne.s32.totalorder %s99, %s113
    %p115 = scmp.eq.s32.totalorder %s31, 0
    %p116 = por %p114, %p115
    %s118 = sadd.s32 %s117, 1
    %p121 = scmp.eq.s32.totalorder %s25, 7
    %p122 = scmp.ne.s32.totalorder %s117, %s119
    %p123 = scmp.eq.s32.totalorder %s25, 0
    %p124 = por %p122, %p123
    %p125 = scmp.ne.s32.totalorder %s117, %s119
    %p126 = scmp.eq.s32.totalorder %s30, 7
    %p127 = por %p125, %p126
    %p128 = scmp.ne.s32.totalorder %s119, %s120
    %p129 = scmp.eq.s32.totalorder %s30, 0
    %p130 = por %p128, %p129
    %p131 = scmp.ne.s32.totalorder %s119, %s120
    %p132 = scmp.eq.s32.totalorder %s31, 7
    %p133 = por %p131, %p132
    %p135 = scmp.ne.s32.totalorder %s120, %s134
    %p136 = scmp.eq.s32.totalorder %s31, 0
    %p137 = por %p135, %p136
    %s139 = sadd.s32 %s138, 1
    %p142 = scmp.eq.s32.totalorder %s25, 7
    %p143 = scmp.ne.s32.totalorder %s138, %s140
    %p144 = scmp.eq.s32.totalorder %s25, 0
    %p145 = por %p143, %p144
    %p146 = scmp.ne.s32.totalorder %s138, %s140
    %p147 = scmp.eq.s32.totalorder %s30, 7
    %p148 = por %p146, %p147
    %p149 = scmp.ne.s32.totalorder %s140, %s141
    %p150 = scmp.eq.s32.totalorder %s30, 0
    %p151 = por %p149, %p150
    %p152 = scmp.ne.s32.totalorder %s140, %s141
    %p153 = scmp.eq.s32.totalorder %s31, 7
    %p154 = por %p152, %p153
    %p156 = scmp.ne.s32.totalorder %s141, %s155
    %p157 = scmp.eq.s32.totalorder %s31, 0
    %p158 = por %p156, %p157
    %s160 = sadd.s32 %s159, 1
    %p163 = scmp.eq.s32.totalorder %s25, 7
    %p164 = scmp.ne.s32.totalorder %s159, %s161
    %p165 = scmp.eq.s32.totalorder %s25, 0
    %p166 = por %p164, %p165
    %p167 = scmp.ne.s32.totalorder %s159, %s161
    %p168 = scmp.eq.s32.totalorder %s30, 7
    %p169 = por %p167, %p168
    %p170 = scmp.ne.s32.totalorder %s161, %s162
    %p171 = scmp.eq.s32.totalorder %s30, 0
    %p172 = por %p170, %p171
    %p173 = scmp.ne.s32.totalorder %s161, %s162
    %p174 = scmp.eq.s32.totalorder %s31, 7
    %p175 = por %p173, %p174
    %p177 = scmp.ne.s32.totalorder %s162, %s176
    %p178 = scmp.eq.s32.totalorder %s31, 0
    %p179 = por %p177, %p178
    %s181 = sadd.s32 %s180, 1
    %p184 = scmp.eq.s32.totalorder %s25, 7
    %p185 = scmp.ne.s32.totalorder %s180, %s182
    %p186 = scmp.eq.s32.totalorder %s25, 0
    %p187 = por %p185, %p186
    %p188 = scmp.ne.s32.totalorder %s180, %s182
    %p189 = scmp.eq.s32.totalorder %s30, 7
    %p190 = por %p188, %p189
    %p191 = scmp.ne.s32.totalorder %s182, %s183
    %p192 = scmp.eq.s32.totalorder %s30, 0
    %p193 = por %p191, %p192
    %p194 = scmp.ne.s32.totalorder %s182, %s183
    %p195 = scmp.eq.s32.totalorder %s31, 7
    %p196 = por %p194, %p195
    %p198 = scmp.ne.s32.totalorder %s183, %s197
    %p199 = scmp.eq.s32.totalorder %s31, 0
    %p200 = por %p198, %p199
    %s202 = sadd.s32 %s201, 1
    %p205 = scmp.eq.s32.totalorder %s25, 7
    %p206 = scmp.ne.s32.totalorder %s201, %s203
    %p207 = scmp.eq.s32.totalorder %s25, 0
    %p208 = por %p206, %p207
    %p209 = scmp.ne.s32.totalorder %s201, %s203
    %p210 = scmp.eq.s32.totalorder %s30, 7
    %p211 = por %p209, %p210
    %p212 = scmp.ne.s32.totalorder %s203, %s204
    %p213 = scmp.eq.s32.totalorder %s30, 0
    %p214 = por %p212, %p213
    %p215 = scmp.ne.s32.totalorder %s203, %s204
    %p216 = scmp.eq.s32.totalorder %s31, 7
    %p217 = por %p215, %p216
    %p219 = scmp.ne.s32.totalorder %s204, %s218
    %p220 = scmp.eq.s32.totalorder %s31, 0
    %p221 = por %p219, %p220
    %s223 = sadd.s32 %s222, 1
    %p226 = scmp.eq.s32.totalorder %s25, 7
    %p227 = scmp.ne.s32.totalorder %s222, %s224
    %p228 = scmp.eq.s32.totalorder %s25, 0
    %p229 = por %p227, %p228
    %p230 = scmp.ne.s32.totalorder %s222, %s224
    %p231 = scmp.eq.s32.totalorder %s30, 7
    %p232 = por %p230, %p231
    %p233 = scmp.ne.s32.totalorder %s224, %s225
    %p234 = scmp.eq.s32.totalorder %s30, 0
    %p235 = por %p233, %p234
    %p236 = scmp.ne.s32.totalorder %s224, %s225
    %p237 = scmp.eq.s32.totalorder %s31, 7
    %p238 = por %p236, %p237
    %p240 = scmp.ne.s32.totalorder %s225, %s239
    %p241 = scmp.eq.s32.totalorder %s31, 0
    %p242 = por %p240, %p241
    %s244 = sadd.s32 %s243, 1
    %p247 = scmp.eq.s32.totalorder %s25, 7
    %p248 = scmp.ne.s32.totalorder %s243, %s245
    %p249 = scmp.eq.s32.totalorder %s25, 0
    %p250 = por %p248, %p249
    %p251 = scmp.ne.s32.totalorder %s243, %s245
    %p252 = scmp.eq.s32.totalorder %s30, 7
    %p253 = por %p251, %p252
    %p254 = scmp.ne.s32.totalorder %s245, %s246
    %p255 = scmp.eq.s32.totalorder %s30, 0
    %p256 = por %p254, %p255
    %p257 = scmp.ne.s32.totalorder %s245, %s246
    %p258 = scmp.eq.s32.totalorder %s31, 7
    %p259 = por %p257, %p258
    %p261 = scmp.ne.s32.totalorder %s246, %s260
    %p262 = scmp.eq.s32.totalorder %s31, 0
    %p263 = por %p261, %p262
    %s265 = sadd.s32 %s264, 1
    %p268 = scmp.eq.s32.totalorder %s25, 7
    %p269 = scmp.ne.s32.totalorder %s264, %s266
    %p270 = scmp.eq.s32.totalorder %s25, 0
    %p271 = por %p269, %p270
    %p272 = scmp.ne.s32.totalorder %s264, %s266
    %p273 = scmp.eq.s32.totalorder %s30, 7
    %p274 = por %p272, %p273
    %p275 = scmp.ne.s32.totalorder %s266, %s267
    %p276 = scmp.eq.s32.totalorder %s30, 0
    %p277 = por %p275, %p276
    %p278 = scmp.ne.s32.totalorder %s266, %s267
    %p279 = scmp.eq.s32.totalorder %s31, 7
    %p280 = por %p278, %p279
    %p282 = scmp.ne.s32.totalorder %s267, %s281
    %p283 = scmp.eq.s32.totalorder %s31, 0
    %p284 = por %p282, %p283
    %s286 = sadd.s32 %s285, 1
    %p289 = scmp.eq.s32.totalorder %s25, 7
    %p290 = scmp.ne.s32.totalorder %s285, %s287
    %p291 = scmp.eq.s32.totalorder %s25, 0
    %p292 = por %p290, %p291
    %p293 = scmp.ne.s32.totalorder %s285, %s287
    %p294 = scmp.eq.s32.totalorder %s30, 7
    %p295 = por %p293, %p294
    %p296 = scmp.ne.s32.totalorder %s287, %s288
    %p297 = scmp.eq.s32.totalorder %s30, 0
    %p298 = por %p296, %p297
    %p299 = scmp.ne.s32.totalorder %s287, %s288
    %p300 = scmp.eq.s32.totalorder %s31, 7
    %p301 = por %p299, %p300
    %p303 = scmp.ne.s32.totalorder %s288, %s302
    %p304 = scmp.eq.s32.totalorder %s31, 0
    %p305 = por %p303, %p304
    %s307 = sadd.s32 %s306, 1
    %p310 = scmp.eq.s32.totalorder %s25, 7
    %p311 = scmp.ne.s32.totalorder %s306, %s308
    %p312 = scmp.eq.s32.totalorder %s25, 0
    %p313 = por %p311, %p312
    %p314 = scmp.ne.s32.totalorder %s306, %s308
    %p315 = scmp.eq.s32.totalorder %s30, 7
    %p316 = por %p314, %p315
    %p317 = scmp.ne.s32.totalorder %s308, %s309
    %p318 = scmp.eq.s32.totalorder %s30, 0
    %p319 = por %p317, %p318
    %p320 = scmp.ne.s32.totalorder %s308, %s309
    %p321 = scmp.eq.s32.totalorder %s31, 7
    %p322 = por %p320, %p321
    %p324 = scmp.ne.s32.totalorder %s309, %s323
    %p325 = scmp.eq.s32.totalorder %s31, 0
    %p326 = por %p324, %p325
    %s328 = sadd.s32 %s327, 1
    %p331 = scmp.eq.s32.totalorder %s25, 7
    %p332 = scmp.ne.s32.totalorder %s327, %s329
    %p333 = scmp.eq.s32.totalorder %s25, 0
    %p334 = por %p332, %p333
    %p335 = scmp.ne.s32.totalorder %s327, %s329
    %p336 = scmp.eq.s32.totalorder %s30, 7
    %p337 = por %p335, %p336
    %p338 = scmp.ne.s32.totalorder %s329, %s330
    %p339 = scmp.eq.s32.totalorder %s30, 0
    %p340 = por %p338, %p339
    %p341 = scmp.ne.s32.totalorder %s329, %s330
    %p342 = scmp.eq.s32.totalorder %s31, 7
    %p343 = por %p341, %p342
    %p345 = scmp.ne.s32.totalorder %s330, %s344
    %p346 = scmp.eq.s32.totalorder %s31, 0
    %p347 = por %p345, %p346
    %s349 = sadd.s32 %s348, 1
    %p352 = scmp.eq.s32.totalorder %s25, 7
    %p353 = scmp.ne.s32.totalorder %s348, %s350
    %p354 = scmp.eq.s32.totalorder %s25, 0
    %p355 = por %p353, %p354
    %p356 = scmp.ne.s32.totalorder %s348, %s350
    %p357 = scmp.eq.s32.totalorder %s30, 7
    %p358 = por %p356, %p357
    %p359 = scmp.ne.s32.totalorder %s350, %s351
    %p360 = scmp.eq.s32.totalorder %s30, 0
    %p361 = por %p359, %p360
    %p362 = scmp.ne.s32.totalorder %s350, %s351
    %p363 = scmp.eq.s32.totalorder %s31, 7
    %p364 = por %p362, %p363
    %p366 = scmp.ne.s32.totalorder %s351, %s365
    %p367 = scmp.eq.s32.totalorder %s31, 0
    %p368 = por %p366, %p367
    %s370 = sadd.s32 %s369, 1
    %p373 = scmp.eq.s32.totalorder %s25, 7
    %p374 = scmp.ne.s32.totalorder %s369, %s371
    %p375 = scmp.eq.s32.totalorder %s25, 0
    %p376 = por %p374, %p375
    %p377 = scmp.ne.s32.totalorder %s369, %s371
    %p378 = scmp.eq.s32.totalorder %s30, 7
    %p379 = por %p377, %p378
    %p380 = scmp.ne.s32.totalorder %s371, %s372
    %p381 = scmp.eq.s32.totalorder %s30, 0
    %p382 = por %p380, %p381
    %p383 = scmp.ne.s32.totalorder %s371, %s372
    %p384 = scmp.eq.s32.totalorder %s31, 7
    %p385 = por %p383, %p384
    %p387 = scmp.ne.s32.totalorder %s372, %s386
    %p388 = scmp.eq.s32.totalorder %s31, 0
    %p389 = por %p387, %p388
    %s391 = sadd.s32 %s390, 1
    %p394 = scmp.eq.s32.totalorder %s25, 7
    %p395 = scmp.ne.s32.totalorder %s390, %s392
    %p396 = scmp.eq.s32.totalorder %s25, 0
    %p397 = por %p395, %p396
    %p398 = scmp.ne.s32.totalorder %s390, %s392
    %p399 = scmp.eq.s32.totalorder %s30, 7
    %p400 = por %p398, %p399
    %p401 = scmp.ne.s32.totalorder %s392, %s393
    %p402 = scmp.eq.s32.totalorder %s30, 0
    %p403 = por %p401, %p402
    %p404 = scmp.ne.s32.totalorder %s392, %s393
    %p405 = scmp.eq.s32.totalorder %s31, 7
    %p406 = por %p404, %p405
    %p408 = scmp.ne.s32.totalorder %s393, %s407
    %p409 = scmp.eq.s32.totalorder %s31, 0
    %p410 = por %p408, %p409
    %s412 = sadd.s32 %s411, 1
    %p415 = scmp.eq.s32.totalorder %s25, 7
    %p416 = scmp.ne.s32.totalorder %s411, %s413
    %p417 = scmp.eq.s32.totalorder %s25, 0
    %p418 = por %p416, %p417
    %p419 = scmp.ne.s32.totalorder %s411, %s413
    %p420 = scmp.eq.s32.totalorder %s30, 7
    %p421 = por %p419, %p420
    %p422 = scmp.ne.s32.totalorder %s413, %s414
    %p423 = scmp.eq.s32.totalorder %s30, 0
    %p424 = por %p422, %p423
    %p425 = scmp.ne.s32.totalorder %s413, %s414
    %p426 = scmp.eq.s32.totalorder %s31, 7
    %p427 = por %p425, %p426
    %p429 = scmp.ne.s32.totalorder %s414, %s428
    %p430 = scmp.eq.s32.totalorder %s31, 0
    %p431 = por %p429, %p430
    %s432 = ssub.s32 %s25, %s32
    %p433 = scmp.eq.s32.totalorder %s432, 0
    %s435 = sadd.s32 %s434, 1
    %s436 = scalar_select %p433, %s434, %s435
    %p439 = pneg %p433
    %p440 = scmp.eq.s32.totalorder %s25, 7
    %p441 = por %p439, %p440
    %p442 = scmp.ne.s32.totalorder %s434, %s437
    %p443 = scmp.eq.s32.totalorder %s25, 0
    %p444 = por %p442, %p443
    %p445 = scmp.ne.s32.totalorder %s434, %s437
    %p446 = scmp.eq.s32.totalorder %s30, 7
    %p447 = por %p445, %p446
    %p448 = scmp.ne.s32.totalorder %s437, %s438
    %p449 = scmp.eq.s32.totalorder %s30, 0
    %p450 = por %p448, %p449
    %p451 = scmp.ne.s32.totalorder %s437, %s438
    %p452 = scmp.eq.s32.totalorder %s31, 7
    %p453 = por %p451, %p452
    %p455 = scmp.ne.s32.totalorder %s438, %s454
    %p456 = scmp.eq.s32.totalorder %s31, 0
    %p457 = por %p455, %p456
    %p458 = scmp.le.s32.totalorder 1, %s25
    %p459 = scmp.lt.s32.totalorder %s25, 9
    %p460 = pnand %p458, %p459
    %p461 = pneg %p460
    // Predicated region
    $region9: #{im2latex_forward.15} parent=5 // pred_check
      _
    $region10: #{im2latex_forward.15} parent=5 // pred_check_branch
      %463 = sbr.rel (%p460) target = $region12
    $region11: #{im2latex_forward.15} parent=5 // pred_region
      %s464 = ssub.s32 %s25, 1
      // Predicated region
      $region13: #{im2latex_forward.15} parent=11 // pred_check
        %p465 = pneg %p46
      $region14: #{im2latex_forward.15} parent=11 // pred_check_branch
        %467 = sbr.rel (%p465) target = $region16
      $region15: #{im2latex_forward.15} parent=11 // pred_region
        _
      $region16: #{im2latex_forward.15} parent=11 // pred_fallthru
        _
      // Predicated region
      $region17: #{im2latex_forward.15} parent=11 // pred_check
        %p468 = pneg %p67
      $region18: #{im2latex_forward.15} parent=11 // pred_check_branch
        %470 = sbr.rel (%p468) target = $region20
      $region19: #{im2latex_forward.15} parent=11 // pred_region
        _
      $region20: #{im2latex_forward.15} parent=11 // pred_fallthru
        _
      // Predicated region
      $region21: #{im2latex_forward.15} parent=11 // pred_check
        %p471 = pneg %p88
      $region22: #{im2latex_forward.15} parent=11 // pred_check_branch
        %473 = sbr.rel (%p471) target = $region24
      $region23: #{im2latex_forward.15} parent=11 // pred_region
        _
      $region24: #{im2latex_forward.15} parent=11 // pred_fallthru
        _
      // Predicated region
      $region25: #{im2latex_forward.15} parent=11 // pred_check
        %p474 = pneg %p109
      $region26: #{im2latex_forward.15} parent=11 // pred_check_branch
        %476 = sbr.rel (%p474) target = $region28
      $region27: #{im2latex_forward.15} parent=11 // pred_region
        _
      $region28: #{im2latex_forward.15} parent=11 // pred_fallthru
        _
      // Predicated region
      $region29: #{im2latex_forward.15} parent=11 // pred_check
        %p477 = pneg %p130
      $region30: #{im2latex_forward.15} parent=11 // pred_check_branch
        %479 = sbr.rel (%p477) target = $region32
      $region31: #{im2latex_forward.15} parent=11 // pred_region
        _
      $region32: #{im2latex_forward.15} parent=11 // pred_fallthru
        _
      // Predicated region
      $region33: #{im2latex_forward.15} parent=11 // pred_check
        %p480 = pneg %p151
      $region34: #{im2latex_forward.15} parent=11 // pred_check_branch
        %482 = sbr.rel (%p480) target = $region36
      $region35: #{im2latex_forward.15} parent=11 // pred_region
        _
      $region36: #{im2latex_forward.15} parent=11 // pred_fallthru
        _
      // Predicated region
      $region37: #{im2latex_forward.15} parent=11 // pred_check
        %p483 = pneg %p172
      $region38: #{im2latex_forward.15} parent=11 // pred_check_branch
        %485 = sbr.rel (%p483) target = $region40
      $region39: #{im2latex_forward.15} parent=11 // pred_region
        _
      $region40: #{im2latex_forward.15} parent=11 // pred_fallthru
        _
      // Predicated region
      $region41: #{im2latex_forward.15} parent=11 // pred_check
        %p486 = pneg %p193
      $region42: #{im2latex_forward.15} parent=11 // pred_check_branch
        %488 = sbr.rel (%p486) target = $region44
      $region43: #{im2latex_forward.15} parent=11 // pred_region
        _
      $region44: #{im2latex_forward.15} parent=11 // pred_fallthru
        _
      // Predicated region
      $region45: #{im2latex_forward.15} parent=11 // pred_check
        %p489 = pneg %p214
      $region46: #{im2latex_forward.15} parent=11 // pred_check_branch
        %491 = sbr.rel (%p489) target = $region48
      $region47: #{im2latex_forward.15} parent=11 // pred_region
        _
      $region48: #{im2latex_forward.15} parent=11 // pred_fallthru
        _
      // Predicated region
      $region49: #{im2latex_forward.15} parent=11 // pred_check
        %p492 = pneg %p235
      $region50: #{im2latex_forward.15} parent=11 // pred_check_branch
        %494 = sbr.rel (%p492) target = $region52
      $region51: #{im2latex_forward.15} parent=11 // pred_region
        _
      $region52: #{im2latex_forward.15} parent=11 // pred_fallthru
        _
      // Predicated region
      $region53: #{im2latex_forward.15} parent=11 // pred_check
        %p495 = pneg %p256
      $region54: #{im2latex_forward.15} parent=11 // pred_check_branch
        %497 = sbr.rel (%p495) target = $region56
      $region55: #{im2latex_forward.15} parent=11 // pred_region
        _
      $region56: #{im2latex_forward.15} parent=11 // pred_fallthru
        _
      // Predicated region
      $region57: #{im2latex_forward.15} parent=11 // pred_check
        %p498 = pneg %p277
      $region58: #{im2latex_forward.15} parent=11 // pred_check_branch
        %500 = sbr.rel (%p498) target = $region60
      $region59: #{im2latex_forward.15} parent=11 // pred_region
        _
      $region60: #{im2latex_forward.15} parent=11 // pred_fallthru
        _
      // Predicated region
      $region61: #{im2latex_forward.15} parent=11 // pred_check
        %p501 = pneg %p298
      $region62: #{im2latex_forward.15} parent=11 // pred_check_branch
        %503 = sbr.rel (%p501) target = $region64
      $region63: #{im2latex_forward.15} parent=11 // pred_region
        _
      $region64: #{im2latex_forward.15} parent=11 // pred_fallthru
        _
      // Predicated region
      $region65: #{im2latex_forward.15} parent=11 // pred_check
        %p504 = pneg %p319
      $region66: #{im2latex_forward.15} parent=11 // pred_check_branch
        %506 = sbr.rel (%p504) target = $region68
      $region67: #{im2latex_forward.15} parent=11 // pred_region
        _
      $region68: #{im2latex_forward.15} parent=11 // pred_fallthru
        _
      // Predicated region
      $region69: #{im2latex_forward.15} parent=11 // pred_check
        %p507 = pneg %p340
      $region70: #{im2latex_forward.15} parent=11 // pred_check_branch
        %509 = sbr.rel (%p507) target = $region72
      $region71: #{im2latex_forward.15} parent=11 // pred_region
        _
      $region72: #{im2latex_forward.15} parent=11 // pred_fallthru
        _
      // Predicated region
      $region73: #{im2latex_forward.15} parent=11 // pred_check
        %p510 = pneg %p361
      $region74: #{im2latex_forward.15} parent=11 // pred_check_branch
        %512 = sbr.rel (%p510) target = $region76
      $region75: #{im2latex_forward.15} parent=11 // pred_region
        _
      $region76: #{im2latex_forward.15} parent=11 // pred_fallthru
        _
      // Predicated region
      $region77: #{im2latex_forward.15} parent=11 // pred_check
        %p513 = pneg %p382
      $region78: #{im2latex_forward.15} parent=11 // pred_check_branch
        %515 = sbr.rel (%p513) target = $region80
      $region79: #{im2latex_forward.15} parent=11 // pred_region
        _
      $region80: #{im2latex_forward.15} parent=11 // pred_fallthru
        _
      // Predicated region
      $region81: #{im2latex_forward.15} parent=11 // pred_check
        %p516 = pneg %p403
      $region82: #{im2latex_forward.15} parent=11 // pred_check_branch
        %518 = sbr.rel (%p516) target = $region84
      $region83: #{im2latex_forward.15} parent=11 // pred_region
        _
      $region84: #{im2latex_forward.15} parent=11 // pred_fallthru
        _
      // Predicated region
      $region85: #{im2latex_forward.15} parent=11 // pred_check
        %p519 = pneg %p424
      $region86: #{im2latex_forward.15} parent=11 // pred_check_branch
        %521 = sbr.rel (%p519) target = $region88
      $region87: #{im2latex_forward.15} parent=11 // pred_region
        _
      $region88: #{im2latex_forward.15} parent=11 // pred_fallthru
        _
    $region12: #{im2latex_forward.15} parent=5 // pred_fallthru
      _
    %p522 = scmp.lt.s32.totalorder %s25, 8
    // Predicated region
    $region89: #{im2latex_forward.15} parent=5 // pred_check
      %p523 = pneg %p522
    $region90: #{im2latex_forward.15} parent=5 // pred_check_branch
      %525 = sbr.rel (%p523) target = $region92
    $region91: #{im2latex_forward.15} parent=5 // pred_region
      _
    $region92: #{im2latex_forward.15} parent=5 // pred_fallthru
      _
    %p526 = scmp.le.s32.totalorder 1, %s25
    %p527 = scmp.lt.s32.totalorder %s25, 9
    %p528 = pnand %p526, %p527
    %p529 = pneg %p528
    // Predicated region
    $region93: #{im2latex_forward.15} parent=5 // pred_check
      _
    $region94: #{im2latex_forward.15} parent=5 // pred_check_branch
      %531 = sbr.rel (%p528) target = $region96
    $region95: #{im2latex_forward.15} parent=5 // pred_region
      %s532 = ssub.s32 %s25, 1
      %p533 = pneg %p46
      %p534 = pneg %p43
      %p535 = pneg %p67
      %p536 = pneg %p64
      %p537 = pneg %p88
      %p538 = pneg %p85
      %p539 = pneg %p109
      %p540 = pneg %p106
      %p541 = pneg %p130
      %p542 = pneg %p127
      %p543 = pneg %p151
      %p544 = pneg %p148
      %p545 = pneg %p172
      %p546 = pneg %p169
      %p547 = pneg %p193
      %p548 = pneg %p190
      %p549 = pneg %p214
      %p550 = pneg %p211
      %p551 = pneg %p235
      %p552 = pneg %p232
      %p553 = pneg %p256
      %p554 = pneg %p253
      %p555 = pneg %p277
      %p556 = pneg %p274
      %p557 = pneg %p298
      %p558 = pneg %p295
      %p559 = pneg %p319
      %p560 = pneg %p316
      %p561 = pneg %p340
      %p562 = pneg %p337
      %p563 = pneg %p361
      %p564 = pneg %p358
      %p565 = pneg %p382
      %p566 = pneg %p379
      %p567 = pneg %p403
      %p568 = pneg %p400
      %p569 = pneg %p424
      %p570 = pneg %p421
      %p571 = pneg %p450
      %p572 = pneg %p447
      %p573 = scmp.lt.s32.totalorder %s30, 7
      %s574 = scalar_select %p573, %s30, 7
      %s575 = smul.addr %s574, 2
      %s576 = scalar_lea.vmem %s19, %s575
      %p577 = scmp.lt.s32.totalorder %s30, 7
      %s578 = scalar_select %p577, %s30, 7
      %s579 = smul.addr %s578, 2
      %s580 = scalar_lea.vmem %s19, %s579
      %p581 = scmp.eq.s32.totalorder %s30, 0
      // Predicated region
      $region97: #{im2latex_forward.15} parent=95 // pred_check
        %p582 = pneg %p581
      $region98: #{im2latex_forward.15} parent=95 // pred_check_branch
        %584 = sbr.rel (%p582) target = $region100
      $region99: #{im2latex_forward.15} parent=95 // pred_region
        %v585 = vld [vmem:[%s0] sm:$0xff]
        %v586 = vld [vmem:[%s0 + $0x8] sm:$0xff]
        %v587 = vld [vmem:[%s0 + $0x10] sm:$0xff]
        %v588 = vld [vmem:[%s0 + $0x18] sm:$0xff]
        %vm589 = vcmask 261120
        %v590 = vsel %vm589, %v585, 0.0
        %v591 = vsel %vm589, %v586, 0.0
        %v592 = vadd.f32 %v590, %v591
        %v593 = vrot.slane %v592, 4
        %v594 = vadd.f32 %v592, %v593
        %v595 = vrot.slane %v594, 2
        %v596 = vadd.f32 %v594, %v595
        %v597 = vrot.slane %v596, 1
        %v598 = vadd.f32 %v596, %v597
        %v599 = vsel %vm589, %v587, 0.0
        %v600 = vsel %vm589, %v588, 0.0
        %v601 = vadd.f32 %v599, %v600
        %v602 = vrot.slane %v601, 4
        %v603 = vadd.f32 %v601, %v602
        %v604 = vrot.slane %v603, 2
        %v605 = vadd.f32 %v603, %v604
        %v606 = vrot.slane %v605, 1
        %v607 = vadd.f32 %v605, %v606
        %v608 = vrcp.pop 16.0
        %v609 = vmul.f32 16.0, %v608
        %v610 = vsub.f32 1.0, %v609
        %v611 = vmul.f32 %v608, %v610
        %v612 = vadd.f32 %v608, %v611
        %vm613 = vweird.f32 %v608
        %v614 = vsel %vm613, %v608, %v612
        %v615 = vmul.f32 %v598, %v614
        %v616 = vmul.f32 %v607, %v614
        %v617 = vld [vmem:[%s7] sm:$0xff]
        %v618 = vld [vmem:[%s7 + $0x8] sm:$0xff]
        %v619 = vld [vmem:[%s7 + $0x10] sm:$0xff]
        %v620 = vld [vmem:[%s7 + $0x18] sm:$0xff]
        %v621 = vld [vmem:[%s8] sm:$0x1]
        %v623 = vperm.slane %v621, 0
        %vm627 = vcmask 1041409
        %v628 = vsel %vm627, %v616, %v615
        %v629 = vsel %vm589, %v628, 0
        %631 = vmatpush.msra.mxu0 0.0
        %632 = vmatpush.msra.mxu0 0.0
        %633 = vmatpush.msra.mxu0 0.0
        %634 = vmatpush.msra.mxu0 0.0
        %635 = vmatpush.msra.mxu0 0.0
        %636 = vmatpush.msra.mxu0 0.0
        %637 = vmatpush.msra.mxu0 0.0
        %638 = vmatpush.msra.mxu0 0.0
        %639 = vmatpush.msra.mxu0 0.0
        %640 = vmatpush.msra.mxu0 0.0
        %641 = vmatpush.msra.mxu0 0.0
        %642 = vmatpush.msra.mxu0 0.0
        %643 = vmatpush.msra.mxu0 %v620
        %644 = vmatpush.msra.mxu0 %v619
        %645 = vmatpush.msra.mxu0 %v618
        %646 = vmatpush.msra.mxu0 %v617
        %647 = vmatmul.f32.gmra.mxu0 %v629
        %v648 = vpop.f32.mrf.mxu0
        %v649 = vadd.f32 %v623, %v648
        %650 = vdwg.mxu0
        %v651 = vtanh.pop %v649
        %vm652 = vcmask 254976
        %653 = vst.msk [vmem:[#allocation2] sm:$0x3] %vm652, %v651
        %v654 = vld [vmem:[%s9] sm:$0xff]
        %v655 = vld [vmem:[%s9 + $0x8] sm:$0xff]
        %v656 = vld [vmem:[%s9 + $0x10] sm:$0xff]
        %v657 = vld [vmem:[%s9 + $0x18] sm:$0xff]
        %v658 = vld [vmem:[%s10] sm:$0x1]
        %v660 = vperm.slane %v658, 0
        %662 = vmatpush.msra.mxu0 0.0
        %663 = vmatpush.msra.mxu0 0.0
        %664 = vmatpush.msra.mxu0 0.0
        %665 = vmatpush.msra.mxu0 0.0
        %666 = vmatpush.msra.mxu0 0.0
        %667 = vmatpush.msra.mxu0 0.0
        %668 = vmatpush.msra.mxu0 0.0
        %669 = vmatpush.msra.mxu0 0.0
        %670 = vmatpush.msra.mxu0 0.0
        %671 = vmatpush.msra.mxu0 0.0
        %672 = vmatpush.msra.mxu0 0.0
        %673 = vmatpush.msra.mxu0 0.0
        %674 = vmatpush.msra.mxu0 %v657
        %675 = vmatpush.msra.mxu0 %v656
        %676 = vmatpush.msra.mxu0 %v655
        %677 = vmatpush.msra.mxu0 %v654
        %678 = vmatmul.f32.gmra.mxu0 %v629
        %v679 = vpop.f32.mrf.mxu0
        %v680 = vadd.f32 %v660, %v679
        %681 = vdwg.mxu0
        %v682 = vtanh.pop %v680
        %683 = vst.msk [vmem:[#allocation3] sm:$0x3] %vm652, %v682
        %v684 = vld [vmem:[%s11] sm:$0xff]
        %v685 = vld [vmem:[%s11 + $0x8] sm:$0xff]
        %v686 = vld [vmem:[%s11 + $0x10] sm:$0xff]
        %v687 = vld [vmem:[%s11 + $0x18] sm:$0xff]
        %v688 = vld [vmem:[%s12] sm:$0x1]
        %v690 = vperm.slane %v688, 0
        %692 = vmatpush.msra.mxu0 0.0
        %693 = vmatpush.msra.mxu0 0.0
        %694 = vmatpush.msra.mxu0 0.0
        %695 = vmatpush.msra.mxu0 0.0
        %696 = vmatpush.msra.mxu0 0.0
        %697 = vmatpush.msra.mxu0 0.0
        %698 = vmatpush.msra.mxu0 0.0
        %699 = vmatpush.msra.mxu0 0.0
        %700 = vmatpush.msra.mxu0 0.0
        %701 = vmatpush.msra.mxu0 0.0
        %702 = vmatpush.msra.mxu0 0.0
        %703 = vmatpush.msra.mxu0 0.0
        %704 = vmatpush.msra.mxu0 %v687
        %705 = vmatpush.msra.mxu0 %v686
        %706 = vmatpush.msra.mxu0 %v685
        %707 = vmatpush.msra.mxu0 %v684
        %708 = vmatmul.f32.gmra.mxu0 %v629
        %v709 = vpop.f32.mrf.mxu0
        %v710 = vadd.f32 %v690, %v709
        %711 = vdwg.mxu0
        %v712 = vtanh.pop %v710
        %713 = vst.msk [vmem:[#allocation4] sm:$0x3] %vm652, %v712
        %v714 = vld [vmem:[%s13] sm:$0xff]
        %v715 = vld [vmem:[%s13 + $0x8] sm:$0xff]
        %v716 = vld [vmem:[%s13 + $0x10] sm:$0xff]
        %v717 = vld [vmem:[%s13 + $0x18] sm:$0xff]
        %v719 = vsel %vm589, %v585, 0
        %v722 = vsel %vm589, %v586, 0
        %v725 = vsel %vm589, %v587, 0
        %v728 = vsel %vm589, %v588, 0
        %730 = vmatpush.msra.mxu0 0.0
        %731 = vmatpush.msra.mxu0 0.0
        %732 = vmatpush.msra.mxu0 0.0
        %733 = vmatpush.msra.mxu0 0.0
        %734 = vmatpush.msra.mxu0 0.0
        %735 = vmatpush.msra.mxu0 0.0
        %736 = vmatpush.msra.mxu0 0.0
        %737 = vmatpush.msra.mxu0 0.0
        %738 = vmatpush.msra.mxu0 0.0
        %739 = vmatpush.msra.mxu0 0.0
        %740 = vmatpush.msra.mxu0 0.0
        %741 = vmatpush.msra.mxu0 0.0
        %742 = vmatpush.msra.mxu0 %v717
        %743 = vmatpush.msra.mxu0 %v716
        %744 = vmatpush.msra.mxu0 %v715
        %745 = vmatpush.msra.mxu0 %v714
        %746 = vmatmul.f32.gmra.mxu0 %v719
        %v747 = vpop.f32.mrf.mxu0
        %v748 = vadd.f32 0.0, %v747
        %749 = vmatmul.f32.gmra.mxu0 %v722
        %v750 = vpop.f32.mrf.mxu0
        %v751 = vadd.f32 0.0, %v750
        %752 = vmatmul.f32.gmra.mxu0 %v725
        %v753 = vpop.f32.mrf.mxu0
        %v754 = vadd.f32 0.0, %v753
        %755 = vmatmul.f32.gmra.mxu0 %v728
        %v756 = vpop.f32.mrf.mxu0
        %v757 = vadd.f32 0.0, %v756
        %758 = vdwg.mxu0
        %759 = vst.msk [vmem:[#allocation6] sm:$0xff] %vm589, %v748
        %760 = vst.msk [vmem:[#allocation6 + $0x8] sm:$0xff] %vm589, %v751
        %761 = vst.msk [vmem:[#allocation6 + $0x10] sm:$0xff] %vm589, %v754
        %762 = vst.msk [vmem:[#allocation6 + $0x18] sm:$0xff] %vm589, %v757
        %v763 = vld [vmem:[%s1] sm:$0x1]
        %v764 = vperm.slane %v763, 0
        %v765 = vadd.f32 %v764, 0.0
        %vm766 = vcmask 123904
        %767 = vst.msk [vmem:[#allocation5] sm:$0x3] %vm766, %v765
      $region100: #{im2latex_forward.15} parent=95 // pred_fallthru
        _
      %v768 = vld [vmem:[#allocation5] sm:$0x3]
      %v769 = vld [vmem:[#allocation4] sm:$0x3]
      %v770 = vld [vmem:[#allocation2] sm:$0x3]
      %v771 = vld [vmem:[#allocation3] sm:$0x3]
      %v772 = vld [vmem:[%s2] sm:$0xff]
      %v773 = vld [vmem:[%s2 + $0x8] sm:$0xff]
      %v774 = vld [vmem:[%s3] sm:$0xff]
      %v775 = vld [vmem:[%s3 + $0x8] sm:$0xff]
      %v776 = vld [vmem:[%s3 + $0x10] sm:$0xff]
      %v777 = vld [vmem:[%s3 + $0x18] sm:$0xff]
      %vm778 = vcmask 261120
      %v780 = vsel %vm778, %v769, 0
      %782 = vmatpush.msra.mxu0 0.0
      %783 = vmatpush.msra.mxu0 0.0
      %784 = vmatpush.msra.mxu0 0.0
      %785 = vmatpush.msra.mxu0 0.0
      %786 = vmatpush.msra.mxu0 0.0
      %787 = vmatpush.msra.mxu0 0.0
      %788 = vmatpush.msra.mxu0 0.0
      %789 = vmatpush.msra.mxu0 0.0
      %790 = vmatpush.msra.mxu0 0.0
      %791 = vmatpush.msra.mxu0 0.0
      %792 = vmatpush.msra.mxu0 0.0
      %793 = vmatpush.msra.mxu0 0.0
      %794 = vmatpush.msra.mxu0 %v777
      %795 = vmatpush.msra.mxu0 %v776
      %796 = vmatpush.msra.mxu0 %v775
      %797 = vmatpush.msra.mxu0 %v774
      %798 = vmatmul.f32.gmra.mxu0 %v780
      %v799 = vpop.f32.mrf.mxu0
      %v800 = vadd.f32 0.0, %v799
      %801 = vdwg.mxu0
      %vm802 = vcmask 130048
      %v804 = vsel %vm802, %v768, 0
      %806 = vmatpush.msra.mxu0 0.0
      %807 = vmatpush.msra.mxu0 0.0
      %808 = vmatpush.msra.mxu0 0.0
      %809 = vmatpush.msra.mxu0 0.0
      %810 = vmatpush.msra.mxu0 0.0
      %811 = vmatpush.msra.mxu0 0.0
      %812 = vmatpush.msra.mxu0 0.0
      %813 = vmatpush.msra.mxu0 0.0
      %814 = vmatpush.msra.mxu0 0.0
      %815 = vmatpush.msra.mxu0 0.0
      %816 = vmatpush.msra.mxu0 0.0
      %817 = vmatpush.msra.mxu0 0.0
      %818 = vmatpush.msra.mxu0 0.0
      %819 = vmatpush.msra.mxu0 0.0
      %820 = vmatpush.msra.mxu0 %v773
      %821 = vmatpush.msra.mxu0 %v772
      %822 = vmatmul.f32.gmra.mxu0 %v804
      %v823 = vpop.f32.mrf.mxu0
      %v824 = vadd.f32 %v800, %v823
      %825 = vdwg.mxu0
      %v826 = vld [vmem:[%s4] sm:$0xff]
      %v827 = vld [vmem:[%s4 + $0x8] sm:$0xff]
      %v828 = vld [vmem:[%s4 + $0x10] sm:$0xff]
      %v829 = vld [vmem:[%s4 + $0x18] sm:$0xff]
      %v831 = vsel %vm778, %v770, 0
      %833 = vmatpush.msra.mxu0 0.0
      %834 = vmatpush.msra.mxu0 0.0
      %835 = vmatpush.msra.mxu0 0.0
      %836 = vmatpush.msra.mxu0 0.0
      %837 = vmatpush.msra.mxu0 0.0
      %838 = vmatpush.msra.mxu0 0.0
      %839 = vmatpush.msra.mxu0 0.0
      %840 = vmatpush.msra.mxu0 0.0
      %841 = vmatpush.msra.mxu0 0.0
      %842 = vmatpush.msra.mxu0 0.0
      %843 = vmatpush.msra.mxu0 0.0
      %844 = vmatpush.msra.mxu0 0.0
      %845 = vmatpush.msra.mxu0 %v829
      %846 = vmatpush.msra.mxu0 %v828
      %847 = vmatpush.msra.mxu0 %v827
      %848 = vmatpush.msra.mxu0 %v826
      %849 = vmatmul.f32.gmra.mxu0 %v831
      %v850 = vpop.f32.mrf.mxu0
      %v851 = vadd.f32 0.0, %v850
      %852 = vdwg.mxu0
      %v853 = vadd.f32 %v824, %v851
      %v854 = vld [vmem:[%s5] sm:$0x1]
      %v856 = vperm.slane %v854, 0
      %v858 = vadd.f32 %v853, %v856
      %v859 = vld [vmem:[%s6] sm:$0x1]
      %v861 = vperm.slane %v859, 0
      %v863 = vadd.f32 %v858, %v861
      %s864 = scalar_lea.vmem %s2, 16
      %v865 = vld [vmem:[%s864] sm:$0xff]
      %v866 = vld [vmem:[%s864 + $0x8] sm:$0xff]
      %s867 = scalar_lea.vmem %s3, 32
      %v868 = vld [vmem:[%s867] sm:$0xff]
      %v869 = vld [vmem:[%s867 + $0x8] sm:$0xff]
      %v870 = vld [vmem:[%s867 + $0x10] sm:$0xff]
      %v871 = vld [vmem:[%s867 + $0x18] sm:$0xff]
      %872 = vmatpush.msra.mxu0 0.0
      %873 = vmatpush.msra.mxu0 0.0
      %874 = vmatpush.msra.mxu0 0.0
      %875 = vmatpush.msra.mxu0 0.0
      %876 = vmatpush.msra.mxu0 0.0
      %877 = vmatpush.msra.mxu0 0.0
      %878 = vmatpush.msra.mxu0 0.0
      %879 = vmatpush.msra.mxu0 0.0
      %880 = vmatpush.msra.mxu0 0.0
      %881 = vmatpush.msra.mxu0 0.0
      %882 = vmatpush.msra.mxu0 0.0
      %883 = vmatpush.msra.mxu0 0.0
      %884 = vmatpush.msra.mxu0 %v871
      %885 = vmatpush.msra.mxu0 %v870
      %886 = vmatpush.msra.mxu0 %v869
      %887 = vmatpush.msra.mxu0 %v868
      %888 = vmatmul.f32.gmra.mxu0 %v780
      %v889 = vpop.f32.mrf.mxu0
      %v890 = vadd.f32 0.0, %v889
      %891 = vdwg.mxu0
      %892 = vmatpush.msra.mxu0 0.0
      %893 = vmatpush.msra.mxu0 0.0
      %894 = vmatpush.msra.mxu0 0.0
      %895 = vmatpush.msra.mxu0 0.0
      %896 = vmatpush.msra.mxu0 0.0
      %897 = vmatpush.msra.mxu0 0.0
      %898 = vmatpush.msra.mxu0 0.0
      %899 = vmatpush.msra.mxu0 0.0
      %900 = vmatpush.msra.mxu0 0.0
      %901 = vmatpush.msra.mxu0 0.0
      %902 = vmatpush.msra.mxu0 0.0
      %903 = vmatpush.msra.mxu0 0.0
      %904 = vmatpush.msra.mxu0 0.0
      %905 = vmatpush.msra.mxu0 0.0
      %906 = vmatpush.msra.mxu0 %v866
      %907 = vmatpush.msra.mxu0 %v865
      %908 = vmatmul.f32.gmra.mxu0 %v804
      %v909 = vpop.f32.mrf.mxu0
      %v910 = vadd.f32 %v890, %v909
      %911 = vdwg.mxu0
      %s912 = scalar_lea.vmem %s4, 32
      %v913 = vld [vmem:[%s912] sm:$0xff]
      %v914 = vld [vmem:[%s912 + $0x8] sm:$0xff]
      %v915 = vld [vmem:[%s912 + $0x10] sm:$0xff]
      %v916 = vld [vmem:[%s912 + $0x18] sm:$0xff]
      %917 = vmatpush.msra.mxu0 0.0
      %918 = vmatpush.msra.mxu0 0.0
      %919 = vmatpush.msra.mxu0 0.0
      %920 = vmatpush.msra.mxu0 0.0
      %921 = vmatpush.msra.mxu0 0.0
      %922 = vmatpush.msra.mxu0 0.0
      %923 = vmatpush.msra.mxu0 0.0
      %924 = vmatpush.msra.mxu0 0.0
      %925 = vmatpush.msra.mxu0 0.0
      %926 = vmatpush.msra.mxu0 0.0
      %927 = vmatpush.msra.mxu0 0.0
      %928 = vmatpush.msra.mxu0 0.0
      %929 = vmatpush.msra.mxu0 %v916
      %930 = vmatpush.msra.mxu0 %v915
      %931 = vmatpush.msra.mxu0 %v914
      %932 = vmatpush.msra.mxu0 %v913
      %933 = vmatmul.f32.gmra.mxu0 %v831
      %v934 = vpop.f32.mrf.mxu0
      %v935 = vadd.f32 0.0, %v934
      %936 = vdwg.mxu0
      %v937 = vadd.f32 %v910, %v935
      %s938 = scalar_lea.vmem %s5, 1
      %v939 = vld [vmem:[%s938] sm:$0x1]
      %v941 = vperm.slane %v939, 0
      %v943 = vadd.f32 %v937, %v941
      %s944 = scalar_lea.vmem %s6, 1
      %v945 = vld [vmem:[%s944] sm:$0x1]
      %v947 = vperm.slane %v945, 0
      %v949 = vadd.f32 %v943, %v947
      %s950 = scalar_lea.vmem %s2, 32
      %v951 = vld [vmem:[%s950] sm:$0xff]
      %v952 = vld [vmem:[%s950 + $0x8] sm:$0xff]
      %s953 = scalar_lea.vmem %s3, 64
      %v954 = vld [vmem:[%s953] sm:$0xff]
      %v955 = vld [vmem:[%s953 + $0x8] sm:$0xff]
      %v956 = vld [vmem:[%s953 + $0x10] sm:$0xff]
      %v957 = vld [vmem:[%s953 + $0x18] sm:$0xff]
      %958 = vmatpush.msra.mxu0 0.0
      %959 = vmatpush.msra.mxu0 0.0
      %960 = vmatpush.msra.mxu0 0.0
      %961 = vmatpush.msra.mxu0 0.0
      %962 = vmatpush.msra.mxu0 0.0
      %963 = vmatpush.msra.mxu0 0.0
      %964 = vmatpush.msra.mxu0 0.0
      %965 = vmatpush.msra.mxu0 0.0
      %966 = vmatpush.msra.mxu0 0.0
      %967 = vmatpush.msra.mxu0 0.0
      %968 = vmatpush.msra.mxu0 0.0
      %969 = vmatpush.msra.mxu0 0.0
      %970 = vmatpush.msra.mxu0 %v957
      %971 = vmatpush.msra.mxu0 %v956
      %972 = vmatpush.msra.mxu0 %v955
      %973 = vmatpush.msra.mxu0 %v954
      %974 = vmatmul.f32.gmra.mxu0 %v780
      %v975 = vpop.f32.mrf.mxu0
      %v976 = vadd.f32 0.0, %v975
      %977 = vdwg.mxu0
      %978 = vmatpush.msra.mxu0 0.0
      %979 = vmatpush.msra.mxu0 0.0
      %980 = vmatpush.msra.mxu0 0.0
      %981 = vmatpush.msra.mxu0 0.0
      %982 = vmatpush.msra.mxu0 0.0
      %983 = vmatpush.msra.mxu0 0.0
      %984 = vmatpush.msra.mxu0 0.0
      %985 = vmatpush.msra.mxu0 0.0
      %986 = vmatpush.msra.mxu0 0.0
      %987 = vmatpush.msra.mxu0 0.0
      %988 = vmatpush.msra.mxu0 0.0
      %989 = vmatpush.msra.mxu0 0.0
      %990 = vmatpush.msra.mxu0 0.0
      %991 = vmatpush.msra.mxu0 0.0
      %992 = vmatpush.msra.mxu0 %v952
      %993 = vmatpush.msra.mxu0 %v951
      %994 = vmatmul.f32.gmra.mxu0 %v804
      %v995 = vpop.f32.mrf.mxu0
      %v996 = vadd.f32 %v976, %v995
      %997 = vdwg.mxu0
      %s998 = scalar_lea.vmem %s4, 64
      %v999 = vld [vmem:[%s998] sm:$0xff]
      %v1000 = vld [vmem:[%s998 + $0x8] sm:$0xff]
      %v1001 = vld [vmem:[%s998 + $0x10] sm:$0xff]
      %v1002 = vld [vmem:[%s998 + $0x18] sm:$0xff]
      %1003 = vmatpush.msra.mxu0 0.0
      %1004 = vmatpush.msra.mxu0 0.0
      %1005 = vmatpush.msra.mxu0 0.0
      %1006 = vmatpush.msra.mxu0 0.0
      %1007 = vmatpush.msra.mxu0 0.0
      %1008 = vmatpush.msra.mxu0 0.0
      %1009 = vmatpush.msra.mxu0 0.0
      %1010 = vmatpush.msra.mxu0 0.0
      %1011 = vmatpush.msra.mxu0 0.0
      %1012 = vmatpush.msra.mxu0 0.0
      %1013 = vmatpush.msra.mxu0 0.0
      %1014 = vmatpush.msra.mxu0 0.0
      %1015 = vmatpush.msra.mxu0 %v1002
      %1016 = vmatpush.msra.mxu0 %v1001
      %1017 = vmatpush.msra.mxu0 %v1000
      %1018 = vmatpush.msra.mxu0 %v999
      %1019 = vmatmul.f32.gmra.mxu0 %v831
      %v1020 = vpop.f32.mrf.mxu0
      %v1021 = vadd.f32 0.0, %v1020
      %1022 = vdwg.mxu0
      %v1023 = vadd.f32 %v996, %v1021
      %s1024 = scalar_lea.vmem %s5, 2
      %v1025 = vld [vmem:[%s1024] sm:$0x1]
      %v1027 = vperm.slane %v1025, 0
      %v1029 = vadd.f32 %v1023, %v1027
      %s1030 = scalar_lea.vmem %s6, 2
      %v1031 = vld [vmem:[%s1030] sm:$0x1]
      %v1033 = vperm.slane %v1031, 0
      %v1035 = vadd.f32 %v1029, %v1033
      %s1036 = scalar_lea.vmem %s2, 48
      %v1037 = vld [vmem:[%s1036] sm:$0xff]
      %v1038 = vld [vmem:[%s1036 + $0x8] sm:$0xff]
      %s1039 = scalar_lea.vmem %s3, 96
      %v1040 = vld [vmem:[%s1039] sm:$0xff]
      %v1041 = vld [vmem:[%s1039 + $0x8] sm:$0xff]
      %v1042 = vld [vmem:[%s1039 + $0x10] sm:$0xff]
      %v1043 = vld [vmem:[%s1039 + $0x18] sm:$0xff]
      %1044 = vmatpush.msra.mxu0 0.0
      %1045 = vmatpush.msra.mxu0 0.0
      %1046 = vmatpush.msra.mxu0 0.0
      %1047 = vmatpush.msra.mxu0 0.0
      %1048 = vmatpush.msra.mxu0 0.0
      %1049 = vmatpush.msra.mxu0 0.0
      %1050 = vmatpush.msra.mxu0 0.0
      %1051 = vmatpush.msra.mxu0 0.0
      %1052 = vmatpush.msra.mxu0 0.0
      %1053 = vmatpush.msra.mxu0 0.0
      %1054 = vmatpush.msra.mxu0 0.0
      %1055 = vmatpush.msra.mxu0 0.0
      %1056 = vmatpush.msra.mxu0 %v1043
      %1057 = vmatpush.msra.mxu0 %v1042
      %1058 = vmatpush.msra.mxu0 %v1041
      %1059 = vmatpush.msra.mxu0 %v1040
      %1060 = vmatmul.f32.gmra.mxu0 %v780
      %v1061 = vpop.f32.mrf.mxu0
      %v1062 = vadd.f32 0.0, %v1061
      %1063 = vdwg.mxu0
      %1064 = vmatpush.msra.mxu0 0.0
      %1065 = vmatpush.msra.mxu0 0.0
      %1066 = vmatpush.msra.mxu0 0.0
      %1067 = vmatpush.msra.mxu0 0.0
      %1068 = vmatpush.msra.mxu0 0.0
      %1069 = vmatpush.msra.mxu0 0.0
      %1070 = vmatpush.msra.mxu0 0.0
      %1071 = vmatpush.msra.mxu0 0.0
      %1072 = vmatpush.msra.mxu0 0.0
      %1073 = vmatpush.msra.mxu0 0.0
      %1074 = vmatpush.msra.mxu0 0.0
      %1075 = vmatpush.msra.mxu0 0.0
      %1076 = vmatpush.msra.mxu0 0.0
      %1077 = vmatpush.msra.mxu0 0.0
      %1078 = vmatpush.msra.mxu0 %v1038
      %1079 = vmatpush.msra.mxu0 %v1037
      %1080 = vmatmul.f32.gmra.mxu0 %v804
      %v1081 = vpop.f32.mrf.mxu0
      %v1082 = vadd.f32 %v1062, %v1081
      %1083 = vdwg.mxu0
      %s1084 = scalar_lea.vmem %s4, 96
      %v1085 = vld [vmem:[%s1084] sm:$0xff]
      %v1086 = vld [vmem:[%s1084 + $0x8] sm:$0xff]
      %v1087 = vld [vmem:[%s1084 + $0x10] sm:$0xff]
      %v1088 = vld [vmem:[%s1084 + $0x18] sm:$0xff]
      %1089 = vmatpush.msra.mxu0 0.0
      %1090 = vmatpush.msra.mxu0 0.0
      %1091 = vmatpush.msra.mxu0 0.0
      %1092 = vmatpush.msra.mxu0 0.0
      %1093 = vmatpush.msra.mxu0 0.0
      %1094 = vmatpush.msra.mxu0 0.0
      %1095 = vmatpush.msra.mxu0 0.0
      %1096 = vmatpush.msra.mxu0 0.0
      %1097 = vmatpush.msra.mxu0 0.0
      %1098 = vmatpush.msra.mxu0 0.0
      %1099 = vmatpush.msra.mxu0 0.0
      %1100 = vmatpush.msra.mxu0 0.0
      %1101 = vmatpush.msra.mxu0 %v1088
      %1102 = vmatpush.msra.mxu0 %v1087
      %1103 = vmatpush.msra.mxu0 %v1086
      %1104 = vmatpush.msra.mxu0 %v1085
      %1105 = vmatmul.f32.gmra.mxu0 %v831
      %v1106 = vpop.f32.mrf.mxu0
      %v1107 = vadd.f32 0.0, %v1106
      %1108 = vdwg.mxu0
      %v1109 = vadd.f32 %v1082, %v1107
      %s1110 = scalar_lea.vmem %s5, 3
      %v1111 = vld [vmem:[%s1110] sm:$0x1]
      %v1113 = vperm.slane %v1111, 0
      %v1115 = vadd.f32 %v1109, %v1113
      %s1116 = scalar_lea.vmem %s6, 3
      %v1117 = vld [vmem:[%s1116] sm:$0x1]
      %v1119 = vperm.slane %v1117, 0
      %v1121 = vadd.f32 %v1115, %v1119
      %v1122 = vxor.u32 %v863, 2147483648
      %v1123 = vmul.f32 %v1122, 1.442695
      %v1124 = vpow.pop %v1123
      %v1125 = vadd.f32 %v1124, 1.0
      %v1126 = vrcp.pop %v1125
      %v1127 = vmul.f32 %v1125, %v1126
      %v1128 = vsub.f32 1.0, %v1127
      %v1129 = vmul.f32 %v1126, %v1128
      %v1130 = vadd.f32 %v1126, %v1129
      %vm1131 = vweird.f32 %v1125
      %vm1132 = vweird.f32 %v1126
      %vm1133 = vmor %vm1131, %vm1132
      %v1134 = vsel %vm1133, %v1126, %v1130
      %v1135 = vand.u32 2147483647, %v1125
      %vm1136 = vcmp.eq.f32.partialorder %v1135, 8.507059e+37
      %v1137 = vand.u32 %v1125, 2147483648
      %v1138 = vor.u32 1.1754944e-38, %v1137
      %v1139 = vsel %vm1136, %v1138, %v1134
      %v1140 = vmul.f32 1.0, %v1139
      %v1141 = vxor.u32 %v949, 2147483648
      %v1142 = vmul.f32 %v1141, 1.442695
      %v1143 = vpow.pop %v1142
      %v1144 = vadd.f32 %v1143, 1.0
      %v1145 = vrcp.pop %v1144
      %v1146 = vmul.f32 %v1144, %v1145
      %v1147 = vsub.f32 1.0, %v1146
      %v1148 = vmul.f32 %v1145, %v1147
      %v1149 = vadd.f32 %v1145, %v1148
      %vm1150 = vweird.f32 %v1144
      %vm1151 = vweird.f32 %v1145
      %vm1152 = vmor %vm1150, %vm1151
      %v1153 = vsel %vm1152, %v1145, %v1149
      %v1154 = vand.u32 2147483647, %v1144
      %vm1155 = vcmp.eq.f32.partialorder %v1154, 8.507059e+37
      %v1156 = vand.u32 %v1144, 2147483648
      %v1157 = vor.u32 1.1754944e-38, %v1156
      %v1158 = vsel %vm1155, %v1157, %v1153
      %v1159 = vmul.f32 1.0, %v1158
      %v1160 = vtanh.pop %v1035
      %v1161 = vxor.u32 %v1121, 2147483648
      %v1162 = vmul.f32 %v1161, 1.442695
      %v1163 = vpow.pop %v1162
      %v1164 = vadd.f32 %v1163, 1.0
      %v1165 = vrcp.pop %v1164
      %v1166 = vmul.f32 %v1164, %v1165
      %v1167 = vsub.f32 1.0, %v1166
      %v1168 = vmul.f32 %v1165, %v1167
      %v1169 = vadd.f32 %v1165, %v1168
      %vm1170 = vweird.f32 %v1164
      %vm1171 = vweird.f32 %v1165
      %vm1172 = vmor %vm1170, %vm1171
      %v1173 = vsel %vm1172, %v1165, %v1169
      %v1174 = vand.u32 2147483647, %v1164
      %vm1175 = vcmp.eq.f32.partialorder %v1174, 8.507059e+37
      %v1176 = vand.u32 %v1164, 2147483648
      %v1177 = vor.u32 1.1754944e-38, %v1176
      %v1178 = vsel %vm1175, %v1177, %v1173
      %v1179 = vmul.f32 1.0, %v1178
      %v1180 = vmul.f32 %v1159, %v771
      %v1181 = vmul.f32 %v1140, %v1160
      %v1182 = vadd.f32 %v1180, %v1181
      %v1183 = vtanh.pop %v1182
      %v1184 = vmul.f32 %v1179, %v1183
      %v1185 = vld [vmem:[%s0] sm:$0xff]
      %v1186 = vld [vmem:[%s0 + $0x8] sm:$0xff]
      %v1187 = vld [vmem:[%s0 + $0x10] sm:$0xff]
      %v1188 = vld [vmem:[%s0 + $0x18] sm:$0xff]
      %v1189 = vld [vmem:[%s14] sm:$0xff]
      %v1190 = vld [vmem:[%s14 + $0x8] sm:$0xff]
      %v1191 = vld [vmem:[%s14 + $0x10] sm:$0xff]
      %v1192 = vld [vmem:[%s14 + $0x18] sm:$0xff]
      %v1194 = vsel %vm778, %v1184, 0
      %1196 = vmatpush.msra.mxu0 0.0
      %1197 = vmatpush.msra.mxu0 0.0
      %1198 = vmatpush.msra.mxu0 0.0
      %1199 = vmatpush.msra.mxu0 0.0
      %1200 = vmatpush.msra.mxu0 0.0
      %1201 = vmatpush.msra.mxu0 0.0
      %1202 = vmatpush.msra.mxu0 0.0
      %1203 = vmatpush.msra.mxu0 0.0
      %1204 = vmatpush.msra.mxu0 0.0
      %1205 = vmatpush.msra.mxu0 0.0
      %1206 = vmatpush.msra.mxu0 0.0
      %1207 = vmatpush.msra.mxu0 0.0
      %1208 = vmatpush.msra.mxu0 %v1192
      %1209 = vmatpush.msra.mxu0 %v1191
      %1210 = vmatpush.msra.mxu0 %v1190
      %1211 = vmatpush.msra.mxu0 %v1189
      %1212 = vmatmul.f32.gmra.mxu0 %v1194
      %v1213 = vpop.f32.mrf.mxu0
      %v1214 = vadd.f32 0.0, %v1213
      %1215 = vdwg.mxu0
      %v1216 = vld [vmem:[#allocation6] sm:$0xff]
      %v1217 = vld [vmem:[#allocation6 + $0x8] sm:$0xff]
      %v1218 = vld [vmem:[#allocation6 + $0x10] sm:$0xff]
      %v1219 = vld [vmem:[#allocation6 + $0x18] sm:$0xff]
      %v1221 = vrot.slane %v1214, 1
      %v1222 = vperm.slane %v1214, 0
      %v1223 = vperm.slane %v1221, 0
      %v1226 = vadd.f32 %v1216, %v1222
      %v1227 = vadd.f32 %v1217, %v1222
      %v1228 = vadd.f32 %v1218, %v1223
      %v1229 = vadd.f32 %v1219, %v1223
      %v1230 = vtanh.pop %v1226
      %v1231 = vtanh.pop %v1227
      %v1232 = vtanh.pop %v1228
      %v1233 = vtanh.pop %v1229
      %v1234 = vld [vmem:[%s15] sm:$0x1]
      %v1236 = vperm.slane %v1234, 0
      %v1238 = vmul.f32 %v1230, %v1236
      %v1239 = vmul.f32 %v1231, %v1236
      %v1240 = vmul.f32 %v1232, %v1236
      %v1241 = vmul.f32 %v1233, %v1236
      %v1242 = vsel %vm778, %v1238, 0.0
      %1243 = vadd.xlane.f32.xlu0 %v1242
      %v1244 = vpop.xlane.xlu0 %1243
      %v1245 = vsel %vm778, %v1239, 0.0
      %1246 = vadd.xlane.f32.xlu0 %v1245
      %v1247 = vpop.xlane.xlu0 %1246
      %v1248 = vsel %vm778, %v1240, 0.0
      %1249 = vadd.xlane.f32.xlu0 %v1248
      %v1250 = vpop.xlane.xlu0 %1249
      %v1251 = vsel %vm778, %v1241, 0.0
      %1252 = vadd.xlane.f32.xlu0 %v1251
      %v1253 = vpop.xlane.xlu0 %1252
      %v1258 = vlaneseq
      %v1259 = vand.u32 %v1258, 127
      %v1260 = vperm.slane %v1244, %v1259
      %v1261 = vadd.s32 %v1259, 4294967288
      %v1262 = vperm.slane %v1247, %v1261
      %vm1263 = vcmask 130112
      %v1264 = vsel %vm1263, %v1262, %v1260
      %v1265 = vperm.slane %v1250, %v1259
      %v1266 = vperm.slane %v1253, %v1261
      %v1267 = vsel %vm1263, %v1266, %v1265
      %vm1268 = vcmask 1041409
      %v1269 = vsel %vm1268, %v1267, %v1264
      %vm1271 = vcmask 123904
      %v1272 = vsel %vm1271, %v1269, -inf
      %1273 = vmax.xlane.f32.xlu0 %v1272
      %v1274 = vpop.xlane.xlu0 %1273
      %v1276 = vperm.slane %v1274, 0
      %v1277 = vperm.slane %v1274, 1
      %v1280 = vsub.f32 %v1244, %v1276
      %v1281 = vsub.f32 %v1247, %v1276
      %v1282 = vsub.f32 %v1250, %v1277
      %v1283 = vsub.f32 %v1253, %v1277
      %v1284 = vmul.f32 %v1280, 1.442695
      %v1285 = vpow.pop %v1284
      %v1286 = vmul.f32 %v1281, 1.442695
      %v1287 = vpow.pop %v1286
      %v1288 = vmul.f32 %v1282, 1.442695
      %v1289 = vpow.pop %v1288
      %v1290 = vmul.f32 %v1283, 1.442695
      %v1291 = vpow.pop %v1290
      %1296 = vset.pattern.permute.xlu0 0
      %1297 = vperm.xlu0 %1296, %v1285
      %v1298 = vpop.permute.xlu0 %1297
      %1299 = vset.pattern.permute.xlu0 0
      %1300 = vperm.xlu0 %1299, %v1287
      %v1301 = vpop.permute.xlu0 %1300
      %1302 = vset.pattern.permute.xlu0 0
      %1303 = vperm.xlu0 %1302, %v1289
      %v1304 = vpop.permute.xlu0 %1303
      %1305 = vset.pattern.permute.xlu0 0
      %1306 = vperm.xlu0 %1305, %v1291
      %v1307 = vpop.permute.xlu0 %1306
      %v1308 = vperm.slane %v1298, %v1259
      %v1309 = vperm.slane %v1301, %v1261
      %v1310 = vsel %vm1263, %v1309, %v1308
      %v1311 = vperm.slane %v1304, %v1259
      %v1312 = vperm.slane %v1307, %v1261
      %v1313 = vsel %vm1263, %v1312, %v1311
      %v1314 = vsel %vm1268, %v1313, %v1310
      %v1316 = vsel %vm1271, %v1314, 0.0
      %1317 = vadd.xlane.f32.xlu0 %v1316
      %v1318 = vpop.xlane.xlu0 %1317
      %v1319 = vrcp.pop %v1318
      %v1321 = vperm.slane %v1319, 0
      %v1322 = vperm.slane %v1319, 1
      %v1325 = vmul.f32 %v1285, %v1321
      %v1326 = vmul.f32 %v1287, %v1321
      %v1327 = vmul.f32 %v1289, %v1322
      %v1328 = vmul.f32 %v1291, %v1322
      %1330 = vset.pattern.permute.xlu0 0
      %1331 = vperm.xlu0 %1330, %v1325
      %v1332 = vpop.permute.xlu0 %1331
      %1335 = vset.pattern.permute.xlu0 0
      %1336 = vperm.xlu0 %1335, %v1326
      %v1337 = vpop.permute.xlu0 %1336
      %1340 = vset.pattern.permute.xlu0 0
      %1341 = vperm.xlu0 %1340, %v1327
      %v1342 = vpop.permute.xlu0 %1341
      %1345 = vset.pattern.permute.xlu0 0
      %1346 = vperm.xlu0 %1345, %v1328
      %v1347 = vpop.permute.xlu0 %1346
      %v1349 = vmul.f32 %v1332, %v1185
      %v1350 = vmul.f32 %v1337, %v1186
      %v1351 = vmul.f32 %v1342, %v1187
      %v1352 = vmul.f32 %v1347, %v1188
      %v1353 = vsel %vm778, %v1349, 0.0
      %v1354 = vsel %vm778, %v1350, 0.0
      %v1355 = vadd.f32 %v1353, %v1354
      %v1356 = vrot.slane %v1355, 4
      %v1357 = vadd.f32 %v1355, %v1356
      %v1358 = vrot.slane %v1357, 2
      %v1359 = vadd.f32 %v1357, %v1358
      %v1360 = vrot.slane %v1359, 1
      %v1361 = vadd.f32 %v1359, %v1360
      %v1362 = vsel %vm778, %v1351, 0.0
      %v1363 = vsel %vm778, %v1352, 0.0
      %v1364 = vadd.f32 %v1362, %v1363
      %v1365 = vrot.slane %v1364, 4
      %v1366 = vadd.f32 %v1364, %v1365
      %v1367 = vrot.slane %v1366, 2
      %v1368 = vadd.f32 %v1366, %v1367
      %v1369 = vrot.slane %v1368, 1
      %v1370 = vadd.f32 %v1368, %v1369
      %v1371 = vld [vmem:[%s16] sm:$0xff]
      %v1372 = vld [vmem:[%s16 + $0x8] sm:$0xff]
      %v1373 = vld [vmem:[%s16 + $0x10] sm:$0xff]
      %v1374 = vld [vmem:[%s16 + $0x18] sm:$0xff]
      %v1375 = vld [vmem:[%s17] sm:$0xff]
      %v1376 = vld [vmem:[%s17 + $0x8] sm:$0xff]
      %v1377 = vld [vmem:[%s17 + $0x10] sm:$0xff]
      %v1378 = vld [vmem:[%s17 + $0x18] sm:$0xff]
      %v1381 = vsel %vm1268, %v1370, %v1361
      %v1382 = vsel %vm778, %v1381, 0
      %1384 = vmatpush.msra.mxu0 0.0
      %1385 = vmatpush.msra.mxu0 0.0
      %1386 = vmatpush.msra.mxu0 0.0
      %1387 = vmatpush.msra.mxu0 0.0
      %1388 = vmatpush.msra.mxu0 0.0
      %1389 = vmatpush.msra.mxu0 0.0
      %1390 = vmatpush.msra.mxu0 0.0
      %1391 = vmatpush.msra.mxu0 0.0
      %1392 = vmatpush.msra.mxu0 0.0
      %1393 = vmatpush.msra.mxu0 0.0
      %1394 = vmatpush.msra.mxu0 0.0
      %1395 = vmatpush.msra.mxu0 0.0
      %1396 = vmatpush.msra.mxu0 %v1378
      %1397 = vmatpush.msra.mxu0 %v1377
      %1398 = vmatpush.msra.mxu0 %v1376
      %1399 = vmatpush.msra.mxu0 %v1375
      %1400 = vmatmul.f32.gmra.mxu0 %v1382
      %v1401 = vpop.f32.mrf.mxu0
      %v1402 = vadd.f32 0.0, %v1401
      %1403 = vdwg.mxu0
      %1404 = vmatpush.msra.mxu0 0.0
      %1405 = vmatpush.msra.mxu0 0.0
      %1406 = vmatpush.msra.mxu0 0.0
      %1407 = vmatpush.msra.mxu0 0.0
      %1408 = vmatpush.msra.mxu0 0.0
      %1409 = vmatpush.msra.mxu0 0.0
      %1410 = vmatpush.msra.mxu0 0.0
      %1411 = vmatpush.msra.mxu0 0.0
      %1412 = vmatpush.msra.mxu0 0.0
      %1413 = vmatpush.msra.mxu0 0.0
      %1414 = vmatpush.msra.mxu0 0.0
      %1415 = vmatpush.msra.mxu0 0.0
      %1416 = vmatpush.msra.mxu0 %v1374
      %1417 = vmatpush.msra.mxu0 %v1373
      %1418 = vmatpush.msra.mxu0 %v1372
      %1419 = vmatpush.msra.mxu0 %v1371
      %1420 = vmatmul.f32.gmra.mxu0 %v1194
      %v1421 = vpop.f32.mrf.mxu0
      %v1422 = vadd.f32 %v1402, %v1421
      %1423 = vdwg.mxu0
      %v1424 = vtanh.pop %v1422
      %v1425 = vld [vmem:[%s18] sm:$0xff]
      %v1426 = vld [vmem:[%s18 + $0x8] sm:$0xff]
      %v1427 = vld [vmem:[%s18 + $0x10] sm:$0xff]
      %v1428 = vld [vmem:[%s18 + $0x18] sm:$0xff]
      %v1430 = vsel %vm778, %v1424, 0
      %1432 = vmatpush.msra.mxu0 0.0
      %1433 = vmatpush.msra.mxu0 0.0
      %1434 = vmatpush.msra.mxu0 0.0
      %1435 = vmatpush.msra.mxu0 0.0
      %1436 = vmatpush.msra.mxu0 0.0
      %1437 = vmatpush.msra.mxu0 0.0
      %1438 = vmatpush.msra.mxu0 0.0
      %1439 = vmatpush.msra.mxu0 0.0
      %1440 = vmatpush.msra.mxu0 0.0
      %1441 = vmatpush.msra.mxu0 0.0
      %1442 = vmatpush.msra.mxu0 0.0
      %1443 = vmatpush.msra.mxu0 0.0
      %1444 = vmatpush.msra.mxu0 %v1428
      %1445 = vmatpush.msra.mxu0 %v1427
      %1446 = vmatpush.msra.mxu0 %v1426
      %1447 = vmatpush.msra.mxu0 %v1425
      %1448 = vmatmul.f32.gmra.mxu0 %v1430
      %v1449 = vpop.f32.mrf.mxu0
      %v1450 = vadd.f32 0.0, %v1449
      %1451 = vdwg.mxu0
      %vm1452 = vcmask 254976
      %v1453 = vsel %vm1452, %v1450, -inf
      %1454 = vmax.xlane.f32.xlu0 %v1453
      %v1455 = vpop.xlane.xlu0 %1454
      %v1456 = vsub.f32 %v1450, %v1455
      %v1457 = vmul.f32 %v1456, 1.442695
      %v1458 = vpow.pop %v1457
      %v1459 = vsel %vm1452, %v1458, 0.0
      %1460 = vadd.xlane.f32.xlu0 %v1459
      %v1461 = vpop.xlane.xlu0 %1460
      %v1462 = vrcp.pop %v1461
      %v1463 = vmul.f32 %v1458, %v1462
      %1464 = vst.msk [vmem:[#allocation2] sm:$0x3] %vm1452, %v1184
      %1465 = vst.msk [vmem:[#allocation3] sm:$0x3] %vm1452, %v1182
      %1466 = vst.msk [vmem:[#allocation4] sm:$0x3] %vm1452, %v1424
      %1467 = vst.msk [vmem:[%s580] sm:$0x3] %vm1452, %v1463
      %v1468 = vsel %vm1452, %v1463, -inf
      %1469 = vmax.xlane.f32.xlu0 %v1468
      %v1470 = vpop.xlane.xlu0 %1469
      %vm1471 = vcmp.ge.f32.partialorder %v1463, %v1470
      %v1472 = vsel %vm1471, %v1259, 32
      %v1473 = vsel %vm1452, %v1472, 2147483647
      %v1474 = vand.u32 %v1473, 65535
      %v1475 = vshra.s32 %v1473, 16
      %v1476 = vcvt.s32.f32 %v1474
      %v1477 = vcvt.s32.f32 %v1475
      %1478 = vmin.xlane.f32.xlu0 %v1477
      %v1479 = vpop.xlane.xlu0 %1478
      %vm1480 = vcmp.eq.f32.partialorder %v1477, %v1479
      %v1481 = vsel %vm1480, %v1476, inf
      %1482 = vmin.xlane.f32.xlu0 %v1481
      %v1483 = vpop.xlane.xlu0 %1482
      %v1484 = vcvt.f32.s32 %v1483
      %v1485 = vcvt.f32.s32 %v1479
      %v1486 = vshll.u32 %v1485, 16
      %v1487 = vadd.s32 %v1486, %v1484
      %vm1488 = vcmp.eq.s32.totalorder %v1259, %v1487
      %v1489 = vsel %vm1488, 1, 0
      %v1490 = vcvt.s32.f32 %v1489
      %v1491 = vld [vmem:[%s1] sm:$0xff]
      %v1492 = vld [vmem:[%s1 + $0x8] sm:$0xff]
      %v1493 = vld [vmem:[%s1 + $0x10] sm:$0xff]
      %v1494 = vld [vmem:[%s1 + $0x18] sm:$0xff]
      %v1496 = vsel %vm778, %v1490, 0
      %1498 = vmatpush.msra.mxu0 0.0
      %1499 = vmatpush.msra.mxu0 0.0
      %1500 = vmatpush.msra.mxu0 0.0
      %1501 = vmatpush.msra.mxu0 0.0
      %1502 = vmatpush.msra.mxu0 0.0
      %1503 = vmatpush.msra.mxu0 0.0
      %1504 = vmatpush.msra.mxu0 0.0
      %1505 = vmatpush.msra.mxu0 0.0
      %1506 = vmatpush.msra.mxu0 0.0
      %1507 = vmatpush.msra.mxu0 0.0
      %1508 = vmatpush.msra.mxu0 0.0
      %1509 = vmatpush.msra.mxu0 0.0
      %1510 = vmatpush.msra.mxu0 %v1494
      %1511 = vmatpush.msra.mxu0 %v1493
      %1512 = vmatpush.msra.mxu0 %v1492
      %1513 = vmatpush.msra.mxu0 %v1491
      %1514 = vmatmul.f32.gmra.mxu0 %v1496
      %v1515 = vpop.f32.mrf.mxu0
      %v1516 = vadd.f32 0.0, %v1515
      %1517 = vdwg.mxu0
      %1518 = vst.msk [vmem:[#allocation5] sm:$0x3] %vm1271, %v1516
      %p1519 = scmp.lt.s32.totalorder %s30, 7
      %s1520 = scalar_select %p1519, %s30, 7
      %s1521 = smul.addr %s1520, 2
      %s1522 = scalar_lea.vmem %s19, %s1521
      // Predicated region
      $region101: #{im2latex_forward.15} parent=95 // pred_check
        %p1523 = pneg %p447
      $region102: #{im2latex_forward.15} parent=95 // pred_check_branch
        %1525 = sbr.rel (%p1523) target = $region104
      $region103: #{im2latex_forward.15} parent=95 // pred_region
        _
      $region104: #{im2latex_forward.15} parent=95 // pred_fallthru
        _
    $region96: #{im2latex_forward.15} parent=5 // pred_fallthru
      _
    %p1526 = scmp.le.s32.totalorder 2, %s25
    // Predicated region
    $region105: #{im2latex_forward.15} parent=5 // pred_check
      %p1527 = pneg %p1526
    $region106: #{im2latex_forward.15} parent=5 // pred_check_branch
      %1529 = sbr.rel (%p1527) target = $region108
    $region107: #{im2latex_forward.15} parent=5 // pred_region
      %s1530 = ssub.s32 %s25, 2
      // Predicated region
      $region109: #{im2latex_forward.15} parent=107 // pred_check
        %p1531 = pneg %p453
      $region110: #{im2latex_forward.15} parent=107 // pred_check_branch
        %1533 = sbr.rel (%p1531) target = $region112
      $region111: #{im2latex_forward.15} parent=107 // pred_region
        %p1534 = scmp.lt.s32.totalorder %s31, 7
        %s1535 = scalar_select %p1534, %s31, 7
        %s1536 = smul.addr %s1535, 2
        %s1537 = scalar_lea.vmem %s19, %s1536
      $region112: #{im2latex_forward.15} parent=107 // pred_fallthru
        _
    $region108: #{im2latex_forward.15} parent=5 // pred_fallthru
      _
  $region6: #{im2latex_forward.15} parent=0 // loop_footer
    %s29 = sadd.s32 1, %s25
  $region7: #{im2latex_forward.15} parent=0 // loop_footer_branch
    %24 = sbr.rel target = $region3
  $region8: #{im2latex_forward.15} parent=0 // loop_exit
    _

</llo_original>
